<compile_context>
chip_gen: v7x
topology: tpu7x:2x2x1
jax: 0.10.0
libtpu: 0.0.40
codegen_flags: <defaults>
</compile_context>

<pallas_src>
import functools

import jax
import jax.numpy as jnp
from jax.experimental import pallas as pl
from jax.experimental.pallas import tpu as pltpu


# ----------------------------- Pallas kernel ------------------------------- #

def _shift_lanes(x, k):
    """Circular left shift along lanes: out[..., l] = x[..., (l + k) % L]."""
    if k == 0:
        return x
    size = x.shape[-1]
    return pltpu.roll(x, shift=size - k, axis=x.ndim - 1)


def _bert_cnn_kernel(*refs, batch, eps):
    (x0_ref, x1_ref, bng_ref, bnb_ref,
     d1w, d1b, d2w, d2b, dc1w, dc1b, dc2w, dc2b, dc3w, dc3b,
     p1w, p1b, p2w, p2b, pc1w, pc1b, pc2w, pc2b, pc3w, pc3b,
     f1w, f1b, f2w, f2b, f3w, f3b, o_ref) = refs

    def dense_part(x_ref, w1, b1, w2, b2):
        # Shared BatchNorm1d in training mode (batch statistics, biased
        # variance, same gamma/beta for both branches), then Linear+ReLU x2.
        x = x_ref[...]                                           # (B, F)
        mean = jnp.mean(x, axis=0, keepdims=True)
        var = jnp.mean((x - mean) ** 2, axis=0, keepdims=True)
        x = (x - mean) * jax.lax.rsqrt(var + eps) * bng_ref[...] + bnb_ref[...]
        h = jnp.dot(x, w1[...], preferred_element_type=jnp.float32) + b1[...]
        h = jnp.maximum(h, 0.0)                                  # (B, 256)
        h = jnp.dot(h, w2[...], preferred_element_type=jnp.float32) + b2[...]
        return jnp.maximum(h, 0.0)                               # (B, 128)

    def conv_part(h, c1w, c1b, c2w, c2b, c3w, c3b):
        # h: (B, L=128).  Per batch row: Conv1d(1->C,k)+ReLU, Conv1d(C->C,k)
        # +ReLU twice, AdaptiveMaxPool1d(1).  Layout: channels on sublanes,
        # full 128-lane length on lanes; "valid" shrinkage handled only by the
        # mask at the final pool.
        cout, ksize = c1w.shape
        seq_len = h.shape[1]
        valid_len = seq_len - 3 * (ksize - 1)        # 119 for L=128, k=4
        lane = jax.lax.broadcasted_iota(jnp.int32, (cout, seq_len), 1)
        cols = []
        for b in range(batch):
            row = h[b:b + 1, :]                       # (1, L): Cin=1 sequence
            # conv1: contraction depth 1 -> VPU outer-product accumulate.
            acc = jnp.zeros((cout, seq_len), jnp.float32)
            for k in range(ksize):
                acc = acc + c1w[:, k:k + 1] * _shift_lanes(row, k)
            y = jnp.maximum(acc + c1b[...], 0.0)      # (C, L)
            # conv2 / conv3: single 512-deep MXU contraction each.
            for cw, cb in ((c2w, c2b), (c3w, c3b)):
                xs = jnp.concatenate(
                    [_shift_lanes(y, k) for k in range(ksize)], axis=0)
                y = jnp.dot(cw[...], xs, preferred_element_type=jnp.float32)
                y = jnp.maximum(y + cb[...], 0.0)     # (C, L)
            # Fused AdaptiveMaxPool1d(1): mask lanes past the true output len.
            y = jnp.where(lane < valid_len, y, -jnp.inf)
            cols.append(jnp.max(y, axis=1, keepdims=True))       # (C, 1)
        return jnp.concatenate(cols, axis=1)          # (C, B), channels on sublanes

    hd = dense_part(x0_ref, d1w, d1b, d2w, d2b)                       # (B, 128)
    hp = dense_part(x1_ref, p1w, p1b, p2w, p2b)                       # (B, 128)
    td = conv_part(hd, dc1w, dc1b, dc2w, dc2b, dc3w, dc3b)            # (128, B)
    tp = conv_part(hp, pc1w, pc1b, pc2w, pc2b, pc3w, pc3b)            # (128, B)

    # Head MLP in transposed form: z = W @ x^T + b (features on sublanes).
    z = jnp.concatenate([td, tp], axis=0)                             # (256, B)
    z = jnp.maximum(
        jnp.dot(f1w[...], z, preferred_element_type=jnp.float32) + f1b[...], 0.0)
    z = jnp.maximum(
        jnp.dot(f2w[...], z, preferred_element_type=jnp.float32) + f2b[...], 0.0)
    pred = jnp.dot(f3w[...], z, preferred_element_type=jnp.float32) + f3b[...]
    o_ref[...] = pred.astype(o_ref.dtype)                             # (1, B)


# ------------------------------- JAX glue ----------------------------------- #

def global_mean_pool(x, batch, num_graphs):
    # TODO(synk): data-dependent segment scatter kept in plain JAX (glue).
    sums = jax.ops.segment_sum(x, batch, num_segments=num_graphs)
    counts = jax.ops.segment_sum(
        jnp.ones((x.shape[0], 1), x.dtype), batch, num_segments=num_graphs)
    return sums / counts


def _flatten_conv_w(w):
    # (K, Cout, Cin) -> (Cout, K*Cin); element [co, k*Cin + ci] = w[k, co, ci].
    # Matches the kernel's stacked [shift_0; shift_1; ...] conv input.
    # NOTE: PyTorch Conv1d stores (Cout, Cin, K); port with permute(2, 0, 1).
    k, cout, cin = w.shape
    return jnp.transpose(w, (1, 0, 2)).reshape(cout, k * cin)


def bert_cnn_forward(params, xd_x, xd_batch, xp_x, xp_batch, num_graphs):
    x0 = global_mean_pool(xd_x, xd_batch, num_graphs)                 # (B, F)
    x1 = global_mean_pool(xp_x, xp_batch, num_graphs)                 # (B, F)
    B, _ = x0.shape

    col = lambda v: v.reshape(-1, 1)
    row = lambda v: v.reshape(1, -1)

    args = (
        x0, x1, row(params["bn_gamma"]), row(params["bn_beta"]),
        params["d1_w"], row(params["d1_b"]),
        params["d2_w"], row(params["d2_b"]),
        _flatten_conv_w(params["dc1_w"]), col(params["dc1_b"]),
        _flatten_conv_w(params["dc2_w"]), col(params["dc2_b"]),
        _flatten_conv_w(params["dc3_w"]), col(params["dc3_b"]),
        params["p1_w"], row(params["p1_b"]),
        params["p2_w"], row(params["p2_b"]),
        _flatten_conv_w(params["pc1_w"]), col(params["pc1_b"]),
        _flatten_conv_w(params["pc2_w"]), col(params["pc2_b"]),
        _flatten_conv_w(params["pc3_w"]), col(params["pc3_b"]),
        params["f1_w"].T, col(params["f1_b"]),                        # head in
        params["f2_w"].T, col(params["f2_b"]),                        # transposed
        params["f3_w"].T, col(params["f3_b"]),                        # (out,in) form
    )
    out = pl.pallas_call(
        functools.partial(_bert_cnn_kernel, batch=B, eps=1e-5),
        out_shape=jax.ShapeDtypeStruct((1, B), jnp.float32),
    )(*args)
    return out.reshape(B, 1)


# ------------------------------ parameters ---------------------------------- #

def _dense_init(key, fan_in, fan_out):
    kw, kb = jax.random.split(key)
    w = jax.random.normal(kw, (fan_in, fan_out), jnp.float32) / float(fan_in) ** 0.5
    b = jax.random.normal(kb, (fan_out,), jnp.float32) * 0.01
    return w, b


def _conv_init(key, cin, cout, ksize):
    kw, kb = jax.random.split(key)
    w = jax.random.normal(kw, (ksize, cout, cin), jnp.float32) / float(cin * ksize) ** 0.5
    b = jax.random.normal(kb, (cout,), jnp.float32) * 0.01
    return w, b


def init_params(key, num_node_features, n_hidden=128):
    keys = jax.random.split(key, 16)
    p = {}
    p["bn_gamma"] = jnp.ones((num_node_features,), jnp.float32)   # BatchNorm weight
    p["bn_beta"] = jnp.zeros((num_node_features,), jnp.float32)   # BatchNorm bias
    # drug branch
    p["d1_w"], p["d1_b"] = _dense_init(keys[0], num_node_features, 2 * n_hidden)
    p["d2_w"], p["d2_b"] = _dense_init(keys[1], 2 * n_hidden, n_hidden)
    p["dc1_w"], p["dc1_b"] = _conv_init(keys[2], 1, 128, 4)
    p["dc2_w"], p["dc2_b"] = _conv_init(keys[3], 128, 128, 4)
    p["dc3_w"], p["dc3_b"] = _conv_init(keys[4], 128, 128, 4)
    # protein branch
    p["p1_w"], p["p1_b"] = _dense_init(keys[5], num_node_features, 2 * n_hidden)
    p["p2_w"], p["p2_b"] = _dense_init(keys[6], 2 * n_hidden, n_hidden)
    p["pc1_w"], p["pc1_b"] = _conv_init(keys[7], 1, 128, 4)
    p["pc2_w"], p["pc2_b"] = _conv_init(keys[8], 128, 128, 4)
    p["pc3_w"], p["pc3_b"] = _conv_init(keys[9], 128, 128, 4)
    # head
    p["f1_w"], p["f1_b"] = _dense_init(keys[10], 2 * n_hidden, 256)
    p["f2_w"], p["f2_b"] = _dense_init(keys[11], 256, 128)
    p["f3_w"], p["f3_b"] = _dense_init(keys[12], 128, 1)
    return p


if __name__ == "__main__":
    key = jax.random.PRNGKey(0)
    num_node_features = 16
    num_graphs = 2
    n_drug_nodes, n_prot_nodes = 10, 12

    k1, k2, kp = jax.random.split(key, 3)
    xd_x = jax.random.normal(k1, (n_drug_nodes, num_node_features), jnp.float32)
    xp_x = jax.random.normal(k2, (n_prot_nodes, num_node_features), jnp.float32)
    xd_batch = jnp.array([0] * 5 + [1] * 5, jnp.int32)
    xp_batch = jnp.array([0] * 6 + [1] * 6, jnp.int32)

    params = init_params(kp, num_node_features, n_hidden=128)

    fwd = jax.jit(bert_cnn_forward, static_argnums=5)
    pred = fwd(params, xd_x, xd_batch, xp_x, xp_batch, num_graphs)
    pred = jax.block_until_ready(pred)
    assert pred.shape == (num_graphs, 1) and pred.dtype == jnp.float32
    print("KERNEL_OK")
</pallas_src>

<mosaic_0001>
module attributes {stable_mosaic.version = 11 : i64} {
  func.func @_bert_cnn_kernel(%arg0: memref<2x16xf32, #tpu.memory_space<vmem>>, %arg1: memref<2x16xf32, #tpu.memory_space<vmem>>, %arg2: memref<1x16xf32, #tpu.memory_space<vmem>>, %arg3: memref<1x16xf32, #tpu.memory_space<vmem>>, %arg4: memref<16x256xf32, #tpu.memory_space<vmem>>, %arg5: memref<1x256xf32, #tpu.memory_space<vmem>>, %arg6: memref<256x128xf32, #tpu.memory_space<vmem>>, %arg7: memref<1x128xf32, #tpu.memory_space<vmem>>, %arg8: memref<128x4xf32, #tpu.memory_space<vmem>>, %arg9: memref<128x1xf32, #tpu.memory_space<vmem>>, %arg10: memref<128x512xf32, #tpu.memory_space<vmem>>, %arg11: memref<128x1xf32, #tpu.memory_space<vmem>>, %arg12: memref<128x512xf32, #tpu.memory_space<vmem>>, %arg13: memref<128x1xf32, #tpu.memory_space<vmem>>, %arg14: memref<16x256xf32, #tpu.memory_space<vmem>>, %arg15: memref<1x256xf32, #tpu.memory_space<vmem>>, %arg16: memref<256x128xf32, #tpu.memory_space<vmem>>, %arg17: memref<1x128xf32, #tpu.memory_space<vmem>>, %arg18: memref<128x4xf32, #tpu.memory_space<vmem>>, %arg19: memref<128x1xf32, #tpu.memory_space<vmem>>, %arg20: memref<128x512xf32, #tpu.memory_space<vmem>>, %arg21: memref<128x1xf32, #tpu.memory_space<vmem>>, %arg22: memref<128x512xf32, #tpu.memory_space<vmem>>, %arg23: memref<128x1xf32, #tpu.memory_space<vmem>>, %arg24: memref<256x256xf32, #tpu.memory_space<vmem>>, %arg25: memref<256x1xf32, #tpu.memory_space<vmem>>, %arg26: memref<128x256xf32, #tpu.memory_space<vmem>>, %arg27: memref<128x1xf32, #tpu.memory_space<vmem>>, %arg28: memref<1x128xf32, #tpu.memory_space<vmem>>, %arg29: memref<1x1xf32, #tpu.memory_space<vmem>>, %arg30: memref<1x2xf32, #tpu.memory_space<vmem>>) attributes {dimension_semantics = [], scalar_prefetch = 0 : i64, scratch_operands = 0 : i64, tpu.core_type = #tpu.core_type<tc>} {
    %c0 = arith.constant 0 : index
    %c0_0 = arith.constant 0 : index
    %0 = vector.load %arg0[%c0, %c0_0] : memref<2x16xf32, #tpu.memory_space<vmem>>, vector<2x16xf32>
    %cst = arith.constant dense<0.000000e+00> : vector<16xf32>
    %1 = vector.multi_reduction <add>, %0, %cst [0] : vector<2x16xf32> to vector<16xf32>
    %2 = vector.shape_cast %1 : vector<16xf32> to vector<1x16xf32>
    %cst_1 = arith.constant 2.000000e+00 : f32
    %3 = vector.broadcast %cst_1 : f32 to vector<1x16xf32>
    %4 = arith.divf %2, %3 : vector<1x16xf32>
    %5 = vector.broadcast %4 : vector<1x16xf32> to vector<2x16xf32>
    %6 = arith.subf %0, %5 : vector<2x16xf32>
    %7 = arith.mulf %6, %6 : vector<2x16xf32>
    %cst_2 = arith.constant dense<0.000000e+00> : vector<16xf32>
    %8 = vector.multi_reduction <add>, %7, %cst_2 [0] : vector<2x16xf32> to vector<16xf32>
    %9 = vector.shape_cast %8 : vector<16xf32> to vector<1x16xf32>
    %cst_3 = arith.constant 2.000000e+00 : f32
    %10 = vector.broadcast %cst_3 : f32 to vector<1x16xf32>
    %11 = arith.divf %9, %10 : vector<1x16xf32>
    %12 = vector.broadcast %4 : vector<1x16xf32> to vector<2x16xf32>
    %13 = arith.subf %0, %12 : vector<2x16xf32>
    %cst_4 = arith.constant 9.99999974E-6 : f32
    %14 = vector.broadcast %cst_4 : f32 to vector<1x16xf32>
    %15 = arith.addf %11, %14 : vector<1x16xf32>
    %16 = math.rsqrt %15 : vector<1x16xf32>
    %17 = vector.broadcast %16 : vector<1x16xf32> to vector<2x16xf32>
    %18 = arith.mulf %13, %17 : vector<2x16xf32>
    %c0_5 = arith.constant 0 : index
    %c0_6 = arith.constant 0 : index
    %19 = vector.load %arg2[%c0_5, %c0_6] : memref<1x16xf32, #tpu.memory_space<vmem>>, vector<1x16xf32>
    %20 = vector.broadcast %19 : vector<1x16xf32> to vector<2x16xf32>
    %21 = arith.mulf %18, %20 : vector<2x16xf32>
    %c0_7 = arith.constant 0 : index
    %c0_8 = arith.constant 0 : index
    %22 = vector.load %arg3[%c0_7, %c0_8] : memref<1x16xf32, #tpu.memory_space<vmem>>, vector<1x16xf32>
    %23 = vector.broadcast %22 : vector<1x16xf32> to vector<2x16xf32>
    %24 = arith.addf %21, %23 : vector<2x16xf32>
    %c0_9 = arith.constant 0 : index
    %c0_10 = arith.constant 0 : index
    %25 = vector.load %arg4[%c0_9, %c0_10] : memref<16x256xf32, #tpu.memory_space<vmem>>, vector<16x256xf32>
    %cst_11 = arith.constant dense<0.000000e+00> : vector<2x256xf32>
    %26 = tpu.matmul %24, %25, %cst_11 {dimension_numbers = #tpu.dot_dimension_numbers<[1], [0], [0], [1], [0, 0, 1, 1], [], []>} : vector<2x16xf32>, vector<16x256xf32>, vector<2x256xf32> -> vector<2x256xf32>
    %c0_12 = arith.constant 0 : index
    %c0_13 = arith.constant 0 : index
    %27 = vector.load %arg5[%c0_12, %c0_13] : memref<1x256xf32, #tpu.memory_space<vmem>>, vector<1x256xf32>
    %28 = vector.broadcast %27 : vector<1x256xf32> to vector<2x256xf32>
    %29 = arith.addf %26, %28 : vector<2x256xf32>
    %cst_14 = arith.constant 0.000000e+00 : f32
    %30 = vector.broadcast %cst_14 : f32 to vector<2x256xf32>
    %31 = arith.maximumf %29, %30 : vector<2x256xf32>
    %c0_15 = arith.constant 0 : index
    %c0_16 = arith.constant 0 : index
    %32 = vector.load %arg6[%c0_15, %c0_16] : memref<256x128xf32, #tpu.memory_space<vmem>>, vector<256x128xf32>
    %cst_17 = arith.constant dense<0.000000e+00> : vector<2x128xf32>
    %33 = tpu.matmul %31, %32, %cst_17 {dimension_numbers = #tpu.dot_dimension_numbers<[1], [0], [0], [1], [0, 0, 1, 1], [], []>} : vector<2x256xf32>, vector<256x128xf32>, vector<2x128xf32> -> vector<2x128xf32>
    %c0_18 = arith.constant 0 : index
    %c0_19 = arith.constant 0 : index
    %34 = vector.load %arg7[%c0_18, %c0_19] : memref<1x128xf32, #tpu.memory_space<vmem>>, vector<1x128xf32>
    %35 = vector.broadcast %34 : vector<1x128xf32> to vector<2x128xf32>
    %36 = arith.addf %33, %35 : vector<2x128xf32>
    %cst_20 = arith.constant 0.000000e+00 : f32
    %37 = vector.broadcast %cst_20 : f32 to vector<2x128xf32>
    %38 = arith.maximumf %36, %37 : vector<2x128xf32>
    %c0_21 = arith.constant 0 : index
    %c0_22 = arith.constant 0 : index
    %39 = vector.load %arg1[%c0_21, %c0_22] : memref<2x16xf32, #tpu.memory_space<vmem>>, vector<2x16xf32>
    %cst_23 = arith.constant dense<0.000000e+00> : vector<16xf32>
    %40 = vector.multi_reduction <add>, %39, %cst_23 [0] : vector<2x16xf32> to vector<16xf32>
    %41 = vector.shape_cast %40 : vector<16xf32> to vector<1x16xf32>
    %cst_24 = arith.constant 2.000000e+00 : f32
    %42 = vector.broadcast %cst_24 : f32 to vector<1x16xf32>
    %43 = arith.divf %41, %42 : vector<1x16xf32>
    %44 = vector.broadcast %43 : vector<1x16xf32> to vector<2x16xf32>
    %45 = arith.subf %39, %44 : vector<2x16xf32>
    %46 = arith.mulf %45, %45 : vector<2x16xf32>
    %cst_25 = arith.constant dense<0.000000e+00> : vector<16xf32>
    %47 = vector.multi_reduction <add>, %46, %cst_25 [0] : vector<2x16xf32> to vector<16xf32>
    %48 = vector.shape_cast %47 : vector<16xf32> to vector<1x16xf32>
    %cst_26 = arith.constant 2.000000e+00 : f32
    %49 = vector.broadcast %cst_26 : f32 to vector<1x16xf32>
    %50 = arith.divf %48, %49 : vector<1x16xf32>
    %51 = vector.broadcast %43 : vector<1x16xf32> to vector<2x16xf32>
    %52 = arith.subf %39, %51 : vector<2x16xf32>
    %cst_27 = arith.constant 9.99999974E-6 : f32
    %53 = vector.broadcast %cst_27 : f32 to vector<1x16xf32>
    %54 = arith.addf %50, %53 : vector<1x16xf32>
    %55 = math.rsqrt %54 : vector<1x16xf32>
    %56 = vector.broadcast %55 : vector<1x16xf32> to vector<2x16xf32>
    %57 = arith.mulf %52, %56 : vector<2x16xf32>
    %c0_28 = arith.constant 0 : index
    %c0_29 = arith.constant 0 : index
    %58 = vector.load %arg2[%c0_28, %c0_29] : memref<1x16xf32, #tpu.memory_space<vmem>>, vector<1x16xf32>
    %59 = vector.broadcast %58 : vector<1x16xf32> to vector<2x16xf32>
    %60 = arith.mulf %57, %59 : vector<2x16xf32>
    %c0_30 = arith.constant 0 : index
    %c0_31 = arith.constant 0 : index
    %61 = vector.load %arg3[%c0_30, %c0_31] : memref<1x16xf32, #tpu.memory_space<vmem>>, vector<1x16xf32>
    %62 = vector.broadcast %61 : vector<1x16xf32> to vector<2x16xf32>
    %63 = arith.addf %60, %62 : vector<2x16xf32>
    %c0_32 = arith.constant 0 : index
    %c0_33 = arith.constant 0 : index
    %64 = vector.load %arg14[%c0_32, %c0_33] : memref<16x256xf32, #tpu.memory_space<vmem>>, vector<16x256xf32>
    %cst_34 = arith.constant dense<0.000000e+00> : vector<2x256xf32>
    %65 = tpu.matmul %63, %64, %cst_34 {dimension_numbers = #tpu.dot_dimension_numbers<[1], [0], [0], [1], [0, 0, 1, 1], [], []>} : vector<2x16xf32>, vector<16x256xf32>, vector<2x256xf32> -> vector<2x256xf32>
    %c0_35 = arith.constant 0 : index
    %c0_36 = arith.constant 0 : index
    %66 = vector.load %arg15[%c0_35, %c0_36] : memref<1x256xf32, #tpu.memory_space<vmem>>, vector<1x256xf32>
    %67 = vector.broadcast %66 : vector<1x256xf32> to vector<2x256xf32>
    %68 = arith.addf %65, %67 : vector<2x256xf32>
    %cst_37 = arith.constant 0.000000e+00 : f32
    %69 = vector.broadcast %cst_37 : f32 to vector<2x256xf32>
    %70 = arith.maximumf %68, %69 : vector<2x256xf32>
    %c0_38 = arith.constant 0 : index
    %c0_39 = arith.constant 0 : index
    %71 = vector.load %arg16[%c0_38, %c0_39] : memref<256x128xf32, #tpu.memory_space<vmem>>, vector<256x128xf32>
    %cst_40 = arith.constant dense<0.000000e+00> : vector<2x128xf32>
    %72 = tpu.matmul %70, %71, %cst_40 {dimension_numbers = #tpu.dot_dimension_numbers<[1], [0], [0], [1], [0, 0, 1, 1], [], []>} : vector<2x256xf32>, vector<256x128xf32>, vector<2x128xf32> -> vector<2x128xf32>
    %c0_41 = arith.constant 0 : index
    %c0_42 = arith.constant 0 : index
    %73 = vector.load %arg17[%c0_41, %c0_42] : memref<1x128xf32, #tpu.memory_space<vmem>>, vector<1x128xf32>
    %74 = vector.broadcast %73 : vector<1x128xf32> to vector<2x128xf32>
    %75 = arith.addf %72, %74 : vector<2x128xf32>
    %cst_43 = arith.constant 0.000000e+00 : f32
    %76 = vector.broadcast %cst_43 : f32 to vector<2x128xf32>
    %77 = arith.maximumf %75, %76 : vector<2x128xf32>
    %78 = tpu.iota {dimensions = array<i32: 1>} : vector<128x128xi32>
    %79 = vector.extract_strided_slice %38 {offsets = [0, 0], sizes = [1, 128], strides = [1, 1]} : vector<2x128xf32> to vector<1x128xf32>
    %cst_44 = arith.constant 0.000000e+00 : f32
    %80 = vector.broadcast %cst_44 : f32 to vector<128x128xf32>
    %c0_45 = arith.constant 0 : index
    %c0_46 = arith.constant 0 : index
    %81 = vector.load %arg8[%c0_45, %c0_46] : memref<128x4xf32, #tpu.memory_space<vmem>>, vector<128x1xf32>
    %82 = vector.broadcast %81 : vector<128x1xf32> to vector<128x128xf32>
    %83 = vector.broadcast %79 : vector<1x128xf32> to vector<128x128xf32>
    %84 = arith.mulf %82, %83 : vector<128x128xf32>
    %85 = arith.addf %80, %84 : vector<128x128xf32>
    %c0_47 = arith.constant 0 : index
    %c1 = arith.constant 1 : index
    %86 = vector.load %arg8[%c0_47, %c1] : memref<128x4xf32, #tpu.memory_space<vmem>>, vector<128x1xf32>
    %c127_i32 = arith.constant 127 : i32
    %87 = tpu.dynamic_rotate %79 by %c127_i32 dim 1 : vector<1x128xf32>, i32 -> vector<1x128xf32>
    %88 = vector.broadcast %86 : vector<128x1xf32> to vector<128x128xf32>
    %89 = vector.broadcast %87 : vector<1x128xf32> to vector<128x128xf32>
    %90 = arith.mulf %88, %89 : vector<128x128xf32>
    %91 = arith.addf %85, %90 : vector<128x128xf32>
    %c0_48 = arith.constant 0 : index
    %c2 = arith.constant 2 : index
    %92 = vector.load %arg8[%c0_48, %c2] : memref<128x4xf32, #tpu.memory_space<vmem>>, vector<128x1xf32>
    %c126_i32 = arith.constant 126 : i32
    %93 = tpu.dynamic_rotate %79 by %c126_i32 dim 1 : vector<1x128xf32>, i32 -> vector<1x128xf32>
    %94 = vector.broadcast %92 : vector<128x1xf32> to vector<128x128xf32>
    %95 = vector.broadcast %93 : vector<1x128xf32> to vector<128x128xf32>
    %96 = arith.mulf %94, %95 : vector<128x128xf32>
    %97 = arith.addf %91, %96 : vector<128x128xf32>
    %c0_49 = arith.constant 0 : index
    %c3 = arith.constant 3 : index
    %98 = vector.load %arg8[%c0_49, %c3] : memref<128x4xf32, #tpu.memory_space<vmem>>, vector<128x1xf32>
    %c125_i32 = arith.constant 125 : i32
    %99 = tpu.dynamic_rotate %79 by %c125_i32 dim 1 : vector<1x128xf32>, i32 -> vector<1x128xf32>
    %100 = vector.broadcast %98 : vector<128x1xf32> to vector<128x128xf32>
    %101 = vector.broadcast %99 : vector<1x128xf32> to vector<128x128xf32>
    %102 = arith.mulf %100, %101 : vector<128x128xf32>
    %103 = arith.addf %97, %102 : vector<128x128xf32>
    %c0_50 = arith.constant 0 : index
    %c0_51 = arith.constant 0 : index
    %104 = vector.load %arg9[%c0_50, %c0_51] : memref<128x1xf32, #tpu.memory_space<vmem>>, vector<128x1xf32>
    %105 = vector.broadcast %104 : vector<128x1xf32> to vector<128x128xf32>
    %106 = arith.addf %103, %105 : vector<128x128xf32>
    %cst_52 = arith.constant 0.000000e+00 : f32
    %107 = vector.broadcast %cst_52 : f32 to vector<128x128xf32>
    %108 = arith.maximumf %106, %107 : vector<128x128xf32>
    %c127_i32_53 = arith.constant 127 : i32
    %109 = tpu.dynamic_rotate %108 by %c127_i32_53 dim 1 : vector<128x128xf32>, i32 -> vector<128x128xf32>
    %c126_i32_54 = arith.constant 126 : i32
    %110 = tpu.dynamic_rotate %108 by %c126_i32_54 dim 1 : vector<128x128xf32>, i32 -> vector<128x128xf32>
    %c125_i32_55 = arith.constant 125 : i32
    %111 = tpu.dynamic_rotate %108 by %c125_i32_55 dim 1 : vector<128x128xf32>, i32 -> vector<128x128xf32>
    %112 = tpu.concatenate %108, %109, %110, %111 in 0 : vector<128x128xf32>, vector<128x128xf32>, vector<128x128xf32>, vector<128x128xf32> -> vector<512x128xf32>
    %c0_56 = arith.constant 0 : index
    %c0_57 = arith.constant 0 : index
    %113 = vector.load %arg10[%c0_56, %c0_57] : memref<128x512xf32, #tpu.memory_space<vmem>>, vector<128x512xf32>
    %cst_58 = arith.constant dense<0.000000e+00> : vector<128x128xf32>
    %114 = tpu.matmul %113, %112, %cst_58 {dimension_numbers = #tpu.dot_dimension_numbers<[1], [0], [0], [1], [0, 0, 1, 1], [], []>} : vector<128x512xf32>, vector<512x128xf32>, vector<128x128xf32> -> vector<128x128xf32>
    %c0_59 = arith.constant 0 : index
    %c0_60 = arith.constant 0 : index
    %115 = vector.load %arg11[%c0_59, %c0_60] : memref<128x1xf32, #tpu.memory_space<vmem>>, vector<128x1xf32>
    %116 = vector.broadcast %115 : vector<128x1xf32> to vector<128x128xf32>
    %117 = arith.addf %114, %116 : vector<128x128xf32>
    %cst_61 = arith.constant 0.000000e+00 : f32
    %118 = vector.broadcast %cst_61 : f32 to vector<128x128xf32>
    %119 = arith.maximumf %117, %118 : vector<128x128xf32>
    %c127_i32_62 = arith.constant 127 : i32
    %120 = tpu.dynamic_rotate %119 by %c127_i32_62 dim 1 : vector<128x128xf32>, i32 -> vector<128x128xf32>
    %c126_i32_63 = arith.constant 126 : i32
    %121 = tpu.dynamic_rotate %119 by %c126_i32_63 dim 1 : vector<128x128xf32>, i32 -> vector<128x128xf32>
    %c125_i32_64 = arith.constant 125 : i32
    %122 = tpu.dynamic_rotate %119 by %c125_i32_64 dim 1 : vector<128x128xf32>, i32 -> vector<128x128xf32>
    %123 = tpu.concatenate %119, %120, %121, %122 in 0 : vector<128x128xf32>, vector<128x128xf32>, vector<128x128xf32>, vector<128x128xf32> -> vector<512x128xf32>
    %c0_65 = arith.constant 0 : index
    %c0_66 = arith.constant 0 : index
    %124 = vector.load %arg12[%c0_65, %c0_66] : memref<128x512xf32, #tpu.memory_space<vmem>>, vector<128x512xf32>
    %cst_67 = arith.constant dense<0.000000e+00> : vector<128x128xf32>
    %125 = tpu.matmul %124, %123, %cst_67 {dimension_numbers = #tpu.dot_dimension_numbers<[1], [0], [0], [1], [0, 0, 1, 1], [], []>} : vector<128x512xf32>, vector<512x128xf32>, vector<128x128xf32> -> vector<128x128xf32>
    %c0_68 = arith.constant 0 : index
    %c0_69 = arith.constant 0 : index
    %126 = vector.load %arg13[%c0_68, %c0_69] : memref<128x1xf32, #tpu.memory_space<vmem>>, vector<128x1xf32>
    %127 = vector.broadcast %126 : vector<128x1xf32> to vector<128x128xf32>
    %128 = arith.addf %125, %127 : vector<128x128xf32>
    %cst_70 = arith.constant 0.000000e+00 : f32
    %129 = vector.broadcast %cst_70 : f32 to vector<128x128xf32>
    %130 = arith.maximumf %128, %129 : vector<128x128xf32>
    %c119_i32 = arith.constant 119 : i32
    %131 = vector.broadcast %c119_i32 : i32 to vector<128x128xi32>
    %132 = arith.cmpi slt, %78, %131 : vector<128x128xi32>
    %cst_71 = arith.constant 0xFF800000 : f32
    %133 = vector.broadcast %cst_71 : f32 to vector<128x128xf32>
    %134 = arith.select %132, %130, %133 : vector<128x128xi1>, vector<128x128xf32>
    %cst_72 = arith.constant dense<0xFF800000> : vector<128xf32>
    %135 = vector.multi_reduction <maximumf>, %134, %cst_72 [1] : vector<128x128xf32> to vector<128xf32>
    %136 = vector.shape_cast %135 : vector<128xf32> to vector<128x1xf32>
    %137 = vector.extract_strided_slice %38 {offsets = [1, 0], sizes = [1, 128], strides = [1, 1]} : vector<2x128xf32> to vector<1x128xf32>
    %cst_73 = arith.constant 0.000000e+00 : f32
    %138 = vector.broadcast %cst_73 : f32 to vector<128x128xf32>
    %c0_74 = arith.constant 0 : index
    %c0_75 = arith.constant 0 : index
    %139 = vector.load %arg8[%c0_74, %c0_75] : memref<128x4xf32, #tpu.memory_space<vmem>>, vector<128x1xf32>
    %140 = vector.broadcast %139 : vector<128x1xf32> to vector<128x128xf32>
    %141 = vector.broadcast %137 : vector<1x128xf32> to vector<128x128xf32>
    %142 = arith.mulf %140, %141 : vector<128x128xf32>
    %143 = arith.addf %138, %142 : vector<128x128xf32>
    %c0_76 = arith.constant 0 : index
    %c1_77 = arith.constant 1 : index
    %144 = vector.load %arg8[%c0_76, %c1_77] : memref<128x4xf32, #tpu.memory_space<vmem>>, vector<128x1xf32>
    %c127_i32_78 = arith.constant 127 : i32
    %145 = tpu.dynamic_rotate %137 by %c127_i32_78 dim 1 : vector<1x128xf32>, i32 -> vector<1x128xf32>
    %146 = vector.broadcast %144 : vector<128x1xf32> to vector<128x128xf32>
    %147 = vector.broadcast %145 : vector<1x128xf32> to vector<128x128xf32>
    %148 = arith.mulf %146, %147 : vector<128x128xf32>
    %149 = arith.addf %143, %148 : vector<128x128xf32>
    %c0_79 = arith.constant 0 : index
    %c2_80 = arith.constant 2 : index
    %150 = vector.load %arg8[%c0_79, %c2_80] : memref<128x4xf32, #tpu.memory_space<vmem>>, vector<128x1xf32>
    %c126_i32_81 = arith.constant 126 : i32
    %151 = tpu.dynamic_rotate %137 by %c126_i32_81 dim 1 : vector<1x128xf32>, i32 -> vector<1x128xf32>
    %152 = vector.broadcast %150 : vector<128x1xf32> to vector<128x128xf32>
    %153 = vector.broadcast %151 : vector<1x128xf32> to vector<128x128xf32>
    %154 = arith.mulf %152, %153 : vector<128x128xf32>
    %155 = arith.addf %149, %154 : vector<128x128xf32>
    %c0_82 = arith.constant 0 : index
    %c3_83 = arith.constant 3 : index
    %156 = vector.load %arg8[%c0_82, %c3_83] : memref<128x4xf32, #tpu.memory_space<vmem>>, vector<128x1xf32>
    %c125_i32_84 = arith.constant 125 : i32
    %157 = tpu.dynamic_rotate %137 by %c125_i32_84 dim 1 : vector<1x128xf32>, i32 -> vector<1x128xf32>
    %158 = vector.broadcast %156 : vector<128x1xf32> to vector<128x128xf32>
    %159 = vector.broadcast %157 : vector<1x128xf32> to vector<128x128xf32>
    %160 = arith.mulf %158, %159 : vector<128x128xf32>
    %161 = arith.addf %155, %160 : vector<128x128xf32>
    %c0_85 = arith.constant 0 : index
    %c0_86 = arith.constant 0 : index
    %162 = vector.load %arg9[%c0_85, %c0_86] : memref<128x1xf32, #tpu.memory_space<vmem>>, vector<128x1xf32>
    %163 = vector.broadcast %162 : vector<128x1xf32> to vector<128x128xf32>
    %164 = arith.addf %161, %163 : vector<128x128xf32>
    %cst_87 = arith.constant 0.000000e+00 : f32
    %165 = vector.broadcast %cst_87 : f32 to vector<128x128xf32>
    %166 = arith.maximumf %164, %165 : vector<128x128xf32>
    %c127_i32_88 = arith.constant 127 : i32
    %167 = tpu.dynamic_rotate %166 by %c127_i32_88 dim 1 : vector<128x128xf32>, i32 -> vector<128x128xf32>
    %c126_i32_89 = arith.constant 126 : i32
    %168 = tpu.dynamic_rotate %166 by %c126_i32_89 dim 1 : vector<128x128xf32>, i32 -> vector<128x128xf32>
    %c125_i32_90 = arith.constant 125 : i32
    %169 = tpu.dynamic_rotate %166 by %c125_i32_90 dim 1 : vector<128x128xf32>, i32 -> vector<128x128xf32>
    %170 = tpu.concatenate %166, %167, %168, %169 in 0 : vector<128x128xf32>, vector<128x128xf32>, vector<128x128xf32>, vector<128x128xf32> -> vector<512x128xf32>
    %c0_91 = arith.constant 0 : index
    %c0_92 = arith.constant 0 : index
    %171 = vector.load %arg10[%c0_91, %c0_92] : memref<128x512xf32, #tpu.memory_space<vmem>>, vector<128x512xf32>
    %cst_93 = arith.constant dense<0.000000e+00> : vector<128x128xf32>
    %172 = tpu.matmul %171, %170, %cst_93 {dimension_numbers = #tpu.dot_dimension_numbers<[1], [0], [0], [1], [0, 0, 1, 1], [], []>} : vector<128x512xf32>, vector<512x128xf32>, vector<128x128xf32> -> vector<128x128xf32>
    %c0_94 = arith.constant 0 : index
    %c0_95 = arith.constant 0 : index
    %173 = vector.load %arg11[%c0_94, %c0_95] : memref<128x1xf32, #tpu.memory_space<vmem>>, vector<128x1xf32>
    %174 = vector.broadcast %173 : vector<128x1xf32> to vector<128x128xf32>
    %175 = arith.addf %172, %174 : vector<128x128xf32>
    %cst_96 = arith.constant 0.000000e+00 : f32
    %176 = vector.broadcast %cst_96 : f32 to vector<128x128xf32>
    %177 = arith.maximumf %175, %176 : vector<128x128xf32>
    %c127_i32_97 = arith.constant 127 : i32
    %178 = tpu.dynamic_rotate %177 by %c127_i32_97 dim 1 : vector<128x128xf32>, i32 -> vector<128x128xf32>
    %c126_i32_98 = arith.constant 126 : i32
    %179 = tpu.dynamic_rotate %177 by %c126_i32_98 dim 1 : vector<128x128xf32>, i32 -> vector<128x128xf32>
    %c125_i32_99 = arith.constant 125 : i32
    %180 = tpu.dynamic_rotate %177 by %c125_i32_99 dim 1 : vector<128x128xf32>, i32 -> vector<128x128xf32>
    %181 = tpu.concatenate %177, %178, %179, %180 in 0 : vector<128x128xf32>, vector<128x128xf32>, vector<128x128xf32>, vector<128x128xf32> -> vector<512x128xf32>
    %c0_100 = arith.constant 0 : index
    %c0_101 = arith.constant 0 : index
    %182 = vector.load %arg12[%c0_100, %c0_101] : memref<128x512xf32, #tpu.memory_space<vmem>>, vector<128x512xf32>
    %cst_102 = arith.constant dense<0.000000e+00> : vector<128x128xf32>
    %183 = tpu.matmul %182, %181, %cst_102 {dimension_numbers = #tpu.dot_dimension_numbers<[1], [0], [0], [1], [0, 0, 1, 1], [], []>} : vector<128x512xf32>, vector<512x128xf32>, vector<128x128xf32> -> vector<128x128xf32>
    %c0_103 = arith.constant 0 : index
    %c0_104 = arith.constant 0 : index
    %184 = vector.load %arg13[%c0_103, %c0_104] : memref<128x1xf32, #tpu.memory_space<vmem>>, vector<128x1xf32>
    %185 = vector.broadcast %184 : vector<128x1xf32> to vector<128x128xf32>
    %186 = arith.addf %183, %185 : vector<128x128xf32>
    %cst_105 = arith.constant 0.000000e+00 : f32
    %187 = vector.broadcast %cst_105 : f32 to vector<128x128xf32>
    %188 = arith.maximumf %186, %187 : vector<128x128xf32>
    %c119_i32_106 = arith.constant 119 : i32
    %189 = vector.broadcast %c119_i32_106 : i32 to vector<128x128xi32>
    %190 = arith.cmpi slt, %78, %189 : vector<128x128xi32>
    %cst_107 = arith.constant 0xFF800000 : f32
    %191 = vector.broadcast %cst_107 : f32 to vector<128x128xf32>
    %192 = arith.select %190, %188, %191 : vector<128x128xi1>, vector<128x128xf32>
    %cst_108 = arith.constant dense<0xFF800000> : vector<128xf32>
    %193 = vector.multi_reduction <maximumf>, %192, %cst_108 [1] : vector<128x128xf32> to vector<128xf32>
    %194 = vector.shape_cast %193 : vector<128xf32> to vector<128x1xf32>
    %195 = tpu.concatenate %136, %194 in 1 : vector<128x1xf32>, vector<128x1xf32> -> vector<128x2xf32>
    %196 = tpu.iota {dimensions = array<i32: 1>} : vector<128x128xi32>
    %197 = vector.extract_strided_slice %77 {offsets = [0, 0], sizes = [1, 128], strides = [1, 1]} : vector<2x128xf32> to vector<1x128xf32>
    %cst_109 = arith.constant 0.000000e+00 : f32
    %198 = vector.broadcast %cst_109 : f32 to vector<128x128xf32>
    %c0_110 = arith.constant 0 : index
    %c0_111 = arith.constant 0 : index
    %199 = vector.load %arg18[%c0_110, %c0_111] : memref<128x4xf32, #tpu.memory_space<vmem>>, vector<128x1xf32>
    %200 = vector.broadcast %199 : vector<128x1xf32> to vector<128x128xf32>
    %201 = vector.broadcast %197 : vector<1x128xf32> to vector<128x128xf32>
    %202 = arith.mulf %200, %201 : vector<128x128xf32>
    %203 = arith.addf %198, %202 : vector<128x128xf32>
    %c0_112 = arith.constant 0 : index
    %c1_113 = arith.constant 1 : index
    %204 = vector.load %arg18[%c0_112, %c1_113] : memref<128x4xf32, #tpu.memory_space<vmem>>, vector<128x1xf32>
    %c127_i32_114 = arith.constant 127 : i32
    %205 = tpu.dynamic_rotate %197 by %c127_i32_114 dim 1 : vector<1x128xf32>, i32 -> vector<1x128xf32>
    %206 = vector.broadcast %204 : vector<128x1xf32> to vector<128x128xf32>
    %207 = vector.broadcast %205 : vector<1x128xf32> to vector<128x128xf32>
    %208 = arith.mulf %206, %207 : vector<128x128xf32>
    %209 = arith.addf %203, %208 : vector<128x128xf32>
    %c0_115 = arith.constant 0 : index
    %c2_116 = arith.constant 2 : index
    %210 = vector.load %arg18[%c0_115, %c2_116] : memref<128x4xf32, #tpu.memory_space<vmem>>, vector<128x1xf32>
    %c126_i32_117 = arith.constant 126 : i32
    %211 = tpu.dynamic_rotate %197 by %c126_i32_117 dim 1 : vector<1x128xf32>, i32 -> vector<1x128xf32>
    %212 = vector.broadcast %210 : vector<128x1xf32> to vector<128x128xf32>
    %213 = vector.broadcast %211 : vector<1x128xf32> to vector<128x128xf32>
    %214 = arith.mulf %212, %213 : vector<128x128xf32>
    %215 = arith.addf %209, %214 : vector<128x128xf32>
    %c0_118 = arith.constant 0 : index
    %c3_119 = arith.constant 3 : index
    %216 = vector.load %arg18[%c0_118, %c3_119] : memref<128x4xf32, #tpu.memory_space<vmem>>, vector<128x1xf32>
    %c125_i32_120 = arith.constant 125 : i32
    %217 = tpu.dynamic_rotate %197 by %c125_i32_120 dim 1 : vector<1x128xf32>, i32 -> vector<1x128xf32>
    %218 = vector.broadcast %216 : vector<128x1xf32> to vector<128x128xf32>
    %219 = vector.broadcast %217 : vector<1x128xf32> to vector<128x128xf32>
    %220 = arith.mulf %218, %219 : vector<128x128xf32>
    %221 = arith.addf %215, %220 : vector<128x128xf32>
    %c0_121 = arith.constant 0 : index
    %c0_122 = arith.constant 0 : index
    %222 = vector.load %arg19[%c0_121, %c0_122] : memref<128x1xf32, #tpu.memory_space<vmem>>, vector<128x1xf32>
    %223 = vector.broadcast %222 : vector<128x1xf32> to vector<128x128xf32>
    %224 = arith.addf %221, %223 : vector<128x128xf32>
    %cst_123 = arith.constant 0.000000e+00 : f32
    %225 = vector.broadcast %cst_123 : f32 to vector<128x128xf32>
    %226 = arith.maximumf %224, %225 : vector<128x128xf32>
    %c127_i32_124 = arith.constant 127 : i32
    %227 = tpu.dynamic_rotate %226 by %c127_i32_124 dim 1 : vector<128x128xf32>, i32 -> vector<128x128xf32>
    %c126_i32_125 = arith.constant 126 : i32
    %228 = tpu.dynamic_rotate %226 by %c126_i32_125 dim 1 : vector<128x128xf32>, i32 -> vector<128x128xf32>
    %c125_i32_126 = arith.constant 125 : i32
    %229 = tpu.dynamic_rotate %226 by %c125_i32_126 dim 1 : vector<128x128xf32>, i32 -> vector<128x128xf32>
    %230 = tpu.concatenate %226, %227, %228, %229 in 0 : vector<128x128xf32>, vector<128x128xf32>, vector<128x128xf32>, vector<128x128xf32> -> vector<512x128xf32>
    %c0_127 = arith.constant 0 : index
    %c0_128 = arith.constant 0 : index
    %231 = vector.load %arg20[%c0_127, %c0_128] : memref<128x512xf32, #tpu.memory_space<vmem>>, vector<128x512xf32>
    %cst_129 = arith.constant dense<0.000000e+00> : vector<128x128xf32>
    %232 = tpu.matmul %231, %230, %cst_129 {dimension_numbers = #tpu.dot_dimension_numbers<[1], [0], [0], [1], [0, 0, 1, 1], [], []>} : vector<128x512xf32>, vector<512x128xf32>, vector<128x128xf32> -> vector<128x128xf32>
    %c0_130 = arith.constant 0 : index
    %c0_131 = arith.constant 0 : index
    %233 = vector.load %arg21[%c0_130, %c0_131] : memref<128x1xf32, #tpu.memory_space<vmem>>, vector<128x1xf32>
    %234 = vector.broadcast %233 : vector<128x1xf32> to vector<128x128xf32>
    %235 = arith.addf %232, %234 : vector<128x128xf32>
    %cst_132 = arith.constant 0.000000e+00 : f32
    %236 = vector.broadcast %cst_132 : f32 to vector<128x128xf32>
    %237 = arith.maximumf %235, %236 : vector<128x128xf32>
    %c127_i32_133 = arith.constant 127 : i32
    %238 = tpu.dynamic_rotate %237 by %c127_i32_133 dim 1 : vector<128x128xf32>, i32 -> vector<128x128xf32>
    %c126_i32_134 = arith.constant 126 : i32
    %239 = tpu.dynamic_rotate %237 by %c126_i32_134 dim 1 : vector<128x128xf32>, i32 -> vector<128x128xf32>
    %c125_i32_135 = arith.constant 125 : i32
    %240 = tpu.dynamic_rotate %237 by %c125_i32_135 dim 1 : vector<128x128xf32>, i32 -> vector<128x128xf32>
    %241 = tpu.concatenate %237, %238, %239, %240 in 0 : vector<128x128xf32>, vector<128x128xf32>, vector<128x128xf32>, vector<128x128xf32> -> vector<512x128xf32>
    %c0_136 = arith.constant 0 : index
    %c0_137 = arith.constant 0 : index
    %242 = vector.load %arg22[%c0_136, %c0_137] : memref<128x512xf32, #tpu.memory_space<vmem>>, vector<128x512xf32>
    %cst_138 = arith.constant dense<0.000000e+00> : vector<128x128xf32>
    %243 = tpu.matmul %242, %241, %cst_138 {dimension_numbers = #tpu.dot_dimension_numbers<[1], [0], [0], [1], [0, 0, 1, 1], [], []>} : vector<128x512xf32>, vector<512x128xf32>, vector<128x128xf32> -> vector<128x128xf32>
    %c0_139 = arith.constant 0 : index
    %c0_140 = arith.constant 0 : index
    %244 = vector.load %arg23[%c0_139, %c0_140] : memref<128x1xf32, #tpu.memory_space<vmem>>, vector<128x1xf32>
    %245 = vector.broadcast %244 : vector<128x1xf32> to vector<128x128xf32>
    %246 = arith.addf %243, %245 : vector<128x128xf32>
    %cst_141 = arith.constant 0.000000e+00 : f32
    %247 = vector.broadcast %cst_141 : f32 to vector<128x128xf32>
    %248 = arith.maximumf %246, %247 : vector<128x128xf32>
    %c119_i32_142 = arith.constant 119 : i32
    %249 = vector.broadcast %c119_i32_142 : i32 to vector<128x128xi32>
    %250 = arith.cmpi slt, %196, %249 : vector<128x128xi32>
    %cst_143 = arith.constant 0xFF800000 : f32
    %251 = vector.broadcast %cst_143 : f32 to vector<128x128xf32>
    %252 = arith.select %250, %248, %251 : vector<128x128xi1>, vector<128x128xf32>
    %cst_144 = arith.constant dense<0xFF800000> : vector<128xf32>
    %253 = vector.multi_reduction <maximumf>, %252, %cst_144 [1] : vector<128x128xf32> to vector<128xf32>
    %254 = vector.shape_cast %253 : vector<128xf32> to vector<128x1xf32>
    %255 = vector.extract_strided_slice %77 {offsets = [1, 0], sizes = [1, 128], strides = [1, 1]} : vector<2x128xf32> to vector<1x128xf32>
    %cst_145 = arith.constant 0.000000e+00 : f32
    %256 = vector.broadcast %cst_145 : f32 to vector<128x128xf32>
    %c0_146 = arith.constant 0 : index
    %c0_147 = arith.constant 0 : index
    %257 = vector.load %arg18[%c0_146, %c0_147] : memref<128x4xf32, #tpu.memory_space<vmem>>, vector<128x1xf32>
    %258 = vector.broadcast %257 : vector<128x1xf32> to vector<128x128xf32>
    %259 = vector.broadcast %255 : vector<1x128xf32> to vector<128x128xf32>
    %260 = arith.mulf %258, %259 : vector<128x128xf32>
    %261 = arith.addf %256, %260 : vector<128x128xf32>
    %c0_148 = arith.constant 0 : index
    %c1_149 = arith.constant 1 : index
    %262 = vector.load %arg18[%c0_148, %c1_149] : memref<128x4xf32, #tpu.memory_space<vmem>>, vector<128x1xf32>
    %c127_i32_150 = arith.constant 127 : i32
    %263 = tpu.dynamic_rotate %255 by %c127_i32_150 dim 1 : vector<1x128xf32>, i32 -> vector<1x128xf32>
    %264 = vector.broadcast %262 : vector<128x1xf32> to vector<128x128xf32>
    %265 = vector.broadcast %263 : vector<1x128xf32> to vector<128x128xf32>
    %266 = arith.mulf %264, %265 : vector<128x128xf32>
    %267 = arith.addf %261, %266 : vector<128x128xf32>
    %c0_151 = arith.constant 0 : index
    %c2_152 = arith.constant 2 : index
    %268 = vector.load %arg18[%c0_151, %c2_152] : memref<128x4xf32, #tpu.memory_space<vmem>>, vector<128x1xf32>
    %c126_i32_153 = arith.constant 126 : i32
    %269 = tpu.dynamic_rotate %255 by %c126_i32_153 dim 1 : vector<1x128xf32>, i32 -> vector<1x128xf32>
    %270 = vector.broadcast %268 : vector<128x1xf32> to vector<128x128xf32>
    %271 = vector.broadcast %269 : vector<1x128xf32> to vector<128x128xf32>
    %272 = arith.mulf %270, %271 : vector<128x128xf32>
    %273 = arith.addf %267, %272 : vector<128x128xf32>
    %c0_154 = arith.constant 0 : index
    %c3_155 = arith.constant 3 : index
    %274 = vector.load %arg18[%c0_154, %c3_155] : memref<128x4xf32, #tpu.memory_space<vmem>>, vector<128x1xf32>
    %c125_i32_156 = arith.constant 125 : i32
    %275 = tpu.dynamic_rotate %255 by %c125_i32_156 dim 1 : vector<1x128xf32>, i32 -> vector<1x128xf32>
    %276 = vector.broadcast %274 : vector<128x1xf32> to vector<128x128xf32>
    %277 = vector.broadcast %275 : vector<1x128xf32> to vector<128x128xf32>
    %278 = arith.mulf %276, %277 : vector<128x128xf32>
    %279 = arith.addf %273, %278 : vector<128x128xf32>
    %c0_157 = arith.constant 0 : index
    %c0_158 = arith.constant 0 : index
    %280 = vector.load %arg19[%c0_157, %c0_158] : memref<128x1xf32, #tpu.memory_space<vmem>>, vector<128x1xf32>
    %281 = vector.broadcast %280 : vector<128x1xf32> to vector<128x128xf32>
    %282 = arith.addf %279, %281 : vector<128x128xf32>
    %cst_159 = arith.constant 0.000000e+00 : f32
    %283 = vector.broadcast %cst_159 : f32 to vector<128x128xf32>
    %284 = arith.maximumf %282, %283 : vector<128x128xf32>
    %c127_i32_160 = arith.constant 127 : i32
    %285 = tpu.dynamic_rotate %284 by %c127_i32_160 dim 1 : vector<128x128xf32>, i32 -> vector<128x128xf32>
    %c126_i32_161 = arith.constant 126 : i32
    %286 = tpu.dynamic_rotate %284 by %c126_i32_161 dim 1 : vector<128x128xf32>, i32 -> vector<128x128xf32>
    %c125_i32_162 = arith.constant 125 : i32
    %287 = tpu.dynamic_rotate %284 by %c125_i32_162 dim 1 : vector<128x128xf32>, i32 -> vector<128x128xf32>
    %288 = tpu.concatenate %284, %285, %286, %287 in 0 : vector<128x128xf32>, vector<128x128xf32>, vector<128x128xf32>, vector<128x128xf32> -> vector<512x128xf32>
    %c0_163 = arith.constant 0 : index
    %c0_164 = arith.constant 0 : index
    %289 = vector.load %arg20[%c0_163, %c0_164] : memref<128x512xf32, #tpu.memory_space<vmem>>, vector<128x512xf32>
    %cst_165 = arith.constant dense<0.000000e+00> : vector<128x128xf32>
    %290 = tpu.matmul %289, %288, %cst_165 {dimension_numbers = #tpu.dot_dimension_numbers<[1], [0], [0], [1], [0, 0, 1, 1], [], []>} : vector<128x512xf32>, vector<512x128xf32>, vector<128x128xf32> -> vector<128x128xf32>
    %c0_166 = arith.constant 0 : index
    %c0_167 = arith.constant 0 : index
    %291 = vector.load %arg21[%c0_166, %c0_167] : memref<128x1xf32, #tpu.memory_space<vmem>>, vector<128x1xf32>
    %292 = vector.broadcast %291 : vector<128x1xf32> to vector<128x128xf32>
    %293 = arith.addf %290, %292 : vector<128x128xf32>
    %cst_168 = arith.constant 0.000000e+00 : f32
    %294 = vector.broadcast %cst_168 : f32 to vector<128x128xf32>
    %295 = arith.maximumf %293, %294 : vector<128x128xf32>
    %c127_i32_169 = arith.constant 127 : i32
    %296 = tpu.dynamic_rotate %295 by %c127_i32_169 dim 1 : vector<128x128xf32>, i32 -> vector<128x128xf32>
    %c126_i32_170 = arith.constant 126 : i32
    %297 = tpu.dynamic_rotate %295 by %c126_i32_170 dim 1 : vector<128x128xf32>, i32 -> vector<128x128xf32>
    %c125_i32_171 = arith.constant 125 : i32
    %298 = tpu.dynamic_rotate %295 by %c125_i32_171 dim 1 : vector<128x128xf32>, i32 -> vector<128x128xf32>
    %299 = tpu.concatenate %295, %296, %297, %298 in 0 : vector<128x128xf32>, vector<128x128xf32>, vector<128x128xf32>, vector<128x128xf32> -> vector<512x128xf32>
    %c0_172 = arith.constant 0 : index
    %c0_173 = arith.constant 0 : index
    %300 = vector.load %arg22[%c0_172, %c0_173] : memref<128x512xf32, #tpu.memory_space<vmem>>, vector<128x512xf32>
    %cst_174 = arith.constant dense<0.000000e+00> : vector<128x128xf32>
    %301 = tpu.matmul %300, %299, %cst_174 {dimension_numbers = #tpu.dot_dimension_numbers<[1], [0], [0], [1], [0, 0, 1, 1], [], []>} : vector<128x512xf32>, vector<512x128xf32>, vector<128x128xf32> -> vector<128x128xf32>
    %c0_175 = arith.constant 0 : index
    %c0_176 = arith.constant 0 : index
    %302 = vector.load %arg23[%c0_175, %c0_176] : memref<128x1xf32, #tpu.memory_space<vmem>>, vector<128x1xf32>
    %303 = vector.broadcast %302 : vector<128x1xf32> to vector<128x128xf32>
    %304 = arith.addf %301, %303 : vector<128x128xf32>
    %cst_177 = arith.constant 0.000000e+00 : f32
    %305 = vector.broadcast %cst_177 : f32 to vector<128x128xf32>
    %306 = arith.maximumf %304, %305 : vector<128x128xf32>
    %c119_i32_178 = arith.constant 119 : i32
    %307 = vector.broadcast %c119_i32_178 : i32 to vector<128x128xi32>
    %308 = arith.cmpi slt, %196, %307 : vector<128x128xi32>
    %cst_179 = arith.constant 0xFF800000 : f32
    %309 = vector.broadcast %cst_179 : f32 to vector<128x128xf32>
    %310 = arith.select %308, %306, %309 : vector<128x128xi1>, vector<128x128xf32>
    %cst_180 = arith.constant dense<0xFF800000> : vector<128xf32>
    %311 = vector.multi_reduction <maximumf>, %310, %cst_180 [1] : vector<128x128xf32> to vector<128xf32>
    %312 = vector.shape_cast %311 : vector<128xf32> to vector<128x1xf32>
    %313 = tpu.concatenate %254, %312 in 1 : vector<128x1xf32>, vector<128x1xf32> -> vector<128x2xf32>
    %314 = tpu.concatenate %195, %313 in 0 : vector<128x2xf32>, vector<128x2xf32> -> vector<256x2xf32>
    %c0_181 = arith.constant 0 : index
    %c0_182 = arith.constant 0 : index
    %315 = vector.load %arg24[%c0_181, %c0_182] : memref<256x256xf32, #tpu.memory_space<vmem>>, vector<256x256xf32>
    %cst_183 = arith.constant dense<0.000000e+00> : vector<256x2xf32>
    %316 = tpu.matmul %315, %314, %cst_183 {dimension_numbers = #tpu.dot_dimension_numbers<[1], [0], [0], [1], [0, 0, 1, 1], [], []>} : vector<256x256xf32>, vector<256x2xf32>, vector<256x2xf32> -> vector<256x2xf32>
    %c0_184 = arith.constant 0 : index
    %c0_185 = arith.constant 0 : index
    %317 = vector.load %arg25[%c0_184, %c0_185] : memref<256x1xf32, #tpu.memory_space<vmem>>, vector<256x1xf32>
    %318 = vector.broadcast %317 : vector<256x1xf32> to vector<256x2xf32>
    %319 = arith.addf %316, %318 : vector<256x2xf32>
    %cst_186 = arith.constant 0.000000e+00 : f32
    %320 = vector.broadcast %cst_186 : f32 to vector<256x2xf32>
    %321 = arith.maximumf %319, %320 : vector<256x2xf32>
    %c0_187 = arith.constant 0 : index
    %c0_188 = arith.constant 0 : index
    %322 = vector.load %arg26[%c0_187, %c0_188] : memref<128x256xf32, #tpu.memory_space<vmem>>, vector<128x256xf32>
    %cst_189 = arith.constant dense<0.000000e+00> : vector<128x2xf32>
    %323 = tpu.matmul %322, %321, %cst_189 {dimension_numbers = #tpu.dot_dimension_numbers<[1], [0], [0], [1], [0, 0, 1, 1], [], []>} : vector<128x256xf32>, vector<256x2xf32>, vector<128x2xf32> -> vector<128x2xf32>
    %c0_190 = arith.constant 0 : index
    %c0_191 = arith.constant 0 : index
    %324 = vector.load %arg27[%c0_190, %c0_191] : memref<128x1xf32, #tpu.memory_space<vmem>>, vector<128x1xf32>
    %325 = vector.broadcast %324 : vector<128x1xf32> to vector<128x2xf32>
    %326 = arith.addf %323, %325 : vector<128x2xf32>
    %cst_192 = arith.constant 0.000000e+00 : f32
    %327 = vector.broadcast %cst_192 : f32 to vector<128x2xf32>
    %328 = arith.maximumf %326, %327 : vector<128x2xf32>
    %c0_193 = arith.constant 0 : index
    %c0_194 = arith.constant 0 : index
    %329 = vector.load %arg28[%c0_193, %c0_194] : memref<1x128xf32, #tpu.memory_space<vmem>>, vector<1x128xf32>
    %cst_195 = arith.constant dense<0.000000e+00> : vector<1x2xf32>
    %330 = tpu.matmul %329, %328, %cst_195 {dimension_numbers = #tpu.dot_dimension_numbers<[1], [0], [0], [1], [0, 0, 1, 1], [], []>} : vector<1x128xf32>, vector<128x2xf32>, vector<1x2xf32> -> vector<1x2xf32>
    %c0_196 = arith.constant 0 : index
    %c0_197 = arith.constant 0 : index
    %331 = vector.load %arg29[%c0_196, %c0_197] : memref<1x1xf32, #tpu.memory_space<vmem>>, vector<1x1xf32>
    %332 = vector.broadcast %331 : vector<1x1xf32> to vector<1x2xf32>
    %333 = arith.addf %330, %332 : vector<1x2xf32>
    %c0_198 = arith.constant 0 : index
    %c0_199 = arith.constant 0 : index
    %334 = vector.load %arg30[%c0_198, %c0_199] : memref<1x2xf32, #tpu.memory_space<vmem>>, vector<1x2xf32>
    tpu.vector_store %arg30[%c0_198, %c0_199], %333 {strides = array<i32>} : memref<1x2xf32, #tpu.memory_space<vmem>>, vector<1x2xf32>,
    return
  }
}

</mosaic_0001>

<llo_original>
// kernel: bert_cnn_forward.1
$region0: #{bert_cnn_forward.1}
  #allocation0 [shape = 'u32[]', space=smem, size = 0x4, offset = 0x4, fixed_abs, tag = 'smem constant byte address 0x4 - core index']
  #allocation1 [shape = 'u32[144,128]{1,0:T(1,128)}', space=vmem, size = 0x12000, scoped, tag = 'internal scratch']
  #allocation2 [shape = 'f32[1,1]{1,0:T(1,128)S(1)}', space=vmem, size = 0x200, scoped, tag = 'scoped memory for bert_cnn_forward.1']
  %s0 = inlined_call_operand.smem [shape: u32[31], index: -1, kind: input, shape index: {}]
  %s1 = sld [smem:[%s0]]
  %s2 = scalar_lea.smem %s0, 1
  %s3 = sld [smem:[%s2]]
  %s4 = scalar_lea.smem %s0, 2
  %s5 = sld [smem:[%s4]]
  %s6 = scalar_lea.smem %s0, 3
  %s7 = sld [smem:[%s6]]
  %s8 = scalar_lea.smem %s0, 4
  %s9 = sld [smem:[%s8]]
  %s10 = scalar_lea.smem %s0, 5
  %s11 = sld [smem:[%s10]]
  %s12 = scalar_lea.smem %s0, 6
  %s13 = sld [smem:[%s12]]
  %s14 = scalar_lea.smem %s0, 7
  %s15 = sld [smem:[%s14]]
  %s16 = scalar_lea.smem %s0, 8
  %s17 = sld [smem:[%s16]]
  %s18 = scalar_lea.smem %s0, 9
  %s19 = sld [smem:[%s18]]
  %s20 = scalar_lea.smem %s0, 10
  %s21 = sld [smem:[%s20]]
  %s22 = scalar_lea.smem %s0, 11
  %s23 = sld [smem:[%s22]]
  %s24 = scalar_lea.smem %s0, 12
  %s25 = sld [smem:[%s24]]
  %s26 = scalar_lea.smem %s0, 13
  %s27 = sld [smem:[%s26]]
  %s28 = scalar_lea.smem %s0, 14
  %s29 = sld [smem:[%s28]]
  %s30 = scalar_lea.smem %s0, 15
  %s31 = sld [smem:[%s30]]
  %s32 = scalar_lea.smem %s0, 16
  %s33 = sld [smem:[%s32]]
  %s34 = scalar_lea.smem %s0, 17
  %s35 = sld [smem:[%s34]]
  %s36 = scalar_lea.smem %s0, 18
  %s37 = sld [smem:[%s36]]
  %s38 = scalar_lea.smem %s0, 19
  %s39 = sld [smem:[%s38]]
  %s40 = scalar_lea.smem %s0, 20
  %s41 = sld [smem:[%s40]]
  %s42 = scalar_lea.smem %s0, 21
  %s43 = sld [smem:[%s42]]
  %s44 = scalar_lea.smem %s0, 22
  %s45 = sld [smem:[%s44]]
  %s46 = scalar_lea.smem %s0, 23
  %s47 = sld [smem:[%s46]]
  %s48 = scalar_lea.smem %s0, 24
  %s49 = sld [smem:[%s48]]
  %s50 = scalar_lea.smem %s0, 25
  %s51 = sld [smem:[%s50]]
  %s52 = scalar_lea.smem %s0, 26
  %s53 = sld [smem:[%s52]]
  %s54 = scalar_lea.smem %s0, 27
  %s55 = sld [smem:[%s54]]
  %s56 = scalar_lea.smem %s0, 28
  %s57 = sld [smem:[%s56]]
  %s58 = scalar_lea.smem %s0, 29
  %s59 = sld [smem:[%s58]]
  %s60 = scalar_lea.smem %s0, 30
  %s61 = sld [smem:[%s60]]
  %s62 = sld [smem:[#allocation0]]
  $region130: #{bert_cnn_forward.1} parent=0
    _
  %s64 = ssub.s32 1, %s62
  %s65 = scalar_select 0, %s64, %s62
  %v66 = vstv %s59
  %67 = vst [vmem:[#allocation2] sm:$0x1] %v66
  $region1: #{bert_cnn_forward.1} parent=0
    #allocation3 [shape = 'u8[512]{0}', space=vmem, size = 0x400, scoped, tag = 'output window, operand 0, single buffered']
    #allocation4 [shape = 's32[1]{0}', space=sflag, size = 0x4, scoped, tag = 'scoped memory for bert_cnn_forward.1']
    %68 = vsyncpa [#allocation4], 0
    // Predicated region
    $region2: #{bert_cnn_forward.1} parent=1 // pred_check
      _
    $region3: #{bert_cnn_forward.1} parent=1 // pred_check_branch
      %70 = sbr.rel (0) target = $region5
    $region4: #{bert_cnn_forward.1} parent=1 // pred_region
      _
    $region5: #{bert_cnn_forward.1} parent=1 // pred_fallthru
      _
    // Predicated region
    $region6: #{bert_cnn_forward.1} parent=1 // pred_check
      _
    $region7: #{bert_cnn_forward.1} parent=1 // pred_check_branch
      %72 = sbr.rel (0) target = $region9
    $region8: #{bert_cnn_forward.1} parent=1 // pred_region
      _
    $region9: #{bert_cnn_forward.1} parent=1 // pred_fallthru
      _
    // Predicated region
    $region10: #{bert_cnn_forward.1} parent=1 // pred_check
      _
    $region11: #{bert_cnn_forward.1} parent=1 // pred_check_branch
      %74 = sbr.rel (0) target = $region13
    $region12: #{bert_cnn_forward.1} parent=1 // pred_region
      _
    $region13: #{bert_cnn_forward.1} parent=1 // pred_fallthru
      _
    // Predicated region
    $region14: #{bert_cnn_forward.1} parent=1 // pred_check
      _
    $region15: #{bert_cnn_forward.1} parent=1 // pred_check_branch
      %76 = sbr.rel (0) target = $region17
    $region16: #{bert_cnn_forward.1} parent=1 // pred_region
      _
    $region17: #{bert_cnn_forward.1} parent=1 // pred_fallthru
      _
    // Predicated region
    $region18: #{bert_cnn_forward.1} parent=1 // pred_check
      _
    $region19: #{bert_cnn_forward.1} parent=1 // pred_check_branch
      %78 = sbr.rel (0) target = $region21
    $region20: #{bert_cnn_forward.1} parent=1 // pred_region
      _
    $region21: #{bert_cnn_forward.1} parent=1 // pred_fallthru
      _
    // Predicated region
    $region22: #{bert_cnn_forward.1} parent=1 // pred_check
      _
    $region23: #{bert_cnn_forward.1} parent=1 // pred_check_branch
      %80 = sbr.rel (0) target = $region25
    $region24: #{bert_cnn_forward.1} parent=1 // pred_region
      _
    $region25: #{bert_cnn_forward.1} parent=1 // pred_fallthru
      _
    // Predicated region
    $region26: #{bert_cnn_forward.1} parent=1 // pred_check
      _
    $region27: #{bert_cnn_forward.1} parent=1 // pred_check_branch
      %82 = sbr.rel (0) target = $region29
    $region28: #{bert_cnn_forward.1} parent=1 // pred_region
      _
    $region29: #{bert_cnn_forward.1} parent=1 // pred_fallthru
      _
    // Predicated region
    $region30: #{bert_cnn_forward.1} parent=1 // pred_check
      _
    $region31: #{bert_cnn_forward.1} parent=1 // pred_check_branch
      %84 = sbr.rel (0) target = $region33
    $region32: #{bert_cnn_forward.1} parent=1 // pred_region
      _
    $region33: #{bert_cnn_forward.1} parent=1 // pred_fallthru
      _
    // Predicated region
    $region34: #{bert_cnn_forward.1} parent=1 // pred_check
      _
    $region35: #{bert_cnn_forward.1} parent=1 // pred_check_branch
      %86 = sbr.rel (0) target = $region37
    $region36: #{bert_cnn_forward.1} parent=1 // pred_region
      _
    $region37: #{bert_cnn_forward.1} parent=1 // pred_fallthru
      _
    // Predicated region
    $region38: #{bert_cnn_forward.1} parent=1 // pred_check
      _
    $region39: #{bert_cnn_forward.1} parent=1 // pred_check_branch
      %88 = sbr.rel (0) target = $region41
    $region40: #{bert_cnn_forward.1} parent=1 // pred_region
      _
    $region41: #{bert_cnn_forward.1} parent=1 // pred_fallthru
      _
    // Predicated region
    $region42: #{bert_cnn_forward.1} parent=1 // pred_check
      _
    $region43: #{bert_cnn_forward.1} parent=1 // pred_check_branch
      %90 = sbr.rel (0) target = $region45
    $region44: #{bert_cnn_forward.1} parent=1 // pred_region
      _
    $region45: #{bert_cnn_forward.1} parent=1 // pred_fallthru
      _
    // Predicated region
    $region46: #{bert_cnn_forward.1} parent=1 // pred_check
      _
    $region47: #{bert_cnn_forward.1} parent=1 // pred_check_branch
      %92 = sbr.rel (0) target = $region49
    $region48: #{bert_cnn_forward.1} parent=1 // pred_region
      _
    $region49: #{bert_cnn_forward.1} parent=1 // pred_fallthru
      _
    // Predicated region
    $region50: #{bert_cnn_forward.1} parent=1 // pred_check
      _
    $region51: #{bert_cnn_forward.1} parent=1 // pred_check_branch
      %94 = sbr.rel (0) target = $region53
    $region52: #{bert_cnn_forward.1} parent=1 // pred_region
      _
    $region53: #{bert_cnn_forward.1} parent=1 // pred_fallthru
      _
    // Predicated region
    $region54: #{bert_cnn_forward.1} parent=1 // pred_check
      _
    $region55: #{bert_cnn_forward.1} parent=1 // pred_check_branch
      %96 = sbr.rel (0) target = $region57
    $region56: #{bert_cnn_forward.1} parent=1 // pred_region
      _
    $region57: #{bert_cnn_forward.1} parent=1 // pred_fallthru
      _
    // Predicated region
    $region58: #{bert_cnn_forward.1} parent=1 // pred_check
      _
    $region59: #{bert_cnn_forward.1} parent=1 // pred_check_branch
      %98 = sbr.rel (0) target = $region61
    $region60: #{bert_cnn_forward.1} parent=1 // pred_region
      _
    $region61: #{bert_cnn_forward.1} parent=1 // pred_fallthru
      _
    // Predicated region
    $region62: #{bert_cnn_forward.1} parent=1 // pred_check
      _
    $region63: #{bert_cnn_forward.1} parent=1 // pred_check_branch
      %100 = sbr.rel (0) target = $region65
    $region64: #{bert_cnn_forward.1} parent=1 // pred_region
      _
    $region65: #{bert_cnn_forward.1} parent=1 // pred_fallthru
      _
    // Predicated region
    $region66: #{bert_cnn_forward.1} parent=1 // pred_check
      _
    $region67: #{bert_cnn_forward.1} parent=1 // pred_check_branch
      %102 = sbr.rel (0) target = $region69
    $region68: #{bert_cnn_forward.1} parent=1 // pred_region
      _
    $region69: #{bert_cnn_forward.1} parent=1 // pred_fallthru
      _
    // Predicated region
    $region70: #{bert_cnn_forward.1} parent=1 // pred_check
      _
    $region71: #{bert_cnn_forward.1} parent=1 // pred_check_branch
      %104 = sbr.rel (0) target = $region73
    $region72: #{bert_cnn_forward.1} parent=1 // pred_region
      _
    $region73: #{bert_cnn_forward.1} parent=1 // pred_fallthru
      _
    // Predicated region
    $region74: #{bert_cnn_forward.1} parent=1 // pred_check
      _
    $region75: #{bert_cnn_forward.1} parent=1 // pred_check_branch
      %106 = sbr.rel (0) target = $region77
    $region76: #{bert_cnn_forward.1} parent=1 // pred_region
      _
    $region77: #{bert_cnn_forward.1} parent=1 // pred_fallthru
      _
    // Predicated region
    $region78: #{bert_cnn_forward.1} parent=1 // pred_check
      _
    $region79: #{bert_cnn_forward.1} parent=1 // pred_check_branch
      %108 = sbr.rel (0) target = $region81
    $region80: #{bert_cnn_forward.1} parent=1 // pred_region
      _
    $region81: #{bert_cnn_forward.1} parent=1 // pred_fallthru
      _
    // Predicated region
    $region82: #{bert_cnn_forward.1} parent=1 // pred_check
      _
    $region83: #{bert_cnn_forward.1} parent=1 // pred_check_branch
      %110 = sbr.rel (0) target = $region85
    $region84: #{bert_cnn_forward.1} parent=1 // pred_region
      _
    $region85: #{bert_cnn_forward.1} parent=1 // pred_fallthru
      _
    // Predicated region
    $region86: #{bert_cnn_forward.1} parent=1 // pred_check
      _
    $region87: #{bert_cnn_forward.1} parent=1 // pred_check_branch
      %112 = sbr.rel (0) target = $region89
    $region88: #{bert_cnn_forward.1} parent=1 // pred_region
      _
    $region89: #{bert_cnn_forward.1} parent=1 // pred_fallthru
      _
    // Predicated region
    $region90: #{bert_cnn_forward.1} parent=1 // pred_check
      _
    $region91: #{bert_cnn_forward.1} parent=1 // pred_check_branch
      %114 = sbr.rel (0) target = $region93
    $region92: #{bert_cnn_forward.1} parent=1 // pred_region
      _
    $region93: #{bert_cnn_forward.1} parent=1 // pred_fallthru
      _
    // Predicated region
    $region94: #{bert_cnn_forward.1} parent=1 // pred_check
      _
    $region95: #{bert_cnn_forward.1} parent=1 // pred_check_branch
      %116 = sbr.rel (0) target = $region97
    $region96: #{bert_cnn_forward.1} parent=1 // pred_region
      _
    $region97: #{bert_cnn_forward.1} parent=1 // pred_fallthru
      _
    // Predicated region
    $region98: #{bert_cnn_forward.1} parent=1 // pred_check
      _
    $region99: #{bert_cnn_forward.1} parent=1 // pred_check_branch
      %118 = sbr.rel (0) target = $region101
    $region100: #{bert_cnn_forward.1} parent=1 // pred_region
      _
    $region101: #{bert_cnn_forward.1} parent=1 // pred_fallthru
      _
    // Predicated region
    $region102: #{bert_cnn_forward.1} parent=1 // pred_check
      _
    $region103: #{bert_cnn_forward.1} parent=1 // pred_check_branch
      %120 = sbr.rel (0) target = $region105
    $region104: #{bert_cnn_forward.1} parent=1 // pred_region
      _
    $region105: #{bert_cnn_forward.1} parent=1 // pred_fallthru
      _
    // Predicated region
    $region106: #{bert_cnn_forward.1} parent=1 // pred_check
      _
    $region107: #{bert_cnn_forward.1} parent=1 // pred_check_branch
      %122 = sbr.rel (0) target = $region109
    $region108: #{bert_cnn_forward.1} parent=1 // pred_region
      _
    $region109: #{bert_cnn_forward.1} parent=1 // pred_fallthru
      _
    // Predicated region
    $region110: #{bert_cnn_forward.1} parent=1 // pred_check
      _
    $region111: #{bert_cnn_forward.1} parent=1 // pred_check_branch
      %124 = sbr.rel (0) target = $region113
    $region112: #{bert_cnn_forward.1} parent=1 // pred_region
      _
    $region113: #{bert_cnn_forward.1} parent=1 // pred_fallthru
      _
    // Predicated region
    $region114: #{bert_cnn_forward.1} parent=1 // pred_check
      _
    $region115: #{bert_cnn_forward.1} parent=1 // pred_check_branch
      %126 = sbr.rel (0) target = $region117
    $region116: #{bert_cnn_forward.1} parent=1 // pred_region
      _
    $region117: #{bert_cnn_forward.1} parent=1 // pred_fallthru
      _
    // Predicated region
    $region118: #{bert_cnn_forward.1} parent=1 // pred_check
      _
    $region119: #{bert_cnn_forward.1} parent=1 // pred_check_branch
      %128 = sbr.rel (0) target = $region121
    $region120: #{bert_cnn_forward.1} parent=1 // pred_region
      _
    $region121: #{bert_cnn_forward.1} parent=1 // pred_fallthru
      _
    %v129 = vld [vmem:[%s1] sm:$0x3]
    %vm130 = vcmask 123904
    %v131 = vsel %vm130, %v129, 0.0
    %v132 = vrot.slane %v131, 4
    %v133 = vadd.f32 %v131, %v132
    %v134 = vrot.slane %v133, 2
    %v135 = vadd.f32 %v133, %v134
    %v136 = vrot.slane %v135, 1
    %v137 = vadd.f32 %v135, %v136
    %v138 = vrcp.pop 2.0
    %v139 = vmul.f32 %v137, %v138
    %v140 = vsub.f32 %v129, %v139
    %v141 = vmul.f32 %v140, %v140
    %v142 = vsel %vm130, %v141, 0.0
    %v143 = vrot.slane %v142, 4
    %v144 = vadd.f32 %v142, %v143
    %v145 = vrot.slane %v144, 2
    %v146 = vadd.f32 %v144, %v145
    %v147 = vrot.slane %v146, 1
    %v148 = vadd.f32 %v146, %v147
    %v149 = vmul.f32 %v148, %v138
    %v150 = vadd.f32 %v149, 1e-05
    %v151 = vrsqrt.pop %v150
    %v152 = vmul.f32 %v140, %v151
    %v153 = vld [vmem:[%s5] sm:$0x1]
    %v155 = vlaneseq
    %v156 = vshrl.u32 %v155, 7
    %v157 = vsub.s32 0, %v156
    %v158 = vrot.slane %v153, %v157
    %v160 = vmul.f32 %v152, %v158
    %v161 = vld [vmem:[%s7] sm:$0x1]
    %v163 = vlaneseq
    %v164 = vshrl.u32 %v163, 7
    %v165 = vsub.s32 0, %v164
    %v166 = vrot.slane %v161, %v165
    %v168 = vadd.f32 %v160, %v166
    %v169 = vld [vmem:[%s9] sm:$0xff]
    %v170 = vld [vmem:[%s9 + $0x8] sm:$0xff]
    %v171 = vld [vmem:[%s9 + $0x10] sm:$0xff]
    %v172 = vld [vmem:[%s9 + $0x18] sm:$0xff]
    %v173 = vld [vmem:[%s11] sm:$0x3]
    %v175 = vlaneseq
    %v176 = vshrl.u32 %v175, 7
    %v177 = vsub.s32 0, %v176
    %v178 = vrot.slane %v173, %v177
    %v179 = vlaneseq
    %v180 = vshrl.u32 %v179, 7
    %v181 = vsub.s32 1, %v180
    %v182 = vrot.slane %v173, %v181
    %vm185 = vcmask 130048
    %v187 = vsel %vm185, %v168, 0
    %189 = vmatprep.subr.mxu0 %v170
    %190 = vmatpush1.msra.mxu0 %v169
    %191 = vmatprep.subr.mxu0 %v172
    %192 = vmatpush1.msra.mxu0 %v171
    %193 = vmatprep.subr.mxu0 0.0
    %194 = vmatpush1.msra.mxu0 0.0
    %195 = vmatprep.subr.mxu0 0.0
    %196 = vmatpush1.msra.mxu0 0.0
    %197 = vmatprep.subr.mxu0 0.0
    %198 = vmatpush1.msra.mxu0 0.0
    %199 = vmatprep.subr.mxu0 0.0
    %200 = vmatpush1.msra.mxu0 0.0
    %201 = vmatprep.subr.mxu0 0.0
    %202 = vmatpush1.msra.mxu0 0.0
    %203 = vmatprep.subr.mxu0 0.0
    %204 = vmatpush1.msra.mxu0 0.0
    %205 = vmatprep.subr.mxu0 0.0
    %206 = vmatpush1.msra.mxu0 0.0
    %207 = vmatprep.subr.mxu0 0.0
    %208 = vmatpush1.msra.mxu0 0.0
    %209 = vmatprep.subr.mxu0 0.0
    %210 = vmatpush1.msra.mxu0 0.0
    %211 = vmatprep.subr.mxu0 0.0
    %212 = vmatpush1.msra.mxu0 0.0
    %213 = vmatprep.subr.mxu0 0.0
    %214 = vmatpush1.msra.mxu0 0.0
    %215 = vmatprep.subr.mxu0 0.0
    %216 = vmatpush1.msra.mxu0 0.0
    %217 = vmatprep.subr.mxu0 0.0
    %218 = vmatpush1.msra.mxu0 0.0
    %219 = vmatprep.subr.mxu0 0.0
    %220 = vmatpush1.msra.mxu0 0.0
    %221 = vmatprep.subr.mxu0 0.0
    %222 = vmatpush1.msra.mxu0 0.0
    %223 = vmatprep.subr.mxu0 0.0
    %224 = vmatpush1.msra.mxu0 0.0
    %225 = vmatprep.subr.mxu0 0.0
    %226 = vmatpush1.msra.mxu0 0.0
    %227 = vmatprep.subr.mxu0 0.0
    %228 = vmatpush1.msra.mxu0 0.0
    %229 = vmatprep.subr.mxu0 0.0
    %230 = vmatpush1.msra.mxu0 0.0
    %231 = vmatprep.subr.mxu0 0.0
    %232 = vmatpush1.msra.mxu0 0.0
    %233 = vmatprep.subr.mxu0 0.0
    %234 = vmatpush1.msra.mxu0 0.0
    %235 = vmatprep.subr.mxu0 0.0
    %236 = vmatpush1.msra.mxu0 0.0
    %237 = vmatprep.subr.mxu0 0.0
    %238 = vmatpush1.msra.mxu0 0.0
    %239 = vmatprep.subr.mxu0 0.0
    %240 = vmatpush1.msra.mxu0 0.0
    %241 = vmatprep.subr.mxu0 0.0
    %242 = vmatpush1.msra.mxu0 0.0
    %243 = vmatprep.subr.mxu0 0.0
    %244 = vmatpush1.msra.mxu0 0.0
    %245 = vmatprep.subr.mxu0 0.0
    %246 = vmatpush1.msra.mxu0 0.0
    %247 = vmatprep.subr.mxu0 0.0
    %248 = vmatpush1.msra.mxu0 0.0
    %249 = vmatprep.subr.mxu0 0.0
    %250 = vmatpush1.msra.mxu0 0.0
    %251 = vmatprep.subr.mxu0 0.0
    %252 = vmatpush1.msra.mxu0 0.0
    %253 = vmatprep.mubr.f32.mxu0 0.0
    %254 = vmatmul.mubr.f32.gmra.mrb[0].mxu0 %v187
    %v255 = vpop.f32.mrb[0].mxu0
    %v256 = vadd.f32 %v178, %v255
    %v257 = vpop.f32.mrb[0].mxu0
    %v258 = vadd.f32 %v182, %v257
    %259 = vdwg.mxu0
    %v260 = vmax.f32 %v256, 0.0
    %v261 = vmax.f32 %v258, 0.0
    %v262 = vld [vmem:[%s13] sm:$0xff]
    %v263 = vld [vmem:[%s13 + $0x8] sm:$0xff]
    %v264 = vld [vmem:[%s13 + $0x10] sm:$0xff]
    %v265 = vld [vmem:[%s13 + $0x18] sm:$0xff]
    %v266 = vld [vmem:[%s13 + $0x20] sm:$0xff]
    %v267 = vld [vmem:[%s13 + $0x28] sm:$0xff]
    %v268 = vld [vmem:[%s13 + $0x30] sm:$0xff]
    %v269 = vld [vmem:[%s13 + $0x38] sm:$0xff]
    %v270 = vld [vmem:[%s13 + $0x40] sm:$0xff]
    %v271 = vld [vmem:[%s13 + $0x48] sm:$0xff]
    %v272 = vld [vmem:[%s13 + $0x50] sm:$0xff]
    %v273 = vld [vmem:[%s13 + $0x58] sm:$0xff]
    %v274 = vld [vmem:[%s13 + $0x60] sm:$0xff]
    %v275 = vld [vmem:[%s13 + $0x68] sm:$0xff]
    %v276 = vld [vmem:[%s13 + $0x70] sm:$0xff]
    %v277 = vld [vmem:[%s13 + $0x78] sm:$0xff]
    %v278 = vld [vmem:[%s13 + $0x80] sm:$0xff]
    %v279 = vld [vmem:[%s13 + $0x88] sm:$0xff]
    %v280 = vld [vmem:[%s13 + $0x90] sm:$0xff]
    %v281 = vld [vmem:[%s13 + $0x98] sm:$0xff]
    %v282 = vld [vmem:[%s13 + $0xa0] sm:$0xff]
    %v283 = vld [vmem:[%s13 + $0xa8] sm:$0xff]
    %v284 = vld [vmem:[%s13 + $0xb0] sm:$0xff]
    %v285 = vld [vmem:[%s13 + $0xb8] sm:$0xff]
    %v286 = vld [vmem:[%s13 + $0xc0] sm:$0xff]
    %v287 = vld [vmem:[%s13 + $0xc8] sm:$0xff]
    %v288 = vld [vmem:[%s13 + $0xd0] sm:$0xff]
    %v289 = vld [vmem:[%s13 + $0xd8] sm:$0xff]
    %v290 = vld [vmem:[%s13 + $0xe0] sm:$0xff]
    %v291 = vld [vmem:[%s13 + $0xe8] sm:$0xff]
    %v292 = vld [vmem:[%s13 + $0xf0] sm:$0xff]
    %v293 = vld [vmem:[%s13 + $0xf8] sm:$0xff]
    %v294 = vld [vmem:[%s15] sm:$0x1]
    %v296 = vlaneseq
    %v297 = vshrl.u32 %v296, 7
    %v298 = vsub.s32 0, %v297
    %v299 = vrot.slane %v294, %v298
    %301 = vmatprep.subr.mxu0 0.0
    %302 = vmatpush1.msra.mxu0 %v262
    %303 = vmatprep.subr.mxu0 0.0
    %304 = vmatpush1.msra.mxu0 %v263
    %305 = vmatprep.subr.mxu0 0.0
    %306 = vmatpush1.msra.mxu0 %v264
    %307 = vmatprep.subr.mxu0 0.0
    %308 = vmatpush1.msra.mxu0 %v265
    %309 = vmatprep.subr.mxu0 0.0
    %310 = vmatpush1.msra.mxu0 %v266
    %311 = vmatprep.subr.mxu0 0.0
    %312 = vmatpush1.msra.mxu0 %v267
    %313 = vmatprep.subr.mxu0 0.0
    %314 = vmatpush1.msra.mxu0 %v268
    %315 = vmatprep.subr.mxu0 0.0
    %316 = vmatpush1.msra.mxu0 %v269
    %317 = vmatprep.subr.mxu0 0.0
    %318 = vmatpush1.msra.mxu0 %v270
    %319 = vmatprep.subr.mxu0 0.0
    %320 = vmatpush1.msra.mxu0 %v271
    %321 = vmatprep.subr.mxu0 0.0
    %322 = vmatpush1.msra.mxu0 %v272
    %323 = vmatprep.subr.mxu0 0.0
    %324 = vmatpush1.msra.mxu0 %v273
    %325 = vmatprep.subr.mxu0 0.0
    %326 = vmatpush1.msra.mxu0 %v274
    %327 = vmatprep.subr.mxu0 0.0
    %328 = vmatpush1.msra.mxu0 %v275
    %329 = vmatprep.subr.mxu0 0.0
    %330 = vmatpush1.msra.mxu0 %v276
    %331 = vmatprep.subr.mxu0 0.0
    %332 = vmatpush1.msra.mxu0 %v277
    %333 = vmatprep.subr.mxu0 0.0
    %334 = vmatpush1.msra.mxu0 %v278
    %335 = vmatprep.subr.mxu0 0.0
    %336 = vmatpush1.msra.mxu0 %v279
    %337 = vmatprep.subr.mxu0 0.0
    %338 = vmatpush1.msra.mxu0 %v280
    %339 = vmatprep.subr.mxu0 0.0
    %340 = vmatpush1.msra.mxu0 %v281
    %341 = vmatprep.subr.mxu0 0.0
    %342 = vmatpush1.msra.mxu0 %v282
    %343 = vmatprep.subr.mxu0 0.0
    %344 = vmatpush1.msra.mxu0 %v283
    %345 = vmatprep.subr.mxu0 0.0
    %346 = vmatpush1.msra.mxu0 %v284
    %347 = vmatprep.subr.mxu0 0.0
    %348 = vmatpush1.msra.mxu0 %v285
    %349 = vmatprep.subr.mxu0 0.0
    %350 = vmatpush1.msra.mxu0 %v286
    %351 = vmatprep.subr.mxu0 0.0
    %352 = vmatpush1.msra.mxu0 %v287
    %353 = vmatprep.subr.mxu0 0.0
    %354 = vmatpush1.msra.mxu0 %v288
    %355 = vmatprep.subr.mxu0 0.0
    %356 = vmatpush1.msra.mxu0 %v289
    %357 = vmatprep.subr.mxu0 0.0
    %358 = vmatpush1.msra.mxu0 %v290
    %359 = vmatprep.subr.mxu0 0.0
    %360 = vmatpush1.msra.mxu0 %v291
    %361 = vmatprep.subr.mxu0 0.0
    %362 = vmatpush1.msra.mxu0 %v292
    %363 = vmatprep.subr.mxu0 0.0
    %364 = vmatpush1.msra.mxu0 %v293
    %365 = vmatprep.mubr.f32.mxu0 %v261
    %366 = vmatmul.mubr.f32.gmra.mrb[0].mxu0 %v260
    %v367 = vpop.f32.mrb[0].mxu0
    %v368 = vadd.f32 %v299, %v367
    %v369 = vpop.f32.mrb[0].mxu0
    %370 = vdwg.mxu0
    %v371 = vmax.f32 %v368, 0.0
    %v372 = vld [vmem:[%s3] sm:$0x3]
    %v373 = vsel %vm130, %v372, 0.0
    %v374 = vrot.slane %v373, 4
    %v375 = vadd.f32 %v373, %v374
    %v376 = vrot.slane %v375, 2
    %v377 = vadd.f32 %v375, %v376
    %v378 = vrot.slane %v377, 1
    %v379 = vadd.f32 %v377, %v378
    %v380 = vmul.f32 %v379, %v138
    %v381 = vsub.f32 %v372, %v380
    %v382 = vmul.f32 %v381, %v381
    %v383 = vsel %vm130, %v382, 0.0
    %v384 = vrot.slane %v383, 4
    %v385 = vadd.f32 %v383, %v384
    %v386 = vrot.slane %v385, 2
    %v387 = vadd.f32 %v385, %v386
    %v388 = vrot.slane %v387, 1
    %v389 = vadd.f32 %v387, %v388
    %v390 = vmul.f32 %v389, %v138
    %v391 = vadd.f32 %v390, 1e-05
    %v392 = vrsqrt.pop %v391
    %v393 = vmul.f32 %v381, %v392
    %v394 = vmul.f32 %v393, %v158
    %v395 = vadd.f32 %v394, %v166
    %v396 = vld [vmem:[%s29] sm:$0xff]
    %v397 = vld [vmem:[%s29 + $0x8] sm:$0xff]
    %v398 = vld [vmem:[%s29 + $0x10] sm:$0xff]
    %v399 = vld [vmem:[%s29 + $0x18] sm:$0xff]
    %v400 = vld [vmem:[%s31] sm:$0x3]
    %v402 = vlaneseq
    %v403 = vshrl.u32 %v402, 7
    %v404 = vsub.s32 0, %v403
    %v405 = vrot.slane %v400, %v404
    %v406 = vlaneseq
    %v407 = vshrl.u32 %v406, 7
    %v408 = vsub.s32 1, %v407
    %v409 = vrot.slane %v400, %v408
    %v413 = vsel %vm185, %v395, 0
    %415 = vmatprep.subr.mxu0 %v397
    %416 = vmatpush1.msra.mxu0 %v396
    %417 = vmatprep.subr.mxu0 %v399
    %418 = vmatpush1.msra.mxu0 %v398
    %419 = vmatprep.subr.mxu0 0.0
    %420 = vmatpush1.msra.mxu0 0.0
    %421 = vmatprep.subr.mxu0 0.0
    %422 = vmatpush1.msra.mxu0 0.0
    %423 = vmatprep.subr.mxu0 0.0
    %424 = vmatpush1.msra.mxu0 0.0
    %425 = vmatprep.subr.mxu0 0.0
    %426 = vmatpush1.msra.mxu0 0.0
    %427 = vmatprep.subr.mxu0 0.0
    %428 = vmatpush1.msra.mxu0 0.0
    %429 = vmatprep.subr.mxu0 0.0
    %430 = vmatpush1.msra.mxu0 0.0
    %431 = vmatprep.subr.mxu0 0.0
    %432 = vmatpush1.msra.mxu0 0.0
    %433 = vmatprep.subr.mxu0 0.0
    %434 = vmatpush1.msra.mxu0 0.0
    %435 = vmatprep.subr.mxu0 0.0
    %436 = vmatpush1.msra.mxu0 0.0
    %437 = vmatprep.subr.mxu0 0.0
    %438 = vmatpush1.msra.mxu0 0.0
    %439 = vmatprep.subr.mxu0 0.0
    %440 = vmatpush1.msra.mxu0 0.0
    %441 = vmatprep.subr.mxu0 0.0
    %442 = vmatpush1.msra.mxu0 0.0
    %443 = vmatprep.subr.mxu0 0.0
    %444 = vmatpush1.msra.mxu0 0.0
    %445 = vmatprep.subr.mxu0 0.0
    %446 = vmatpush1.msra.mxu0 0.0
    %447 = vmatprep.subr.mxu0 0.0
    %448 = vmatpush1.msra.mxu0 0.0
    %449 = vmatprep.subr.mxu0 0.0
    %450 = vmatpush1.msra.mxu0 0.0
    %451 = vmatprep.subr.mxu0 0.0
    %452 = vmatpush1.msra.mxu0 0.0
    %453 = vmatprep.subr.mxu0 0.0
    %454 = vmatpush1.msra.mxu0 0.0
    %455 = vmatprep.subr.mxu0 0.0
    %456 = vmatpush1.msra.mxu0 0.0
    %457 = vmatprep.subr.mxu0 0.0
    %458 = vmatpush1.msra.mxu0 0.0
    %459 = vmatprep.subr.mxu0 0.0
    %460 = vmatpush1.msra.mxu0 0.0
    %461 = vmatprep.subr.mxu0 0.0
    %462 = vmatpush1.msra.mxu0 0.0
    %463 = vmatprep.subr.mxu0 0.0
    %464 = vmatpush1.msra.mxu0 0.0
    %465 = vmatprep.subr.mxu0 0.0
    %466 = vmatpush1.msra.mxu0 0.0
    %467 = vmatprep.subr.mxu0 0.0
    %468 = vmatpush1.msra.mxu0 0.0
    %469 = vmatprep.subr.mxu0 0.0
    %470 = vmatpush1.msra.mxu0 0.0
    %471 = vmatprep.subr.mxu0 0.0
    %472 = vmatpush1.msra.mxu0 0.0
    %473 = vmatprep.subr.mxu0 0.0
    %474 = vmatpush1.msra.mxu0 0.0
    %475 = vmatprep.subr.mxu0 0.0
    %476 = vmatpush1.msra.mxu0 0.0
    %477 = vmatprep.subr.mxu0 0.0
    %478 = vmatpush1.msra.mxu0 0.0
    %479 = vmatprep.mubr.f32.mxu0 0.0
    %480 = vmatmul.mubr.f32.gmra.mrb[0].mxu0 %v413
    %v481 = vpop.f32.mrb[0].mxu0
    %v482 = vadd.f32 %v405, %v481
    %v483 = vpop.f32.mrb[0].mxu0
    %v484 = vadd.f32 %v409, %v483
    %485 = vdwg.mxu0
    %v486 = vmax.f32 %v482, 0.0
    %v487 = vmax.f32 %v484, 0.0
    %v488 = vld [vmem:[%s33] sm:$0xff]
    %v489 = vld [vmem:[%s33 + $0x8] sm:$0xff]
    %v490 = vld [vmem:[%s33 + $0x10] sm:$0xff]
    %v491 = vld [vmem:[%s33 + $0x18] sm:$0xff]
    %v492 = vld [vmem:[%s33 + $0x20] sm:$0xff]
    %v493 = vld [vmem:[%s33 + $0x28] sm:$0xff]
    %v494 = vld [vmem:[%s33 + $0x30] sm:$0xff]
    %v495 = vld [vmem:[%s33 + $0x38] sm:$0xff]
    %v496 = vld [vmem:[%s33 + $0x40] sm:$0xff]
    %v497 = vld [vmem:[%s33 + $0x48] sm:$0xff]
    %v498 = vld [vmem:[%s33 + $0x50] sm:$0xff]
    %v499 = vld [vmem:[%s33 + $0x58] sm:$0xff]
    %v500 = vld [vmem:[%s33 + $0x60] sm:$0xff]
    %v501 = vld [vmem:[%s33 + $0x68] sm:$0xff]
    %v502 = vld [vmem:[%s33 + $0x70] sm:$0xff]
    %v503 = vld [vmem:[%s33 + $0x78] sm:$0xff]
    %v504 = vld [vmem:[%s33 + $0x80] sm:$0xff]
    %v505 = vld [vmem:[%s33 + $0x88] sm:$0xff]
    %v506 = vld [vmem:[%s33 + $0x90] sm:$0xff]
    %v507 = vld [vmem:[%s33 + $0x98] sm:$0xff]
    %v508 = vld [vmem:[%s33 + $0xa0] sm:$0xff]
    %v509 = vld [vmem:[%s33 + $0xa8] sm:$0xff]
    %v510 = vld [vmem:[%s33 + $0xb0] sm:$0xff]
    %v511 = vld [vmem:[%s33 + $0xb8] sm:$0xff]
    %v512 = vld [vmem:[%s33 + $0xc0] sm:$0xff]
    %v513 = vld [vmem:[%s33 + $0xc8] sm:$0xff]
    %v514 = vld [vmem:[%s33 + $0xd0] sm:$0xff]
    %v515 = vld [vmem:[%s33 + $0xd8] sm:$0xff]
    %v516 = vld [vmem:[%s33 + $0xe0] sm:$0xff]
    %v517 = vld [vmem:[%s33 + $0xe8] sm:$0xff]
    %v518 = vld [vmem:[%s33 + $0xf0] sm:$0xff]
    %v519 = vld [vmem:[%s33 + $0xf8] sm:$0xff]
    %v520 = vld [vmem:[%s35] sm:$0x1]
    %v522 = vlaneseq
    %v523 = vshrl.u32 %v522, 7
    %v524 = vsub.s32 0, %v523
    %v525 = vrot.slane %v520, %v524
    %527 = vmatprep.subr.mxu0 0.0
    %528 = vmatpush1.msra.mxu0 %v488
    %529 = vmatprep.subr.mxu0 0.0
    %530 = vmatpush1.msra.mxu0 %v489
    %531 = vmatprep.subr.mxu0 0.0
    %532 = vmatpush1.msra.mxu0 %v490
    %533 = vmatprep.subr.mxu0 0.0
    %534 = vmatpush1.msra.mxu0 %v491
    %535 = vmatprep.subr.mxu0 0.0
    %536 = vmatpush1.msra.mxu0 %v492
    %537 = vmatprep.subr.mxu0 0.0
    %538 = vmatpush1.msra.mxu0 %v493
    %539 = vmatprep.subr.mxu0 0.0
    %540 = vmatpush1.msra.mxu0 %v494
    %541 = vmatprep.subr.mxu0 0.0
    %542 = vmatpush1.msra.mxu0 %v495
    %543 = vmatprep.subr.mxu0 0.0
    %544 = vmatpush1.msra.mxu0 %v496
    %545 = vmatprep.subr.mxu0 0.0
    %546 = vmatpush1.msra.mxu0 %v497
    %547 = vmatprep.subr.mxu0 0.0
    %548 = vmatpush1.msra.mxu0 %v498
    %549 = vmatprep.subr.mxu0 0.0
    %550 = vmatpush1.msra.mxu0 %v499
    %551 = vmatprep.subr.mxu0 0.0
    %552 = vmatpush1.msra.mxu0 %v500
    %553 = vmatprep.subr.mxu0 0.0
    %554 = vmatpush1.msra.mxu0 %v501
    %555 = vmatprep.subr.mxu0 0.0
    %556 = vmatpush1.msra.mxu0 %v502
    %557 = vmatprep.subr.mxu0 0.0
    %558 = vmatpush1.msra.mxu0 %v503
    %559 = vmatprep.subr.mxu0 0.0
    %560 = vmatpush1.msra.mxu0 %v504
    %561 = vmatprep.subr.mxu0 0.0
    %562 = vmatpush1.msra.mxu0 %v505
    %563 = vmatprep.subr.mxu0 0.0
    %564 = vmatpush1.msra.mxu0 %v506
    %565 = vmatprep.subr.mxu0 0.0
    %566 = vmatpush1.msra.mxu0 %v507
    %567 = vmatprep.subr.mxu0 0.0
    %568 = vmatpush1.msra.mxu0 %v508
    %569 = vmatprep.subr.mxu0 0.0
    %570 = vmatpush1.msra.mxu0 %v509
    %571 = vmatprep.subr.mxu0 0.0
    %572 = vmatpush1.msra.mxu0 %v510
    %573 = vmatprep.subr.mxu0 0.0
    %574 = vmatpush1.msra.mxu0 %v511
    %575 = vmatprep.subr.mxu0 0.0
    %576 = vmatpush1.msra.mxu0 %v512
    %577 = vmatprep.subr.mxu0 0.0
    %578 = vmatpush1.msra.mxu0 %v513
    %579 = vmatprep.subr.mxu0 0.0
    %580 = vmatpush1.msra.mxu0 %v514
    %581 = vmatprep.subr.mxu0 0.0
    %582 = vmatpush1.msra.mxu0 %v515
    %583 = vmatprep.subr.mxu0 0.0
    %584 = vmatpush1.msra.mxu0 %v516
    %585 = vmatprep.subr.mxu0 0.0
    %586 = vmatpush1.msra.mxu0 %v517
    %587 = vmatprep.subr.mxu0 0.0
    %588 = vmatpush1.msra.mxu0 %v518
    %589 = vmatprep.subr.mxu0 0.0
    %590 = vmatpush1.msra.mxu0 %v519
    %591 = vmatprep.mubr.f32.mxu0 %v487
    %592 = vmatmul.mubr.f32.gmra.mrb[0].mxu0 %v486
    %v593 = vpop.f32.mrb[0].mxu0
    %v594 = vadd.f32 %v525, %v593
    %v595 = vpop.f32.mrb[0].mxu0
    %596 = vdwg.mxu0
    %v597 = vmax.f32 %v594, 0.0
    %v598 = vlaneseq
    %v599 = vand.u32 %v598, 127
    %v600 = vld [vmem:[%s17] sm:$0xff]
    %v601 = vld [vmem:[%s17 + $0x8] sm:$0xff]
    %v602 = vld [vmem:[%s17 + $0x10] sm:$0xff]
    %v603 = vld [vmem:[%s17 + $0x18] sm:$0xff]
    %v604 = vld [vmem:[%s17 + $0x20] sm:$0xff]
    %v605 = vld [vmem:[%s17 + $0x28] sm:$0xff]
    %v606 = vld [vmem:[%s17 + $0x30] sm:$0xff]
    %v607 = vld [vmem:[%s17 + $0x38] sm:$0xff]
    %v608 = vld [vmem:[%s17 + $0x40] sm:$0xff]
    %v609 = vld [vmem:[%s17 + $0x48] sm:$0xff]
    %v610 = vld [vmem:[%s17 + $0x50] sm:$0xff]
    %v611 = vld [vmem:[%s17 + $0x58] sm:$0xff]
    %v612 = vld [vmem:[%s17 + $0x60] sm:$0xff]
    %v613 = vld [vmem:[%s17 + $0x68] sm:$0xff]
    %v614 = vld [vmem:[%s17 + $0x70] sm:$0xff]
    %v615 = vld [vmem:[%s17 + $0x78] sm:$0xff]
    %617 = vset.pattern.permute.xlu0 0
    %618 = vperm.xlu0 %617, %v600
    %v619 = vpop.permute.xlu0 %618
    %622 = vset.pattern.permute.xlu0 0
    %623 = vperm.xlu0 %622, %v601
    %v624 = vpop.permute.xlu0 %623
    %627 = vset.pattern.permute.xlu0 0
    %628 = vperm.xlu0 %627, %v602
    %v629 = vpop.permute.xlu0 %628
    %632 = vset.pattern.permute.xlu0 0
    %633 = vperm.xlu0 %632, %v603
    %v634 = vpop.permute.xlu0 %633
    %637 = vset.pattern.permute.xlu0 0
    %638 = vperm.xlu0 %637, %v604
    %v639 = vpop.permute.xlu0 %638
    %642 = vset.pattern.permute.xlu0 0
    %643 = vperm.xlu0 %642, %v605
    %v644 = vpop.permute.xlu0 %643
    %647 = vset.pattern.permute.xlu0 0
    %648 = vperm.xlu0 %647, %v606
    %v649 = vpop.permute.xlu0 %648
    %652 = vset.pattern.permute.xlu0 0
    %653 = vperm.xlu0 %652, %v607
    %v654 = vpop.permute.xlu0 %653
    %657 = vset.pattern.permute.xlu0 0
    %658 = vperm.xlu0 %657, %v608
    %v659 = vpop.permute.xlu0 %658
    %662 = vset.pattern.permute.xlu0 0
    %663 = vperm.xlu0 %662, %v609
    %v664 = vpop.permute.xlu0 %663
    %667 = vset.pattern.permute.xlu0 0
    %668 = vperm.xlu0 %667, %v610
    %v669 = vpop.permute.xlu0 %668
    %672 = vset.pattern.permute.xlu0 0
    %673 = vperm.xlu0 %672, %v611
    %v674 = vpop.permute.xlu0 %673
    %677 = vset.pattern.permute.xlu0 0
    %678 = vperm.xlu0 %677, %v612
    %v679 = vpop.permute.xlu0 %678
    %682 = vset.pattern.permute.xlu0 0
    %683 = vperm.xlu0 %682, %v613
    %v684 = vpop.permute.xlu0 %683
    %687 = vset.pattern.permute.xlu0 0
    %688 = vperm.xlu0 %687, %v614
    %v689 = vpop.permute.xlu0 %688
    %692 = vset.pattern.permute.xlu0 0
    %693 = vperm.xlu0 %692, %v615
    %v694 = vpop.permute.xlu0 %693
    %v696 = vlaneseq
    %v697 = vshrl.u32 %v696, 7
    %v698 = vsub.s32 0, %v697
    %v699 = vrot.slane %v371, %v698
    %v700 = vmul.f32 %v619, %v699
    %v701 = vmul.f32 %v624, %v699
    %v702 = vmul.f32 %v629, %v699
    %v703 = vmul.f32 %v634, %v699
    %v704 = vmul.f32 %v639, %v699
    %v705 = vmul.f32 %v644, %v699
    %v706 = vmul.f32 %v649, %v699
    %v707 = vmul.f32 %v654, %v699
    %v708 = vmul.f32 %v659, %v699
    %v709 = vmul.f32 %v664, %v699
    %v710 = vmul.f32 %v669, %v699
    %v711 = vmul.f32 %v674, %v699
    %v712 = vmul.f32 %v679, %v699
    %v713 = vmul.f32 %v684, %v699
    %v714 = vmul.f32 %v689, %v699
    %v715 = vmul.f32 %v694, %v699
    %v716 = vadd.f32 %v700, 0.0
    %v717 = vadd.f32 %v701, 0.0
    %v718 = vadd.f32 %v702, 0.0
    %v719 = vadd.f32 %v703, 0.0
    %v720 = vadd.f32 %v704, 0.0
    %v721 = vadd.f32 %v705, 0.0
    %v722 = vadd.f32 %v706, 0.0
    %v723 = vadd.f32 %v707, 0.0
    %v724 = vadd.f32 %v708, 0.0
    %v725 = vadd.f32 %v709, 0.0
    %v726 = vadd.f32 %v710, 0.0
    %v727 = vadd.f32 %v711, 0.0
    %v728 = vadd.f32 %v712, 0.0
    %v729 = vadd.f32 %v713, 0.0
    %v730 = vadd.f32 %v714, 0.0
    %v731 = vadd.f32 %v715, 0.0
    %732 = vrot.lane.b32.xlu0 %v371, 127
    %v733 = vpop.permute.xlu0 %732
    %734 = vset.pattern.permute.xlu0 1
    %735 = vperm.xlu0 %734, %v600
    %v736 = vpop.permute.xlu0 %735
    %738 = vset.pattern.permute.xlu0 1
    %739 = vperm.xlu0 %738, %v601
    %v740 = vpop.permute.xlu0 %739
    %742 = vset.pattern.permute.xlu0 1
    %743 = vperm.xlu0 %742, %v602
    %v744 = vpop.permute.xlu0 %743
    %746 = vset.pattern.permute.xlu0 1
    %747 = vperm.xlu0 %746, %v603
    %v748 = vpop.permute.xlu0 %747
    %750 = vset.pattern.permute.xlu0 1
    %751 = vperm.xlu0 %750, %v604
    %v752 = vpop.permute.xlu0 %751
    %754 = vset.pattern.permute.xlu0 1
    %755 = vperm.xlu0 %754, %v605
    %v756 = vpop.permute.xlu0 %755
    %758 = vset.pattern.permute.xlu0 1
    %759 = vperm.xlu0 %758, %v606
    %v760 = vpop.permute.xlu0 %759
    %762 = vset.pattern.permute.xlu0 1
    %763 = vperm.xlu0 %762, %v607
    %v764 = vpop.permute.xlu0 %763
    %766 = vset.pattern.permute.xlu0 1
    %767 = vperm.xlu0 %766, %v608
    %v768 = vpop.permute.xlu0 %767
    %770 = vset.pattern.permute.xlu0 1
    %771 = vperm.xlu0 %770, %v609
    %v772 = vpop.permute.xlu0 %771
    %774 = vset.pattern.permute.xlu0 1
    %775 = vperm.xlu0 %774, %v610
    %v776 = vpop.permute.xlu0 %775
    %778 = vset.pattern.permute.xlu0 1
    %779 = vperm.xlu0 %778, %v611
    %v780 = vpop.permute.xlu0 %779
    %782 = vset.pattern.permute.xlu0 1
    %783 = vperm.xlu0 %782, %v612
    %v784 = vpop.permute.xlu0 %783
    %786 = vset.pattern.permute.xlu0 1
    %787 = vperm.xlu0 %786, %v613
    %v788 = vpop.permute.xlu0 %787
    %790 = vset.pattern.permute.xlu0 1
    %791 = vperm.xlu0 %790, %v614
    %v792 = vpop.permute.xlu0 %791
    %794 = vset.pattern.permute.xlu0 1
    %795 = vperm.xlu0 %794, %v615
    %v796 = vpop.permute.xlu0 %795
    %v798 = vlaneseq
    %v799 = vshrl.u32 %v798, 7
    %v800 = vsub.s32 0, %v799
    %v801 = vrot.slane %v733, %v800
    %v802 = vmul.f32 %v736, %v801
    %v803 = vmul.f32 %v740, %v801
    %v804 = vmul.f32 %v744, %v801
    %v805 = vmul.f32 %v748, %v801
    %v806 = vmul.f32 %v752, %v801
    %v807 = vmul.f32 %v756, %v801
    %v808 = vmul.f32 %v760, %v801
    %v809 = vmul.f32 %v764, %v801
    %v810 = vmul.f32 %v768, %v801
    %v811 = vmul.f32 %v772, %v801
    %v812 = vmul.f32 %v776, %v801
    %v813 = vmul.f32 %v780, %v801
    %v814 = vmul.f32 %v784, %v801
    %v815 = vmul.f32 %v788, %v801
    %v816 = vmul.f32 %v792, %v801
    %v817 = vmul.f32 %v796, %v801
    %v818 = vadd.f32 %v716, %v802
    %v819 = vadd.f32 %v717, %v803
    %v820 = vadd.f32 %v718, %v804
    %v821 = vadd.f32 %v719, %v805
    %v822 = vadd.f32 %v720, %v806
    %v823 = vadd.f32 %v721, %v807
    %v824 = vadd.f32 %v722, %v808
    %v825 = vadd.f32 %v723, %v809
    %v826 = vadd.f32 %v724, %v810
    %v827 = vadd.f32 %v725, %v811
    %v828 = vadd.f32 %v726, %v812
    %v829 = vadd.f32 %v727, %v813
    %v830 = vadd.f32 %v728, %v814
    %v831 = vadd.f32 %v729, %v815
    %v832 = vadd.f32 %v730, %v816
    %v833 = vadd.f32 %v731, %v817
    %834 = vrot.lane.b32.xlu0 %v371, 126
    %v835 = vpop.permute.xlu0 %834
    %836 = vset.pattern.permute.xlu0 2
    %837 = vperm.xlu0 %836, %v600
    %v838 = vpop.permute.xlu0 %837
    %840 = vset.pattern.permute.xlu0 2
    %841 = vperm.xlu0 %840, %v601
    %v842 = vpop.permute.xlu0 %841
    %844 = vset.pattern.permute.xlu0 2
    %845 = vperm.xlu0 %844, %v602
    %v846 = vpop.permute.xlu0 %845
    %848 = vset.pattern.permute.xlu0 2
    %849 = vperm.xlu0 %848, %v603
    %v850 = vpop.permute.xlu0 %849
    %852 = vset.pattern.permute.xlu0 2
    %853 = vperm.xlu0 %852, %v604
    %v854 = vpop.permute.xlu0 %853
    %856 = vset.pattern.permute.xlu0 2
    %857 = vperm.xlu0 %856, %v605
    %v858 = vpop.permute.xlu0 %857
    %860 = vset.pattern.permute.xlu0 2
    %861 = vperm.xlu0 %860, %v606
    %v862 = vpop.permute.xlu0 %861
    %864 = vset.pattern.permute.xlu0 2
    %865 = vperm.xlu0 %864, %v607
    %v866 = vpop.permute.xlu0 %865
    %868 = vset.pattern.permute.xlu0 2
    %869 = vperm.xlu0 %868, %v608
    %v870 = vpop.permute.xlu0 %869
    %872 = vset.pattern.permute.xlu0 2
    %873 = vperm.xlu0 %872, %v609
    %v874 = vpop.permute.xlu0 %873
    %876 = vset.pattern.permute.xlu0 2
    %877 = vperm.xlu0 %876, %v610
    %v878 = vpop.permute.xlu0 %877
    %880 = vset.pattern.permute.xlu0 2
    %881 = vperm.xlu0 %880, %v611
    %v882 = vpop.permute.xlu0 %881
    %884 = vset.pattern.permute.xlu0 2
    %885 = vperm.xlu0 %884, %v612
    %v886 = vpop.permute.xlu0 %885
    %888 = vset.pattern.permute.xlu0 2
    %889 = vperm.xlu0 %888, %v613
    %v890 = vpop.permute.xlu0 %889
    %892 = vset.pattern.permute.xlu0 2
    %893 = vperm.xlu0 %892, %v614
    %v894 = vpop.permute.xlu0 %893
    %896 = vset.pattern.permute.xlu0 2
    %897 = vperm.xlu0 %896, %v615
    %v898 = vpop.permute.xlu0 %897
    %v900 = vlaneseq
    %v901 = vshrl.u32 %v900, 7
    %v902 = vsub.s32 0, %v901
    %v903 = vrot.slane %v835, %v902
    %v904 = vmul.f32 %v838, %v903
    %v905 = vmul.f32 %v842, %v903
    %v906 = vmul.f32 %v846, %v903
    %v907 = vmul.f32 %v850, %v903
    %v908 = vmul.f32 %v854, %v903
    %v909 = vmul.f32 %v858, %v903
    %v910 = vmul.f32 %v862, %v903
    %v911 = vmul.f32 %v866, %v903
    %v912 = vmul.f32 %v870, %v903
    %v913 = vmul.f32 %v874, %v903
    %v914 = vmul.f32 %v878, %v903
    %v915 = vmul.f32 %v882, %v903
    %v916 = vmul.f32 %v886, %v903
    %v917 = vmul.f32 %v890, %v903
    %v918 = vmul.f32 %v894, %v903
    %v919 = vmul.f32 %v898, %v903
    %v920 = vadd.f32 %v818, %v904
    %v921 = vadd.f32 %v819, %v905
    %v922 = vadd.f32 %v820, %v906
    %v923 = vadd.f32 %v821, %v907
    %v924 = vadd.f32 %v822, %v908
    %v925 = vadd.f32 %v823, %v909
    %v926 = vadd.f32 %v824, %v910
    %v927 = vadd.f32 %v825, %v911
    %v928 = vadd.f32 %v826, %v912
    %v929 = vadd.f32 %v827, %v913
    %v930 = vadd.f32 %v828, %v914
    %v931 = vadd.f32 %v829, %v915
    %v932 = vadd.f32 %v830, %v916
    %v933 = vadd.f32 %v831, %v917
    %v934 = vadd.f32 %v832, %v918
    %v935 = vadd.f32 %v833, %v919
    %936 = vrot.lane.b32.xlu0 %v371, 125
    %v937 = vpop.permute.xlu0 %936
    %938 = vset.pattern.permute.xlu0 3
    %939 = vperm.xlu0 %938, %v600
    %v940 = vpop.permute.xlu0 %939
    %942 = vset.pattern.permute.xlu0 3
    %943 = vperm.xlu0 %942, %v601
    %v944 = vpop.permute.xlu0 %943
    %946 = vset.pattern.permute.xlu0 3
    %947 = vperm.xlu0 %946, %v602
    %v948 = vpop.permute.xlu0 %947
    %950 = vset.pattern.permute.xlu0 3
    %951 = vperm.xlu0 %950, %v603
    %v952 = vpop.permute.xlu0 %951
    %954 = vset.pattern.permute.xlu0 3
    %955 = vperm.xlu0 %954, %v604
    %v956 = vpop.permute.xlu0 %955
    %958 = vset.pattern.permute.xlu0 3
    %959 = vperm.xlu0 %958, %v605
    %v960 = vpop.permute.xlu0 %959
    %962 = vset.pattern.permute.xlu0 3
    %963 = vperm.xlu0 %962, %v606
    %v964 = vpop.permute.xlu0 %963
    %966 = vset.pattern.permute.xlu0 3
    %967 = vperm.xlu0 %966, %v607
    %v968 = vpop.permute.xlu0 %967
    %970 = vset.pattern.permute.xlu0 3
    %971 = vperm.xlu0 %970, %v608
    %v972 = vpop.permute.xlu0 %971
    %974 = vset.pattern.permute.xlu0 3
    %975 = vperm.xlu0 %974, %v609
    %v976 = vpop.permute.xlu0 %975
    %978 = vset.pattern.permute.xlu0 3
    %979 = vperm.xlu0 %978, %v610
    %v980 = vpop.permute.xlu0 %979
    %982 = vset.pattern.permute.xlu0 3
    %983 = vperm.xlu0 %982, %v611
    %v984 = vpop.permute.xlu0 %983
    %986 = vset.pattern.permute.xlu0 3
    %987 = vperm.xlu0 %986, %v612
    %v988 = vpop.permute.xlu0 %987
    %990 = vset.pattern.permute.xlu0 3
    %991 = vperm.xlu0 %990, %v613
    %v992 = vpop.permute.xlu0 %991
    %994 = vset.pattern.permute.xlu0 3
    %995 = vperm.xlu0 %994, %v614
    %v996 = vpop.permute.xlu0 %995
    %998 = vset.pattern.permute.xlu0 3
    %999 = vperm.xlu0 %998, %v615
    %v1000 = vpop.permute.xlu0 %999
    %v1002 = vlaneseq
    %v1003 = vshrl.u32 %v1002, 7
    %v1004 = vsub.s32 0, %v1003
    %v1005 = vrot.slane %v937, %v1004
    %v1006 = vmul.f32 %v940, %v1005
    %v1007 = vmul.f32 %v944, %v1005
    %v1008 = vmul.f32 %v948, %v1005
    %v1009 = vmul.f32 %v952, %v1005
    %v1010 = vmul.f32 %v956, %v1005
    %v1011 = vmul.f32 %v960, %v1005
    %v1012 = vmul.f32 %v964, %v1005
    %v1013 = vmul.f32 %v968, %v1005
    %v1014 = vmul.f32 %v972, %v1005
    %v1015 = vmul.f32 %v976, %v1005
    %v1016 = vmul.f32 %v980, %v1005
    %v1017 = vmul.f32 %v984, %v1005
    %v1018 = vmul.f32 %v988, %v1005
    %v1019 = vmul.f32 %v992, %v1005
    %v1020 = vmul.f32 %v996, %v1005
    %v1021 = vmul.f32 %v1000, %v1005
    %v1022 = vadd.f32 %v920, %v1006
    %v1023 = vadd.f32 %v921, %v1007
    %v1024 = vadd.f32 %v922, %v1008
    %v1025 = vadd.f32 %v923, %v1009
    %v1026 = vadd.f32 %v924, %v1010
    %v1027 = vadd.f32 %v925, %v1011
    %v1028 = vadd.f32 %v926, %v1012
    %v1029 = vadd.f32 %v927, %v1013
    %v1030 = vadd.f32 %v928, %v1014
    %v1031 = vadd.f32 %v929, %v1015
    %v1032 = vadd.f32 %v930, %v1016
    %v1033 = vadd.f32 %v931, %v1017
    %v1034 = vadd.f32 %v932, %v1018
    %v1035 = vadd.f32 %v933, %v1019
    %v1036 = vadd.f32 %v934, %v1020
    %v1037 = vadd.f32 %v935, %v1021
    %v1038 = vld [vmem:[%s19] sm:$0xff]
    %v1039 = vld [vmem:[%s19 + $0x8] sm:$0xff]
    %v1040 = vld [vmem:[%s19 + $0x10] sm:$0xff]
    %v1041 = vld [vmem:[%s19 + $0x18] sm:$0xff]
    %v1042 = vld [vmem:[%s19 + $0x20] sm:$0xff]
    %v1043 = vld [vmem:[%s19 + $0x28] sm:$0xff]
    %v1044 = vld [vmem:[%s19 + $0x30] sm:$0xff]
    %v1045 = vld [vmem:[%s19 + $0x38] sm:$0xff]
    %v1046 = vld [vmem:[%s19 + $0x40] sm:$0xff]
    %v1047 = vld [vmem:[%s19 + $0x48] sm:$0xff]
    %v1048 = vld [vmem:[%s19 + $0x50] sm:$0xff]
    %v1049 = vld [vmem:[%s19 + $0x58] sm:$0xff]
    %v1050 = vld [vmem:[%s19 + $0x60] sm:$0xff]
    %v1051 = vld [vmem:[%s19 + $0x68] sm:$0xff]
    %v1052 = vld [vmem:[%s19 + $0x70] sm:$0xff]
    %v1053 = vld [vmem:[%s19 + $0x78] sm:$0xff]
    %1055 = vset.pattern.permute.xlu0 0
    %1056 = vperm.xlu0 %1055, %v1038
    %v1057 = vpop.permute.xlu0 %1056
    %1060 = vset.pattern.permute.xlu0 0
    %1061 = vperm.xlu0 %1060, %v1039
    %v1062 = vpop.permute.xlu0 %1061
    %1065 = vset.pattern.permute.xlu0 0
    %1066 = vperm.xlu0 %1065, %v1040
    %v1067 = vpop.permute.xlu0 %1066
    %1070 = vset.pattern.permute.xlu0 0
    %1071 = vperm.xlu0 %1070, %v1041
    %v1072 = vpop.permute.xlu0 %1071
    %1075 = vset.pattern.permute.xlu0 0
    %1076 = vperm.xlu0 %1075, %v1042
    %v1077 = vpop.permute.xlu0 %1076
    %1080 = vset.pattern.permute.xlu0 0
    %1081 = vperm.xlu0 %1080, %v1043
    %v1082 = vpop.permute.xlu0 %1081
    %1085 = vset.pattern.permute.xlu0 0
    %1086 = vperm.xlu0 %1085, %v1044
    %v1087 = vpop.permute.xlu0 %1086
    %1090 = vset.pattern.permute.xlu0 0
    %1091 = vperm.xlu0 %1090, %v1045
    %v1092 = vpop.permute.xlu0 %1091
    %1095 = vset.pattern.permute.xlu0 0
    %1096 = vperm.xlu0 %1095, %v1046
    %v1097 = vpop.permute.xlu0 %1096
    %1100 = vset.pattern.permute.xlu0 0
    %1101 = vperm.xlu0 %1100, %v1047
    %v1102 = vpop.permute.xlu0 %1101
    %1105 = vset.pattern.permute.xlu0 0
    %1106 = vperm.xlu0 %1105, %v1048
    %v1107 = vpop.permute.xlu0 %1106
    %1110 = vset.pattern.permute.xlu0 0
    %1111 = vperm.xlu0 %1110, %v1049
    %v1112 = vpop.permute.xlu0 %1111
    %1115 = vset.pattern.permute.xlu0 0
    %1116 = vperm.xlu0 %1115, %v1050
    %v1117 = vpop.permute.xlu0 %1116
    %1120 = vset.pattern.permute.xlu0 0
    %1121 = vperm.xlu0 %1120, %v1051
    %v1122 = vpop.permute.xlu0 %1121
    %1125 = vset.pattern.permute.xlu0 0
    %1126 = vperm.xlu0 %1125, %v1052
    %v1127 = vpop.permute.xlu0 %1126
    %1130 = vset.pattern.permute.xlu0 0
    %1131 = vperm.xlu0 %1130, %v1053
    %v1132 = vpop.permute.xlu0 %1131
    %v1134 = vadd.f32 %v1022, %v1057
    %v1135 = vadd.f32 %v1023, %v1062
    %v1136 = vadd.f32 %v1024, %v1067
    %v1137 = vadd.f32 %v1025, %v1072
    %v1138 = vadd.f32 %v1026, %v1077
    %v1139 = vadd.f32 %v1027, %v1082
    %v1140 = vadd.f32 %v1028, %v1087
    %v1141 = vadd.f32 %v1029, %v1092
    %v1142 = vadd.f32 %v1030, %v1097
    %v1143 = vadd.f32 %v1031, %v1102
    %v1144 = vadd.f32 %v1032, %v1107
    %v1145 = vadd.f32 %v1033, %v1112
    %v1146 = vadd.f32 %v1034, %v1117
    %v1147 = vadd.f32 %v1035, %v1122
    %v1148 = vadd.f32 %v1036, %v1127
    %v1149 = vadd.f32 %v1037, %v1132
    %v1150 = vmax.f32 %v1134, 0.0
    %v1151 = vmax.f32 %v1135, 0.0
    %v1152 = vmax.f32 %v1136, 0.0
    %v1153 = vmax.f32 %v1137, 0.0
    %v1154 = vmax.f32 %v1138, 0.0
    %v1155 = vmax.f32 %v1139, 0.0
    %v1156 = vmax.f32 %v1140, 0.0
    %v1157 = vmax.f32 %v1141, 0.0
    %v1158 = vmax.f32 %v1142, 0.0
    %v1159 = vmax.f32 %v1143, 0.0
    %v1160 = vmax.f32 %v1144, 0.0
    %v1161 = vmax.f32 %v1145, 0.0
    %v1162 = vmax.f32 %v1146, 0.0
    %v1163 = vmax.f32 %v1147, 0.0
    %v1164 = vmax.f32 %v1148, 0.0
    %v1165 = vmax.f32 %v1149, 0.0
    %1166 = vrot.lane.b32.xlu0 %v1150, 127
    %v1167 = vpop.permute.xlu0 %1166
    %1168 = vrot.lane.b32.xlu0 %v1151, 127
    %v1169 = vpop.permute.xlu0 %1168
    %1170 = vrot.lane.b32.xlu0 %v1152, 127
    %v1171 = vpop.permute.xlu0 %1170
    %1172 = vrot.lane.b32.xlu0 %v1153, 127
    %v1173 = vpop.permute.xlu0 %1172
    %1174 = vrot.lane.b32.xlu0 %v1154, 127
    %v1175 = vpop.permute.xlu0 %1174
    %1176 = vrot.lane.b32.xlu0 %v1155, 127
    %v1177 = vpop.permute.xlu0 %1176
    %1178 = vrot.lane.b32.xlu0 %v1156, 127
    %v1179 = vpop.permute.xlu0 %1178
    %1180 = vrot.lane.b32.xlu0 %v1157, 127
    %v1181 = vpop.permute.xlu0 %1180
    %1182 = vrot.lane.b32.xlu0 %v1158, 127
    %v1183 = vpop.permute.xlu0 %1182
    %1184 = vrot.lane.b32.xlu0 %v1159, 127
    %v1185 = vpop.permute.xlu0 %1184
    %1186 = vrot.lane.b32.xlu0 %v1160, 127
    %v1187 = vpop.permute.xlu0 %1186
    %1188 = vrot.lane.b32.xlu0 %v1161, 127
    %v1189 = vpop.permute.xlu0 %1188
    %1190 = vrot.lane.b32.xlu0 %v1162, 127
    %v1191 = vpop.permute.xlu0 %1190
    %1192 = vrot.lane.b32.xlu0 %v1163, 127
    %v1193 = vpop.permute.xlu0 %1192
    %1194 = vrot.lane.b32.xlu0 %v1164, 127
    %v1195 = vpop.permute.xlu0 %1194
    %1196 = vrot.lane.b32.xlu0 %v1165, 127
    %v1197 = vpop.permute.xlu0 %1196
    %1198 = vrot.lane.b32.xlu0 %v1150, 126
    %v1199 = vpop.permute.xlu0 %1198
    %1200 = vrot.lane.b32.xlu0 %v1151, 126
    %v1201 = vpop.permute.xlu0 %1200
    %1202 = vrot.lane.b32.xlu0 %v1152, 126
    %v1203 = vpop.permute.xlu0 %1202
    %1204 = vrot.lane.b32.xlu0 %v1153, 126
    %v1205 = vpop.permute.xlu0 %1204
    %1206 = vrot.lane.b32.xlu0 %v1154, 126
    %v1207 = vpop.permute.xlu0 %1206
    %1208 = vrot.lane.b32.xlu0 %v1155, 126
    %v1209 = vpop.permute.xlu0 %1208
    %1210 = vrot.lane.b32.xlu0 %v1156, 126
    %v1211 = vpop.permute.xlu0 %1210
    %1212 = vrot.lane.b32.xlu0 %v1157, 126
    %v1213 = vpop.permute.xlu0 %1212
    %1214 = vrot.lane.b32.xlu0 %v1158, 126
    %v1215 = vpop.permute.xlu0 %1214
    %1216 = vrot.lane.b32.xlu0 %v1159, 126
    %v1217 = vpop.permute.xlu0 %1216
    %1218 = vrot.lane.b32.xlu0 %v1160, 126
    %v1219 = vpop.permute.xlu0 %1218
    %1220 = vrot.lane.b32.xlu0 %v1161, 126
    %v1221 = vpop.permute.xlu0 %1220
    %1222 = vrot.lane.b32.xlu0 %v1162, 126
    %v1223 = vpop.permute.xlu0 %1222
    %1224 = vrot.lane.b32.xlu0 %v1163, 126
    %v1225 = vpop.permute.xlu0 %1224
    %1226 = vrot.lane.b32.xlu0 %v1164, 126
    %v1227 = vpop.permute.xlu0 %1226
    %1228 = vrot.lane.b32.xlu0 %v1165, 126
    %v1229 = vpop.permute.xlu0 %1228
    %1230 = vrot.lane.b32.xlu0 %v1150, 125
    %v1231 = vpop.permute.xlu0 %1230
    %1232 = vrot.lane.b32.xlu0 %v1151, 125
    %v1233 = vpop.permute.xlu0 %1232
    %1234 = vrot.lane.b32.xlu0 %v1152, 125
    %v1235 = vpop.permute.xlu0 %1234
    %1236 = vrot.lane.b32.xlu0 %v1153, 125
    %v1237 = vpop.permute.xlu0 %1236
    %1238 = vrot.lane.b32.xlu0 %v1154, 125
    %v1239 = vpop.permute.xlu0 %1238
    %1240 = vrot.lane.b32.xlu0 %v1155, 125
    %v1241 = vpop.permute.xlu0 %1240
    %1242 = vrot.lane.b32.xlu0 %v1156, 125
    %v1243 = vpop.permute.xlu0 %1242
    %1244 = vrot.lane.b32.xlu0 %v1157, 125
    %v1245 = vpop.permute.xlu0 %1244
    %1246 = vrot.lane.b32.xlu0 %v1158, 125
    %v1247 = vpop.permute.xlu0 %1246
    %1248 = vrot.lane.b32.xlu0 %v1159, 125
    %v1249 = vpop.permute.xlu0 %1248
    %1250 = vrot.lane.b32.xlu0 %v1160, 125
    %v1251 = vpop.permute.xlu0 %1250
    %1252 = vrot.lane.b32.xlu0 %v1161, 125
    %v1253 = vpop.permute.xlu0 %1252
    %1254 = vrot.lane.b32.xlu0 %v1162, 125
    %v1255 = vpop.permute.xlu0 %1254
    %1256 = vrot.lane.b32.xlu0 %v1163, 125
    %v1257 = vpop.permute.xlu0 %1256
    %1258 = vrot.lane.b32.xlu0 %v1164, 125
    %v1259 = vpop.permute.xlu0 %1258
    %1260 = vrot.lane.b32.xlu0 %v1165, 125
    %v1261 = vpop.permute.xlu0 %1260
    %v1262 = vld [vmem:[%s21] sm:$0xff]
    %v1263 = vld [vmem:[%s21 + $0x8] sm:$0xff]
    %v1264 = vld [vmem:[%s21 + $0x10] sm:$0xff]
    %v1265 = vld [vmem:[%s21 + $0x18] sm:$0xff]
    %v1266 = vld [vmem:[%s21 + $0x20] sm:$0xff]
    %v1267 = vld [vmem:[%s21 + $0x28] sm:$0xff]
    %v1268 = vld [vmem:[%s21 + $0x30] sm:$0xff]
    %v1269 = vld [vmem:[%s21 + $0x38] sm:$0xff]
    %v1270 = vld [vmem:[%s21 + $0x40] sm:$0xff]
    %v1271 = vld [vmem:[%s21 + $0x48] sm:$0xff]
    %v1272 = vld [vmem:[%s21 + $0x50] sm:$0xff]
    %v1273 = vld [vmem:[%s21 + $0x58] sm:$0xff]
    %v1274 = vld [vmem:[%s21 + $0x60] sm:$0xff]
    %v1275 = vld [vmem:[%s21 + $0x68] sm:$0xff]
    %v1276 = vld [vmem:[%s21 + $0x70] sm:$0xff]
    %v1277 = vld [vmem:[%s21 + $0x78] sm:$0xff]
    %v1278 = vld [vmem:[%s21 + $0x80] sm:$0xff]
    %v1279 = vld [vmem:[%s21 + $0x88] sm:$0xff]
    %v1280 = vld [vmem:[%s21 + $0x90] sm:$0xff]
    %v1281 = vld [vmem:[%s21 + $0x98] sm:$0xff]
    %v1282 = vld [vmem:[%s21 + $0xa0] sm:$0xff]
    %v1283 = vld [vmem:[%s21 + $0xa8] sm:$0xff]
    %v1284 = vld [vmem:[%s21 + $0xb0] sm:$0xff]
    %v1285 = vld [vmem:[%s21 + $0xb8] sm:$0xff]
    %v1286 = vld [vmem:[%s21 + $0xc0] sm:$0xff]
    %v1287 = vld [vmem:[%s21 + $0xc8] sm:$0xff]
    %v1288 = vld [vmem:[%s21 + $0xd0] sm:$0xff]
    %v1289 = vld [vmem:[%s21 + $0xd8] sm:$0xff]
    %v1290 = vld [vmem:[%s21 + $0xe0] sm:$0xff]
    %v1291 = vld [vmem:[%s21 + $0xe8] sm:$0xff]
    %v1292 = vld [vmem:[%s21 + $0xf0] sm:$0xff]
    %v1293 = vld [vmem:[%s21 + $0xf8] sm:$0xff]
    %v1294 = vld [vmem:[%s21 + $0x100] sm:$0xff]
    %v1295 = vld [vmem:[%s21 + $0x108] sm:$0xff]
    %v1296 = vld [vmem:[%s21 + $0x110] sm:$0xff]
    %v1297 = vld [vmem:[%s21 + $0x118] sm:$0xff]
    %v1298 = vld [vmem:[%s21 + $0x120] sm:$0xff]
    %v1299 = vld [vmem:[%s21 + $0x128] sm:$0xff]
    %v1300 = vld [vmem:[%s21 + $0x130] sm:$0xff]
    %v1301 = vld [vmem:[%s21 + $0x138] sm:$0xff]
    %v1302 = vld [vmem:[%s21 + $0x140] sm:$0xff]
    %v1303 = vld [vmem:[%s21 + $0x148] sm:$0xff]
    %v1304 = vld [vmem:[%s21 + $0x150] sm:$0xff]
    %v1305 = vld [vmem:[%s21 + $0x158] sm:$0xff]
    %v1306 = vld [vmem:[%s21 + $0x160] sm:$0xff]
    %v1307 = vld [vmem:[%s21 + $0x168] sm:$0xff]
    %v1308 = vld [vmem:[%s21 + $0x170] sm:$0xff]
    %v1309 = vld [vmem:[%s21 + $0x178] sm:$0xff]
    %v1310 = vld [vmem:[%s21 + $0x180] sm:$0xff]
    %v1311 = vld [vmem:[%s21 + $0x188] sm:$0xff]
    %v1312 = vld [vmem:[%s21 + $0x190] sm:$0xff]
    %v1313 = vld [vmem:[%s21 + $0x198] sm:$0xff]
    %v1314 = vld [vmem:[%s21 + $0x1a0] sm:$0xff]
    %v1315 = vld [vmem:[%s21 + $0x1a8] sm:$0xff]
    %v1316 = vld [vmem:[%s21 + $0x1b0] sm:$0xff]
    %v1317 = vld [vmem:[%s21 + $0x1b8] sm:$0xff]
    %v1318 = vld [vmem:[%s21 + $0x1c0] sm:$0xff]
    %v1319 = vld [vmem:[%s21 + $0x1c8] sm:$0xff]
    %v1320 = vld [vmem:[%s21 + $0x1d0] sm:$0xff]
    %v1321 = vld [vmem:[%s21 + $0x1d8] sm:$0xff]
    %v1322 = vld [vmem:[%s21 + $0x1e0] sm:$0xff]
    %v1323 = vld [vmem:[%s21 + $0x1e8] sm:$0xff]
    %v1324 = vld [vmem:[%s21 + $0x1f0] sm:$0xff]
    %v1325 = vld [vmem:[%s21 + $0x1f8] sm:$0xff]
    %v1326 = vld [vmem:[%s23] sm:$0xff]
    %v1327 = vld [vmem:[%s23 + $0x8] sm:$0xff]
    %v1328 = vld [vmem:[%s23 + $0x10] sm:$0xff]
    %v1329 = vld [vmem:[%s23 + $0x18] sm:$0xff]
    %v1330 = vld [vmem:[%s23 + $0x20] sm:$0xff]
    %v1331 = vld [vmem:[%s23 + $0x28] sm:$0xff]
    %v1332 = vld [vmem:[%s23 + $0x30] sm:$0xff]
    %v1333 = vld [vmem:[%s23 + $0x38] sm:$0xff]
    %v1334 = vld [vmem:[%s23 + $0x40] sm:$0xff]
    %v1335 = vld [vmem:[%s23 + $0x48] sm:$0xff]
    %v1336 = vld [vmem:[%s23 + $0x50] sm:$0xff]
    %v1337 = vld [vmem:[%s23 + $0x58] sm:$0xff]
    %v1338 = vld [vmem:[%s23 + $0x60] sm:$0xff]
    %v1339 = vld [vmem:[%s23 + $0x68] sm:$0xff]
    %v1340 = vld [vmem:[%s23 + $0x70] sm:$0xff]
    %v1341 = vld [vmem:[%s23 + $0x78] sm:$0xff]
    %1343 = vset.pattern.permute.xlu0 0
    %1344 = vperm.xlu0 %1343, %v1326
    %v1345 = vpop.permute.xlu0 %1344
    %1348 = vset.pattern.permute.xlu0 0
    %1349 = vperm.xlu0 %1348, %v1327
    %v1350 = vpop.permute.xlu0 %1349
    %1353 = vset.pattern.permute.xlu0 0
    %1354 = vperm.xlu0 %1353, %v1328
    %v1355 = vpop.permute.xlu0 %1354
    %1358 = vset.pattern.permute.xlu0 0
    %1359 = vperm.xlu0 %1358, %v1329
    %v1360 = vpop.permute.xlu0 %1359
    %1363 = vset.pattern.permute.xlu0 0
    %1364 = vperm.xlu0 %1363, %v1330
    %v1365 = vpop.permute.xlu0 %1364
    %1368 = vset.pattern.permute.xlu0 0
    %1369 = vperm.xlu0 %1368, %v1331
    %v1370 = vpop.permute.xlu0 %1369
    %1373 = vset.pattern.permute.xlu0 0
    %1374 = vperm.xlu0 %1373, %v1332
    %v1375 = vpop.permute.xlu0 %1374
    %1378 = vset.pattern.permute.xlu0 0
    %1379 = vperm.xlu0 %1378, %v1333
    %v1380 = vpop.permute.xlu0 %1379
    %1383 = vset.pattern.permute.xlu0 0
    %1384 = vperm.xlu0 %1383, %v1334
    %v1385 = vpop.permute.xlu0 %1384
    %1388 = vset.pattern.permute.xlu0 0
    %1389 = vperm.xlu0 %1388, %v1335
    %v1390 = vpop.permute.xlu0 %1389
    %1393 = vset.pattern.permute.xlu0 0
    %1394 = vperm.xlu0 %1393, %v1336
    %v1395 = vpop.permute.xlu0 %1394
    %1398 = vset.pattern.permute.xlu0 0
    %1399 = vperm.xlu0 %1398, %v1337
    %v1400 = vpop.permute.xlu0 %1399
    %1403 = vset.pattern.permute.xlu0 0
    %1404 = vperm.xlu0 %1403, %v1338
    %v1405 = vpop.permute.xlu0 %1404
    %1408 = vset.pattern.permute.xlu0 0
    %1409 = vperm.xlu0 %1408, %v1339
    %v1410 = vpop.permute.xlu0 %1409
    %1413 = vset.pattern.permute.xlu0 0
    %1414 = vperm.xlu0 %1413, %v1340
    %v1415 = vpop.permute.xlu0 %1414
    %1418 = vset.pattern.permute.xlu0 0
    %1419 = vperm.xlu0 %1418, %v1341
    %v1420 = vpop.permute.xlu0 %1419
    %1422 = vmatprep.subr.mxu0 0.0
    %1423 = vmatpush1.msra.mxu0 %v1150
    %1424 = vmatprep.subr.mxu0 0.0
    %1425 = vmatpush1.msra.mxu0 %v1151
    %1426 = vmatprep.subr.mxu0 0.0
    %1427 = vmatpush1.msra.mxu0 %v1152
    %1428 = vmatprep.subr.mxu0 0.0
    %1429 = vmatpush1.msra.mxu0 %v1153
    %1430 = vmatprep.subr.mxu0 0.0
    %1431 = vmatpush1.msra.mxu0 %v1154
    %1432 = vmatprep.subr.mxu0 0.0
    %1433 = vmatpush1.msra.mxu0 %v1155
    %1434 = vmatprep.subr.mxu0 0.0
    %1435 = vmatpush1.msra.mxu0 %v1156
    %1436 = vmatprep.subr.mxu0 0.0
    %1437 = vmatpush1.msra.mxu0 %v1157
    %1438 = vmatprep.subr.mxu0 0.0
    %1439 = vmatpush1.msra.mxu0 %v1158
    %1440 = vmatprep.subr.mxu0 0.0
    %1441 = vmatpush1.msra.mxu0 %v1159
    %1442 = vmatprep.subr.mxu0 0.0
    %1443 = vmatpush1.msra.mxu0 %v1160
    %1444 = vmatprep.subr.mxu0 0.0
    %1445 = vmatpush1.msra.mxu0 %v1161
    %1446 = vmatprep.subr.mxu0 0.0
    %1447 = vmatpush1.msra.mxu0 %v1162
    %1448 = vmatprep.subr.mxu0 0.0
    %1449 = vmatpush1.msra.mxu0 %v1163
    %1450 = vmatprep.subr.mxu0 0.0
    %1451 = vmatpush1.msra.mxu0 %v1164
    %1452 = vmatprep.subr.mxu0 0.0
    %1453 = vmatpush1.msra.mxu0 %v1165
    %1454 = vmatprep.subr.mxu0 0.0
    %1455 = vmatpush1.msra.mxu0 %v1167
    %1456 = vmatprep.subr.mxu0 0.0
    %1457 = vmatpush1.msra.mxu0 %v1169
    %1458 = vmatprep.subr.mxu0 0.0
    %1459 = vmatpush1.msra.mxu0 %v1171
    %1460 = vmatprep.subr.mxu0 0.0
    %1461 = vmatpush1.msra.mxu0 %v1173
    %1462 = vmatprep.subr.mxu0 0.0
    %1463 = vmatpush1.msra.mxu0 %v1175
    %1464 = vmatprep.subr.mxu0 0.0
    %1465 = vmatpush1.msra.mxu0 %v1177
    %1466 = vmatprep.subr.mxu0 0.0
    %1467 = vmatpush1.msra.mxu0 %v1179
    %1468 = vmatprep.subr.mxu0 0.0
    %1469 = vmatpush1.msra.mxu0 %v1181
    %1470 = vmatprep.subr.mxu0 0.0
    %1471 = vmatpush1.msra.mxu0 %v1183
    %1472 = vmatprep.subr.mxu0 0.0
    %1473 = vmatpush1.msra.mxu0 %v1185
    %1474 = vmatprep.subr.mxu0 0.0
    %1475 = vmatpush1.msra.mxu0 %v1187
    %1476 = vmatprep.subr.mxu0 0.0
    %1477 = vmatpush1.msra.mxu0 %v1189
    %1478 = vmatprep.subr.mxu0 0.0
    %1479 = vmatpush1.msra.mxu0 %v1191
    %1480 = vmatprep.subr.mxu0 0.0
    %1481 = vmatpush1.msra.mxu0 %v1193
    %1482 = vmatprep.subr.mxu0 0.0
    %1483 = vmatpush1.msra.mxu0 %v1195
    %1484 = vmatprep.subr.mxu0 0.0
    %1485 = vmatpush1.msra.mxu0 %v1197
    %1486 = vmatprep.mubr.f32.mxu0 %v1263
    %1487 = vmatmul.mubr.f32.gmra.mrb[0].mxu0 %v1262
    %v1488 = vpop.f32.mrb[0].mxu0
    %v1489 = vadd.f32 %v1345, %v1488
    %v1490 = vpop.f32.mrb[0].mxu0
    %1491 = vmatprep.mubr.f32.mxu0 %v1267
    %1492 = vmatmul.mubr.f32.gmra.mrb[0].mxu0 %v1266
    %v1493 = vpop.f32.mrb[0].mxu0
    %v1494 = vadd.f32 %v1350, %v1493
    %v1495 = vpop.f32.mrb[0].mxu0
    %1496 = vmatprep.mubr.f32.mxu0 %v1271
    %1497 = vmatmul.mubr.f32.gmra.mrb[0].mxu0 %v1270
    %v1498 = vpop.f32.mrb[0].mxu0
    %v1499 = vadd.f32 %v1355, %v1498
    %v1500 = vpop.f32.mrb[0].mxu0
    %1501 = vmatprep.mubr.f32.mxu0 %v1275
    %1502 = vmatmul.mubr.f32.gmra.mrb[0].mxu0 %v1274
    %v1503 = vpop.f32.mrb[0].mxu0
    %v1504 = vadd.f32 %v1360, %v1503
    %v1505 = vpop.f32.mrb[0].mxu0
    %1506 = vmatprep.mubr.f32.mxu0 %v1279
    %1507 = vmatmul.mubr.f32.gmra.mrb[0].mxu0 %v1278
    %v1508 = vpop.f32.mrb[0].mxu0
    %v1509 = vadd.f32 %v1365, %v1508
    %v1510 = vpop.f32.mrb[0].mxu0
    %1511 = vmatprep.mubr.f32.mxu0 %v1283
    %1512 = vmatmul.mubr.f32.gmra.mrb[0].mxu0 %v1282
    %v1513 = vpop.f32.mrb[0].mxu0
    %v1514 = vadd.f32 %v1370, %v1513
    %v1515 = vpop.f32.mrb[0].mxu0
    %1516 = vmatprep.mubr.f32.mxu0 %v1287
    %1517 = vmatmul.mubr.f32.gmra.mrb[0].mxu0 %v1286
    %v1518 = vpop.f32.mrb[0].mxu0
    %v1519 = vadd.f32 %v1375, %v1518
    %v1520 = vpop.f32.mrb[0].mxu0
    %1521 = vmatprep.mubr.f32.mxu0 %v1291
    %1522 = vmatmul.mubr.f32.gmra.mrb[0].mxu0 %v1290
    %v1523 = vpop.f32.mrb[0].mxu0
    %v1524 = vadd.f32 %v1380, %v1523
    %v1525 = vpop.f32.mrb[0].mxu0
    %1526 = vmatprep.mubr.f32.mxu0 %v1295
    %1527 = vmatmul.mubr.f32.gmra.mrb[0].mxu0 %v1294
    %v1528 = vpop.f32.mrb[0].mxu0
    %v1529 = vadd.f32 %v1385, %v1528
    %v1530 = vpop.f32.mrb[0].mxu0
    %1531 = vmatprep.mubr.f32.mxu0 %v1299
    %1532 = vmatmul.mubr.f32.gmra.mrb[0].mxu0 %v1298
    %v1533 = vpop.f32.mrb[0].mxu0
    %v1534 = vadd.f32 %v1390, %v1533
    %v1535 = vpop.f32.mrb[0].mxu0
    %1536 = vmatprep.mubr.f32.mxu0 %v1303
    %1537 = vmatmul.mubr.f32.gmra.mrb[0].mxu0 %v1302
    %v1538 = vpop.f32.mrb[0].mxu0
    %v1539 = vadd.f32 %v1395, %v1538
    %v1540 = vpop.f32.mrb[0].mxu0
    %1541 = vmatprep.mubr.f32.mxu0 %v1307
    %1542 = vmatmul.mubr.f32.gmra.mrb[0].mxu0 %v1306
    %v1543 = vpop.f32.mrb[0].mxu0
    %v1544 = vadd.f32 %v1400, %v1543
    %v1545 = vpop.f32.mrb[0].mxu0
    %1546 = vmatprep.mubr.f32.mxu0 %v1311
    %1547 = vmatmul.mubr.f32.gmra.mrb[0].mxu0 %v1310
    %v1548 = vpop.f32.mrb[0].mxu0
    %v1549 = vadd.f32 %v1405, %v1548
    %v1550 = vpop.f32.mrb[0].mxu0
    %1551 = vmatprep.mubr.f32.mxu0 %v1315
    %1552 = vmatmul.mubr.f32.gmra.mrb[0].mxu0 %v1314
    %v1553 = vpop.f32.mrb[0].mxu0
    %v1554 = vadd.f32 %v1410, %v1553
    %v1555 = vpop.f32.mrb[0].mxu0
    %1556 = vmatprep.mubr.f32.mxu0 %v1319
    %1557 = vmatmul.mubr.f32.gmra.mrb[0].mxu0 %v1318
    %v1558 = vpop.f32.mrb[0].mxu0
    %v1559 = vadd.f32 %v1415, %v1558
    %v1560 = vpop.f32.mrb[0].mxu0
    %1561 = vmatprep.mubr.f32.mxu0 %v1323
    %1562 = vmatmul.mubr.f32.gmra.mrb[0].mxu0 %v1322
    %v1563 = vpop.f32.mrb[0].mxu0
    %v1564 = vadd.f32 %v1420, %v1563
    %v1565 = vpop.f32.mrb[0].mxu0
    %1566 = vdwg.mxu0
    %1567 = vmatprep.subr.mxu0 0.0
    %1568 = vmatpush1.msra.mxu0 %v1199
    %1569 = vmatprep.subr.mxu0 0.0
    %1570 = vmatpush1.msra.mxu0 %v1201
    %1571 = vmatprep.subr.mxu0 0.0
    %1572 = vmatpush1.msra.mxu0 %v1203
    %1573 = vmatprep.subr.mxu0 0.0
    %1574 = vmatpush1.msra.mxu0 %v1205
    %1575 = vmatprep.subr.mxu0 0.0
    %1576 = vmatpush1.msra.mxu0 %v1207
    %1577 = vmatprep.subr.mxu0 0.0
    %1578 = vmatpush1.msra.mxu0 %v1209
    %1579 = vmatprep.subr.mxu0 0.0
    %1580 = vmatpush1.msra.mxu0 %v1211
    %1581 = vmatprep.subr.mxu0 0.0
    %1582 = vmatpush1.msra.mxu0 %v1213
    %1583 = vmatprep.subr.mxu0 0.0
    %1584 = vmatpush1.msra.mxu0 %v1215
    %1585 = vmatprep.subr.mxu0 0.0
    %1586 = vmatpush1.msra.mxu0 %v1217
    %1587 = vmatprep.subr.mxu0 0.0
    %1588 = vmatpush1.msra.mxu0 %v1219
    %1589 = vmatprep.subr.mxu0 0.0
    %1590 = vmatpush1.msra.mxu0 %v1221
    %1591 = vmatprep.subr.mxu0 0.0
    %1592 = vmatpush1.msra.mxu0 %v1223
    %1593 = vmatprep.subr.mxu0 0.0
    %1594 = vmatpush1.msra.mxu0 %v1225
    %1595 = vmatprep.subr.mxu0 0.0
    %1596 = vmatpush1.msra.mxu0 %v1227
    %1597 = vmatprep.subr.mxu0 0.0
    %1598 = vmatpush1.msra.mxu0 %v1229
    %1599 = vmatprep.subr.mxu0 0.0
    %1600 = vmatpush1.msra.mxu0 %v1231
    %1601 = vmatprep.subr.mxu0 0.0
    %1602 = vmatpush1.msra.mxu0 %v1233
    %1603 = vmatprep.subr.mxu0 0.0
    %1604 = vmatpush1.msra.mxu0 %v1235
    %1605 = vmatprep.subr.mxu0 0.0
    %1606 = vmatpush1.msra.mxu0 %v1237
    %1607 = vmatprep.subr.mxu0 0.0
    %1608 = vmatpush1.msra.mxu0 %v1239
    %1609 = vmatprep.subr.mxu0 0.0
    %1610 = vmatpush1.msra.mxu0 %v1241
    %1611 = vmatprep.subr.mxu0 0.0
    %1612 = vmatpush1.msra.mxu0 %v1243
    %1613 = vmatprep.subr.mxu0 0.0
    %1614 = vmatpush1.msra.mxu0 %v1245
    %1615 = vmatprep.subr.mxu0 0.0
    %1616 = vmatpush1.msra.mxu0 %v1247
    %1617 = vmatprep.subr.mxu0 0.0
    %1618 = vmatpush1.msra.mxu0 %v1249
    %1619 = vmatprep.subr.mxu0 0.0
    %1620 = vmatpush1.msra.mxu0 %v1251
    %1621 = vmatprep.subr.mxu0 0.0
    %1622 = vmatpush1.msra.mxu0 %v1253
    %1623 = vmatprep.subr.mxu0 0.0
    %1624 = vmatpush1.msra.mxu0 %v1255
    %1625 = vmatprep.subr.mxu0 0.0
    %1626 = vmatpush1.msra.mxu0 %v1257
    %1627 = vmatprep.subr.mxu0 0.0
    %1628 = vmatpush1.msra.mxu0 %v1259
    %1629 = vmatprep.subr.mxu0 0.0
    %1630 = vmatpush1.msra.mxu0 %v1261
    %1631 = vmatprep.mubr.f32.mxu0 %v1265
    %1632 = vmatmul.mubr.f32.gmra.mrb[0].mxu0 %v1264
    %v1633 = vpop.f32.mrb[0].mxu0
    %v1634 = vadd.f32 %v1489, %v1633
    %v1635 = vpop.f32.mrb[0].mxu0
    %1636 = vmatprep.mubr.f32.mxu0 %v1269
    %1637 = vmatmul.mubr.f32.gmra.mrb[0].mxu0 %v1268
    %v1638 = vpop.f32.mrb[0].mxu0
    %v1639 = vadd.f32 %v1494, %v1638
    %v1640 = vpop.f32.mrb[0].mxu0
    %1641 = vmatprep.mubr.f32.mxu0 %v1273
    %1642 = vmatmul.mubr.f32.gmra.mrb[0].mxu0 %v1272
    %v1643 = vpop.f32.mrb[0].mxu0
    %v1644 = vadd.f32 %v1499, %v1643
    %v1645 = vpop.f32.mrb[0].mxu0
    %1646 = vmatprep.mubr.f32.mxu0 %v1277
    %1647 = vmatmul.mubr.f32.gmra.mrb[0].mxu0 %v1276
    %v1648 = vpop.f32.mrb[0].mxu0
    %v1649 = vadd.f32 %v1504, %v1648
    %v1650 = vpop.f32.mrb[0].mxu0
    %1651 = vmatprep.mubr.f32.mxu0 %v1281
    %1652 = vmatmul.mubr.f32.gmra.mrb[0].mxu0 %v1280
    %v1653 = vpop.f32.mrb[0].mxu0
    %v1654 = vadd.f32 %v1509, %v1653
    %v1655 = vpop.f32.mrb[0].mxu0
    %1656 = vmatprep.mubr.f32.mxu0 %v1285
    %1657 = vmatmul.mubr.f32.gmra.mrb[0].mxu0 %v1284
    %v1658 = vpop.f32.mrb[0].mxu0
    %v1659 = vadd.f32 %v1514, %v1658
    %v1660 = vpop.f32.mrb[0].mxu0
    %1661 = vmatprep.mubr.f32.mxu0 %v1289
    %1662 = vmatmul.mubr.f32.gmra.mrb[0].mxu0 %v1288
    %v1663 = vpop.f32.mrb[0].mxu0
    %v1664 = vadd.f32 %v1519, %v1663
    %v1665 = vpop.f32.mrb[0].mxu0
    %1666 = vmatprep.mubr.f32.mxu0 %v1293
    %1667 = vmatmul.mubr.f32.gmra.mrb[0].mxu0 %v1292
    %v1668 = vpop.f32.mrb[0].mxu0
    %v1669 = vadd.f32 %v1524, %v1668
    %v1670 = vpop.f32.mrb[0].mxu0
    %1671 = vmatprep.mubr.f32.mxu0 %v1297
    %1672 = vmatmul.mubr.f32.gmra.mrb[0].mxu0 %v1296
    %v1673 = vpop.f32.mrb[0].mxu0
    %v1674 = vadd.f32 %v1529, %v1673
    %v1675 = vpop.f32.mrb[0].mxu0
    %1676 = vmatprep.mubr.f32.mxu0 %v1301
    %1677 = vmatmul.mubr.f32.gmra.mrb[0].mxu0 %v1300
    %v1678 = vpop.f32.mrb[0].mxu0
    %v1679 = vadd.f32 %v1534, %v1678
    %v1680 = vpop.f32.mrb[0].mxu0
    %1681 = vmatprep.mubr.f32.mxu0 %v1305
    %1682 = vmatmul.mubr.f32.gmra.mrb[0].mxu0 %v1304
    %v1683 = vpop.f32.mrb[0].mxu0
    %v1684 = vadd.f32 %v1539, %v1683
    %v1685 = vpop.f32.mrb[0].mxu0
    %1686 = vmatprep.mubr.f32.mxu0 %v1309
    %1687 = vmatmul.mubr.f32.gmra.mrb[0].mxu0 %v1308
    %v1688 = vpop.f32.mrb[0].mxu0
    %v1689 = vadd.f32 %v1544, %v1688
    %v1690 = vpop.f32.mrb[0].mxu0
    %1691 = vmatprep.mubr.f32.mxu0 %v1313
    %1692 = vmatmul.mubr.f32.gmra.mrb[0].mxu0 %v1312
    %v1693 = vpop.f32.mrb[0].mxu0
    %v1694 = vadd.f32 %v1549, %v1693
    %v1695 = vpop.f32.mrb[0].mxu0
    %1696 = vmatprep.mubr.f32.mxu0 %v1317
    %1697 = vmatmul.mubr.f32.gmra.mrb[0].mxu0 %v1316
    %v1698 = vpop.f32.mrb[0].mxu0
    %v1699 = vadd.f32 %v1554, %v1698
    %v1700 = vpop.f32.mrb[0].mxu0
    %1701 = vmatprep.mubr.f32.mxu0 %v1321
    %1702 = vmatmul.mubr.f32.gmra.mrb[0].mxu0 %v1320
    %v1703 = vpop.f32.mrb[0].mxu0
    %v1704 = vadd.f32 %v1559, %v1703
    %v1705 = vpop.f32.mrb[0].mxu0
    %1706 = vmatprep.mubr.f32.mxu0 %v1325
    %1707 = vmatmul.mubr.f32.gmra.mrb[0].mxu0 %v1324
    %v1708 = vpop.f32.mrb[0].mxu0
    %v1709 = vadd.f32 %v1564, %v1708
    %v1710 = vpop.f32.mrb[0].mxu0
    %1711 = vdwg.mxu0
    %v1712 = vmax.f32 %v1634, 0.0
    %v1713 = vmax.f32 %v1639, 0.0
    %v1714 = vmax.f32 %v1644, 0.0
    %v1715 = vmax.f32 %v1649, 0.0
    %v1716 = vmax.f32 %v1654, 0.0
    %v1717 = vmax.f32 %v1659, 0.0
    %v1718 = vmax.f32 %v1664, 0.0
    %v1719 = vmax.f32 %v1669, 0.0
    %v1720 = vmax.f32 %v1674, 0.0
    %v1721 = vmax.f32 %v1679, 0.0
    %v1722 = vmax.f32 %v1684, 0.0
    %v1723 = vmax.f32 %v1689, 0.0
    %v1724 = vmax.f32 %v1694, 0.0
    %v1725 = vmax.f32 %v1699, 0.0
    %v1726 = vmax.f32 %v1704, 0.0
    %v1727 = vmax.f32 %v1709, 0.0
    %1728 = vrot.lane.b32.xlu0 %v1712, 127
    %v1729 = vpop.permute.xlu0 %1728
    %1730 = vrot.lane.b32.xlu0 %v1713, 127
    %v1731 = vpop.permute.xlu0 %1730
    %1732 = vrot.lane.b32.xlu0 %v1714, 127
    %v1733 = vpop.permute.xlu0 %1732
    %1734 = vrot.lane.b32.xlu0 %v1715, 127
    %v1735 = vpop.permute.xlu0 %1734
    %1736 = vrot.lane.b32.xlu0 %v1716, 127
    %v1737 = vpop.permute.xlu0 %1736
    %1738 = vrot.lane.b32.xlu0 %v1717, 127
    %v1739 = vpop.permute.xlu0 %1738
    %1740 = vrot.lane.b32.xlu0 %v1718, 127
    %v1741 = vpop.permute.xlu0 %1740
    %1742 = vrot.lane.b32.xlu0 %v1719, 127
    %v1743 = vpop.permute.xlu0 %1742
    %1744 = vrot.lane.b32.xlu0 %v1720, 127
    %v1745 = vpop.permute.xlu0 %1744
    %1746 = vrot.lane.b32.xlu0 %v1721, 127
    %v1747 = vpop.permute.xlu0 %1746
    %1748 = vrot.lane.b32.xlu0 %v1722, 127
    %v1749 = vpop.permute.xlu0 %1748
    %1750 = vrot.lane.b32.xlu0 %v1723, 127
    %v1751 = vpop.permute.xlu0 %1750
    %1752 = vrot.lane.b32.xlu0 %v1724, 127
    %v1753 = vpop.permute.xlu0 %1752
    %1754 = vrot.lane.b32.xlu0 %v1725, 127
    %v1755 = vpop.permute.xlu0 %1754
    %1756 = vrot.lane.b32.xlu0 %v1726, 127
    %v1757 = vpop.permute.xlu0 %1756
    %1758 = vrot.lane.b32.xlu0 %v1727, 127
    %v1759 = vpop.permute.xlu0 %1758
    %1760 = vrot.lane.b32.xlu0 %v1712, 126
    %v1761 = vpop.permute.xlu0 %1760
    %1762 = vrot.lane.b32.xlu0 %v1713, 126
    %v1763 = vpop.permute.xlu0 %1762
    %1764 = vrot.lane.b32.xlu0 %v1714, 126
    %v1765 = vpop.permute.xlu0 %1764
    %1766 = vrot.lane.b32.xlu0 %v1715, 126
    %v1767 = vpop.permute.xlu0 %1766
    %1768 = vrot.lane.b32.xlu0 %v1716, 126
    %v1769 = vpop.permute.xlu0 %1768
    %1770 = vrot.lane.b32.xlu0 %v1717, 126
    %v1771 = vpop.permute.xlu0 %1770
    %1772 = vrot.lane.b32.xlu0 %v1718, 126
    %v1773 = vpop.permute.xlu0 %1772
    %1774 = vrot.lane.b32.xlu0 %v1719, 126
    %v1775 = vpop.permute.xlu0 %1774
    %1776 = vrot.lane.b32.xlu0 %v1720, 126
    %v1777 = vpop.permute.xlu0 %1776
    %1778 = vrot.lane.b32.xlu0 %v1721, 126
    %v1779 = vpop.permute.xlu0 %1778
    %1780 = vrot.lane.b32.xlu0 %v1722, 126
    %v1781 = vpop.permute.xlu0 %1780
    %1782 = vrot.lane.b32.xlu0 %v1723, 126
    %v1783 = vpop.permute.xlu0 %1782
    %1784 = vrot.lane.b32.xlu0 %v1724, 126
    %v1785 = vpop.permute.xlu0 %1784
    %1786 = vrot.lane.b32.xlu0 %v1725, 126
    %v1787 = vpop.permute.xlu0 %1786
    %1788 = vrot.lane.b32.xlu0 %v1726, 126
    %v1789 = vpop.permute.xlu0 %1788
    %1790 = vrot.lane.b32.xlu0 %v1727, 126
    %v1791 = vpop.permute.xlu0 %1790
    %1792 = vrot.lane.b32.xlu0 %v1712, 125
    %v1793 = vpop.permute.xlu0 %1792
    %1794 = vrot.lane.b32.xlu0 %v1713, 125
    %v1795 = vpop.permute.xlu0 %1794
    %1796 = vrot.lane.b32.xlu0 %v1714, 125
    %v1797 = vpop.permute.xlu0 %1796
    %1798 = vrot.lane.b32.xlu0 %v1715, 125
    %v1799 = vpop.permute.xlu0 %1798
    %1800 = vrot.lane.b32.xlu0 %v1716, 125
    %v1801 = vpop.permute.xlu0 %1800
    %1802 = vrot.lane.b32.xlu0 %v1717, 125
    %v1803 = vpop.permute.xlu0 %1802
    %1804 = vrot.lane.b32.xlu0 %v1718, 125
    %v1805 = vpop.permute.xlu0 %1804
    %1806 = vrot.lane.b32.xlu0 %v1719, 125
    %v1807 = vpop.permute.xlu0 %1806
    %1808 = vrot.lane.b32.xlu0 %v1720, 125
    %v1809 = vpop.permute.xlu0 %1808
    %1810 = vrot.lane.b32.xlu0 %v1721, 125
    %v1811 = vpop.permute.xlu0 %1810
    %1812 = vrot.lane.b32.xlu0 %v1722, 125
    %v1813 = vpop.permute.xlu0 %1812
    %1814 = vrot.lane.b32.xlu0 %v1723, 125
    %v1815 = vpop.permute.xlu0 %1814
    %1816 = vrot.lane.b32.xlu0 %v1724, 125
    %v1817 = vpop.permute.xlu0 %1816
    %1818 = vrot.lane.b32.xlu0 %v1725, 125
    %v1819 = vpop.permute.xlu0 %1818
    %1820 = vrot.lane.b32.xlu0 %v1726, 125
    %v1821 = vpop.permute.xlu0 %1820
    %1822 = vrot.lane.b32.xlu0 %v1727, 125
    %v1823 = vpop.permute.xlu0 %1822
    %v1824 = vld [vmem:[%s25] sm:$0xff]
    %v1825 = vld [vmem:[%s25 + $0x8] sm:$0xff]
    %v1826 = vld [vmem:[%s25 + $0x10] sm:$0xff]
    %v1827 = vld [vmem:[%s25 + $0x18] sm:$0xff]
    %v1828 = vld [vmem:[%s25 + $0x20] sm:$0xff]
    %v1829 = vld [vmem:[%s25 + $0x28] sm:$0xff]
    %v1830 = vld [vmem:[%s25 + $0x30] sm:$0xff]
    %v1831 = vld [vmem:[%s25 + $0x38] sm:$0xff]
    %v1832 = vld [vmem:[%s25 + $0x40] sm:$0xff]
    %v1833 = vld [vmem:[%s25 + $0x48] sm:$0xff]
    %v1834 = vld [vmem:[%s25 + $0x50] sm:$0xff]
    %v1835 = vld [vmem:[%s25 + $0x58] sm:$0xff]
    %v1836 = vld [vmem:[%s25 + $0x60] sm:$0xff]
    %v1837 = vld [vmem:[%s25 + $0x68] sm:$0xff]
    %v1838 = vld [vmem:[%s25 + $0x70] sm:$0xff]
    %v1839 = vld [vmem:[%s25 + $0x78] sm:$0xff]
    %v1840 = vld [vmem:[%s25 + $0x80] sm:$0xff]
    %v1841 = vld [vmem:[%s25 + $0x88] sm:$0xff]
    %v1842 = vld [vmem:[%s25 + $0x90] sm:$0xff]
    %v1843 = vld [vmem:[%s25 + $0x98] sm:$0xff]
    %v1844 = vld [vmem:[%s25 + $0xa0] sm:$0xff]
    %v1845 = vld [vmem:[%s25 + $0xa8] sm:$0xff]
    %v1846 = vld [vmem:[%s25 + $0xb0] sm:$0xff]
    %v1847 = vld [vmem:[%s25 + $0xb8] sm:$0xff]
    %v1848 = vld [vmem:[%s25 + $0xc0] sm:$0xff]
    %v1849 = vld [vmem:[%s25 + $0xc8] sm:$0xff]
    %v1850 = vld [vmem:[%s25 + $0xd0] sm:$0xff]
    %v1851 = vld [vmem:[%s25 + $0xd8] sm:$0xff]
    %v1852 = vld [vmem:[%s25 + $0xe0] sm:$0xff]
    %v1853 = vld [vmem:[%s25 + $0xe8] sm:$0xff]
    %v1854 = vld [vmem:[%s25 + $0xf0] sm:$0xff]
    %v1855 = vld [vmem:[%s25 + $0xf8] sm:$0xff]
    %v1856 = vld [vmem:[%s25 + $0x100] sm:$0xff]
    %v1857 = vld [vmem:[%s25 + $0x108] sm:$0xff]
    %v1858 = vld [vmem:[%s25 + $0x110] sm:$0xff]
    %v1859 = vld [vmem:[%s25 + $0x118] sm:$0xff]
    %v1860 = vld [vmem:[%s25 + $0x120] sm:$0xff]
    %v1861 = vld [vmem:[%s25 + $0x128] sm:$0xff]
    %v1862 = vld [vmem:[%s25 + $0x130] sm:$0xff]
    %v1863 = vld [vmem:[%s25 + $0x138] sm:$0xff]
    %v1864 = vld [vmem:[%s25 + $0x140] sm:$0xff]
    %v1865 = vld [vmem:[%s25 + $0x148] sm:$0xff]
    %v1866 = vld [vmem:[%s25 + $0x150] sm:$0xff]
    %v1867 = vld [vmem:[%s25 + $0x158] sm:$0xff]
    %v1868 = vld [vmem:[%s25 + $0x160] sm:$0xff]
    %v1869 = vld [vmem:[%s25 + $0x168] sm:$0xff]
    %v1870 = vld [vmem:[%s25 + $0x170] sm:$0xff]
    %v1871 = vld [vmem:[%s25 + $0x178] sm:$0xff]
    %v1872 = vld [vmem:[%s25 + $0x180] sm:$0xff]
    %v1873 = vld [vmem:[%s25 + $0x188] sm:$0xff]
    %v1874 = vld [vmem:[%s25 + $0x190] sm:$0xff]
    %v1875 = vld [vmem:[%s25 + $0x198] sm:$0xff]
    %v1876 = vld [vmem:[%s25 + $0x1a0] sm:$0xff]
    %v1877 = vld [vmem:[%s25 + $0x1a8] sm:$0xff]
    %v1878 = vld [vmem:[%s25 + $0x1b0] sm:$0xff]
    %v1879 = vld [vmem:[%s25 + $0x1b8] sm:$0xff]
    %v1880 = vld [vmem:[%s25 + $0x1c0] sm:$0xff]
    %v1881 = vld [vmem:[%s25 + $0x1c8] sm:$0xff]
    %v1882 = vld [vmem:[%s25 + $0x1d0] sm:$0xff]
    %v1883 = vld [vmem:[%s25 + $0x1d8] sm:$0xff]
    %v1884 = vld [vmem:[%s25 + $0x1e0] sm:$0xff]
    %v1885 = vld [vmem:[%s25 + $0x1e8] sm:$0xff]
    %v1886 = vld [vmem:[%s25 + $0x1f0] sm:$0xff]
    %v1887 = vld [vmem:[%s25 + $0x1f8] sm:$0xff]
    %v1888 = vld [vmem:[%s27] sm:$0xff]
    %v1889 = vld [vmem:[%s27 + $0x8] sm:$0xff]
    %v1890 = vld [vmem:[%s27 + $0x10] sm:$0xff]
    %v1891 = vld [vmem:[%s27 + $0x18] sm:$0xff]
    %v1892 = vld [vmem:[%s27 + $0x20] sm:$0xff]
    %v1893 = vld [vmem:[%s27 + $0x28] sm:$0xff]
    %v1894 = vld [vmem:[%s27 + $0x30] sm:$0xff]
    %v1895 = vld [vmem:[%s27 + $0x38] sm:$0xff]
    %v1896 = vld [vmem:[%s27 + $0x40] sm:$0xff]
    %v1897 = vld [vmem:[%s27 + $0x48] sm:$0xff]
    %v1898 = vld [vmem:[%s27 + $0x50] sm:$0xff]
    %v1899 = vld [vmem:[%s27 + $0x58] sm:$0xff]
    %v1900 = vld [vmem:[%s27 + $0x60] sm:$0xff]
    %v1901 = vld [vmem:[%s27 + $0x68] sm:$0xff]
    %v1902 = vld [vmem:[%s27 + $0x70] sm:$0xff]
    %v1903 = vld [vmem:[%s27 + $0x78] sm:$0xff]
    %1905 = vset.pattern.permute.xlu0 0
    %1906 = vperm.xlu0 %1905, %v1888
    %v1907 = vpop.permute.xlu0 %1906
    %1910 = vset.pattern.permute.xlu0 0
    %1911 = vperm.xlu0 %1910, %v1889
    %v1912 = vpop.permute.xlu0 %1911
    %1915 = vset.pattern.permute.xlu0 0
    %1916 = vperm.xlu0 %1915, %v1890
    %v1917 = vpop.permute.xlu0 %1916
    %1920 = vset.pattern.permute.xlu0 0
    %1921 = vperm.xlu0 %1920, %v1891
    %v1922 = vpop.permute.xlu0 %1921
    %1925 = vset.pattern.permute.xlu0 0
    %1926 = vperm.xlu0 %1925, %v1892
    %v1927 = vpop.permute.xlu0 %1926
    %1930 = vset.pattern.permute.xlu0 0
    %1931 = vperm.xlu0 %1930, %v1893
    %v1932 = vpop.permute.xlu0 %1931
    %1935 = vset.pattern.permute.xlu0 0
    %1936 = vperm.xlu0 %1935, %v1894
    %v1937 = vpop.permute.xlu0 %1936
    %1940 = vset.pattern.permute.xlu0 0
    %1941 = vperm.xlu0 %1940, %v1895
    %v1942 = vpop.permute.xlu0 %1941
    %1945 = vset.pattern.permute.xlu0 0
    %1946 = vperm.xlu0 %1945, %v1896
    %v1947 = vpop.permute.xlu0 %1946
    %1950 = vset.pattern.permute.xlu0 0
    %1951 = vperm.xlu0 %1950, %v1897
    %v1952 = vpop.permute.xlu0 %1951
    %1955 = vset.pattern.permute.xlu0 0
    %1956 = vperm.xlu0 %1955, %v1898
    %v1957 = vpop.permute.xlu0 %1956
    %1960 = vset.pattern.permute.xlu0 0
    %1961 = vperm.xlu0 %1960, %v1899
    %v1962 = vpop.permute.xlu0 %1961
    %1965 = vset.pattern.permute.xlu0 0
    %1966 = vperm.xlu0 %1965, %v1900
    %v1967 = vpop.permute.xlu0 %1966
    %1970 = vset.pattern.permute.xlu0 0
    %1971 = vperm.xlu0 %1970, %v1901
    %v1972 = vpop.permute.xlu0 %1971
    %1975 = vset.pattern.permute.xlu0 0
    %1976 = vperm.xlu0 %1975, %v1902
    %v1977 = vpop.permute.xlu0 %1976
    %1980 = vset.pattern.permute.xlu0 0
    %1981 = vperm.xlu0 %1980, %v1903
    %v1982 = vpop.permute.xlu0 %1981
    %1984 = vmatprep.subr.mxu0 0.0
    %1985 = vmatpush1.msra.mxu0 %v1712
    %1986 = vmatprep.subr.mxu0 0.0
    %1987 = vmatpush1.msra.mxu0 %v1713
    %1988 = vmatprep.subr.mxu0 0.0
    %1989 = vmatpush1.msra.mxu0 %v1714
    %1990 = vmatprep.subr.mxu0 0.0
    %1991 = vmatpush1.msra.mxu0 %v1715
    %1992 = vmatprep.subr.mxu0 0.0
    %1993 = vmatpush1.msra.mxu0 %v1716
    %1994 = vmatprep.subr.mxu0 0.0
    %1995 = vmatpush1.msra.mxu0 %v1717
    %1996 = vmatprep.subr.mxu0 0.0
    %1997 = vmatpush1.msra.mxu0 %v1718
    %1998 = vmatprep.subr.mxu0 0.0
    %1999 = vmatpush1.msra.mxu0 %v1719
    %2000 = vmatprep.subr.mxu0 0.0
    %2001 = vmatpush1.msra.mxu0 %v1720
    %2002 = vmatprep.subr.mxu0 0.0
    %2003 = vmatpush1.msra.mxu0 %v1721
    %2004 = vmatprep.subr.mxu0 0.0
    %2005 = vmatpush1.msra.mxu0 %v1722
    %2006 = vmatprep.subr.mxu0 0.0
    %2007 = vmatpush1.msra.mxu0 %v1723
    %2008 = vmatprep.subr.mxu0 0.0
    %2009 = vmatpush1.msra.mxu0 %v1724
    %2010 = vmatprep.subr.mxu0 0.0
    %2011 = vmatpush1.msra.mxu0 %v1725
    %2012 = vmatprep.subr.mxu0 0.0
    %2013 = vmatpush1.msra.mxu0 %v1726
    %2014 = vmatprep.subr.mxu0 0.0
    %2015 = vmatpush1.msra.mxu0 %v1727
    %2016 = vmatprep.subr.mxu0 0.0
    %2017 = vmatpush1.msra.mxu0 %v1729
    %2018 = vmatprep.subr.mxu0 0.0
    %2019 = vmatpush1.msra.mxu0 %v1731
    %2020 = vmatprep.subr.mxu0 0.0
    %2021 = vmatpush1.msra.mxu0 %v1733
    %2022 = vmatprep.subr.mxu0 0.0
    %2023 = vmatpush1.msra.mxu0 %v1735
    %2024 = vmatprep.subr.mxu0 0.0
    %2025 = vmatpush1.msra.mxu0 %v1737
    %2026 = vmatprep.subr.mxu0 0.0
    %2027 = vmatpush1.msra.mxu0 %v1739
    %2028 = vmatprep.subr.mxu0 0.0
    %2029 = vmatpush1.msra.mxu0 %v1741
    %2030 = vmatprep.subr.mxu0 0.0
    %2031 = vmatpush1.msra.mxu0 %v1743
    %2032 = vmatprep.subr.mxu0 0.0
    %2033 = vmatpush1.msra.mxu0 %v1745
    %2034 = vmatprep.subr.mxu0 0.0
    %2035 = vmatpush1.msra.mxu0 %v1747
    %2036 = vmatprep.subr.mxu0 0.0
    %2037 = vmatpush1.msra.mxu0 %v1749
    %2038 = vmatprep.subr.mxu0 0.0
    %2039 = vmatpush1.msra.mxu0 %v1751
    %2040 = vmatprep.subr.mxu0 0.0
    %2041 = vmatpush1.msra.mxu0 %v1753
    %2042 = vmatprep.subr.mxu0 0.0
    %2043 = vmatpush1.msra.mxu0 %v1755
    %2044 = vmatprep.subr.mxu0 0.0
    %2045 = vmatpush1.msra.mxu0 %v1757
    %2046 = vmatprep.subr.mxu0 0.0
    %2047 = vmatpush1.msra.mxu0 %v1759
    %2048 = vmatprep.mubr.f32.mxu0 %v1825
    %2049 = vmatmul.mubr.f32.gmra.mrb[0].mxu0 %v1824
    %v2050 = vpop.f32.mrb[0].mxu0
    %v2051 = vadd.f32 %v1907, %v2050
    %v2052 = vpop.f32.mrb[0].mxu0
    %2053 = vmatprep.mubr.f32.mxu0 %v1829
    %2054 = vmatmul.mubr.f32.gmra.mrb[0].mxu0 %v1828
    %v2055 = vpop.f32.mrb[0].mxu0
    %v2056 = vadd.f32 %v1912, %v2055
    %v2057 = vpop.f32.mrb[0].mxu0
    %2058 = vmatprep.mubr.f32.mxu0 %v1833
    %2059 = vmatmul.mubr.f32.gmra.mrb[0].mxu0 %v1832
    %v2060 = vpop.f32.mrb[0].mxu0
    %v2061 = vadd.f32 %v1917, %v2060
    %v2062 = vpop.f32.mrb[0].mxu0
    %2063 = vmatprep.mubr.f32.mxu0 %v1837
    %2064 = vmatmul.mubr.f32.gmra.mrb[0].mxu0 %v1836
    %v2065 = vpop.f32.mrb[0].mxu0
    %v2066 = vadd.f32 %v1922, %v2065
    %v2067 = vpop.f32.mrb[0].mxu0
    %2068 = vmatprep.mubr.f32.mxu0 %v1841
    %2069 = vmatmul.mubr.f32.gmra.mrb[0].mxu0 %v1840
    %v2070 = vpop.f32.mrb[0].mxu0
    %v2071 = vadd.f32 %v1927, %v2070
    %v2072 = vpop.f32.mrb[0].mxu0
    %2073 = vmatprep.mubr.f32.mxu0 %v1845
    %2074 = vmatmul.mubr.f32.gmra.mrb[0].mxu0 %v1844
    %v2075 = vpop.f32.mrb[0].mxu0
    %v2076 = vadd.f32 %v1932, %v2075
    %v2077 = vpop.f32.mrb[0].mxu0
    %2078 = vmatprep.mubr.f32.mxu0 %v1849
    %2079 = vmatmul.mubr.f32.gmra.mrb[0].mxu0 %v1848
    %v2080 = vpop.f32.mrb[0].mxu0
    %v2081 = vadd.f32 %v1937, %v2080
    %v2082 = vpop.f32.mrb[0].mxu0
    %2083 = vmatprep.mubr.f32.mxu0 %v1853
    %2084 = vmatmul.mubr.f32.gmra.mrb[0].mxu0 %v1852
    %v2085 = vpop.f32.mrb[0].mxu0
    %v2086 = vadd.f32 %v1942, %v2085
    %v2087 = vpop.f32.mrb[0].mxu0
    %2088 = vmatprep.mubr.f32.mxu0 %v1857
    %2089 = vmatmul.mubr.f32.gmra.mrb[0].mxu0 %v1856
    %v2090 = vpop.f32.mrb[0].mxu0
    %v2091 = vadd.f32 %v1947, %v2090
    %v2092 = vpop.f32.mrb[0].mxu0
    %2093 = vmatprep.mubr.f32.mxu0 %v1861
    %2094 = vmatmul.mubr.f32.gmra.mrb[0].mxu0 %v1860
    %v2095 = vpop.f32.mrb[0].mxu0
    %v2096 = vadd.f32 %v1952, %v2095
    %v2097 = vpop.f32.mrb[0].mxu0
    %2098 = vmatprep.mubr.f32.mxu0 %v1865
    %2099 = vmatmul.mubr.f32.gmra.mrb[0].mxu0 %v1864
    %v2100 = vpop.f32.mrb[0].mxu0
    %v2101 = vadd.f32 %v1957, %v2100
    %v2102 = vpop.f32.mrb[0].mxu0
    %2103 = vmatprep.mubr.f32.mxu0 %v1869
    %2104 = vmatmul.mubr.f32.gmra.mrb[0].mxu0 %v1868
    %v2105 = vpop.f32.mrb[0].mxu0
    %v2106 = vadd.f32 %v1962, %v2105
    %v2107 = vpop.f32.mrb[0].mxu0
    %2108 = vmatprep.mubr.f32.mxu0 %v1873
    %2109 = vmatmul.mubr.f32.gmra.mrb[0].mxu0 %v1872
    %v2110 = vpop.f32.mrb[0].mxu0
    %v2111 = vadd.f32 %v1967, %v2110
    %v2112 = vpop.f32.mrb[0].mxu0
    %2113 = vmatprep.mubr.f32.mxu0 %v1877
    %2114 = vmatmul.mubr.f32.gmra.mrb[0].mxu0 %v1876
    %v2115 = vpop.f32.mrb[0].mxu0
    %v2116 = vadd.f32 %v1972, %v2115
    %v2117 = vpop.f32.mrb[0].mxu0
    %2118 = vmatprep.mubr.f32.mxu0 %v1881
    %2119 = vmatmul.mubr.f32.gmra.mrb[0].mxu0 %v1880
    %v2120 = vpop.f32.mrb[0].mxu0
    %v2121 = vadd.f32 %v1977, %v2120
    %v2122 = vpop.f32.mrb[0].mxu0
    %2123 = vmatprep.mubr.f32.mxu0 %v1885
    %2124 = vmatmul.mubr.f32.gmra.mrb[0].mxu0 %v1884
    %v2125 = vpop.f32.mrb[0].mxu0
    %v2126 = vadd.f32 %v1982, %v2125
    %v2127 = vpop.f32.mrb[0].mxu0
    %2128 = vdwg.mxu0
    %2129 = vmatprep.subr.mxu0 0.0
    %2130 = vmatpush1.msra.mxu0 %v1761
    %2131 = vmatprep.subr.mxu0 0.0
    %2132 = vmatpush1.msra.mxu0 %v1763
    %2133 = vmatprep.subr.mxu0 0.0
    %2134 = vmatpush1.msra.mxu0 %v1765
    %2135 = vmatprep.subr.mxu0 0.0
    %2136 = vmatpush1.msra.mxu0 %v1767
    %2137 = vmatprep.subr.mxu0 0.0
    %2138 = vmatpush1.msra.mxu0 %v1769
    %2139 = vmatprep.subr.mxu0 0.0
    %2140 = vmatpush1.msra.mxu0 %v1771
    %2141 = vmatprep.subr.mxu0 0.0
    %2142 = vmatpush1.msra.mxu0 %v1773
    %2143 = vmatprep.subr.mxu0 0.0
    %2144 = vmatpush1.msra.mxu0 %v1775
    %2145 = vmatprep.subr.mxu0 0.0
    %2146 = vmatpush1.msra.mxu0 %v1777
    %2147 = vmatprep.subr.mxu0 0.0
    %2148 = vmatpush1.msra.mxu0 %v1779
    %2149 = vmatprep.subr.mxu0 0.0
    %2150 = vmatpush1.msra.mxu0 %v1781
    %2151 = vmatprep.subr.mxu0 0.0
    %2152 = vmatpush1.msra.mxu0 %v1783
    %2153 = vmatprep.subr.mxu0 0.0
    %2154 = vmatpush1.msra.mxu0 %v1785
    %2155 = vmatprep.subr.mxu0 0.0
    %2156 = vmatpush1.msra.mxu0 %v1787
    %2157 = vmatprep.subr.mxu0 0.0
    %2158 = vmatpush1.msra.mxu0 %v1789
    %2159 = vmatprep.subr.mxu0 0.0
    %2160 = vmatpush1.msra.mxu0 %v1791
    %2161 = vmatprep.subr.mxu0 0.0
    %2162 = vmatpush1.msra.mxu0 %v1793
    %2163 = vmatprep.subr.mxu0 0.0
    %2164 = vmatpush1.msra.mxu0 %v1795
    %2165 = vmatprep.subr.mxu0 0.0
    %2166 = vmatpush1.msra.mxu0 %v1797
    %2167 = vmatprep.subr.mxu0 0.0
    %2168 = vmatpush1.msra.mxu0 %v1799
    %2169 = vmatprep.subr.mxu0 0.0
    %2170 = vmatpush1.msra.mxu0 %v1801
    %2171 = vmatprep.subr.mxu0 0.0
    %2172 = vmatpush1.msra.mxu0 %v1803
    %2173 = vmatprep.subr.mxu0 0.0
    %2174 = vmatpush1.msra.mxu0 %v1805
    %2175 = vmatprep.subr.mxu0 0.0
    %2176 = vmatpush1.msra.mxu0 %v1807
    %2177 = vmatprep.subr.mxu0 0.0
    %2178 = vmatpush1.msra.mxu0 %v1809
    %2179 = vmatprep.subr.mxu0 0.0
    %2180 = vmatpush1.msra.mxu0 %v1811
    %2181 = vmatprep.subr.mxu0 0.0
    %2182 = vmatpush1.msra.mxu0 %v1813
    %2183 = vmatprep.subr.mxu0 0.0
    %2184 = vmatpush1.msra.mxu0 %v1815
    %2185 = vmatprep.subr.mxu0 0.0
    %2186 = vmatpush1.msra.mxu0 %v1817
    %2187 = vmatprep.subr.mxu0 0.0
    %2188 = vmatpush1.msra.mxu0 %v1819
    %2189 = vmatprep.subr.mxu0 0.0
    %2190 = vmatpush1.msra.mxu0 %v1821
    %2191 = vmatprep.subr.mxu0 0.0
    %2192 = vmatpush1.msra.mxu0 %v1823
    %2193 = vmatprep.mubr.f32.mxu0 %v1827
    %2194 = vmatmul.mubr.f32.gmra.mrb[0].mxu0 %v1826
    %v2195 = vpop.f32.mrb[0].mxu0
    %v2196 = vadd.f32 %v2051, %v2195
    %v2197 = vpop.f32.mrb[0].mxu0
    %2198 = vmatprep.mubr.f32.mxu0 %v1831
    %2199 = vmatmul.mubr.f32.gmra.mrb[0].mxu0 %v1830
    %v2200 = vpop.f32.mrb[0].mxu0
    %v2201 = vadd.f32 %v2056, %v2200
    %v2202 = vpop.f32.mrb[0].mxu0
    %2203 = vmatprep.mubr.f32.mxu0 %v1835
    %2204 = vmatmul.mubr.f32.gmra.mrb[0].mxu0 %v1834
    %v2205 = vpop.f32.mrb[0].mxu0
    %v2206 = vadd.f32 %v2061, %v2205
    %v2207 = vpop.f32.mrb[0].mxu0
    %2208 = vmatprep.mubr.f32.mxu0 %v1839
    %2209 = vmatmul.mubr.f32.gmra.mrb[0].mxu0 %v1838
    %v2210 = vpop.f32.mrb[0].mxu0
    %v2211 = vadd.f32 %v2066, %v2210
    %v2212 = vpop.f32.mrb[0].mxu0
    %2213 = vmatprep.mubr.f32.mxu0 %v1843
    %2214 = vmatmul.mubr.f32.gmra.mrb[0].mxu0 %v1842
    %v2215 = vpop.f32.mrb[0].mxu0
    %v2216 = vadd.f32 %v2071, %v2215
    %v2217 = vpop.f32.mrb[0].mxu0
    %2218 = vmatprep.mubr.f32.mxu0 %v1847
    %2219 = vmatmul.mubr.f32.gmra.mrb[0].mxu0 %v1846
    %v2220 = vpop.f32.mrb[0].mxu0
    %v2221 = vadd.f32 %v2076, %v2220
    %v2222 = vpop.f32.mrb[0].mxu0
    %2223 = vmatprep.mubr.f32.mxu0 %v1851
    %2224 = vmatmul.mubr.f32.gmra.mrb[0].mxu0 %v1850
    %v2225 = vpop.f32.mrb[0].mxu0
    %v2226 = vadd.f32 %v2081, %v2225
    %v2227 = vpop.f32.mrb[0].mxu0
    %2228 = vmatprep.mubr.f32.mxu0 %v1855
    %2229 = vmatmul.mubr.f32.gmra.mrb[0].mxu0 %v1854
    %v2230 = vpop.f32.mrb[0].mxu0
    %v2231 = vadd.f32 %v2086, %v2230
    %v2232 = vpop.f32.mrb[0].mxu0
    %2233 = vmatprep.mubr.f32.mxu0 %v1859
    %2234 = vmatmul.mubr.f32.gmra.mrb[0].mxu0 %v1858
    %v2235 = vpop.f32.mrb[0].mxu0
    %v2236 = vadd.f32 %v2091, %v2235
    %v2237 = vpop.f32.mrb[0].mxu0
    %2238 = vmatprep.mubr.f32.mxu0 %v1863
    %2239 = vmatmul.mubr.f32.gmra.mrb[0].mxu0 %v1862
    %v2240 = vpop.f32.mrb[0].mxu0
    %v2241 = vadd.f32 %v2096, %v2240
    %v2242 = vpop.f32.mrb[0].mxu0
    %2243 = vmatprep.mubr.f32.mxu0 %v1867
    %2244 = vmatmul.mubr.f32.gmra.mrb[0].mxu0 %v1866
    %v2245 = vpop.f32.mrb[0].mxu0
    %v2246 = vadd.f32 %v2101, %v2245
    %v2247 = vpop.f32.mrb[0].mxu0
    %2248 = vmatprep.mubr.f32.mxu0 %v1871
    %2249 = vmatmul.mubr.f32.gmra.mrb[0].mxu0 %v1870
    %v2250 = vpop.f32.mrb[0].mxu0
    %v2251 = vadd.f32 %v2106, %v2250
    %v2252 = vpop.f32.mrb[0].mxu0
    %2253 = vmatprep.mubr.f32.mxu0 %v1875
    %2254 = vmatmul.mubr.f32.gmra.mrb[0].mxu0 %v1874
    %v2255 = vpop.f32.mrb[0].mxu0
    %v2256 = vadd.f32 %v2111, %v2255
    %v2257 = vpop.f32.mrb[0].mxu0
    %2258 = vmatprep.mubr.f32.mxu0 %v1879
    %2259 = vmatmul.mubr.f32.gmra.mrb[0].mxu0 %v1878
    %v2260 = vpop.f32.mrb[0].mxu0
    %v2261 = vadd.f32 %v2116, %v2260
    %v2262 = vpop.f32.mrb[0].mxu0
    %2263 = vmatprep.mubr.f32.mxu0 %v1883
    %2264 = vmatmul.mubr.f32.gmra.mrb[0].mxu0 %v1882
    %v2265 = vpop.f32.mrb[0].mxu0
    %v2266 = vadd.f32 %v2121, %v2265
    %v2267 = vpop.f32.mrb[0].mxu0
    %2268 = vmatprep.mubr.f32.mxu0 %v1887
    %2269 = vmatmul.mubr.f32.gmra.mrb[0].mxu0 %v1886
    %v2270 = vpop.f32.mrb[0].mxu0
    %v2271 = vadd.f32 %v2126, %v2270
    %v2272 = vpop.f32.mrb[0].mxu0
    %2273 = vdwg.mxu0
    %v2274 = vmax.f32 %v2196, 0.0
    %v2275 = vmax.f32 %v2201, 0.0
    %v2276 = vmax.f32 %v2206, 0.0
    %v2277 = vmax.f32 %v2211, 0.0
    %v2278 = vmax.f32 %v2216, 0.0
    %v2279 = vmax.f32 %v2221, 0.0
    %v2280 = vmax.f32 %v2226, 0.0
    %v2281 = vmax.f32 %v2231, 0.0
    %v2282 = vmax.f32 %v2236, 0.0
    %v2283 = vmax.f32 %v2241, 0.0
    %v2284 = vmax.f32 %v2246, 0.0
    %v2285 = vmax.f32 %v2251, 0.0
    %v2286 = vmax.f32 %v2256, 0.0
    %v2287 = vmax.f32 %v2261, 0.0
    %v2288 = vmax.f32 %v2266, 0.0
    %v2289 = vmax.f32 %v2271, 0.0
    %vm2290 = vcmp.lt.s32.totalorder %v599, 119
    %v2291 = vsel %vm2290, %v2274, -inf
    %v2292 = vsel %vm2290, %v2275, -inf
    %v2293 = vsel %vm2290, %v2276, -inf
    %v2294 = vsel %vm2290, %v2277, -inf
    %v2295 = vsel %vm2290, %v2278, -inf
    %v2296 = vsel %vm2290, %v2279, -inf
    %v2297 = vsel %vm2290, %v2280, -inf
    %v2298 = vsel %vm2290, %v2281, -inf
    %v2299 = vsel %vm2290, %v2282, -inf
    %v2300 = vsel %vm2290, %v2283, -inf
    %v2301 = vsel %vm2290, %v2284, -inf
    %v2302 = vsel %vm2290, %v2285, -inf
    %v2303 = vsel %vm2290, %v2286, -inf
    %v2304 = vsel %vm2290, %v2287, -inf
    %v2305 = vsel %vm2290, %v2288, -inf
    %v2306 = vsel %vm2290, %v2289, -inf
    %2307 = vmax.xlane.f32.xlu0 %v2291
    %v2308 = vpop.xlane.xlu0 %2307
    %2309 = vmax.xlane.f32.xlu0 %v2292
    %v2310 = vpop.xlane.xlu0 %2309
    %2311 = vmax.xlane.f32.xlu0 %v2293
    %v2312 = vpop.xlane.xlu0 %2311
    %2313 = vmax.xlane.f32.xlu0 %v2294
    %v2314 = vpop.xlane.xlu0 %2313
    %2315 = vmax.xlane.f32.xlu0 %v2295
    %v2316 = vpop.xlane.xlu0 %2315
    %2317 = vmax.xlane.f32.xlu0 %v2296
    %v2318 = vpop.xlane.xlu0 %2317
    %2319 = vmax.xlane.f32.xlu0 %v2297
    %v2320 = vpop.xlane.xlu0 %2319
    %2321 = vmax.xlane.f32.xlu0 %v2298
    %v2322 = vpop.xlane.xlu0 %2321
    %2323 = vmax.xlane.f32.xlu0 %v2299
    %v2324 = vpop.xlane.xlu0 %2323
    %2325 = vmax.xlane.f32.xlu0 %v2300
    %v2326 = vpop.xlane.xlu0 %2325
    %2327 = vmax.xlane.f32.xlu0 %v2301
    %v2328 = vpop.xlane.xlu0 %2327
    %2329 = vmax.xlane.f32.xlu0 %v2302
    %v2330 = vpop.xlane.xlu0 %2329
    %2331 = vmax.xlane.f32.xlu0 %v2303
    %v2332 = vpop.xlane.xlu0 %2331
    %2333 = vmax.xlane.f32.xlu0 %v2304
    %v2334 = vpop.xlane.xlu0 %2333
    %2335 = vmax.xlane.f32.xlu0 %v2305
    %v2336 = vpop.xlane.xlu0 %2335
    %2337 = vmax.xlane.f32.xlu0 %v2306
    %v2338 = vpop.xlane.xlu0 %2337
    %v2339 = vlaneseq
    %v2340 = vshrl.u32 %v2339, 7
    %v2341 = vsub.s32 1, %v2340
    %v2342 = vrot.slane %v371, %v2341
    %v2343 = vmul.f32 %v619, %v2342
    %v2344 = vmul.f32 %v624, %v2342
    %v2345 = vmul.f32 %v629, %v2342
    %v2346 = vmul.f32 %v634, %v2342
    %v2347 = vmul.f32 %v639, %v2342
    %v2348 = vmul.f32 %v644, %v2342
    %v2349 = vmul.f32 %v649, %v2342
    %v2350 = vmul.f32 %v654, %v2342
    %v2351 = vmul.f32 %v659, %v2342
    %v2352 = vmul.f32 %v664, %v2342
    %v2353 = vmul.f32 %v669, %v2342
    %v2354 = vmul.f32 %v674, %v2342
    %v2355 = vmul.f32 %v679, %v2342
    %v2356 = vmul.f32 %v684, %v2342
    %v2357 = vmul.f32 %v689, %v2342
    %v2358 = vmul.f32 %v694, %v2342
    %v2359 = vadd.f32 %v2343, 0.0
    %v2360 = vadd.f32 %v2344, 0.0
    %v2361 = vadd.f32 %v2345, 0.0
    %v2362 = vadd.f32 %v2346, 0.0
    %v2363 = vadd.f32 %v2347, 0.0
    %v2364 = vadd.f32 %v2348, 0.0
    %v2365 = vadd.f32 %v2349, 0.0
    %v2366 = vadd.f32 %v2350, 0.0
    %v2367 = vadd.f32 %v2351, 0.0
    %v2368 = vadd.f32 %v2352, 0.0
    %v2369 = vadd.f32 %v2353, 0.0
    %v2370 = vadd.f32 %v2354, 0.0
    %v2371 = vadd.f32 %v2355, 0.0
    %v2372 = vadd.f32 %v2356, 0.0
    %v2373 = vadd.f32 %v2357, 0.0
    %v2374 = vadd.f32 %v2358, 0.0
    %v2376 = vrot.slane %v371, 1
    %2378 = vrot.lane.b32.xlu0 %v2376, 127
    %v2379 = vpop.permute.xlu0 %2378
    %v2380 = vlaneseq
    %v2381 = vshrl.u32 %v2380, 7
    %v2382 = vsub.s32 0, %v2381
    %v2383 = vrot.slane %v2379, %v2382
    %v2384 = vmul.f32 %v736, %v2383
    %v2385 = vmul.f32 %v740, %v2383
    %v2386 = vmul.f32 %v744, %v2383
    %v2387 = vmul.f32 %v748, %v2383
    %v2388 = vmul.f32 %v752, %v2383
    %v2389 = vmul.f32 %v756, %v2383
    %v2390 = vmul.f32 %v760, %v2383
    %v2391 = vmul.f32 %v764, %v2383
    %v2392 = vmul.f32 %v768, %v2383
    %v2393 = vmul.f32 %v772, %v2383
    %v2394 = vmul.f32 %v776, %v2383
    %v2395 = vmul.f32 %v780, %v2383
    %v2396 = vmul.f32 %v784, %v2383
    %v2397 = vmul.f32 %v788, %v2383
    %v2398 = vmul.f32 %v792, %v2383
    %v2399 = vmul.f32 %v796, %v2383
    %v2400 = vadd.f32 %v2359, %v2384
    %v2401 = vadd.f32 %v2360, %v2385
    %v2402 = vadd.f32 %v2361, %v2386
    %v2403 = vadd.f32 %v2362, %v2387
    %v2404 = vadd.f32 %v2363, %v2388
    %v2405 = vadd.f32 %v2364, %v2389
    %v2406 = vadd.f32 %v2365, %v2390
    %v2407 = vadd.f32 %v2366, %v2391
    %v2408 = vadd.f32 %v2367, %v2392
    %v2409 = vadd.f32 %v2368, %v2393
    %v2410 = vadd.f32 %v2369, %v2394
    %v2411 = vadd.f32 %v2370, %v2395
    %v2412 = vadd.f32 %v2371, %v2396
    %v2413 = vadd.f32 %v2372, %v2397
    %v2414 = vadd.f32 %v2373, %v2398
    %v2415 = vadd.f32 %v2374, %v2399
    %2416 = vrot.lane.b32.xlu0 %v2376, 126
    %v2417 = vpop.permute.xlu0 %2416
    %v2418 = vlaneseq
    %v2419 = vshrl.u32 %v2418, 7
    %v2420 = vsub.s32 0, %v2419
    %v2421 = vrot.slane %v2417, %v2420
    %v2422 = vmul.f32 %v838, %v2421
    %v2423 = vmul.f32 %v842, %v2421
    %v2424 = vmul.f32 %v846, %v2421
    %v2425 = vmul.f32 %v850, %v2421
    %v2426 = vmul.f32 %v854, %v2421
    %v2427 = vmul.f32 %v858, %v2421
    %v2428 = vmul.f32 %v862, %v2421
    %v2429 = vmul.f32 %v866, %v2421
    %v2430 = vmul.f32 %v870, %v2421
    %v2431 = vmul.f32 %v874, %v2421
    %v2432 = vmul.f32 %v878, %v2421
    %v2433 = vmul.f32 %v882, %v2421
    %v2434 = vmul.f32 %v886, %v2421
    %v2435 = vmul.f32 %v890, %v2421
    %v2436 = vmul.f32 %v894, %v2421
    %v2437 = vmul.f32 %v898, %v2421
    %v2438 = vadd.f32 %v2400, %v2422
    %v2439 = vadd.f32 %v2401, %v2423
    %v2440 = vadd.f32 %v2402, %v2424
    %v2441 = vadd.f32 %v2403, %v2425
    %v2442 = vadd.f32 %v2404, %v2426
    %v2443 = vadd.f32 %v2405, %v2427
    %v2444 = vadd.f32 %v2406, %v2428
    %v2445 = vadd.f32 %v2407, %v2429
    %v2446 = vadd.f32 %v2408, %v2430
    %v2447 = vadd.f32 %v2409, %v2431
    %v2448 = vadd.f32 %v2410, %v2432
    %v2449 = vadd.f32 %v2411, %v2433
    %v2450 = vadd.f32 %v2412, %v2434
    %v2451 = vadd.f32 %v2413, %v2435
    %v2452 = vadd.f32 %v2414, %v2436
    %v2453 = vadd.f32 %v2415, %v2437
    %2454 = vrot.lane.b32.xlu0 %v2376, 125
    %v2455 = vpop.permute.xlu0 %2454
    %v2456 = vlaneseq
    %v2457 = vshrl.u32 %v2456, 7
    %v2458 = vsub.s32 0, %v2457
    %v2459 = vrot.slane %v2455, %v2458
    %v2460 = vmul.f32 %v940, %v2459
    %v2461 = vmul.f32 %v944, %v2459
    %v2462 = vmul.f32 %v948, %v2459
    %v2463 = vmul.f32 %v952, %v2459
    %v2464 = vmul.f32 %v956, %v2459
    %v2465 = vmul.f32 %v960, %v2459
    %v2466 = vmul.f32 %v964, %v2459
    %v2467 = vmul.f32 %v968, %v2459
    %v2468 = vmul.f32 %v972, %v2459
    %v2469 = vmul.f32 %v976, %v2459
    %v2470 = vmul.f32 %v980, %v2459
    %v2471 = vmul.f32 %v984, %v2459
    %v2472 = vmul.f32 %v988, %v2459
    %v2473 = vmul.f32 %v992, %v2459
    %v2474 = vmul.f32 %v996, %v2459
    %v2475 = vmul.f32 %v1000, %v2459
    %v2476 = vadd.f32 %v2438, %v2460
    %v2477 = vadd.f32 %v2439, %v2461
    %v2478 = vadd.f32 %v2440, %v2462
    %v2479 = vadd.f32 %v2441, %v2463
    %v2480 = vadd.f32 %v2442, %v2464
    %v2481 = vadd.f32 %v2443, %v2465
    %v2482 = vadd.f32 %v2444, %v2466
    %v2483 = vadd.f32 %v2445, %v2467
    %v2484 = vadd.f32 %v2446, %v2468
    %v2485 = vadd.f32 %v2447, %v2469
    %v2486 = vadd.f32 %v2448, %v2470
    %v2487 = vadd.f32 %v2449, %v2471
    %v2488 = vadd.f32 %v2450, %v2472
    %v2489 = vadd.f32 %v2451, %v2473
    %v2490 = vadd.f32 %v2452, %v2474
    %v2491 = vadd.f32 %v2453, %v2475
    %v2492 = vadd.f32 %v2476, %v1057
    %v2493 = vadd.f32 %v2477, %v1062
    %v2494 = vadd.f32 %v2478, %v1067
    %v2495 = vadd.f32 %v2479, %v1072
    %v2496 = vadd.f32 %v2480, %v1077
    %v2497 = vadd.f32 %v2481, %v1082
    %v2498 = vadd.f32 %v2482, %v1087
    %v2499 = vadd.f32 %v2483, %v1092
    %v2500 = vadd.f32 %v2484, %v1097
    %v2501 = vadd.f32 %v2485, %v1102
    %v2502 = vadd.f32 %v2486, %v1107
    %v2503 = vadd.f32 %v2487, %v1112
    %v2504 = vadd.f32 %v2488, %v1117
    %v2505 = vadd.f32 %v2489, %v1122
    %v2506 = vadd.f32 %v2490, %v1127
    %v2507 = vadd.f32 %v2491, %v1132
    %v2508 = vmax.f32 %v2492, 0.0
    %v2509 = vmax.f32 %v2493, 0.0
    %v2510 = vmax.f32 %v2494, 0.0
    %v2511 = vmax.f32 %v2495, 0.0
    %v2512 = vmax.f32 %v2496, 0.0
    %v2513 = vmax.f32 %v2497, 0.0
    %v2514 = vmax.f32 %v2498, 0.0
    %v2515 = vmax.f32 %v2499, 0.0
    %v2516 = vmax.f32 %v2500, 0.0
    %v2517 = vmax.f32 %v2501, 0.0
    %v2518 = vmax.f32 %v2502, 0.0
    %v2519 = vmax.f32 %v2503, 0.0
    %v2520 = vmax.f32 %v2504, 0.0
    %v2521 = vmax.f32 %v2505, 0.0
    %v2522 = vmax.f32 %v2506, 0.0
    %v2523 = vmax.f32 %v2507, 0.0
    %2524 = vrot.lane.b32.xlu0 %v2508, 127
    %v2525 = vpop.permute.xlu0 %2524
    %2526 = vrot.lane.b32.xlu0 %v2509, 127
    %v2527 = vpop.permute.xlu0 %2526
    %2528 = vrot.lane.b32.xlu0 %v2510, 127
    %v2529 = vpop.permute.xlu0 %2528
    %2530 = vrot.lane.b32.xlu0 %v2511, 127
    %v2531 = vpop.permute.xlu0 %2530
    %2532 = vrot.lane.b32.xlu0 %v2512, 127
    %v2533 = vpop.permute.xlu0 %2532
    %2534 = vrot.lane.b32.xlu0 %v2513, 127
    %v2535 = vpop.permute.xlu0 %2534
    %2536 = vrot.lane.b32.xlu0 %v2514, 127
    %v2537 = vpop.permute.xlu0 %2536
    %2538 = vrot.lane.b32.xlu0 %v2515, 127
    %v2539 = vpop.permute.xlu0 %2538
    %2540 = vrot.lane.b32.xlu0 %v2516, 127
    %v2541 = vpop.permute.xlu0 %2540
    %2542 = vrot.lane.b32.xlu0 %v2517, 127
    %v2543 = vpop.permute.xlu0 %2542
    %2544 = vrot.lane.b32.xlu0 %v2518, 127
    %v2545 = vpop.permute.xlu0 %2544
    %2546 = vrot.lane.b32.xlu0 %v2519, 127
    %v2547 = vpop.permute.xlu0 %2546
    %2548 = vrot.lane.b32.xlu0 %v2520, 127
    %v2549 = vpop.permute.xlu0 %2548
    %2550 = vrot.lane.b32.xlu0 %v2521, 127
    %v2551 = vpop.permute.xlu0 %2550
    %2552 = vrot.lane.b32.xlu0 %v2522, 127
    %v2553 = vpop.permute.xlu0 %2552
    %2554 = vrot.lane.b32.xlu0 %v2523, 127
    %v2555 = vpop.permute.xlu0 %2554
    %2556 = vrot.lane.b32.xlu0 %v2508, 126
    %v2557 = vpop.permute.xlu0 %2556
    %2558 = vrot.lane.b32.xlu0 %v2509, 126
    %v2559 = vpop.permute.xlu0 %2558
    %2560 = vrot.lane.b32.xlu0 %v2510, 126
    %v2561 = vpop.permute.xlu0 %2560
    %2562 = vrot.lane.b32.xlu0 %v2511, 126
    %v2563 = vpop.permute.xlu0 %2562
    %2564 = vrot.lane.b32.xlu0 %v2512, 126
    %v2565 = vpop.permute.xlu0 %2564
    %2566 = vrot.lane.b32.xlu0 %v2513, 126
    %v2567 = vpop.permute.xlu0 %2566
    %2568 = vrot.lane.b32.xlu0 %v2514, 126
    %v2569 = vpop.permute.xlu0 %2568
    %2570 = vrot.lane.b32.xlu0 %v2515, 126
    %v2571 = vpop.permute.xlu0 %2570
    %2572 = vrot.lane.b32.xlu0 %v2516, 126
    %v2573 = vpop.permute.xlu0 %2572
    %2574 = vrot.lane.b32.xlu0 %v2517, 126
    %v2575 = vpop.permute.xlu0 %2574
    %2576 = vrot.lane.b32.xlu0 %v2518, 126
    %v2577 = vpop.permute.xlu0 %2576
    %2578 = vrot.lane.b32.xlu0 %v2519, 126
    %v2579 = vpop.permute.xlu0 %2578
    %2580 = vrot.lane.b32.xlu0 %v2520, 126
    %v2581 = vpop.permute.xlu0 %2580
    %2582 = vrot.lane.b32.xlu0 %v2521, 126
    %v2583 = vpop.permute.xlu0 %2582
    %2584 = vrot.lane.b32.xlu0 %v2522, 126
    %v2585 = vpop.permute.xlu0 %2584
    %2586 = vrot.lane.b32.xlu0 %v2523, 126
    %v2587 = vpop.permute.xlu0 %2586
    %2588 = vrot.lane.b32.xlu0 %v2508, 125
    %v2589 = vpop.permute.xlu0 %2588
    %2590 = vrot.lane.b32.xlu0 %v2509, 125
    %v2591 = vpop.permute.xlu0 %2590
    %2592 = vrot.lane.b32.xlu0 %v2510, 125
    %v2593 = vpop.permute.xlu0 %2592
    %2594 = vrot.lane.b32.xlu0 %v2511, 125
    %v2595 = vpop.permute.xlu0 %2594
    %2596 = vrot.lane.b32.xlu0 %v2512, 125
    %v2597 = vpop.permute.xlu0 %2596
    %2598 = vrot.lane.b32.xlu0 %v2513, 125
    %v2599 = vpop.permute.xlu0 %2598
    %2600 = vrot.lane.b32.xlu0 %v2514, 125
    %v2601 = vpop.permute.xlu0 %2600
    %2602 = vrot.lane.b32.xlu0 %v2515, 125
    %v2603 = vpop.permute.xlu0 %2602
    %2604 = vrot.lane.b32.xlu0 %v2516, 125
    %v2605 = vpop.permute.xlu0 %2604
    %2606 = vrot.lane.b32.xlu0 %v2517, 125
    %v2607 = vpop.permute.xlu0 %2606
    %2608 = vrot.lane.b32.xlu0 %v2518, 125
    %v2609 = vpop.permute.xlu0 %2608
    %2610 = vrot.lane.b32.xlu0 %v2519, 125
    %v2611 = vpop.permute.xlu0 %2610
    %2612 = vrot.lane.b32.xlu0 %v2520, 125
    %v2613 = vpop.permute.xlu0 %2612
    %2614 = vrot.lane.b32.xlu0 %v2521, 125
    %v2615 = vpop.permute.xlu0 %2614
    %2616 = vrot.lane.b32.xlu0 %v2522, 125
    %v2617 = vpop.permute.xlu0 %2616
    %2618 = vrot.lane.b32.xlu0 %v2523, 125
    %v2619 = vpop.permute.xlu0 %2618
    %2620 = vmatprep.subr.mxu0 0.0
    %2621 = vmatpush1.msra.mxu0 %v2508
    %2622 = vmatprep.subr.mxu0 0.0
    %2623 = vmatpush1.msra.mxu0 %v2509
    %2624 = vmatprep.subr.mxu0 0.0
    %2625 = vmatpush1.msra.mxu0 %v2510
    %2626 = vmatprep.subr.mxu0 0.0
    %2627 = vmatpush1.msra.mxu0 %v2511
    %2628 = vmatprep.subr.mxu0 0.0
    %2629 = vmatpush1.msra.mxu0 %v2512
    %2630 = vmatprep.subr.mxu0 0.0
    %2631 = vmatpush1.msra.mxu0 %v2513
    %2632 = vmatprep.subr.mxu0 0.0
    %2633 = vmatpush1.msra.mxu0 %v2514
    %2634 = vmatprep.subr.mxu0 0.0
    %2635 = vmatpush1.msra.mxu0 %v2515
    %2636 = vmatprep.subr.mxu0 0.0
    %2637 = vmatpush1.msra.mxu0 %v2516
    %2638 = vmatprep.subr.mxu0 0.0
    %2639 = vmatpush1.msra.mxu0 %v2517
    %2640 = vmatprep.subr.mxu0 0.0
    %2641 = vmatpush1.msra.mxu0 %v2518
    %2642 = vmatprep.subr.mxu0 0.0
    %2643 = vmatpush1.msra.mxu0 %v2519
    %2644 = vmatprep.subr.mxu0 0.0
    %2645 = vmatpush1.msra.mxu0 %v2520
    %2646 = vmatprep.subr.mxu0 0.0
    %2647 = vmatpush1.msra.mxu0 %v2521
    %2648 = vmatprep.subr.mxu0 0.0
    %2649 = vmatpush1.msra.mxu0 %v2522
    %2650 = vmatprep.subr.mxu0 0.0
    %2651 = vmatpush1.msra.mxu0 %v2523
    %2652 = vmatprep.subr.mxu0 0.0
    %2653 = vmatpush1.msra.mxu0 %v2525
    %2654 = vmatprep.subr.mxu0 0.0
    %2655 = vmatpush1.msra.mxu0 %v2527
    %2656 = vmatprep.subr.mxu0 0.0
    %2657 = vmatpush1.msra.mxu0 %v2529
    %2658 = vmatprep.subr.mxu0 0.0
    %2659 = vmatpush1.msra.mxu0 %v2531
    %2660 = vmatprep.subr.mxu0 0.0
    %2661 = vmatpush1.msra.mxu0 %v2533
    %2662 = vmatprep.subr.mxu0 0.0
    %2663 = vmatpush1.msra.mxu0 %v2535
    %2664 = vmatprep.subr.mxu0 0.0
    %2665 = vmatpush1.msra.mxu0 %v2537
    %2666 = vmatprep.subr.mxu0 0.0
    %2667 = vmatpush1.msra.mxu0 %v2539
    %2668 = vmatprep.subr.mxu0 0.0
    %2669 = vmatpush1.msra.mxu0 %v2541
    %2670 = vmatprep.subr.mxu0 0.0
    %2671 = vmatpush1.msra.mxu0 %v2543
    %2672 = vmatprep.subr.mxu0 0.0
    %2673 = vmatpush1.msra.mxu0 %v2545
    %2674 = vmatprep.subr.mxu0 0.0
    %2675 = vmatpush1.msra.mxu0 %v2547
    %2676 = vmatprep.subr.mxu0 0.0
    %2677 = vmatpush1.msra.mxu0 %v2549
    %2678 = vmatprep.subr.mxu0 0.0
    %2679 = vmatpush1.msra.mxu0 %v2551
    %2680 = vmatprep.subr.mxu0 0.0
    %2681 = vmatpush1.msra.mxu0 %v2553
    %2682 = vmatprep.subr.mxu0 0.0
    %2683 = vmatpush1.msra.mxu0 %v2555
    %2684 = vmatprep.mubr.f32.mxu0 %v1263
    %2685 = vmatmul.mubr.f32.gmra.mrb[0].mxu0 %v1262
    %v2686 = vpop.f32.mrb[0].mxu0
    %v2687 = vadd.f32 %v1345, %v2686
    %v2688 = vpop.f32.mrb[0].mxu0
    %2689 = vmatprep.mubr.f32.mxu0 %v1267
    %2690 = vmatmul.mubr.f32.gmra.mrb[0].mxu0 %v1266
    %v2691 = vpop.f32.mrb[0].mxu0
    %v2692 = vadd.f32 %v1350, %v2691
    %v2693 = vpop.f32.mrb[0].mxu0
    %2694 = vmatprep.mubr.f32.mxu0 %v1271
    %2695 = vmatmul.mubr.f32.gmra.mrb[0].mxu0 %v1270
    %v2696 = vpop.f32.mrb[0].mxu0
    %v2697 = vadd.f32 %v1355, %v2696
    %v2698 = vpop.f32.mrb[0].mxu0
    %2699 = vmatprep.mubr.f32.mxu0 %v1275
    %2700 = vmatmul.mubr.f32.gmra.mrb[0].mxu0 %v1274
    %v2701 = vpop.f32.mrb[0].mxu0
    %v2702 = vadd.f32 %v1360, %v2701
    %v2703 = vpop.f32.mrb[0].mxu0
    %2704 = vmatprep.mubr.f32.mxu0 %v1279
    %2705 = vmatmul.mubr.f32.gmra.mrb[0].mxu0 %v1278
    %v2706 = vpop.f32.mrb[0].mxu0
    %v2707 = vadd.f32 %v1365, %v2706
    %v2708 = vpop.f32.mrb[0].mxu0
    %2709 = vmatprep.mubr.f32.mxu0 %v1283
    %2710 = vmatmul.mubr.f32.gmra.mrb[0].mxu0 %v1282
    %v2711 = vpop.f32.mrb[0].mxu0
    %v2712 = vadd.f32 %v1370, %v2711
    %v2713 = vpop.f32.mrb[0].mxu0
    %2714 = vmatprep.mubr.f32.mxu0 %v1287
    %2715 = vmatmul.mubr.f32.gmra.mrb[0].mxu0 %v1286
    %v2716 = vpop.f32.mrb[0].mxu0
    %v2717 = vadd.f32 %v1375, %v2716
    %v2718 = vpop.f32.mrb[0].mxu0
    %2719 = vmatprep.mubr.f32.mxu0 %v1291
    %2720 = vmatmul.mubr.f32.gmra.mrb[0].mxu0 %v1290
    %v2721 = vpop.f32.mrb[0].mxu0
    %v2722 = vadd.f32 %v1380, %v2721
    %v2723 = vpop.f32.mrb[0].mxu0
    %2724 = vmatprep.mubr.f32.mxu0 %v1295
    %2725 = vmatmul.mubr.f32.gmra.mrb[0].mxu0 %v1294
    %v2726 = vpop.f32.mrb[0].mxu0
    %v2727 = vadd.f32 %v1385, %v2726
    %v2728 = vpop.f32.mrb[0].mxu0
    %2729 = vmatprep.mubr.f32.mxu0 %v1299
    %2730 = vmatmul.mubr.f32.gmra.mrb[0].mxu0 %v1298
    %v2731 = vpop.f32.mrb[0].mxu0
    %v2732 = vadd.f32 %v1390, %v2731
    %v2733 = vpop.f32.mrb[0].mxu0
    %2734 = vmatprep.mubr.f32.mxu0 %v1303
    %2735 = vmatmul.mubr.f32.gmra.mrb[0].mxu0 %v1302
    %v2736 = vpop.f32.mrb[0].mxu0
    %v2737 = vadd.f32 %v1395, %v2736
    %v2738 = vpop.f32.mrb[0].mxu0
    %2739 = vmatprep.mubr.f32.mxu0 %v1307
    %2740 = vmatmul.mubr.f32.gmra.mrb[0].mxu0 %v1306
    %v2741 = vpop.f32.mrb[0].mxu0
    %v2742 = vadd.f32 %v1400, %v2741
    %v2743 = vpop.f32.mrb[0].mxu0
    %2744 = vmatprep.mubr.f32.mxu0 %v1311
    %2745 = vmatmul.mubr.f32.gmra.mrb[0].mxu0 %v1310
    %v2746 = vpop.f32.mrb[0].mxu0
    %v2747 = vadd.f32 %v1405, %v2746
    %v2748 = vpop.f32.mrb[0].mxu0
    %2749 = vmatprep.mubr.f32.mxu0 %v1315
    %2750 = vmatmul.mubr.f32.gmra.mrb[0].mxu0 %v1314
    %v2751 = vpop.f32.mrb[0].mxu0
    %v2752 = vadd.f32 %v1410, %v2751
    %v2753 = vpop.f32.mrb[0].mxu0
    %2754 = vmatprep.mubr.f32.mxu0 %v1319
    %2755 = vmatmul.mubr.f32.gmra.mrb[0].mxu0 %v1318
    %v2756 = vpop.f32.mrb[0].mxu0
    %v2757 = vadd.f32 %v1415, %v2756
    %v2758 = vpop.f32.mrb[0].mxu0
    %2759 = vmatprep.mubr.f32.mxu0 %v1323
    %2760 = vmatmul.mubr.f32.gmra.mrb[0].mxu0 %v1322
    %v2761 = vpop.f32.mrb[0].mxu0
    %v2762 = vadd.f32 %v1420, %v2761
    %v2763 = vpop.f32.mrb[0].mxu0
    %2764 = vdwg.mxu0
    %2765 = vmatprep.subr.mxu0 0.0
    %2766 = vmatpush1.msra.mxu0 %v2557
    %2767 = vmatprep.subr.mxu0 0.0
    %2768 = vmatpush1.msra.mxu0 %v2559
    %2769 = vmatprep.subr.mxu0 0.0
    %2770 = vmatpush1.msra.mxu0 %v2561
    %2771 = vmatprep.subr.mxu0 0.0
    %2772 = vmatpush1.msra.mxu0 %v2563
    %2773 = vmatprep.subr.mxu0 0.0
    %2774 = vmatpush1.msra.mxu0 %v2565
    %2775 = vmatprep.subr.mxu0 0.0
    %2776 = vmatpush1.msra.mxu0 %v2567
    %2777 = vmatprep.subr.mxu0 0.0
    %2778 = vmatpush1.msra.mxu0 %v2569
    %2779 = vmatprep.subr.mxu0 0.0
    %2780 = vmatpush1.msra.mxu0 %v2571
    %2781 = vmatprep.subr.mxu0 0.0
    %2782 = vmatpush1.msra.mxu0 %v2573
    %2783 = vmatprep.subr.mxu0 0.0
    %2784 = vmatpush1.msra.mxu0 %v2575
    %2785 = vmatprep.subr.mxu0 0.0
    %2786 = vmatpush1.msra.mxu0 %v2577
    %2787 = vmatprep.subr.mxu0 0.0
    %2788 = vmatpush1.msra.mxu0 %v2579
    %2789 = vmatprep.subr.mxu0 0.0
    %2790 = vmatpush1.msra.mxu0 %v2581
    %2791 = vmatprep.subr.mxu0 0.0
    %2792 = vmatpush1.msra.mxu0 %v2583
    %2793 = vmatprep.subr.mxu0 0.0
    %2794 = vmatpush1.msra.mxu0 %v2585
    %2795 = vmatprep.subr.mxu0 0.0
    %2796 = vmatpush1.msra.mxu0 %v2587
    %2797 = vmatprep.subr.mxu0 0.0
    %2798 = vmatpush1.msra.mxu0 %v2589
    %2799 = vmatprep.subr.mxu0 0.0
    %2800 = vmatpush1.msra.mxu0 %v2591
    %2801 = vmatprep.subr.mxu0 0.0
    %2802 = vmatpush1.msra.mxu0 %v2593
    %2803 = vmatprep.subr.mxu0 0.0
    %2804 = vmatpush1.msra.mxu0 %v2595
    %2805 = vmatprep.subr.mxu0 0.0
    %2806 = vmatpush1.msra.mxu0 %v2597
    %2807 = vmatprep.subr.mxu0 0.0
    %2808 = vmatpush1.msra.mxu0 %v2599
    %2809 = vmatprep.subr.mxu0 0.0
    %2810 = vmatpush1.msra.mxu0 %v2601
    %2811 = vmatprep.subr.mxu0 0.0
    %2812 = vmatpush1.msra.mxu0 %v2603
    %2813 = vmatprep.subr.mxu0 0.0
    %2814 = vmatpush1.msra.mxu0 %v2605
    %2815 = vmatprep.subr.mxu0 0.0
    %2816 = vmatpush1.msra.mxu0 %v2607
    %2817 = vmatprep.subr.mxu0 0.0
    %2818 = vmatpush1.msra.mxu0 %v2609
    %2819 = vmatprep.subr.mxu0 0.0
    %2820 = vmatpush1.msra.mxu0 %v2611
    %2821 = vmatprep.subr.mxu0 0.0
    %2822 = vmatpush1.msra.mxu0 %v2613
    %2823 = vmatprep.subr.mxu0 0.0
    %2824 = vmatpush1.msra.mxu0 %v2615
    %2825 = vmatprep.subr.mxu0 0.0
    %2826 = vmatpush1.msra.mxu0 %v2617
    %2827 = vmatprep.subr.mxu0 0.0
    %2828 = vmatpush1.msra.mxu0 %v2619
    %2829 = vmatprep.mubr.f32.mxu0 %v1265
    %2830 = vmatmul.mubr.f32.gmra.mrb[0].mxu0 %v1264
    %v2831 = vpop.f32.mrb[0].mxu0
    %v2832 = vadd.f32 %v2687, %v2831
    %v2833 = vpop.f32.mrb[0].mxu0
    %2834 = vmatprep.mubr.f32.mxu0 %v1269
    %2835 = vmatmul.mubr.f32.gmra.mrb[0].mxu0 %v1268
    %v2836 = vpop.f32.mrb[0].mxu0
    %v2837 = vadd.f32 %v2692, %v2836
    %v2838 = vpop.f32.mrb[0].mxu0
    %2839 = vmatprep.mubr.f32.mxu0 %v1273
    %2840 = vmatmul.mubr.f32.gmra.mrb[0].mxu0 %v1272
    %v2841 = vpop.f32.mrb[0].mxu0
    %v2842 = vadd.f32 %v2697, %v2841
    %v2843 = vpop.f32.mrb[0].mxu0
    %2844 = vmatprep.mubr.f32.mxu0 %v1277
    %2845 = vmatmul.mubr.f32.gmra.mrb[0].mxu0 %v1276
    %v2846 = vpop.f32.mrb[0].mxu0
    %v2847 = vadd.f32 %v2702, %v2846
    %v2848 = vpop.f32.mrb[0].mxu0
    %2849 = vmatprep.mubr.f32.mxu0 %v1281
    %2850 = vmatmul.mubr.f32.gmra.mrb[0].mxu0 %v1280
    %v2851 = vpop.f32.mrb[0].mxu0
    %v2852 = vadd.f32 %v2707, %v2851
    %v2853 = vpop.f32.mrb[0].mxu0
    %2854 = vmatprep.mubr.f32.mxu0 %v1285
    %2855 = vmatmul.mubr.f32.gmra.mrb[0].mxu0 %v1284
    %v2856 = vpop.f32.mrb[0].mxu0
    %v2857 = vadd.f32 %v2712, %v2856
    %v2858 = vpop.f32.mrb[0].mxu0
    %2859 = vmatprep.mubr.f32.mxu0 %v1289
    %2860 = vmatmul.mubr.f32.gmra.mrb[0].mxu0 %v1288
    %v2861 = vpop.f32.mrb[0].mxu0
    %v2862 = vadd.f32 %v2717, %v2861
    %v2863 = vpop.f32.mrb[0].mxu0
    %2864 = vmatprep.mubr.f32.mxu0 %v1293
    %2865 = vmatmul.mubr.f32.gmra.mrb[0].mxu0 %v1292
    %v2866 = vpop.f32.mrb[0].mxu0
    %v2867 = vadd.f32 %v2722, %v2866
    %v2868 = vpop.f32.mrb[0].mxu0
    %2869 = vmatprep.mubr.f32.mxu0 %v1297
    %2870 = vmatmul.mubr.f32.gmra.mrb[0].mxu0 %v1296
    %v2871 = vpop.f32.mrb[0].mxu0
    %v2872 = vadd.f32 %v2727, %v2871
    %v2873 = vpop.f32.mrb[0].mxu0
    %2874 = vmatprep.mubr.f32.mxu0 %v1301
    %2875 = vmatmul.mubr.f32.gmra.mrb[0].mxu0 %v1300
    %v2876 = vpop.f32.mrb[0].mxu0
    %v2877 = vadd.f32 %v2732, %v2876
    %v2878 = vpop.f32.mrb[0].mxu0
    %2879 = vmatprep.mubr.f32.mxu0 %v1305
    %2880 = vmatmul.mubr.f32.gmra.mrb[0].mxu0 %v1304
    %v2881 = vpop.f32.mrb[0].mxu0
    %v2882 = vadd.f32 %v2737, %v2881
    %v2883 = vpop.f32.mrb[0].mxu0
    %2884 = vmatprep.mubr.f32.mxu0 %v1309
    %2885 = vmatmul.mubr.f32.gmra.mrb[0].mxu0 %v1308
    %v2886 = vpop.f32.mrb[0].mxu0
    %v2887 = vadd.f32 %v2742, %v2886
    %v2888 = vpop.f32.mrb[0].mxu0
    %2889 = vmatprep.mubr.f32.mxu0 %v1313
    %2890 = vmatmul.mubr.f32.gmra.mrb[0].mxu0 %v1312
    %v2891 = vpop.f32.mrb[0].mxu0
    %v2892 = vadd.f32 %v2747, %v2891
    %v2893 = vpop.f32.mrb[0].mxu0
    %2894 = vmatprep.mubr.f32.mxu0 %v1317
    %2895 = vmatmul.mubr.f32.gmra.mrb[0].mxu0 %v1316
    %v2896 = vpop.f32.mrb[0].mxu0
    %v2897 = vadd.f32 %v2752, %v2896
    %v2898 = vpop.f32.mrb[0].mxu0
    %2899 = vmatprep.mubr.f32.mxu0 %v1321
    %2900 = vmatmul.mubr.f32.gmra.mrb[0].mxu0 %v1320
    %v2901 = vpop.f32.mrb[0].mxu0
    %v2902 = vadd.f32 %v2757, %v2901
    %v2903 = vpop.f32.mrb[0].mxu0
    %2904 = vmatprep.mubr.f32.mxu0 %v1325
    %2905 = vmatmul.mubr.f32.gmra.mrb[0].mxu0 %v1324
    %v2906 = vpop.f32.mrb[0].mxu0
    %v2907 = vadd.f32 %v2762, %v2906
    %v2908 = vpop.f32.mrb[0].mxu0
    %2909 = vdwg.mxu0
    %v2910 = vmax.f32 %v2832, 0.0
    %v2911 = vmax.f32 %v2837, 0.0
    %v2912 = vmax.f32 %v2842, 0.0
    %v2913 = vmax.f32 %v2847, 0.0
    %v2914 = vmax.f32 %v2852, 0.0
    %v2915 = vmax.f32 %v2857, 0.0
    %v2916 = vmax.f32 %v2862, 0.0
    %v2917 = vmax.f32 %v2867, 0.0
    %v2918 = vmax.f32 %v2872, 0.0
    %v2919 = vmax.f32 %v2877, 0.0
    %v2920 = vmax.f32 %v2882, 0.0
    %v2921 = vmax.f32 %v2887, 0.0
    %v2922 = vmax.f32 %v2892, 0.0
    %v2923 = vmax.f32 %v2897, 0.0
    %v2924 = vmax.f32 %v2902, 0.0
    %v2925 = vmax.f32 %v2907, 0.0
    %2926 = vrot.lane.b32.xlu0 %v2910, 127
    %v2927 = vpop.permute.xlu0 %2926
    %2928 = vrot.lane.b32.xlu0 %v2911, 127
    %v2929 = vpop.permute.xlu0 %2928
    %2930 = vrot.lane.b32.xlu0 %v2912, 127
    %v2931 = vpop.permute.xlu0 %2930
    %2932 = vrot.lane.b32.xlu0 %v2913, 127
    %v2933 = vpop.permute.xlu0 %2932
    %2934 = vrot.lane.b32.xlu0 %v2914, 127
    %v2935 = vpop.permute.xlu0 %2934
    %2936 = vrot.lane.b32.xlu0 %v2915, 127
    %v2937 = vpop.permute.xlu0 %2936
    %2938 = vrot.lane.b32.xlu0 %v2916, 127
    %v2939 = vpop.permute.xlu0 %2938
    %2940 = vrot.lane.b32.xlu0 %v2917, 127
    %v2941 = vpop.permute.xlu0 %2940
    %2942 = vrot.lane.b32.xlu0 %v2918, 127
    %v2943 = vpop.permute.xlu0 %2942
    %2944 = vrot.lane.b32.xlu0 %v2919, 127
    %v2945 = vpop.permute.xlu0 %2944
    %2946 = vrot.lane.b32.xlu0 %v2920, 127
    %v2947 = vpop.permute.xlu0 %2946
    %2948 = vrot.lane.b32.xlu0 %v2921, 127
    %v2949 = vpop.permute.xlu0 %2948
    %2950 = vrot.lane.b32.xlu0 %v2922, 127
    %v2951 = vpop.permute.xlu0 %2950
    %2952 = vrot.lane.b32.xlu0 %v2923, 127
    %v2953 = vpop.permute.xlu0 %2952
    %2954 = vrot.lane.b32.xlu0 %v2924, 127
    %v2955 = vpop.permute.xlu0 %2954
    %2956 = vrot.lane.b32.xlu0 %v2925, 127
    %v2957 = vpop.permute.xlu0 %2956
    %2958 = vrot.lane.b32.xlu0 %v2910, 126
    %v2959 = vpop.permute.xlu0 %2958
    %2960 = vrot.lane.b32.xlu0 %v2911, 126
    %v2961 = vpop.permute.xlu0 %2960
    %2962 = vrot.lane.b32.xlu0 %v2912, 126
    %v2963 = vpop.permute.xlu0 %2962
    %2964 = vrot.lane.b32.xlu0 %v2913, 126
    %v2965 = vpop.permute.xlu0 %2964
    %2966 = vrot.lane.b32.xlu0 %v2914, 126
    %v2967 = vpop.permute.xlu0 %2966
    %2968 = vrot.lane.b32.xlu0 %v2915, 126
    %v2969 = vpop.permute.xlu0 %2968
    %2970 = vrot.lane.b32.xlu0 %v2916, 126
    %v2971 = vpop.permute.xlu0 %2970
    %2972 = vrot.lane.b32.xlu0 %v2917, 126
    %v2973 = vpop.permute.xlu0 %2972
    %2974 = vrot.lane.b32.xlu0 %v2918, 126
    %v2975 = vpop.permute.xlu0 %2974
    %2976 = vrot.lane.b32.xlu0 %v2919, 126
    %v2977 = vpop.permute.xlu0 %2976
    %2978 = vrot.lane.b32.xlu0 %v2920, 126
    %v2979 = vpop.permute.xlu0 %2978
    %2980 = vrot.lane.b32.xlu0 %v2921, 126
    %v2981 = vpop.permute.xlu0 %2980
    %2982 = vrot.lane.b32.xlu0 %v2922, 126
    %v2983 = vpop.permute.xlu0 %2982
    %2984 = vrot.lane.b32.xlu0 %v2923, 126
    %v2985 = vpop.permute.xlu0 %2984
    %2986 = vrot.lane.b32.xlu0 %v2924, 126
    %v2987 = vpop.permute.xlu0 %2986
    %2988 = vrot.lane.b32.xlu0 %v2925, 126
    %v2989 = vpop.permute.xlu0 %2988
    %2990 = vrot.lane.b32.xlu0 %v2910, 125
    %v2991 = vpop.permute.xlu0 %2990
    %2992 = vrot.lane.b32.xlu0 %v2911, 125
    %v2993 = vpop.permute.xlu0 %2992
    %2994 = vrot.lane.b32.xlu0 %v2912, 125
    %v2995 = vpop.permute.xlu0 %2994
    %2996 = vrot.lane.b32.xlu0 %v2913, 125
    %v2997 = vpop.permute.xlu0 %2996
    %2998 = vrot.lane.b32.xlu0 %v2914, 125
    %v2999 = vpop.permute.xlu0 %2998
    %3000 = vrot.lane.b32.xlu0 %v2915, 125
    %v3001 = vpop.permute.xlu0 %3000
    %3002 = vrot.lane.b32.xlu0 %v2916, 125
    %v3003 = vpop.permute.xlu0 %3002
    %3004 = vrot.lane.b32.xlu0 %v2917, 125
    %v3005 = vpop.permute.xlu0 %3004
    %3006 = vrot.lane.b32.xlu0 %v2918, 125
    %v3007 = vpop.permute.xlu0 %3006
    %3008 = vrot.lane.b32.xlu0 %v2919, 125
    %v3009 = vpop.permute.xlu0 %3008
    %3010 = vrot.lane.b32.xlu0 %v2920, 125
    %v3011 = vpop.permute.xlu0 %3010
    %3012 = vrot.lane.b32.xlu0 %v2921, 125
    %v3013 = vpop.permute.xlu0 %3012
    %3014 = vrot.lane.b32.xlu0 %v2922, 125
    %v3015 = vpop.permute.xlu0 %3014
    %3016 = vrot.lane.b32.xlu0 %v2923, 125
    %v3017 = vpop.permute.xlu0 %3016
    %3018 = vrot.lane.b32.xlu0 %v2924, 125
    %v3019 = vpop.permute.xlu0 %3018
    %3020 = vrot.lane.b32.xlu0 %v2925, 125
    %v3021 = vpop.permute.xlu0 %3020
    %3022 = vmatprep.subr.mxu0 0.0
    %3023 = vmatpush1.msra.mxu0 %v2910
    %3024 = vmatprep.subr.mxu0 0.0
    %3025 = vmatpush1.msra.mxu0 %v2911
    %3026 = vmatprep.subr.mxu0 0.0
    %3027 = vmatpush1.msra.mxu0 %v2912
    %3028 = vmatprep.subr.mxu0 0.0
    %3029 = vmatpush1.msra.mxu0 %v2913
    %3030 = vmatprep.subr.mxu0 0.0
    %3031 = vmatpush1.msra.mxu0 %v2914
    %3032 = vmatprep.subr.mxu0 0.0
    %3033 = vmatpush1.msra.mxu0 %v2915
    %3034 = vmatprep.subr.mxu0 0.0
    %3035 = vmatpush1.msra.mxu0 %v2916
    %3036 = vmatprep.subr.mxu0 0.0
    %3037 = vmatpush1.msra.mxu0 %v2917
    %3038 = vmatprep.subr.mxu0 0.0
    %3039 = vmatpush1.msra.mxu0 %v2918
    %3040 = vmatprep.subr.mxu0 0.0
    %3041 = vmatpush1.msra.mxu0 %v2919
    %3042 = vmatprep.subr.mxu0 0.0
    %3043 = vmatpush1.msra.mxu0 %v2920
    %3044 = vmatprep.subr.mxu0 0.0
    %3045 = vmatpush1.msra.mxu0 %v2921
    %3046 = vmatprep.subr.mxu0 0.0
    %3047 = vmatpush1.msra.mxu0 %v2922
    %3048 = vmatprep.subr.mxu0 0.0
    %3049 = vmatpush1.msra.mxu0 %v2923
    %3050 = vmatprep.subr.mxu0 0.0
    %3051 = vmatpush1.msra.mxu0 %v2924
    %3052 = vmatprep.subr.mxu0 0.0
    %3053 = vmatpush1.msra.mxu0 %v2925
    %3054 = vmatprep.subr.mxu0 0.0
    %3055 = vmatpush1.msra.mxu0 %v2927
    %3056 = vmatprep.subr.mxu0 0.0
    %3057 = vmatpush1.msra.mxu0 %v2929
    %3058 = vmatprep.subr.mxu0 0.0
    %3059 = vmatpush1.msra.mxu0 %v2931
    %3060 = vmatprep.subr.mxu0 0.0
    %3061 = vmatpush1.msra.mxu0 %v2933
    %3062 = vmatprep.subr.mxu0 0.0
    %3063 = vmatpush1.msra.mxu0 %v2935
    %3064 = vmatprep.subr.mxu0 0.0
    %3065 = vmatpush1.msra.mxu0 %v2937
    %3066 = vmatprep.subr.mxu0 0.0
    %3067 = vmatpush1.msra.mxu0 %v2939
    %3068 = vmatprep.subr.mxu0 0.0
    %3069 = vmatpush1.msra.mxu0 %v2941
    %3070 = vmatprep.subr.mxu0 0.0
    %3071 = vmatpush1.msra.mxu0 %v2943
    %3072 = vmatprep.subr.mxu0 0.0
    %3073 = vmatpush1.msra.mxu0 %v2945
    %3074 = vmatprep.subr.mxu0 0.0
    %3075 = vmatpush1.msra.mxu0 %v2947
    %3076 = vmatprep.subr.mxu0 0.0
    %3077 = vmatpush1.msra.mxu0 %v2949
    %3078 = vmatprep.subr.mxu0 0.0
    %3079 = vmatpush1.msra.mxu0 %v2951
    %3080 = vmatprep.subr.mxu0 0.0
    %3081 = vmatpush1.msra.mxu0 %v2953
    %3082 = vmatprep.subr.mxu0 0.0
    %3083 = vmatpush1.msra.mxu0 %v2955
    %3084 = vmatprep.subr.mxu0 0.0
    %3085 = vmatpush1.msra.mxu0 %v2957
    %3086 = vmatprep.mubr.f32.mxu0 %v1825
    %3087 = vmatmul.mubr.f32.gmra.mrb[0].mxu0 %v1824
    %v3088 = vpop.f32.mrb[0].mxu0
    %v3089 = vadd.f32 %v1907, %v3088
    %v3090 = vpop.f32.mrb[0].mxu0
    %3091 = vmatprep.mubr.f32.mxu0 %v1829
    %3092 = vmatmul.mubr.f32.gmra.mrb[0].mxu0 %v1828
    %v3093 = vpop.f32.mrb[0].mxu0
    %v3094 = vadd.f32 %v1912, %v3093
    %v3095 = vpop.f32.mrb[0].mxu0
    %3096 = vmatprep.mubr.f32.mxu0 %v1833
    %3097 = vmatmul.mubr.f32.gmra.mrb[0].mxu0 %v1832
    %v3098 = vpop.f32.mrb[0].mxu0
    %v3099 = vadd.f32 %v1917, %v3098
    %v3100 = vpop.f32.mrb[0].mxu0
    %3101 = vmatprep.mubr.f32.mxu0 %v1837
    %3102 = vmatmul.mubr.f32.gmra.mrb[0].mxu0 %v1836
    %v3103 = vpop.f32.mrb[0].mxu0
    %v3104 = vadd.f32 %v1922, %v3103
    %v3105 = vpop.f32.mrb[0].mxu0
    %3106 = vmatprep.mubr.f32.mxu0 %v1841
    %3107 = vmatmul.mubr.f32.gmra.mrb[0].mxu0 %v1840
    %v3108 = vpop.f32.mrb[0].mxu0
    %v3109 = vadd.f32 %v1927, %v3108
    %v3110 = vpop.f32.mrb[0].mxu0
    %3111 = vmatprep.mubr.f32.mxu0 %v1845
    %3112 = vmatmul.mubr.f32.gmra.mrb[0].mxu0 %v1844
    %v3113 = vpop.f32.mrb[0].mxu0
    %v3114 = vadd.f32 %v1932, %v3113
    %v3115 = vpop.f32.mrb[0].mxu0
    %3116 = vmatprep.mubr.f32.mxu0 %v1849
    %3117 = vmatmul.mubr.f32.gmra.mrb[0].mxu0 %v1848
    %v3118 = vpop.f32.mrb[0].mxu0
    %v3119 = vadd.f32 %v1937, %v3118
    %v3120 = vpop.f32.mrb[0].mxu0
    %3121 = vmatprep.mubr.f32.mxu0 %v1853
    %3122 = vmatmul.mubr.f32.gmra.mrb[0].mxu0 %v1852
    %v3123 = vpop.f32.mrb[0].mxu0
    %v3124 = vadd.f32 %v1942, %v3123
    %v3125 = vpop.f32.mrb[0].mxu0
    %3126 = vmatprep.mubr.f32.mxu0 %v1857
    %3127 = vmatmul.mubr.f32.gmra.mrb[0].mxu0 %v1856
    %v3128 = vpop.f32.mrb[0].mxu0
    %v3129 = vadd.f32 %v1947, %v3128
    %v3130 = vpop.f32.mrb[0].mxu0
    %3131 = vmatprep.mubr.f32.mxu0 %v1861
    %3132 = vmatmul.mubr.f32.gmra.mrb[0].mxu0 %v1860
    %v3133 = vpop.f32.mrb[0].mxu0
    %v3134 = vadd.f32 %v1952, %v3133
    %v3135 = vpop.f32.mrb[0].mxu0
    %3136 = vmatprep.mubr.f32.mxu0 %v1865
    %3137 = vmatmul.mubr.f32.gmra.mrb[0].mxu0 %v1864
    %v3138 = vpop.f32.mrb[0].mxu0
    %v3139 = vadd.f32 %v1957, %v3138
    %v3140 = vpop.f32.mrb[0].mxu0
    %3141 = vmatprep.mubr.f32.mxu0 %v1869
    %3142 = vmatmul.mubr.f32.gmra.mrb[0].mxu0 %v1868
    %v3143 = vpop.f32.mrb[0].mxu0
    %v3144 = vadd.f32 %v1962, %v3143
    %v3145 = vpop.f32.mrb[0].mxu0
    %3146 = vmatprep.mubr.f32.mxu0 %v1873
    %3147 = vmatmul.mubr.f32.gmra.mrb[0].mxu0 %v1872
    %v3148 = vpop.f32.mrb[0].mxu0
    %v3149 = vadd.f32 %v1967, %v3148
    %v3150 = vpop.f32.mrb[0].mxu0
    %3151 = vmatprep.mubr.f32.mxu0 %v1877
    %3152 = vmatmul.mubr.f32.gmra.mrb[0].mxu0 %v1876
    %v3153 = vpop.f32.mrb[0].mxu0
    %v3154 = vadd.f32 %v1972, %v3153
    %v3155 = vpop.f32.mrb[0].mxu0
    %3156 = vmatprep.mubr.f32.mxu0 %v1881
    %3157 = vmatmul.mubr.f32.gmra.mrb[0].mxu0 %v1880
    %v3158 = vpop.f32.mrb[0].mxu0
    %v3159 = vadd.f32 %v1977, %v3158
    %v3160 = vpop.f32.mrb[0].mxu0
    %3161 = vmatprep.mubr.f32.mxu0 %v1885
    %3162 = vmatmul.mubr.f32.gmra.mrb[0].mxu0 %v1884
    %v3163 = vpop.f32.mrb[0].mxu0
    %v3164 = vadd.f32 %v1982, %v3163
    %v3165 = vpop.f32.mrb[0].mxu0
    %3166 = vdwg.mxu0
    %3167 = vmatprep.subr.mxu0 0.0
    %3168 = vmatpush1.msra.mxu0 %v2959
    %3169 = vmatprep.subr.mxu0 0.0
    %3170 = vmatpush1.msra.mxu0 %v2961
    %3171 = vmatprep.subr.mxu0 0.0
    %3172 = vmatpush1.msra.mxu0 %v2963
    %3173 = vmatprep.subr.mxu0 0.0
    %3174 = vmatpush1.msra.mxu0 %v2965
    %3175 = vmatprep.subr.mxu0 0.0
    %3176 = vmatpush1.msra.mxu0 %v2967
    %3177 = vmatprep.subr.mxu0 0.0
    %3178 = vmatpush1.msra.mxu0 %v2969
    %3179 = vmatprep.subr.mxu0 0.0
    %3180 = vmatpush1.msra.mxu0 %v2971
    %3181 = vmatprep.subr.mxu0 0.0
    %3182 = vmatpush1.msra.mxu0 %v2973
    %3183 = vmatprep.subr.mxu0 0.0
    %3184 = vmatpush1.msra.mxu0 %v2975
    %3185 = vmatprep.subr.mxu0 0.0
    %3186 = vmatpush1.msra.mxu0 %v2977
    %3187 = vmatprep.subr.mxu0 0.0
    %3188 = vmatpush1.msra.mxu0 %v2979
    %3189 = vmatprep.subr.mxu0 0.0
    %3190 = vmatpush1.msra.mxu0 %v2981
    %3191 = vmatprep.subr.mxu0 0.0
    %3192 = vmatpush1.msra.mxu0 %v2983
    %3193 = vmatprep.subr.mxu0 0.0
    %3194 = vmatpush1.msra.mxu0 %v2985
    %3195 = vmatprep.subr.mxu0 0.0
    %3196 = vmatpush1.msra.mxu0 %v2987
    %3197 = vmatprep.subr.mxu0 0.0
    %3198 = vmatpush1.msra.mxu0 %v2989
    %3199 = vmatprep.subr.mxu0 0.0
    %3200 = vmatpush1.msra.mxu0 %v2991
    %3201 = vmatprep.subr.mxu0 0.0
    %3202 = vmatpush1.msra.mxu0 %v2993
    %3203 = vmatprep.subr.mxu0 0.0
    %3204 = vmatpush1.msra.mxu0 %v2995
    %3205 = vmatprep.subr.mxu0 0.0
    %3206 = vmatpush1.msra.mxu0 %v2997
    %3207 = vmatprep.subr.mxu0 0.0
    %3208 = vmatpush1.msra.mxu0 %v2999
    %3209 = vmatprep.subr.mxu0 0.0
    %3210 = vmatpush1.msra.mxu0 %v3001
    %3211 = vmatprep.subr.mxu0 0.0
    %3212 = vmatpush1.msra.mxu0 %v3003
    %3213 = vmatprep.subr.mxu0 0.0
    %3214 = vmatpush1.msra.mxu0 %v3005
    %3215 = vmatprep.subr.mxu0 0.0
    %3216 = vmatpush1.msra.mxu0 %v3007
    %3217 = vmatprep.subr.mxu0 0.0
    %3218 = vmatpush1.msra.mxu0 %v3009
    %3219 = vmatprep.subr.mxu0 0.0
    %3220 = vmatpush1.msra.mxu0 %v3011
    %3221 = vmatprep.subr.mxu0 0.0
    %3222 = vmatpush1.msra.mxu0 %v3013
    %3223 = vmatprep.subr.mxu0 0.0
    %3224 = vmatpush1.msra.mxu0 %v3015
    %3225 = vmatprep.subr.mxu0 0.0
    %3226 = vmatpush1.msra.mxu0 %v3017
    %3227 = vmatprep.subr.mxu0 0.0
    %3228 = vmatpush1.msra.mxu0 %v3019
    %3229 = vmatprep.subr.mxu0 0.0
    %3230 = vmatpush1.msra.mxu0 %v3021
    %3231 = vmatprep.mubr.f32.mxu0 %v1827
    %3232 = vmatmul.mubr.f32.gmra.mrb[0].mxu0 %v1826
    %v3233 = vpop.f32.mrb[0].mxu0
    %v3234 = vadd.f32 %v3089, %v3233
    %v3235 = vpop.f32.mrb[0].mxu0
    %3236 = vmatprep.mubr.f32.mxu0 %v1831
    %3237 = vmatmul.mubr.f32.gmra.mrb[0].mxu0 %v1830
    %v3238 = vpop.f32.mrb[0].mxu0
    %v3239 = vadd.f32 %v3094, %v3238
    %v3240 = vpop.f32.mrb[0].mxu0
    %3241 = vmatprep.mubr.f32.mxu0 %v1835
    %3242 = vmatmul.mubr.f32.gmra.mrb[0].mxu0 %v1834
    %v3243 = vpop.f32.mrb[0].mxu0
    %v3244 = vadd.f32 %v3099, %v3243
    %v3245 = vpop.f32.mrb[0].mxu0
    %3246 = vmatprep.mubr.f32.mxu0 %v1839
    %3247 = vmatmul.mubr.f32.gmra.mrb[0].mxu0 %v1838
    %v3248 = vpop.f32.mrb[0].mxu0
    %v3249 = vadd.f32 %v3104, %v3248
    %v3250 = vpop.f32.mrb[0].mxu0
    %3251 = vmatprep.mubr.f32.mxu0 %v1843
    %3252 = vmatmul.mubr.f32.gmra.mrb[0].mxu0 %v1842
    %v3253 = vpop.f32.mrb[0].mxu0
    %v3254 = vadd.f32 %v3109, %v3253
    %v3255 = vpop.f32.mrb[0].mxu0
    %3256 = vmatprep.mubr.f32.mxu0 %v1847
    %3257 = vmatmul.mubr.f32.gmra.mrb[0].mxu0 %v1846
    %v3258 = vpop.f32.mrb[0].mxu0
    %v3259 = vadd.f32 %v3114, %v3258
    %v3260 = vpop.f32.mrb[0].mxu0
    %3261 = vmatprep.mubr.f32.mxu0 %v1851
    %3262 = vmatmul.mubr.f32.gmra.mrb[0].mxu0 %v1850
    %v3263 = vpop.f32.mrb[0].mxu0
    %v3264 = vadd.f32 %v3119, %v3263
    %v3265 = vpop.f32.mrb[0].mxu0
    %3266 = vmatprep.mubr.f32.mxu0 %v1855
    %3267 = vmatmul.mubr.f32.gmra.mrb[0].mxu0 %v1854
    %v3268 = vpop.f32.mrb[0].mxu0
    %v3269 = vadd.f32 %v3124, %v3268
    %v3270 = vpop.f32.mrb[0].mxu0
    %3271 = vmatprep.mubr.f32.mxu0 %v1859
    %3272 = vmatmul.mubr.f32.gmra.mrb[0].mxu0 %v1858
    %v3273 = vpop.f32.mrb[0].mxu0
    %v3274 = vadd.f32 %v3129, %v3273
    %v3275 = vpop.f32.mrb[0].mxu0
    %3276 = vmatprep.mubr.f32.mxu0 %v1863
    %3277 = vmatmul.mubr.f32.gmra.mrb[0].mxu0 %v1862
    %v3278 = vpop.f32.mrb[0].mxu0
    %v3279 = vadd.f32 %v3134, %v3278
    %v3280 = vpop.f32.mrb[0].mxu0
    %3281 = vmatprep.mubr.f32.mxu0 %v1867
    %3282 = vmatmul.mubr.f32.gmra.mrb[0].mxu0 %v1866
    %v3283 = vpop.f32.mrb[0].mxu0
    %v3284 = vadd.f32 %v3139, %v3283
    %v3285 = vpop.f32.mrb[0].mxu0
    %3286 = vmatprep.mubr.f32.mxu0 %v1871
    %3287 = vmatmul.mubr.f32.gmra.mrb[0].mxu0 %v1870
    %v3288 = vpop.f32.mrb[0].mxu0
    %v3289 = vadd.f32 %v3144, %v3288
    %v3290 = vpop.f32.mrb[0].mxu0
    %3291 = vmatprep.mubr.f32.mxu0 %v1875
    %3292 = vmatmul.mubr.f32.gmra.mrb[0].mxu0 %v1874
    %v3293 = vpop.f32.mrb[0].mxu0
    %v3294 = vadd.f32 %v3149, %v3293
    %v3295 = vpop.f32.mrb[0].mxu0
    %3296 = vmatprep.mubr.f32.mxu0 %v1879
    %3297 = vmatmul.mubr.f32.gmra.mrb[0].mxu0 %v1878
    %v3298 = vpop.f32.mrb[0].mxu0
    %v3299 = vadd.f32 %v3154, %v3298
    %v3300 = vpop.f32.mrb[0].mxu0
    %3301 = vmatprep.mubr.f32.mxu0 %v1883
    %3302 = vmatmul.mubr.f32.gmra.mrb[0].mxu0 %v1882
    %v3303 = vpop.f32.mrb[0].mxu0
    %v3304 = vadd.f32 %v3159, %v3303
    %v3305 = vpop.f32.mrb[0].mxu0
    %3306 = vmatprep.mubr.f32.mxu0 %v1887
    %3307 = vmatmul.mubr.f32.gmra.mrb[0].mxu0 %v1886
    %v3308 = vpop.f32.mrb[0].mxu0
    %v3309 = vadd.f32 %v3164, %v3308
    %v3310 = vpop.f32.mrb[0].mxu0
    %3311 = vdwg.mxu0
    %v3312 = vmax.f32 %v3234, 0.0
    %v3313 = vmax.f32 %v3239, 0.0
    %v3314 = vmax.f32 %v3244, 0.0
    %v3315 = vmax.f32 %v3249, 0.0
    %v3316 = vmax.f32 %v3254, 0.0
    %v3317 = vmax.f32 %v3259, 0.0
    %v3318 = vmax.f32 %v3264, 0.0
    %v3319 = vmax.f32 %v3269, 0.0
    %v3320 = vmax.f32 %v3274, 0.0
    %v3321 = vmax.f32 %v3279, 0.0
    %v3322 = vmax.f32 %v3284, 0.0
    %v3323 = vmax.f32 %v3289, 0.0
    %v3324 = vmax.f32 %v3294, 0.0
    %v3325 = vmax.f32 %v3299, 0.0
    %v3326 = vmax.f32 %v3304, 0.0
    %v3327 = vmax.f32 %v3309, 0.0
    %v3328 = vsel %vm2290, %v3312, -inf
    %v3329 = vsel %vm2290, %v3313, -inf
    %v3330 = vsel %vm2290, %v3314, -inf
    %v3331 = vsel %vm2290, %v3315, -inf
    %v3332 = vsel %vm2290, %v3316, -inf
    %v3333 = vsel %vm2290, %v3317, -inf
    %v3334 = vsel %vm2290, %v3318, -inf
    %v3335 = vsel %vm2290, %v3319, -inf
    %v3336 = vsel %vm2290, %v3320, -inf
    %v3337 = vsel %vm2290, %v3321, -inf
    %v3338 = vsel %vm2290, %v3322, -inf
    %v3339 = vsel %vm2290, %v3323, -inf
    %v3340 = vsel %vm2290, %v3324, -inf
    %v3341 = vsel %vm2290, %v3325, -inf
    %v3342 = vsel %vm2290, %v3326, -inf
    %v3343 = vsel %vm2290, %v3327, -inf
    %3344 = vmax.xlane.f32.xlu0 %v3328
    %v3345 = vpop.xlane.xlu0 %3344
    %3346 = vmax.xlane.f32.xlu0 %v3329
    %v3347 = vpop.xlane.xlu0 %3346
    %3348 = vmax.xlane.f32.xlu0 %v3330
    %v3349 = vpop.xlane.xlu0 %3348
    %3350 = vmax.xlane.f32.xlu0 %v3331
    %v3351 = vpop.xlane.xlu0 %3350
    %3352 = vmax.xlane.f32.xlu0 %v3332
    %v3353 = vpop.xlane.xlu0 %3352
    %3354 = vmax.xlane.f32.xlu0 %v3333
    %v3355 = vpop.xlane.xlu0 %3354
    %3356 = vmax.xlane.f32.xlu0 %v3334
    %v3357 = vpop.xlane.xlu0 %3356
    %3358 = vmax.xlane.f32.xlu0 %v3335
    %v3359 = vpop.xlane.xlu0 %3358
    %3360 = vmax.xlane.f32.xlu0 %v3336
    %v3361 = vpop.xlane.xlu0 %3360
    %3362 = vmax.xlane.f32.xlu0 %v3337
    %v3363 = vpop.xlane.xlu0 %3362
    %3364 = vmax.xlane.f32.xlu0 %v3338
    %v3365 = vpop.xlane.xlu0 %3364
    %3366 = vmax.xlane.f32.xlu0 %v3339
    %v3367 = vpop.xlane.xlu0 %3366
    %3368 = vmax.xlane.f32.xlu0 %v3340
    %v3369 = vpop.xlane.xlu0 %3368
    %3370 = vmax.xlane.f32.xlu0 %v3341
    %v3371 = vpop.xlane.xlu0 %3370
    %3372 = vmax.xlane.f32.xlu0 %v3342
    %v3373 = vpop.xlane.xlu0 %3372
    %3374 = vmax.xlane.f32.xlu0 %v3343
    %v3375 = vpop.xlane.xlu0 %3374
    %vm3376 = vcmask 7168
    %v3377 = vsel %vm3376, %v2308, %v3345
    %v3378 = vsel %vm3376, %v2310, %v3347
    %v3379 = vsel %vm3376, %v2312, %v3349
    %v3380 = vsel %vm3376, %v2314, %v3351
    %v3381 = vsel %vm3376, %v2316, %v3353
    %v3382 = vsel %vm3376, %v2318, %v3355
    %v3383 = vsel %vm3376, %v2320, %v3357
    %v3384 = vsel %vm3376, %v2322, %v3359
    %v3385 = vsel %vm3376, %v2324, %v3361
    %v3386 = vsel %vm3376, %v2326, %v3363
    %v3387 = vsel %vm3376, %v2328, %v3365
    %v3388 = vsel %vm3376, %v2330, %v3367
    %v3389 = vsel %vm3376, %v2332, %v3369
    %v3390 = vsel %vm3376, %v2334, %v3371
    %v3391 = vsel %vm3376, %v2336, %v3373
    %v3392 = vsel %vm3376, %v2338, %v3375
    %v3393 = vld [vmem:[%s37] sm:$0xff]
    %v3394 = vld [vmem:[%s37 + $0x8] sm:$0xff]
    %v3395 = vld [vmem:[%s37 + $0x10] sm:$0xff]
    %v3396 = vld [vmem:[%s37 + $0x18] sm:$0xff]
    %v3397 = vld [vmem:[%s37 + $0x20] sm:$0xff]
    %v3398 = vld [vmem:[%s37 + $0x28] sm:$0xff]
    %v3399 = vld [vmem:[%s37 + $0x30] sm:$0xff]
    %v3400 = vld [vmem:[%s37 + $0x38] sm:$0xff]
    %v3401 = vld [vmem:[%s37 + $0x40] sm:$0xff]
    %v3402 = vld [vmem:[%s37 + $0x48] sm:$0xff]
    %v3403 = vld [vmem:[%s37 + $0x50] sm:$0xff]
    %v3404 = vld [vmem:[%s37 + $0x58] sm:$0xff]
    %v3405 = vld [vmem:[%s37 + $0x60] sm:$0xff]
    %v3406 = vld [vmem:[%s37 + $0x68] sm:$0xff]
    %v3407 = vld [vmem:[%s37 + $0x70] sm:$0xff]
    %v3408 = vld [vmem:[%s37 + $0x78] sm:$0xff]
    %3410 = vset.pattern.permute.xlu0 0
    %3411 = vperm.xlu0 %3410, %v3393
    %v3412 = vpop.permute.xlu0 %3411
    %3415 = vset.pattern.permute.xlu0 0
    %3416 = vperm.xlu0 %3415, %v3394
    %v3417 = vpop.permute.xlu0 %3416
    %3420 = vset.pattern.permute.xlu0 0
    %3421 = vperm.xlu0 %3420, %v3395
    %v3422 = vpop.permute.xlu0 %3421
    %3425 = vset.pattern.permute.xlu0 0
    %3426 = vperm.xlu0 %3425, %v3396
    %v3427 = vpop.permute.xlu0 %3426
    %3430 = vset.pattern.permute.xlu0 0
    %3431 = vperm.xlu0 %3430, %v3397
    %v3432 = vpop.permute.xlu0 %3431
    %3435 = vset.pattern.permute.xlu0 0
    %3436 = vperm.xlu0 %3435, %v3398
    %v3437 = vpop.permute.xlu0 %3436
    %3440 = vset.pattern.permute.xlu0 0
    %3441 = vperm.xlu0 %3440, %v3399
    %v3442 = vpop.permute.xlu0 %3441
    %3445 = vset.pattern.permute.xlu0 0
    %3446 = vperm.xlu0 %3445, %v3400
    %v3447 = vpop.permute.xlu0 %3446
    %3450 = vset.pattern.permute.xlu0 0
    %3451 = vperm.xlu0 %3450, %v3401
    %v3452 = vpop.permute.xlu0 %3451
    %3455 = vset.pattern.permute.xlu0 0
    %3456 = vperm.xlu0 %3455, %v3402
    %v3457 = vpop.permute.xlu0 %3456
    %3460 = vset.pattern.permute.xlu0 0
    %3461 = vperm.xlu0 %3460, %v3403
    %v3462 = vpop.permute.xlu0 %3461
    %3465 = vset.pattern.permute.xlu0 0
    %3466 = vperm.xlu0 %3465, %v3404
    %v3467 = vpop.permute.xlu0 %3466
    %3470 = vset.pattern.permute.xlu0 0
    %3471 = vperm.xlu0 %3470, %v3405
    %v3472 = vpop.permute.xlu0 %3471
    %3475 = vset.pattern.permute.xlu0 0
    %3476 = vperm.xlu0 %3475, %v3406
    %v3477 = vpop.permute.xlu0 %3476
    %3480 = vset.pattern.permute.xlu0 0
    %3481 = vperm.xlu0 %3480, %v3407
    %v3482 = vpop.permute.xlu0 %3481
    %3485 = vset.pattern.permute.xlu0 0
    %3486 = vperm.xlu0 %3485, %v3408
    %v3487 = vpop.permute.xlu0 %3486
    %v3489 = vlaneseq
    %v3490 = vshrl.u32 %v3489, 7
    %v3491 = vsub.s32 0, %v3490
    %v3492 = vrot.slane %v597, %v3491
    %v3493 = vmul.f32 %v3412, %v3492
    %v3494 = vmul.f32 %v3417, %v3492
    %v3495 = vmul.f32 %v3422, %v3492
    %v3496 = vmul.f32 %v3427, %v3492
    %v3497 = vmul.f32 %v3432, %v3492
    %v3498 = vmul.f32 %v3437, %v3492
    %v3499 = vmul.f32 %v3442, %v3492
    %v3500 = vmul.f32 %v3447, %v3492
    %v3501 = vmul.f32 %v3452, %v3492
    %v3502 = vmul.f32 %v3457, %v3492
    %v3503 = vmul.f32 %v3462, %v3492
    %v3504 = vmul.f32 %v3467, %v3492
    %v3505 = vmul.f32 %v3472, %v3492
    %v3506 = vmul.f32 %v3477, %v3492
    %v3507 = vmul.f32 %v3482, %v3492
    %v3508 = vmul.f32 %v3487, %v3492
    %v3509 = vadd.f32 %v3493, 0.0
    %v3510 = vadd.f32 %v3494, 0.0
    %v3511 = vadd.f32 %v3495, 0.0
    %v3512 = vadd.f32 %v3496, 0.0
    %v3513 = vadd.f32 %v3497, 0.0
    %v3514 = vadd.f32 %v3498, 0.0
    %v3515 = vadd.f32 %v3499, 0.0
    %v3516 = vadd.f32 %v3500, 0.0
    %v3517 = vadd.f32 %v3501, 0.0
    %v3518 = vadd.f32 %v3502, 0.0
    %v3519 = vadd.f32 %v3503, 0.0
    %v3520 = vadd.f32 %v3504, 0.0
    %v3521 = vadd.f32 %v3505, 0.0
    %v3522 = vadd.f32 %v3506, 0.0
    %v3523 = vadd.f32 %v3507, 0.0
    %v3524 = vadd.f32 %v3508, 0.0
    %3525 = vrot.lane.b32.xlu0 %v597, 127
    %v3526 = vpop.permute.xlu0 %3525
    %3527 = vset.pattern.permute.xlu0 1
    %3528 = vperm.xlu0 %3527, %v3393
    %v3529 = vpop.permute.xlu0 %3528
    %3531 = vset.pattern.permute.xlu0 1
    %3532 = vperm.xlu0 %3531, %v3394
    %v3533 = vpop.permute.xlu0 %3532
    %3535 = vset.pattern.permute.xlu0 1
    %3536 = vperm.xlu0 %3535, %v3395
    %v3537 = vpop.permute.xlu0 %3536
    %3539 = vset.pattern.permute.xlu0 1
    %3540 = vperm.xlu0 %3539, %v3396
    %v3541 = vpop.permute.xlu0 %3540
    %3543 = vset.pattern.permute.xlu0 1
    %3544 = vperm.xlu0 %3543, %v3397
    %v3545 = vpop.permute.xlu0 %3544
    %3547 = vset.pattern.permute.xlu0 1
    %3548 = vperm.xlu0 %3547, %v3398
    %v3549 = vpop.permute.xlu0 %3548
    %3551 = vset.pattern.permute.xlu0 1
    %3552 = vperm.xlu0 %3551, %v3399
    %v3553 = vpop.permute.xlu0 %3552
    %3555 = vset.pattern.permute.xlu0 1
    %3556 = vperm.xlu0 %3555, %v3400
    %v3557 = vpop.permute.xlu0 %3556
    %3559 = vset.pattern.permute.xlu0 1
    %3560 = vperm.xlu0 %3559, %v3401
    %v3561 = vpop.permute.xlu0 %3560
    %3563 = vset.pattern.permute.xlu0 1
    %3564 = vperm.xlu0 %3563, %v3402
    %v3565 = vpop.permute.xlu0 %3564
    %3567 = vset.pattern.permute.xlu0 1
    %3568 = vperm.xlu0 %3567, %v3403
    %v3569 = vpop.permute.xlu0 %3568
    %3571 = vset.pattern.permute.xlu0 1
    %3572 = vperm.xlu0 %3571, %v3404
    %v3573 = vpop.permute.xlu0 %3572
    %3575 = vset.pattern.permute.xlu0 1
    %3576 = vperm.xlu0 %3575, %v3405
    %v3577 = vpop.permute.xlu0 %3576
    %3579 = vset.pattern.permute.xlu0 1
    %3580 = vperm.xlu0 %3579, %v3406
    %v3581 = vpop.permute.xlu0 %3580
    %3583 = vset.pattern.permute.xlu0 1
    %3584 = vperm.xlu0 %3583, %v3407
    %v3585 = vpop.permute.xlu0 %3584
    %3587 = vset.pattern.permute.xlu0 1
    %3588 = vperm.xlu0 %3587, %v3408
    %v3589 = vpop.permute.xlu0 %3588
    %v3591 = vlaneseq
    %v3592 = vshrl.u32 %v3591, 7
    %v3593 = vsub.s32 0, %v3592
    %v3594 = vrot.slane %v3526, %v3593
    %v3595 = vmul.f32 %v3529, %v3594
    %v3596 = vmul.f32 %v3533, %v3594
    %v3597 = vmul.f32 %v3537, %v3594
    %v3598 = vmul.f32 %v3541, %v3594
    %v3599 = vmul.f32 %v3545, %v3594
    %v3600 = vmul.f32 %v3549, %v3594
    %v3601 = vmul.f32 %v3553, %v3594
    %v3602 = vmul.f32 %v3557, %v3594
    %v3603 = vmul.f32 %v3561, %v3594
    %v3604 = vmul.f32 %v3565, %v3594
    %v3605 = vmul.f32 %v3569, %v3594
    %v3606 = vmul.f32 %v3573, %v3594
    %v3607 = vmul.f32 %v3577, %v3594
    %v3608 = vmul.f32 %v3581, %v3594
    %v3609 = vmul.f32 %v3585, %v3594
    %v3610 = vmul.f32 %v3589, %v3594
    %v3611 = vadd.f32 %v3509, %v3595
    %v3612 = vadd.f32 %v3510, %v3596
    %v3613 = vadd.f32 %v3511, %v3597
    %v3614 = vadd.f32 %v3512, %v3598
    %v3615 = vadd.f32 %v3513, %v3599
    %v3616 = vadd.f32 %v3514, %v3600
    %v3617 = vadd.f32 %v3515, %v3601
    %v3618 = vadd.f32 %v3516, %v3602
    %v3619 = vadd.f32 %v3517, %v3603
    %v3620 = vadd.f32 %v3518, %v3604
    %v3621 = vadd.f32 %v3519, %v3605
    %v3622 = vadd.f32 %v3520, %v3606
    %v3623 = vadd.f32 %v3521, %v3607
    %v3624 = vadd.f32 %v3522, %v3608
    %v3625 = vadd.f32 %v3523, %v3609
    %v3626 = vadd.f32 %v3524, %v3610
    %3627 = vrot.lane.b32.xlu0 %v597, 126
    %v3628 = vpop.permute.xlu0 %3627
    %3629 = vset.pattern.permute.xlu0 2
    %3630 = vperm.xlu0 %3629, %v3393
    %v3631 = vpop.permute.xlu0 %3630
    %3633 = vset.pattern.permute.xlu0 2
    %3634 = vperm.xlu0 %3633, %v3394
    %v3635 = vpop.permute.xlu0 %3634
    %3637 = vset.pattern.permute.xlu0 2
    %3638 = vperm.xlu0 %3637, %v3395
    %v3639 = vpop.permute.xlu0 %3638
    %3641 = vset.pattern.permute.xlu0 2
    %3642 = vperm.xlu0 %3641, %v3396
    %v3643 = vpop.permute.xlu0 %3642
    %3645 = vset.pattern.permute.xlu0 2
    %3646 = vperm.xlu0 %3645, %v3397
    %v3647 = vpop.permute.xlu0 %3646
    %3649 = vset.pattern.permute.xlu0 2
    %3650 = vperm.xlu0 %3649, %v3398
    %v3651 = vpop.permute.xlu0 %3650
    %3653 = vset.pattern.permute.xlu0 2
    %3654 = vperm.xlu0 %3653, %v3399
    %v3655 = vpop.permute.xlu0 %3654
    %3657 = vset.pattern.permute.xlu0 2
    %3658 = vperm.xlu0 %3657, %v3400
    %v3659 = vpop.permute.xlu0 %3658
    %3661 = vset.pattern.permute.xlu0 2
    %3662 = vperm.xlu0 %3661, %v3401
    %v3663 = vpop.permute.xlu0 %3662
    %3665 = vset.pattern.permute.xlu0 2
    %3666 = vperm.xlu0 %3665, %v3402
    %v3667 = vpop.permute.xlu0 %3666
    %3669 = vset.pattern.permute.xlu0 2
    %3670 = vperm.xlu0 %3669, %v3403
    %v3671 = vpop.permute.xlu0 %3670
    %3673 = vset.pattern.permute.xlu0 2
    %3674 = vperm.xlu0 %3673, %v3404
    %v3675 = vpop.permute.xlu0 %3674
    %3677 = vset.pattern.permute.xlu0 2
    %3678 = vperm.xlu0 %3677, %v3405
    %v3679 = vpop.permute.xlu0 %3678
    %3681 = vset.pattern.permute.xlu0 2
    %3682 = vperm.xlu0 %3681, %v3406
    %v3683 = vpop.permute.xlu0 %3682
    %3685 = vset.pattern.permute.xlu0 2
    %3686 = vperm.xlu0 %3685, %v3407
    %v3687 = vpop.permute.xlu0 %3686
    %3689 = vset.pattern.permute.xlu0 2
    %3690 = vperm.xlu0 %3689, %v3408
    %v3691 = vpop.permute.xlu0 %3690
    %v3693 = vlaneseq
    %v3694 = vshrl.u32 %v3693, 7
    %v3695 = vsub.s32 0, %v3694
    %v3696 = vrot.slane %v3628, %v3695
    %v3697 = vmul.f32 %v3631, %v3696
    %v3698 = vmul.f32 %v3635, %v3696
    %v3699 = vmul.f32 %v3639, %v3696
    %v3700 = vmul.f32 %v3643, %v3696
    %v3701 = vmul.f32 %v3647, %v3696
    %v3702 = vmul.f32 %v3651, %v3696
    %v3703 = vmul.f32 %v3655, %v3696
    %v3704 = vmul.f32 %v3659, %v3696
    %v3705 = vmul.f32 %v3663, %v3696
    %v3706 = vmul.f32 %v3667, %v3696
    %v3707 = vmul.f32 %v3671, %v3696
    %v3708 = vmul.f32 %v3675, %v3696
    %v3709 = vmul.f32 %v3679, %v3696
    %v3710 = vmul.f32 %v3683, %v3696
    %v3711 = vmul.f32 %v3687, %v3696
    %v3712 = vmul.f32 %v3691, %v3696
    %v3713 = vadd.f32 %v3611, %v3697
    %v3714 = vadd.f32 %v3612, %v3698
    %v3715 = vadd.f32 %v3613, %v3699
    %v3716 = vadd.f32 %v3614, %v3700
    %v3717 = vadd.f32 %v3615, %v3701
    %v3718 = vadd.f32 %v3616, %v3702
    %v3719 = vadd.f32 %v3617, %v3703
    %v3720 = vadd.f32 %v3618, %v3704
    %v3721 = vadd.f32 %v3619, %v3705
    %v3722 = vadd.f32 %v3620, %v3706
    %v3723 = vadd.f32 %v3621, %v3707
    %v3724 = vadd.f32 %v3622, %v3708
    %v3725 = vadd.f32 %v3623, %v3709
    %v3726 = vadd.f32 %v3624, %v3710
    %v3727 = vadd.f32 %v3625, %v3711
    %v3728 = vadd.f32 %v3626, %v3712
    %3729 = vrot.lane.b32.xlu0 %v597, 125
    %v3730 = vpop.permute.xlu0 %3729
    %3731 = vset.pattern.permute.xlu0 3
    %3732 = vperm.xlu0 %3731, %v3393
    %v3733 = vpop.permute.xlu0 %3732
    %3735 = vset.pattern.permute.xlu0 3
    %3736 = vperm.xlu0 %3735, %v3394
    %v3737 = vpop.permute.xlu0 %3736
    %3739 = vset.pattern.permute.xlu0 3
    %3740 = vperm.xlu0 %3739, %v3395
    %v3741 = vpop.permute.xlu0 %3740
    %3743 = vset.pattern.permute.xlu0 3
    %3744 = vperm.xlu0 %3743, %v3396
    %v3745 = vpop.permute.xlu0 %3744
    %3747 = vset.pattern.permute.xlu0 3
    %3748 = vperm.xlu0 %3747, %v3397
    %v3749 = vpop.permute.xlu0 %3748
    %3751 = vset.pattern.permute.xlu0 3
    %3752 = vperm.xlu0 %3751, %v3398
    %v3753 = vpop.permute.xlu0 %3752
    %3755 = vset.pattern.permute.xlu0 3
    %3756 = vperm.xlu0 %3755, %v3399
    %v3757 = vpop.permute.xlu0 %3756
    %3759 = vset.pattern.permute.xlu0 3
    %3760 = vperm.xlu0 %3759, %v3400
    %v3761 = vpop.permute.xlu0 %3760
    %3763 = vset.pattern.permute.xlu0 3
    %3764 = vperm.xlu0 %3763, %v3401
    %v3765 = vpop.permute.xlu0 %3764
    %3767 = vset.pattern.permute.xlu0 3
    %3768 = vperm.xlu0 %3767, %v3402
    %v3769 = vpop.permute.xlu0 %3768
    %3771 = vset.pattern.permute.xlu0 3
    %3772 = vperm.xlu0 %3771, %v3403
    %v3773 = vpop.permute.xlu0 %3772
    %3775 = vset.pattern.permute.xlu0 3
    %3776 = vperm.xlu0 %3775, %v3404
    %v3777 = vpop.permute.xlu0 %3776
    %3779 = vset.pattern.permute.xlu0 3
    %3780 = vperm.xlu0 %3779, %v3405
    %v3781 = vpop.permute.xlu0 %3780
    %3783 = vset.pattern.permute.xlu0 3
    %3784 = vperm.xlu0 %3783, %v3406
    %v3785 = vpop.permute.xlu0 %3784
    %3787 = vset.pattern.permute.xlu0 3
    %3788 = vperm.xlu0 %3787, %v3407
    %v3789 = vpop.permute.xlu0 %3788
    %3791 = vset.pattern.permute.xlu0 3
    %3792 = vperm.xlu0 %3791, %v3408
    %v3793 = vpop.permute.xlu0 %3792
    %v3795 = vlaneseq
    %v3796 = vshrl.u32 %v3795, 7
    %v3797 = vsub.s32 0, %v3796
    %v3798 = vrot.slane %v3730, %v3797
    %v3799 = vmul.f32 %v3733, %v3798
    %v3800 = vmul.f32 %v3737, %v3798
    %v3801 = vmul.f32 %v3741, %v3798
    %v3802 = vmul.f32 %v3745, %v3798
    %v3803 = vmul.f32 %v3749, %v3798
    %v3804 = vmul.f32 %v3753, %v3798
    %v3805 = vmul.f32 %v3757, %v3798
    %v3806 = vmul.f32 %v3761, %v3798
    %v3807 = vmul.f32 %v3765, %v3798
    %v3808 = vmul.f32 %v3769, %v3798
    %v3809 = vmul.f32 %v3773, %v3798
    %v3810 = vmul.f32 %v3777, %v3798
    %v3811 = vmul.f32 %v3781, %v3798
    %v3812 = vmul.f32 %v3785, %v3798
    %v3813 = vmul.f32 %v3789, %v3798
    %v3814 = vmul.f32 %v3793, %v3798
    %v3815 = vadd.f32 %v3713, %v3799
    %v3816 = vadd.f32 %v3714, %v3800
    %v3817 = vadd.f32 %v3715, %v3801
    %v3818 = vadd.f32 %v3716, %v3802
    %v3819 = vadd.f32 %v3717, %v3803
    %v3820 = vadd.f32 %v3718, %v3804
    %v3821 = vadd.f32 %v3719, %v3805
    %v3822 = vadd.f32 %v3720, %v3806
    %v3823 = vadd.f32 %v3721, %v3807
    %v3824 = vadd.f32 %v3722, %v3808
    %v3825 = vadd.f32 %v3723, %v3809
    %v3826 = vadd.f32 %v3724, %v3810
    %v3827 = vadd.f32 %v3725, %v3811
    %v3828 = vadd.f32 %v3726, %v3812
    %v3829 = vadd.f32 %v3727, %v3813
    %v3830 = vadd.f32 %v3728, %v3814
    %v3831 = vld [vmem:[%s39] sm:$0xff]
    %v3832 = vld [vmem:[%s39 + $0x8] sm:$0xff]
    %v3833 = vld [vmem:[%s39 + $0x10] sm:$0xff]
    %v3834 = vld [vmem:[%s39 + $0x18] sm:$0xff]
    %v3835 = vld [vmem:[%s39 + $0x20] sm:$0xff]
    %v3836 = vld [vmem:[%s39 + $0x28] sm:$0xff]
    %v3837 = vld [vmem:[%s39 + $0x30] sm:$0xff]
    %v3838 = vld [vmem:[%s39 + $0x38] sm:$0xff]
    %v3839 = vld [vmem:[%s39 + $0x40] sm:$0xff]
    %v3840 = vld [vmem:[%s39 + $0x48] sm:$0xff]
    %v3841 = vld [vmem:[%s39 + $0x50] sm:$0xff]
    %v3842 = vld [vmem:[%s39 + $0x58] sm:$0xff]
    %v3843 = vld [vmem:[%s39 + $0x60] sm:$0xff]
    %v3844 = vld [vmem:[%s39 + $0x68] sm:$0xff]
    %v3845 = vld [vmem:[%s39 + $0x70] sm:$0xff]
    %v3846 = vld [vmem:[%s39 + $0x78] sm:$0xff]
    %3848 = vset.pattern.permute.xlu0 0
    %3849 = vperm.xlu0 %3848, %v3831
    %v3850 = vpop.permute.xlu0 %3849
    %3853 = vset.pattern.permute.xlu0 0
    %3854 = vperm.xlu0 %3853, %v3832
    %v3855 = vpop.permute.xlu0 %3854
    %3858 = vset.pattern.permute.xlu0 0
    %3859 = vperm.xlu0 %3858, %v3833
    %v3860 = vpop.permute.xlu0 %3859
    %3863 = vset.pattern.permute.xlu0 0
    %3864 = vperm.xlu0 %3863, %v3834
    %v3865 = vpop.permute.xlu0 %3864
    %3868 = vset.pattern.permute.xlu0 0
    %3869 = vperm.xlu0 %3868, %v3835
    %v3870 = vpop.permute.xlu0 %3869
    %3873 = vset.pattern.permute.xlu0 0
    %3874 = vperm.xlu0 %3873, %v3836
    %v3875 = vpop.permute.xlu0 %3874
    %3878 = vset.pattern.permute.xlu0 0
    %3879 = vperm.xlu0 %3878, %v3837
    %v3880 = vpop.permute.xlu0 %3879
    %3883 = vset.pattern.permute.xlu0 0
    %3884 = vperm.xlu0 %3883, %v3838
    %v3885 = vpop.permute.xlu0 %3884
    %3888 = vset.pattern.permute.xlu0 0
    %3889 = vperm.xlu0 %3888, %v3839
    %v3890 = vpop.permute.xlu0 %3889
    %3893 = vset.pattern.permute.xlu0 0
    %3894 = vperm.xlu0 %3893, %v3840
    %v3895 = vpop.permute.xlu0 %3894
    %3898 = vset.pattern.permute.xlu0 0
    %3899 = vperm.xlu0 %3898, %v3841
    %v3900 = vpop.permute.xlu0 %3899
    %3903 = vset.pattern.permute.xlu0 0
    %3904 = vperm.xlu0 %3903, %v3842
    %v3905 = vpop.permute.xlu0 %3904
    %3908 = vset.pattern.permute.xlu0 0
    %3909 = vperm.xlu0 %3908, %v3843
    %v3910 = vpop.permute.xlu0 %3909
    %3913 = vset.pattern.permute.xlu0 0
    %3914 = vperm.xlu0 %3913, %v3844
    %v3915 = vpop.permute.xlu0 %3914
    %3918 = vset.pattern.permute.xlu0 0
    %3919 = vperm.xlu0 %3918, %v3845
    %v3920 = vpop.permute.xlu0 %3919
    %3923 = vset.pattern.permute.xlu0 0
    %3924 = vperm.xlu0 %3923, %v3846
    %v3925 = vpop.permute.xlu0 %3924
    %v3927 = vadd.f32 %v3815, %v3850
    %v3928 = vadd.f32 %v3816, %v3855
    %v3929 = vadd.f32 %v3817, %v3860
    %v3930 = vadd.f32 %v3818, %v3865
    %v3931 = vadd.f32 %v3819, %v3870
    %v3932 = vadd.f32 %v3820, %v3875
    %v3933 = vadd.f32 %v3821, %v3880
    %v3934 = vadd.f32 %v3822, %v3885
    %v3935 = vadd.f32 %v3823, %v3890
    %v3936 = vadd.f32 %v3824, %v3895
    %v3937 = vadd.f32 %v3825, %v3900
    %v3938 = vadd.f32 %v3826, %v3905
    %v3939 = vadd.f32 %v3827, %v3910
    %v3940 = vadd.f32 %v3828, %v3915
    %v3941 = vadd.f32 %v3829, %v3920
    %v3942 = vadd.f32 %v3830, %v3925
    %v3943 = vmax.f32 %v3927, 0.0
    %v3944 = vmax.f32 %v3928, 0.0
    %v3945 = vmax.f32 %v3929, 0.0
    %v3946 = vmax.f32 %v3930, 0.0
    %v3947 = vmax.f32 %v3931, 0.0
    %v3948 = vmax.f32 %v3932, 0.0
    %v3949 = vmax.f32 %v3933, 0.0
    %v3950 = vmax.f32 %v3934, 0.0
    %v3951 = vmax.f32 %v3935, 0.0
    %v3952 = vmax.f32 %v3936, 0.0
    %v3953 = vmax.f32 %v3937, 0.0
    %v3954 = vmax.f32 %v3938, 0.0
    %v3955 = vmax.f32 %v3939, 0.0
    %v3956 = vmax.f32 %v3940, 0.0
    %v3957 = vmax.f32 %v3941, 0.0
    %v3958 = vmax.f32 %v3942, 0.0
    %3959 = vrot.lane.b32.xlu0 %v3943, 127
    %v3960 = vpop.permute.xlu0 %3959
    %3961 = vrot.lane.b32.xlu0 %v3944, 127
    %v3962 = vpop.permute.xlu0 %3961
    %3963 = vrot.lane.b32.xlu0 %v3945, 127
    %v3964 = vpop.permute.xlu0 %3963
    %3965 = vrot.lane.b32.xlu0 %v3946, 127
    %v3966 = vpop.permute.xlu0 %3965
    %3967 = vrot.lane.b32.xlu0 %v3947, 127
    %v3968 = vpop.permute.xlu0 %3967
    %3969 = vrot.lane.b32.xlu0 %v3948, 127
    %v3970 = vpop.permute.xlu0 %3969
    %3971 = vrot.lane.b32.xlu0 %v3949, 127
    %v3972 = vpop.permute.xlu0 %3971
    %3973 = vrot.lane.b32.xlu0 %v3950, 127
    %v3974 = vpop.permute.xlu0 %3973
    %3975 = vrot.lane.b32.xlu0 %v3951, 127
    %v3976 = vpop.permute.xlu0 %3975
    %3977 = vrot.lane.b32.xlu0 %v3952, 127
    %v3978 = vpop.permute.xlu0 %3977
    %3979 = vrot.lane.b32.xlu0 %v3953, 127
    %v3980 = vpop.permute.xlu0 %3979
    %3981 = vrot.lane.b32.xlu0 %v3954, 127
    %v3982 = vpop.permute.xlu0 %3981
    %3983 = vrot.lane.b32.xlu0 %v3955, 127
    %v3984 = vpop.permute.xlu0 %3983
    %3985 = vrot.lane.b32.xlu0 %v3956, 127
    %v3986 = vpop.permute.xlu0 %3985
    %3987 = vrot.lane.b32.xlu0 %v3957, 127
    %v3988 = vpop.permute.xlu0 %3987
    %3989 = vrot.lane.b32.xlu0 %v3958, 127
    %v3990 = vpop.permute.xlu0 %3989
    %3991 = vrot.lane.b32.xlu0 %v3943, 126
    %v3992 = vpop.permute.xlu0 %3991
    %3993 = vrot.lane.b32.xlu0 %v3944, 126
    %v3994 = vpop.permute.xlu0 %3993
    %3995 = vrot.lane.b32.xlu0 %v3945, 126
    %v3996 = vpop.permute.xlu0 %3995
    %3997 = vrot.lane.b32.xlu0 %v3946, 126
    %v3998 = vpop.permute.xlu0 %3997
    %3999 = vrot.lane.b32.xlu0 %v3947, 126
    %v4000 = vpop.permute.xlu0 %3999
    %4001 = vrot.lane.b32.xlu0 %v3948, 126
    %v4002 = vpop.permute.xlu0 %4001
    %4003 = vrot.lane.b32.xlu0 %v3949, 126
    %v4004 = vpop.permute.xlu0 %4003
    %4005 = vrot.lane.b32.xlu0 %v3950, 126
    %v4006 = vpop.permute.xlu0 %4005
    %4007 = vrot.lane.b32.xlu0 %v3951, 126
    %v4008 = vpop.permute.xlu0 %4007
    %4009 = vrot.lane.b32.xlu0 %v3952, 126
    %v4010 = vpop.permute.xlu0 %4009
    %4011 = vrot.lane.b32.xlu0 %v3953, 126
    %v4012 = vpop.permute.xlu0 %4011
    %4013 = vrot.lane.b32.xlu0 %v3954, 126
    %v4014 = vpop.permute.xlu0 %4013
    %4015 = vrot.lane.b32.xlu0 %v3955, 126
    %v4016 = vpop.permute.xlu0 %4015
    %4017 = vrot.lane.b32.xlu0 %v3956, 126
    %v4018 = vpop.permute.xlu0 %4017
    %4019 = vrot.lane.b32.xlu0 %v3957, 126
    %v4020 = vpop.permute.xlu0 %4019
    %4021 = vrot.lane.b32.xlu0 %v3958, 126
    %v4022 = vpop.permute.xlu0 %4021
    %4023 = vrot.lane.b32.xlu0 %v3943, 125
    %v4024 = vpop.permute.xlu0 %4023
    %4025 = vrot.lane.b32.xlu0 %v3944, 125
    %v4026 = vpop.permute.xlu0 %4025
    %4027 = vrot.lane.b32.xlu0 %v3945, 125
    %v4028 = vpop.permute.xlu0 %4027
    %4029 = vrot.lane.b32.xlu0 %v3946, 125
    %v4030 = vpop.permute.xlu0 %4029
    %4031 = vrot.lane.b32.xlu0 %v3947, 125
    %v4032 = vpop.permute.xlu0 %4031
    %4033 = vrot.lane.b32.xlu0 %v3948, 125
    %v4034 = vpop.permute.xlu0 %4033
    %4035 = vrot.lane.b32.xlu0 %v3949, 125
    %v4036 = vpop.permute.xlu0 %4035
    %4037 = vrot.lane.b32.xlu0 %v3950, 125
    %v4038 = vpop.permute.xlu0 %4037
    %4039 = vrot.lane.b32.xlu0 %v3951, 125
    %v4040 = vpop.permute.xlu0 %4039
    %4041 = vrot.lane.b32.xlu0 %v3952, 125
    %v4042 = vpop.permute.xlu0 %4041
    %4043 = vrot.lane.b32.xlu0 %v3953, 125
    %v4044 = vpop.permute.xlu0 %4043
    %4045 = vrot.lane.b32.xlu0 %v3954, 125
    %v4046 = vpop.permute.xlu0 %4045
    %4047 = vrot.lane.b32.xlu0 %v3955, 125
    %v4048 = vpop.permute.xlu0 %4047
    %4049 = vrot.lane.b32.xlu0 %v3956, 125
    %v4050 = vpop.permute.xlu0 %4049
    %4051 = vrot.lane.b32.xlu0 %v3957, 125
    %v4052 = vpop.permute.xlu0 %4051
    %4053 = vrot.lane.b32.xlu0 %v3958, 125
    %v4054 = vpop.permute.xlu0 %4053
    %v4055 = vld [vmem:[%s41] sm:$0xff]
    %v4056 = vld [vmem:[%s41 + $0x8] sm:$0xff]
    %v4057 = vld [vmem:[%s41 + $0x10] sm:$0xff]
    %v4058 = vld [vmem:[%s41 + $0x18] sm:$0xff]
    %v4059 = vld [vmem:[%s41 + $0x20] sm:$0xff]
    %v4060 = vld [vmem:[%s41 + $0x28] sm:$0xff]
    %v4061 = vld [vmem:[%s41 + $0x30] sm:$0xff]
    %v4062 = vld [vmem:[%s41 + $0x38] sm:$0xff]
    %v4063 = vld [vmem:[%s41 + $0x40] sm:$0xff]
    %v4064 = vld [vmem:[%s41 + $0x48] sm:$0xff]
    %v4065 = vld [vmem:[%s41 + $0x50] sm:$0xff]
    %v4066 = vld [vmem:[%s41 + $0x58] sm:$0xff]
    %v4067 = vld [vmem:[%s41 + $0x60] sm:$0xff]
    %v4068 = vld [vmem:[%s41 + $0x68] sm:$0xff]
    %v4069 = vld [vmem:[%s41 + $0x70] sm:$0xff]
    %v4070 = vld [vmem:[%s41 + $0x78] sm:$0xff]
    %v4071 = vld [vmem:[%s41 + $0x80] sm:$0xff]
    %v4072 = vld [vmem:[%s41 + $0x88] sm:$0xff]
    %v4073 = vld [vmem:[%s41 + $0x90] sm:$0xff]
    %v4074 = vld [vmem:[%s41 + $0x98] sm:$0xff]
    %v4075 = vld [vmem:[%s41 + $0xa0] sm:$0xff]
    %v4076 = vld [vmem:[%s41 + $0xa8] sm:$0xff]
    %v4077 = vld [vmem:[%s41 + $0xb0] sm:$0xff]
    %v4078 = vld [vmem:[%s41 + $0xb8] sm:$0xff]
    %v4079 = vld [vmem:[%s41 + $0xc0] sm:$0xff]
    %v4080 = vld [vmem:[%s41 + $0xc8] sm:$0xff]
    %v4081 = vld [vmem:[%s41 + $0xd0] sm:$0xff]
    %v4082 = vld [vmem:[%s41 + $0xd8] sm:$0xff]
    %v4083 = vld [vmem:[%s41 + $0xe0] sm:$0xff]
    %v4084 = vld [vmem:[%s41 + $0xe8] sm:$0xff]
    %v4085 = vld [vmem:[%s41 + $0xf0] sm:$0xff]
    %v4086 = vld [vmem:[%s41 + $0xf8] sm:$0xff]
    %v4087 = vld [vmem:[%s41 + $0x100] sm:$0xff]
    %v4088 = vld [vmem:[%s41 + $0x108] sm:$0xff]
    %v4089 = vld [vmem:[%s41 + $0x110] sm:$0xff]
    %v4090 = vld [vmem:[%s41 + $0x118] sm:$0xff]
    %v4091 = vld [vmem:[%s41 + $0x120] sm:$0xff]
    %v4092 = vld [vmem:[%s41 + $0x128] sm:$0xff]
    %v4093 = vld [vmem:[%s41 + $0x130] sm:$0xff]
    %v4094 = vld [vmem:[%s41 + $0x138] sm:$0xff]
    %v4095 = vld [vmem:[%s41 + $0x140] sm:$0xff]
    %v4096 = vld [vmem:[%s41 + $0x148] sm:$0xff]
    %v4097 = vld [vmem:[%s41 + $0x150] sm:$0xff]
    %v4098 = vld [vmem:[%s41 + $0x158] sm:$0xff]
    %v4099 = vld [vmem:[%s41 + $0x160] sm:$0xff]
    %v4100 = vld [vmem:[%s41 + $0x168] sm:$0xff]
    %v4101 = vld [vmem:[%s41 + $0x170] sm:$0xff]
    %v4102 = vld [vmem:[%s41 + $0x178] sm:$0xff]
    %v4103 = vld [vmem:[%s41 + $0x180] sm:$0xff]
    %v4104 = vld [vmem:[%s41 + $0x188] sm:$0xff]
    %v4105 = vld [vmem:[%s41 + $0x190] sm:$0xff]
    %v4106 = vld [vmem:[%s41 + $0x198] sm:$0xff]
    %v4107 = vld [vmem:[%s41 + $0x1a0] sm:$0xff]
    %v4108 = vld [vmem:[%s41 + $0x1a8] sm:$0xff]
    %v4109 = vld [vmem:[%s41 + $0x1b0] sm:$0xff]
    %v4110 = vld [vmem:[%s41 + $0x1b8] sm:$0xff]
    %v4111 = vld [vmem:[%s41 + $0x1c0] sm:$0xff]
    %v4112 = vld [vmem:[%s41 + $0x1c8] sm:$0xff]
    %v4113 = vld [vmem:[%s41 + $0x1d0] sm:$0xff]
    %v4114 = vld [vmem:[%s41 + $0x1d8] sm:$0xff]
    %v4115 = vld [vmem:[%s41 + $0x1e0] sm:$0xff]
    %v4116 = vld [vmem:[%s41 + $0x1e8] sm:$0xff]
    %v4117 = vld [vmem:[%s41 + $0x1f0] sm:$0xff]
    %v4118 = vld [vmem:[%s41 + $0x1f8] sm:$0xff]
    %v4119 = vld [vmem:[%s43] sm:$0xff]
    %v4120 = vld [vmem:[%s43 + $0x8] sm:$0xff]
    %v4121 = vld [vmem:[%s43 + $0x10] sm:$0xff]
    %v4122 = vld [vmem:[%s43 + $0x18] sm:$0xff]
    %v4123 = vld [vmem:[%s43 + $0x20] sm:$0xff]
    %v4124 = vld [vmem:[%s43 + $0x28] sm:$0xff]
    %v4125 = vld [vmem:[%s43 + $0x30] sm:$0xff]
    %v4126 = vld [vmem:[%s43 + $0x38] sm:$0xff]
    %v4127 = vld [vmem:[%s43 + $0x40] sm:$0xff]
    %v4128 = vld [vmem:[%s43 + $0x48] sm:$0xff]
    %v4129 = vld [vmem:[%s43 + $0x50] sm:$0xff]
    %v4130 = vld [vmem:[%s43 + $0x58] sm:$0xff]
    %v4131 = vld [vmem:[%s43 + $0x60] sm:$0xff]
    %v4132 = vld [vmem:[%s43 + $0x68] sm:$0xff]
    %v4133 = vld [vmem:[%s43 + $0x70] sm:$0xff]
    %v4134 = vld [vmem:[%s43 + $0x78] sm:$0xff]
    %4136 = vset.pattern.permute.xlu0 0
    %4137 = vperm.xlu0 %4136, %v4119
    %v4138 = vpop.permute.xlu0 %4137
    %4141 = vset.pattern.permute.xlu0 0
    %4142 = vperm.xlu0 %4141, %v4120
    %v4143 = vpop.permute.xlu0 %4142
    %4146 = vset.pattern.permute.xlu0 0
    %4147 = vperm.xlu0 %4146, %v4121
    %v4148 = vpop.permute.xlu0 %4147
    %4151 = vset.pattern.permute.xlu0 0
    %4152 = vperm.xlu0 %4151, %v4122
    %v4153 = vpop.permute.xlu0 %4152
    %4156 = vset.pattern.permute.xlu0 0
    %4157 = vperm.xlu0 %4156, %v4123
    %v4158 = vpop.permute.xlu0 %4157
    %4161 = vset.pattern.permute.xlu0 0
    %4162 = vperm.xlu0 %4161, %v4124
    %v4163 = vpop.permute.xlu0 %4162
    %4166 = vset.pattern.permute.xlu0 0
    %4167 = vperm.xlu0 %4166, %v4125
    %v4168 = vpop.permute.xlu0 %4167
    %4171 = vset.pattern.permute.xlu0 0
    %4172 = vperm.xlu0 %4171, %v4126
    %v4173 = vpop.permute.xlu0 %4172
    %4176 = vset.pattern.permute.xlu0 0
    %4177 = vperm.xlu0 %4176, %v4127
    %v4178 = vpop.permute.xlu0 %4177
    %4181 = vset.pattern.permute.xlu0 0
    %4182 = vperm.xlu0 %4181, %v4128
    %v4183 = vpop.permute.xlu0 %4182
    %4186 = vset.pattern.permute.xlu0 0
    %4187 = vperm.xlu0 %4186, %v4129
    %v4188 = vpop.permute.xlu0 %4187
    %4191 = vset.pattern.permute.xlu0 0
    %4192 = vperm.xlu0 %4191, %v4130
    %v4193 = vpop.permute.xlu0 %4192
    %4196 = vset.pattern.permute.xlu0 0
    %4197 = vperm.xlu0 %4196, %v4131
    %v4198 = vpop.permute.xlu0 %4197
    %4201 = vset.pattern.permute.xlu0 0
    %4202 = vperm.xlu0 %4201, %v4132
    %v4203 = vpop.permute.xlu0 %4202
    %4206 = vset.pattern.permute.xlu0 0
    %4207 = vperm.xlu0 %4206, %v4133
    %v4208 = vpop.permute.xlu0 %4207
    %4211 = vset.pattern.permute.xlu0 0
    %4212 = vperm.xlu0 %4211, %v4134
    %v4213 = vpop.permute.xlu0 %4212
    %4215 = vmatprep.subr.mxu0 0.0
    %4216 = vmatpush1.msra.mxu0 %v3943
    %4217 = vmatprep.subr.mxu0 0.0
    %4218 = vmatpush1.msra.mxu0 %v3944
    %4219 = vmatprep.subr.mxu0 0.0
    %4220 = vmatpush1.msra.mxu0 %v3945
    %4221 = vmatprep.subr.mxu0 0.0
    %4222 = vmatpush1.msra.mxu0 %v3946
    %4223 = vmatprep.subr.mxu0 0.0
    %4224 = vmatpush1.msra.mxu0 %v3947
    %4225 = vmatprep.subr.mxu0 0.0
    %4226 = vmatpush1.msra.mxu0 %v3948
    %4227 = vmatprep.subr.mxu0 0.0
    %4228 = vmatpush1.msra.mxu0 %v3949
    %4229 = vmatprep.subr.mxu0 0.0
    %4230 = vmatpush1.msra.mxu0 %v3950
    %4231 = vmatprep.subr.mxu0 0.0
    %4232 = vmatpush1.msra.mxu0 %v3951
    %4233 = vmatprep.subr.mxu0 0.0
    %4234 = vmatpush1.msra.mxu0 %v3952
    %4235 = vmatprep.subr.mxu0 0.0
    %4236 = vmatpush1.msra.mxu0 %v3953
    %4237 = vmatprep.subr.mxu0 0.0
    %4238 = vmatpush1.msra.mxu0 %v3954
    %4239 = vmatprep.subr.mxu0 0.0
    %4240 = vmatpush1.msra.mxu0 %v3955
    %4241 = vmatprep.subr.mxu0 0.0
    %4242 = vmatpush1.msra.mxu0 %v3956
    %4243 = vmatprep.subr.mxu0 0.0
    %4244 = vmatpush1.msra.mxu0 %v3957
    %4245 = vmatprep.subr.mxu0 0.0
    %4246 = vmatpush1.msra.mxu0 %v3958
    %4247 = vmatprep.subr.mxu0 0.0
    %4248 = vmatpush1.msra.mxu0 %v3960
    %4249 = vmatprep.subr.mxu0 0.0
    %4250 = vmatpush1.msra.mxu0 %v3962
    %4251 = vmatprep.subr.mxu0 0.0
    %4252 = vmatpush1.msra.mxu0 %v3964
    %4253 = vmatprep.subr.mxu0 0.0
    %4254 = vmatpush1.msra.mxu0 %v3966
    %4255 = vmatprep.subr.mxu0 0.0
    %4256 = vmatpush1.msra.mxu0 %v3968
    %4257 = vmatprep.subr.mxu0 0.0
    %4258 = vmatpush1.msra.mxu0 %v3970
    %4259 = vmatprep.subr.mxu0 0.0
    %4260 = vmatpush1.msra.mxu0 %v3972
    %4261 = vmatprep.subr.mxu0 0.0
    %4262 = vmatpush1.msra.mxu0 %v3974
    %4263 = vmatprep.subr.mxu0 0.0
    %4264 = vmatpush1.msra.mxu0 %v3976
    %4265 = vmatprep.subr.mxu0 0.0
    %4266 = vmatpush1.msra.mxu0 %v3978
    %4267 = vmatprep.subr.mxu0 0.0
    %4268 = vmatpush1.msra.mxu0 %v3980
    %4269 = vmatprep.subr.mxu0 0.0
    %4270 = vmatpush1.msra.mxu0 %v3982
    %4271 = vmatprep.subr.mxu0 0.0
    %4272 = vmatpush1.msra.mxu0 %v3984
    %4273 = vmatprep.subr.mxu0 0.0
    %4274 = vmatpush1.msra.mxu0 %v3986
    %4275 = vmatprep.subr.mxu0 0.0
    %4276 = vmatpush1.msra.mxu0 %v3988
    %4277 = vmatprep.subr.mxu0 0.0
    %4278 = vmatpush1.msra.mxu0 %v3990
    %4279 = vmatprep.mubr.f32.mxu0 %v4056
    %4280 = vmatmul.mubr.f32.gmra.mrb[0].mxu0 %v4055
    %v4281 = vpop.f32.mrb[0].mxu0
    %v4282 = vadd.f32 %v4138, %v4281
    %v4283 = vpop.f32.mrb[0].mxu0
    %4284 = vmatprep.mubr.f32.mxu0 %v4060
    %4285 = vmatmul.mubr.f32.gmra.mrb[0].mxu0 %v4059
    %v4286 = vpop.f32.mrb[0].mxu0
    %v4287 = vadd.f32 %v4143, %v4286
    %v4288 = vpop.f32.mrb[0].mxu0
    %4289 = vmatprep.mubr.f32.mxu0 %v4064
    %4290 = vmatmul.mubr.f32.gmra.mrb[0].mxu0 %v4063
    %v4291 = vpop.f32.mrb[0].mxu0
    %v4292 = vadd.f32 %v4148, %v4291
    %v4293 = vpop.f32.mrb[0].mxu0
    %4294 = vmatprep.mubr.f32.mxu0 %v4068
    %4295 = vmatmul.mubr.f32.gmra.mrb[0].mxu0 %v4067
    %v4296 = vpop.f32.mrb[0].mxu0
    %v4297 = vadd.f32 %v4153, %v4296
    %v4298 = vpop.f32.mrb[0].mxu0
    %4299 = vmatprep.mubr.f32.mxu0 %v4072
    %4300 = vmatmul.mubr.f32.gmra.mrb[0].mxu0 %v4071
    %v4301 = vpop.f32.mrb[0].mxu0
    %v4302 = vadd.f32 %v4158, %v4301
    %v4303 = vpop.f32.mrb[0].mxu0
    %4304 = vmatprep.mubr.f32.mxu0 %v4076
    %4305 = vmatmul.mubr.f32.gmra.mrb[0].mxu0 %v4075
    %v4306 = vpop.f32.mrb[0].mxu0
    %v4307 = vadd.f32 %v4163, %v4306
    %v4308 = vpop.f32.mrb[0].mxu0
    %4309 = vmatprep.mubr.f32.mxu0 %v4080
    %4310 = vmatmul.mubr.f32.gmra.mrb[0].mxu0 %v4079
    %v4311 = vpop.f32.mrb[0].mxu0
    %v4312 = vadd.f32 %v4168, %v4311
    %v4313 = vpop.f32.mrb[0].mxu0
    %4314 = vmatprep.mubr.f32.mxu0 %v4084
    %4315 = vmatmul.mubr.f32.gmra.mrb[0].mxu0 %v4083
    %v4316 = vpop.f32.mrb[0].mxu0
    %v4317 = vadd.f32 %v4173, %v4316
    %v4318 = vpop.f32.mrb[0].mxu0
    %4319 = vmatprep.mubr.f32.mxu0 %v4088
    %4320 = vmatmul.mubr.f32.gmra.mrb[0].mxu0 %v4087
    %v4321 = vpop.f32.mrb[0].mxu0
    %v4322 = vadd.f32 %v4178, %v4321
    %v4323 = vpop.f32.mrb[0].mxu0
    %4324 = vmatprep.mubr.f32.mxu0 %v4092
    %4325 = vmatmul.mubr.f32.gmra.mrb[0].mxu0 %v4091
    %v4326 = vpop.f32.mrb[0].mxu0
    %v4327 = vadd.f32 %v4183, %v4326
    %v4328 = vpop.f32.mrb[0].mxu0
    %4329 = vmatprep.mubr.f32.mxu0 %v4096
    %4330 = vmatmul.mubr.f32.gmra.mrb[0].mxu0 %v4095
    %v4331 = vpop.f32.mrb[0].mxu0
    %v4332 = vadd.f32 %v4188, %v4331
    %v4333 = vpop.f32.mrb[0].mxu0
    %4334 = vmatprep.mubr.f32.mxu0 %v4100
    %4335 = vmatmul.mubr.f32.gmra.mrb[0].mxu0 %v4099
    %v4336 = vpop.f32.mrb[0].mxu0
    %v4337 = vadd.f32 %v4193, %v4336
    %v4338 = vpop.f32.mrb[0].mxu0
    %4339 = vmatprep.mubr.f32.mxu0 %v4104
    %4340 = vmatmul.mubr.f32.gmra.mrb[0].mxu0 %v4103
    %v4341 = vpop.f32.mrb[0].mxu0
    %v4342 = vadd.f32 %v4198, %v4341
    %v4343 = vpop.f32.mrb[0].mxu0
    %4344 = vmatprep.mubr.f32.mxu0 %v4108
    %4345 = vmatmul.mubr.f32.gmra.mrb[0].mxu0 %v4107
    %v4346 = vpop.f32.mrb[0].mxu0
    %v4347 = vadd.f32 %v4203, %v4346
    %v4348 = vpop.f32.mrb[0].mxu0
    %4349 = vmatprep.mubr.f32.mxu0 %v4112
    %4350 = vmatmul.mubr.f32.gmra.mrb[0].mxu0 %v4111
    %v4351 = vpop.f32.mrb[0].mxu0
    %v4352 = vadd.f32 %v4208, %v4351
    %v4353 = vpop.f32.mrb[0].mxu0
    %4354 = vmatprep.mubr.f32.mxu0 %v4116
    %4355 = vmatmul.mubr.f32.gmra.mrb[0].mxu0 %v4115
    %v4356 = vpop.f32.mrb[0].mxu0
    %v4357 = vadd.f32 %v4213, %v4356
    %v4358 = vpop.f32.mrb[0].mxu0
    %4359 = vdwg.mxu0
    %4360 = vmatprep.subr.mxu0 0.0
    %4361 = vmatpush1.msra.mxu0 %v3992
    %4362 = vmatprep.subr.mxu0 0.0
    %4363 = vmatpush1.msra.mxu0 %v3994
    %4364 = vmatprep.subr.mxu0 0.0
    %4365 = vmatpush1.msra.mxu0 %v3996
    %4366 = vmatprep.subr.mxu0 0.0
    %4367 = vmatpush1.msra.mxu0 %v3998
    %4368 = vmatprep.subr.mxu0 0.0
    %4369 = vmatpush1.msra.mxu0 %v4000
    %4370 = vmatprep.subr.mxu0 0.0
    %4371 = vmatpush1.msra.mxu0 %v4002
    %4372 = vmatprep.subr.mxu0 0.0
    %4373 = vmatpush1.msra.mxu0 %v4004
    %4374 = vmatprep.subr.mxu0 0.0
    %4375 = vmatpush1.msra.mxu0 %v4006
    %4376 = vmatprep.subr.mxu0 0.0
    %4377 = vmatpush1.msra.mxu0 %v4008
    %4378 = vmatprep.subr.mxu0 0.0
    %4379 = vmatpush1.msra.mxu0 %v4010
    %4380 = vmatprep.subr.mxu0 0.0
    %4381 = vmatpush1.msra.mxu0 %v4012
    %4382 = vmatprep.subr.mxu0 0.0
    %4383 = vmatpush1.msra.mxu0 %v4014
    %4384 = vmatprep.subr.mxu0 0.0
    %4385 = vmatpush1.msra.mxu0 %v4016
    %4386 = vmatprep.subr.mxu0 0.0
    %4387 = vmatpush1.msra.mxu0 %v4018
    %4388 = vmatprep.subr.mxu0 0.0
    %4389 = vmatpush1.msra.mxu0 %v4020
    %4390 = vmatprep.subr.mxu0 0.0
    %4391 = vmatpush1.msra.mxu0 %v4022
    %4392 = vmatprep.subr.mxu0 0.0
    %4393 = vmatpush1.msra.mxu0 %v4024
    %4394 = vmatprep.subr.mxu0 0.0
    %4395 = vmatpush1.msra.mxu0 %v4026
    %4396 = vmatprep.subr.mxu0 0.0
    %4397 = vmatpush1.msra.mxu0 %v4028
    %4398 = vmatprep.subr.mxu0 0.0
    %4399 = vmatpush1.msra.mxu0 %v4030
    %4400 = vmatprep.subr.mxu0 0.0
    %4401 = vmatpush1.msra.mxu0 %v4032
    %4402 = vmatprep.subr.mxu0 0.0
    %4403 = vmatpush1.msra.mxu0 %v4034
    %4404 = vmatprep.subr.mxu0 0.0
    %4405 = vmatpush1.msra.mxu0 %v4036
    %4406 = vmatprep.subr.mxu0 0.0
    %4407 = vmatpush1.msra.mxu0 %v4038
    %4408 = vmatprep.subr.mxu0 0.0
    %4409 = vmatpush1.msra.mxu0 %v4040
    %4410 = vmatprep.subr.mxu0 0.0
    %4411 = vmatpush1.msra.mxu0 %v4042
    %4412 = vmatprep.subr.mxu0 0.0
    %4413 = vmatpush1.msra.mxu0 %v4044
    %4414 = vmatprep.subr.mxu0 0.0
    %4415 = vmatpush1.msra.mxu0 %v4046
    %4416 = vmatprep.subr.mxu0 0.0
    %4417 = vmatpush1.msra.mxu0 %v4048
    %4418 = vmatprep.subr.mxu0 0.0
    %4419 = vmatpush1.msra.mxu0 %v4050
    %4420 = vmatprep.subr.mxu0 0.0
    %4421 = vmatpush1.msra.mxu0 %v4052
    %4422 = vmatprep.subr.mxu0 0.0
    %4423 = vmatpush1.msra.mxu0 %v4054
    %4424 = vmatprep.mubr.f32.mxu0 %v4058
    %4425 = vmatmul.mubr.f32.gmra.mrb[0].mxu0 %v4057
    %v4426 = vpop.f32.mrb[0].mxu0
    %v4427 = vadd.f32 %v4282, %v4426
    %v4428 = vpop.f32.mrb[0].mxu0
    %4429 = vmatprep.mubr.f32.mxu0 %v4062
    %4430 = vmatmul.mubr.f32.gmra.mrb[0].mxu0 %v4061
    %v4431 = vpop.f32.mrb[0].mxu0
    %v4432 = vadd.f32 %v4287, %v4431
    %v4433 = vpop.f32.mrb[0].mxu0
    %4434 = vmatprep.mubr.f32.mxu0 %v4066
    %4435 = vmatmul.mubr.f32.gmra.mrb[0].mxu0 %v4065
    %v4436 = vpop.f32.mrb[0].mxu0
    %v4437 = vadd.f32 %v4292, %v4436
    %v4438 = vpop.f32.mrb[0].mxu0
    %4439 = vmatprep.mubr.f32.mxu0 %v4070
    %4440 = vmatmul.mubr.f32.gmra.mrb[0].mxu0 %v4069
    %v4441 = vpop.f32.mrb[0].mxu0
    %v4442 = vadd.f32 %v4297, %v4441
    %v4443 = vpop.f32.mrb[0].mxu0
    %4444 = vmatprep.mubr.f32.mxu0 %v4074
    %4445 = vmatmul.mubr.f32.gmra.mrb[0].mxu0 %v4073
    %v4446 = vpop.f32.mrb[0].mxu0
    %v4447 = vadd.f32 %v4302, %v4446
    %v4448 = vpop.f32.mrb[0].mxu0
    %4449 = vmatprep.mubr.f32.mxu0 %v4078
    %4450 = vmatmul.mubr.f32.gmra.mrb[0].mxu0 %v4077
    %v4451 = vpop.f32.mrb[0].mxu0
    %v4452 = vadd.f32 %v4307, %v4451
    %v4453 = vpop.f32.mrb[0].mxu0
    %4454 = vmatprep.mubr.f32.mxu0 %v4082
    %4455 = vmatmul.mubr.f32.gmra.mrb[0].mxu0 %v4081
    %v4456 = vpop.f32.mrb[0].mxu0
    %v4457 = vadd.f32 %v4312, %v4456
    %v4458 = vpop.f32.mrb[0].mxu0
    %4459 = vmatprep.mubr.f32.mxu0 %v4086
    %4460 = vmatmul.mubr.f32.gmra.mrb[0].mxu0 %v4085
    %v4461 = vpop.f32.mrb[0].mxu0
    %v4462 = vadd.f32 %v4317, %v4461
    %v4463 = vpop.f32.mrb[0].mxu0
    %4464 = vmatprep.mubr.f32.mxu0 %v4090
    %4465 = vmatmul.mubr.f32.gmra.mrb[0].mxu0 %v4089
    %v4466 = vpop.f32.mrb[0].mxu0
    %v4467 = vadd.f32 %v4322, %v4466
    %v4468 = vpop.f32.mrb[0].mxu0
    %4469 = vmatprep.mubr.f32.mxu0 %v4094
    %4470 = vmatmul.mubr.f32.gmra.mrb[0].mxu0 %v4093
    %v4471 = vpop.f32.mrb[0].mxu0
    %v4472 = vadd.f32 %v4327, %v4471
    %v4473 = vpop.f32.mrb[0].mxu0
    %4474 = vmatprep.mubr.f32.mxu0 %v4098
    %4475 = vmatmul.mubr.f32.gmra.mrb[0].mxu0 %v4097
    %v4476 = vpop.f32.mrb[0].mxu0
    %v4477 = vadd.f32 %v4332, %v4476
    %v4478 = vpop.f32.mrb[0].mxu0
    %4479 = vmatprep.mubr.f32.mxu0 %v4102
    %4480 = vmatmul.mubr.f32.gmra.mrb[0].mxu0 %v4101
    %v4481 = vpop.f32.mrb[0].mxu0
    %v4482 = vadd.f32 %v4337, %v4481
    %v4483 = vpop.f32.mrb[0].mxu0
    %4484 = vmatprep.mubr.f32.mxu0 %v4106
    %4485 = vmatmul.mubr.f32.gmra.mrb[0].mxu0 %v4105
    %v4486 = vpop.f32.mrb[0].mxu0
    %v4487 = vadd.f32 %v4342, %v4486
    %v4488 = vpop.f32.mrb[0].mxu0
    %4489 = vmatprep.mubr.f32.mxu0 %v4110
    %4490 = vmatmul.mubr.f32.gmra.mrb[0].mxu0 %v4109
    %v4491 = vpop.f32.mrb[0].mxu0
    %v4492 = vadd.f32 %v4347, %v4491
    %v4493 = vpop.f32.mrb[0].mxu0
    %4494 = vmatprep.mubr.f32.mxu0 %v4114
    %4495 = vmatmul.mubr.f32.gmra.mrb[0].mxu0 %v4113
    %v4496 = vpop.f32.mrb[0].mxu0
    %v4497 = vadd.f32 %v4352, %v4496
    %v4498 = vpop.f32.mrb[0].mxu0
    %4499 = vmatprep.mubr.f32.mxu0 %v4118
    %4500 = vmatmul.mubr.f32.gmra.mrb[0].mxu0 %v4117
    %v4501 = vpop.f32.mrb[0].mxu0
    %v4502 = vadd.f32 %v4357, %v4501
    %v4503 = vpop.f32.mrb[0].mxu0
    %4504 = vdwg.mxu0
    %v4505 = vmax.f32 %v4427, 0.0
    %v4506 = vmax.f32 %v4432, 0.0
    %v4507 = vmax.f32 %v4437, 0.0
    %v4508 = vmax.f32 %v4442, 0.0
    %v4509 = vmax.f32 %v4447, 0.0
    %v4510 = vmax.f32 %v4452, 0.0
    %v4511 = vmax.f32 %v4457, 0.0
    %v4512 = vmax.f32 %v4462, 0.0
    %v4513 = vmax.f32 %v4467, 0.0
    %v4514 = vmax.f32 %v4472, 0.0
    %v4515 = vmax.f32 %v4477, 0.0
    %v4516 = vmax.f32 %v4482, 0.0
    %v4517 = vmax.f32 %v4487, 0.0
    %v4518 = vmax.f32 %v4492, 0.0
    %v4519 = vmax.f32 %v4497, 0.0
    %v4520 = vmax.f32 %v4502, 0.0
    %4521 = vrot.lane.b32.xlu0 %v4505, 127
    %v4522 = vpop.permute.xlu0 %4521
    %4523 = vrot.lane.b32.xlu0 %v4506, 127
    %v4524 = vpop.permute.xlu0 %4523
    %4525 = vrot.lane.b32.xlu0 %v4507, 127
    %v4526 = vpop.permute.xlu0 %4525
    %4527 = vrot.lane.b32.xlu0 %v4508, 127
    %v4528 = vpop.permute.xlu0 %4527
    %4529 = vrot.lane.b32.xlu0 %v4509, 127
    %v4530 = vpop.permute.xlu0 %4529
    %4531 = vrot.lane.b32.xlu0 %v4510, 127
    %v4532 = vpop.permute.xlu0 %4531
    %4533 = vrot.lane.b32.xlu0 %v4511, 127
    %v4534 = vpop.permute.xlu0 %4533
    %4535 = vrot.lane.b32.xlu0 %v4512, 127
    %v4536 = vpop.permute.xlu0 %4535
    %4537 = vrot.lane.b32.xlu0 %v4513, 127
    %v4538 = vpop.permute.xlu0 %4537
    %4539 = vrot.lane.b32.xlu0 %v4514, 127
    %v4540 = vpop.permute.xlu0 %4539
    %4541 = vrot.lane.b32.xlu0 %v4515, 127
    %v4542 = vpop.permute.xlu0 %4541
    %4543 = vrot.lane.b32.xlu0 %v4516, 127
    %v4544 = vpop.permute.xlu0 %4543
    %4545 = vrot.lane.b32.xlu0 %v4517, 127
    %v4546 = vpop.permute.xlu0 %4545
    %4547 = vrot.lane.b32.xlu0 %v4518, 127
    %v4548 = vpop.permute.xlu0 %4547
    %4549 = vrot.lane.b32.xlu0 %v4519, 127
    %v4550 = vpop.permute.xlu0 %4549
    %4551 = vrot.lane.b32.xlu0 %v4520, 127
    %v4552 = vpop.permute.xlu0 %4551
    %4553 = vrot.lane.b32.xlu0 %v4505, 126
    %v4554 = vpop.permute.xlu0 %4553
    %4555 = vrot.lane.b32.xlu0 %v4506, 126
    %v4556 = vpop.permute.xlu0 %4555
    %4557 = vrot.lane.b32.xlu0 %v4507, 126
    %v4558 = vpop.permute.xlu0 %4557
    %4559 = vrot.lane.b32.xlu0 %v4508, 126
    %v4560 = vpop.permute.xlu0 %4559
    %4561 = vrot.lane.b32.xlu0 %v4509, 126
    %v4562 = vpop.permute.xlu0 %4561
    %4563 = vrot.lane.b32.xlu0 %v4510, 126
    %v4564 = vpop.permute.xlu0 %4563
    %4565 = vrot.lane.b32.xlu0 %v4511, 126
    %v4566 = vpop.permute.xlu0 %4565
    %4567 = vrot.lane.b32.xlu0 %v4512, 126
    %v4568 = vpop.permute.xlu0 %4567
    %4569 = vrot.lane.b32.xlu0 %v4513, 126
    %v4570 = vpop.permute.xlu0 %4569
    %4571 = vrot.lane.b32.xlu0 %v4514, 126
    %v4572 = vpop.permute.xlu0 %4571
    %4573 = vrot.lane.b32.xlu0 %v4515, 126
    %v4574 = vpop.permute.xlu0 %4573
    %4575 = vrot.lane.b32.xlu0 %v4516, 126
    %v4576 = vpop.permute.xlu0 %4575
    %4577 = vrot.lane.b32.xlu0 %v4517, 126
    %v4578 = vpop.permute.xlu0 %4577
    %4579 = vrot.lane.b32.xlu0 %v4518, 126
    %v4580 = vpop.permute.xlu0 %4579
    %4581 = vrot.lane.b32.xlu0 %v4519, 126
    %v4582 = vpop.permute.xlu0 %4581
    %4583 = vrot.lane.b32.xlu0 %v4520, 126
    %v4584 = vpop.permute.xlu0 %4583
    %4585 = vrot.lane.b32.xlu0 %v4505, 125
    %v4586 = vpop.permute.xlu0 %4585
    %4587 = vrot.lane.b32.xlu0 %v4506, 125
    %v4588 = vpop.permute.xlu0 %4587
    %4589 = vrot.lane.b32.xlu0 %v4507, 125
    %v4590 = vpop.permute.xlu0 %4589
    %4591 = vrot.lane.b32.xlu0 %v4508, 125
    %v4592 = vpop.permute.xlu0 %4591
    %4593 = vrot.lane.b32.xlu0 %v4509, 125
    %v4594 = vpop.permute.xlu0 %4593
    %4595 = vrot.lane.b32.xlu0 %v4510, 125
    %v4596 = vpop.permute.xlu0 %4595
    %4597 = vrot.lane.b32.xlu0 %v4511, 125
    %v4598 = vpop.permute.xlu0 %4597
    %4599 = vrot.lane.b32.xlu0 %v4512, 125
    %v4600 = vpop.permute.xlu0 %4599
    %4601 = vrot.lane.b32.xlu0 %v4513, 125
    %v4602 = vpop.permute.xlu0 %4601
    %4603 = vrot.lane.b32.xlu0 %v4514, 125
    %v4604 = vpop.permute.xlu0 %4603
    %4605 = vrot.lane.b32.xlu0 %v4515, 125
    %v4606 = vpop.permute.xlu0 %4605
    %4607 = vrot.lane.b32.xlu0 %v4516, 125
    %v4608 = vpop.permute.xlu0 %4607
    %4609 = vrot.lane.b32.xlu0 %v4517, 125
    %v4610 = vpop.permute.xlu0 %4609
    %4611 = vrot.lane.b32.xlu0 %v4518, 125
    %v4612 = vpop.permute.xlu0 %4611
    %4613 = vrot.lane.b32.xlu0 %v4519, 125
    %v4614 = vpop.permute.xlu0 %4613
    %4615 = vrot.lane.b32.xlu0 %v4520, 125
    %v4616 = vpop.permute.xlu0 %4615
    %v4617 = vld [vmem:[%s45] sm:$0xff]
    %v4618 = vld [vmem:[%s45 + $0x8] sm:$0xff]
    %v4619 = vld [vmem:[%s45 + $0x10] sm:$0xff]
    %v4620 = vld [vmem:[%s45 + $0x18] sm:$0xff]
    %v4621 = vld [vmem:[%s45 + $0x20] sm:$0xff]
    %v4622 = vld [vmem:[%s45 + $0x28] sm:$0xff]
    %v4623 = vld [vmem:[%s45 + $0x30] sm:$0xff]
    %v4624 = vld [vmem:[%s45 + $0x38] sm:$0xff]
    %v4625 = vld [vmem:[%s45 + $0x40] sm:$0xff]
    %v4626 = vld [vmem:[%s45 + $0x48] sm:$0xff]
    %v4627 = vld [vmem:[%s45 + $0x50] sm:$0xff]
    %v4628 = vld [vmem:[%s45 + $0x58] sm:$0xff]
    %v4629 = vld [vmem:[%s45 + $0x60] sm:$0xff]
    %v4630 = vld [vmem:[%s45 + $0x68] sm:$0xff]
    %v4631 = vld [vmem:[%s45 + $0x70] sm:$0xff]
    %v4632 = vld [vmem:[%s45 + $0x78] sm:$0xff]
    %v4633 = vld [vmem:[%s45 + $0x80] sm:$0xff]
    %v4634 = vld [vmem:[%s45 + $0x88] sm:$0xff]
    %v4635 = vld [vmem:[%s45 + $0x90] sm:$0xff]
    %v4636 = vld [vmem:[%s45 + $0x98] sm:$0xff]
    %v4637 = vld [vmem:[%s45 + $0xa0] sm:$0xff]
    %v4638 = vld [vmem:[%s45 + $0xa8] sm:$0xff]
    %v4639 = vld [vmem:[%s45 + $0xb0] sm:$0xff]
    %v4640 = vld [vmem:[%s45 + $0xb8] sm:$0xff]
    %v4641 = vld [vmem:[%s45 + $0xc0] sm:$0xff]
    %v4642 = vld [vmem:[%s45 + $0xc8] sm:$0xff]
    %v4643 = vld [vmem:[%s45 + $0xd0] sm:$0xff]
    %v4644 = vld [vmem:[%s45 + $0xd8] sm:$0xff]
    %v4645 = vld [vmem:[%s45 + $0xe0] sm:$0xff]
    %v4646 = vld [vmem:[%s45 + $0xe8] sm:$0xff]
    %v4647 = vld [vmem:[%s45 + $0xf0] sm:$0xff]
    %v4648 = vld [vmem:[%s45 + $0xf8] sm:$0xff]
    %v4649 = vld [vmem:[%s45 + $0x100] sm:$0xff]
    %v4650 = vld [vmem:[%s45 + $0x108] sm:$0xff]
    %v4651 = vld [vmem:[%s45 + $0x110] sm:$0xff]
    %v4652 = vld [vmem:[%s45 + $0x118] sm:$0xff]
    %v4653 = vld [vmem:[%s45 + $0x120] sm:$0xff]
    %v4654 = vld [vmem:[%s45 + $0x128] sm:$0xff]
    %v4655 = vld [vmem:[%s45 + $0x130] sm:$0xff]
    %v4656 = vld [vmem:[%s45 + $0x138] sm:$0xff]
    %v4657 = vld [vmem:[%s45 + $0x140] sm:$0xff]
    %v4658 = vld [vmem:[%s45 + $0x148] sm:$0xff]
    %v4659 = vld [vmem:[%s45 + $0x150] sm:$0xff]
    %v4660 = vld [vmem:[%s45 + $0x158] sm:$0xff]
    %v4661 = vld [vmem:[%s45 + $0x160] sm:$0xff]
    %v4662 = vld [vmem:[%s45 + $0x168] sm:$0xff]
    %v4663 = vld [vmem:[%s45 + $0x170] sm:$0xff]
    %v4664 = vld [vmem:[%s45 + $0x178] sm:$0xff]
    %v4665 = vld [vmem:[%s45 + $0x180] sm:$0xff]
    %v4666 = vld [vmem:[%s45 + $0x188] sm:$0xff]
    %v4667 = vld [vmem:[%s45 + $0x190] sm:$0xff]
    %v4668 = vld [vmem:[%s45 + $0x198] sm:$0xff]
    %v4669 = vld [vmem:[%s45 + $0x1a0] sm:$0xff]
    %v4670 = vld [vmem:[%s45 + $0x1a8] sm:$0xff]
    %v4671 = vld [vmem:[%s45 + $0x1b0] sm:$0xff]
    %v4672 = vld [vmem:[%s45 + $0x1b8] sm:$0xff]
    %v4673 = vld [vmem:[%s45 + $0x1c0] sm:$0xff]
    %v4674 = vld [vmem:[%s45 + $0x1c8] sm:$0xff]
    %v4675 = vld [vmem:[%s45 + $0x1d0] sm:$0xff]
    %v4676 = vld [vmem:[%s45 + $0x1d8] sm:$0xff]
    %v4677 = vld [vmem:[%s45 + $0x1e0] sm:$0xff]
    %v4678 = vld [vmem:[%s45 + $0x1e8] sm:$0xff]
    %v4679 = vld [vmem:[%s45 + $0x1f0] sm:$0xff]
    %v4680 = vld [vmem:[%s45 + $0x1f8] sm:$0xff]
    %v4681 = vld [vmem:[%s47] sm:$0xff]
    %v4682 = vld [vmem:[%s47 + $0x8] sm:$0xff]
    %v4683 = vld [vmem:[%s47 + $0x10] sm:$0xff]
    %v4684 = vld [vmem:[%s47 + $0x18] sm:$0xff]
    %v4685 = vld [vmem:[%s47 + $0x20] sm:$0xff]
    %v4686 = vld [vmem:[%s47 + $0x28] sm:$0xff]
    %v4687 = vld [vmem:[%s47 + $0x30] sm:$0xff]
    %v4688 = vld [vmem:[%s47 + $0x38] sm:$0xff]
    %v4689 = vld [vmem:[%s47 + $0x40] sm:$0xff]
    %v4690 = vld [vmem:[%s47 + $0x48] sm:$0xff]
    %v4691 = vld [vmem:[%s47 + $0x50] sm:$0xff]
    %v4692 = vld [vmem:[%s47 + $0x58] sm:$0xff]
    %v4693 = vld [vmem:[%s47 + $0x60] sm:$0xff]
    %v4694 = vld [vmem:[%s47 + $0x68] sm:$0xff]
    %v4695 = vld [vmem:[%s47 + $0x70] sm:$0xff]
    %v4696 = vld [vmem:[%s47 + $0x78] sm:$0xff]
    %4698 = vset.pattern.permute.xlu0 0
    %4699 = vperm.xlu0 %4698, %v4681
    %v4700 = vpop.permute.xlu0 %4699
    %4703 = vset.pattern.permute.xlu0 0
    %4704 = vperm.xlu0 %4703, %v4682
    %v4705 = vpop.permute.xlu0 %4704
    %4708 = vset.pattern.permute.xlu0 0
    %4709 = vperm.xlu0 %4708, %v4683
    %v4710 = vpop.permute.xlu0 %4709
    %4713 = vset.pattern.permute.xlu0 0
    %4714 = vperm.xlu0 %4713, %v4684
    %v4715 = vpop.permute.xlu0 %4714
    %4718 = vset.pattern.permute.xlu0 0
    %4719 = vperm.xlu0 %4718, %v4685
    %v4720 = vpop.permute.xlu0 %4719
    %4723 = vset.pattern.permute.xlu0 0
    %4724 = vperm.xlu0 %4723, %v4686
    %v4725 = vpop.permute.xlu0 %4724
    %4728 = vset.pattern.permute.xlu0 0
    %4729 = vperm.xlu0 %4728, %v4687
    %v4730 = vpop.permute.xlu0 %4729
    %4733 = vset.pattern.permute.xlu0 0
    %4734 = vperm.xlu0 %4733, %v4688
    %v4735 = vpop.permute.xlu0 %4734
    %4738 = vset.pattern.permute.xlu0 0
    %4739 = vperm.xlu0 %4738, %v4689
    %v4740 = vpop.permute.xlu0 %4739
    %4743 = vset.pattern.permute.xlu0 0
    %4744 = vperm.xlu0 %4743, %v4690
    %v4745 = vpop.permute.xlu0 %4744
    %4748 = vset.pattern.permute.xlu0 0
    %4749 = vperm.xlu0 %4748, %v4691
    %v4750 = vpop.permute.xlu0 %4749
    %4753 = vset.pattern.permute.xlu0 0
    %4754 = vperm.xlu0 %4753, %v4692
    %v4755 = vpop.permute.xlu0 %4754
    %4758 = vset.pattern.permute.xlu0 0
    %4759 = vperm.xlu0 %4758, %v4693
    %v4760 = vpop.permute.xlu0 %4759
    %4763 = vset.pattern.permute.xlu0 0
    %4764 = vperm.xlu0 %4763, %v4694
    %v4765 = vpop.permute.xlu0 %4764
    %4768 = vset.pattern.permute.xlu0 0
    %4769 = vperm.xlu0 %4768, %v4695
    %v4770 = vpop.permute.xlu0 %4769
    %4773 = vset.pattern.permute.xlu0 0
    %4774 = vperm.xlu0 %4773, %v4696
    %v4775 = vpop.permute.xlu0 %4774
    %4777 = vmatprep.subr.mxu0 0.0
    %4778 = vmatpush1.msra.mxu0 %v4505
    %4779 = vmatprep.subr.mxu0 0.0
    %4780 = vmatpush1.msra.mxu0 %v4506
    %4781 = vmatprep.subr.mxu0 0.0
    %4782 = vmatpush1.msra.mxu0 %v4507
    %4783 = vmatprep.subr.mxu0 0.0
    %4784 = vmatpush1.msra.mxu0 %v4508
    %4785 = vmatprep.subr.mxu0 0.0
    %4786 = vmatpush1.msra.mxu0 %v4509
    %4787 = vmatprep.subr.mxu0 0.0
    %4788 = vmatpush1.msra.mxu0 %v4510
    %4789 = vmatprep.subr.mxu0 0.0
    %4790 = vmatpush1.msra.mxu0 %v4511
    %4791 = vmatprep.subr.mxu0 0.0
    %4792 = vmatpush1.msra.mxu0 %v4512
    %4793 = vmatprep.subr.mxu0 0.0
    %4794 = vmatpush1.msra.mxu0 %v4513
    %4795 = vmatprep.subr.mxu0 0.0
    %4796 = vmatpush1.msra.mxu0 %v4514
    %4797 = vmatprep.subr.mxu0 0.0
    %4798 = vmatpush1.msra.mxu0 %v4515
    %4799 = vmatprep.subr.mxu0 0.0
    %4800 = vmatpush1.msra.mxu0 %v4516
    %4801 = vmatprep.subr.mxu0 0.0
    %4802 = vmatpush1.msra.mxu0 %v4517
    %4803 = vmatprep.subr.mxu0 0.0
    %4804 = vmatpush1.msra.mxu0 %v4518
    %4805 = vmatprep.subr.mxu0 0.0
    %4806 = vmatpush1.msra.mxu0 %v4519
    %4807 = vmatprep.subr.mxu0 0.0
    %4808 = vmatpush1.msra.mxu0 %v4520
    %4809 = vmatprep.subr.mxu0 0.0
    %4810 = vmatpush1.msra.mxu0 %v4522
    %4811 = vmatprep.subr.mxu0 0.0
    %4812 = vmatpush1.msra.mxu0 %v4524
    %4813 = vmatprep.subr.mxu0 0.0
    %4814 = vmatpush1.msra.mxu0 %v4526
    %4815 = vmatprep.subr.mxu0 0.0
    %4816 = vmatpush1.msra.mxu0 %v4528
    %4817 = vmatprep.subr.mxu0 0.0
    %4818 = vmatpush1.msra.mxu0 %v4530
    %4819 = vmatprep.subr.mxu0 0.0
    %4820 = vmatpush1.msra.mxu0 %v4532
    %4821 = vmatprep.subr.mxu0 0.0
    %4822 = vmatpush1.msra.mxu0 %v4534
    %4823 = vmatprep.subr.mxu0 0.0
    %4824 = vmatpush1.msra.mxu0 %v4536
    %4825 = vmatprep.subr.mxu0 0.0
    %4826 = vmatpush1.msra.mxu0 %v4538
    %4827 = vmatprep.subr.mxu0 0.0
    %4828 = vmatpush1.msra.mxu0 %v4540
    %4829 = vmatprep.subr.mxu0 0.0
    %4830 = vmatpush1.msra.mxu0 %v4542
    %4831 = vmatprep.subr.mxu0 0.0
    %4832 = vmatpush1.msra.mxu0 %v4544
    %4833 = vmatprep.subr.mxu0 0.0
    %4834 = vmatpush1.msra.mxu0 %v4546
    %4835 = vmatprep.subr.mxu0 0.0
    %4836 = vmatpush1.msra.mxu0 %v4548
    %4837 = vmatprep.subr.mxu0 0.0
    %4838 = vmatpush1.msra.mxu0 %v4550
    %4839 = vmatprep.subr.mxu0 0.0
    %4840 = vmatpush1.msra.mxu0 %v4552
    %4841 = vmatprep.mubr.f32.mxu0 %v4618
    %4842 = vmatmul.mubr.f32.gmra.mrb[0].mxu0 %v4617
    %v4843 = vpop.f32.mrb[0].mxu0
    %v4844 = vadd.f32 %v4700, %v4843
    %v4845 = vpop.f32.mrb[0].mxu0
    %4846 = vmatprep.mubr.f32.mxu0 %v4622
    %4847 = vmatmul.mubr.f32.gmra.mrb[0].mxu0 %v4621
    %v4848 = vpop.f32.mrb[0].mxu0
    %v4849 = vadd.f32 %v4705, %v4848
    %v4850 = vpop.f32.mrb[0].mxu0
    %4851 = vmatprep.mubr.f32.mxu0 %v4626
    %4852 = vmatmul.mubr.f32.gmra.mrb[0].mxu0 %v4625
    %v4853 = vpop.f32.mrb[0].mxu0
    %v4854 = vadd.f32 %v4710, %v4853
    %v4855 = vpop.f32.mrb[0].mxu0
    %4856 = vmatprep.mubr.f32.mxu0 %v4630
    %4857 = vmatmul.mubr.f32.gmra.mrb[0].mxu0 %v4629
    %v4858 = vpop.f32.mrb[0].mxu0
    %v4859 = vadd.f32 %v4715, %v4858
    %v4860 = vpop.f32.mrb[0].mxu0
    %4861 = vmatprep.mubr.f32.mxu0 %v4634
    %4862 = vmatmul.mubr.f32.gmra.mrb[0].mxu0 %v4633
    %v4863 = vpop.f32.mrb[0].mxu0
    %v4864 = vadd.f32 %v4720, %v4863
    %v4865 = vpop.f32.mrb[0].mxu0
    %4866 = vmatprep.mubr.f32.mxu0 %v4638
    %4867 = vmatmul.mubr.f32.gmra.mrb[0].mxu0 %v4637
    %v4868 = vpop.f32.mrb[0].mxu0
    %v4869 = vadd.f32 %v4725, %v4868
    %v4870 = vpop.f32.mrb[0].mxu0
    %4871 = vmatprep.mubr.f32.mxu0 %v4642
    %4872 = vmatmul.mubr.f32.gmra.mrb[0].mxu0 %v4641
    %v4873 = vpop.f32.mrb[0].mxu0
    %v4874 = vadd.f32 %v4730, %v4873
    %v4875 = vpop.f32.mrb[0].mxu0
    %4876 = vmatprep.mubr.f32.mxu0 %v4646
    %4877 = vmatmul.mubr.f32.gmra.mrb[0].mxu0 %v4645
    %v4878 = vpop.f32.mrb[0].mxu0
    %v4879 = vadd.f32 %v4735, %v4878
    %v4880 = vpop.f32.mrb[0].mxu0
    %4881 = vmatprep.mubr.f32.mxu0 %v4650
    %4882 = vmatmul.mubr.f32.gmra.mrb[0].mxu0 %v4649
    %v4883 = vpop.f32.mrb[0].mxu0
    %v4884 = vadd.f32 %v4740, %v4883
    %v4885 = vpop.f32.mrb[0].mxu0
    %4886 = vmatprep.mubr.f32.mxu0 %v4654
    %4887 = vmatmul.mubr.f32.gmra.mrb[0].mxu0 %v4653
    %v4888 = vpop.f32.mrb[0].mxu0
    %v4889 = vadd.f32 %v4745, %v4888
    %v4890 = vpop.f32.mrb[0].mxu0
    %4891 = vmatprep.mubr.f32.mxu0 %v4658
    %4892 = vmatmul.mubr.f32.gmra.mrb[0].mxu0 %v4657
    %v4893 = vpop.f32.mrb[0].mxu0
    %v4894 = vadd.f32 %v4750, %v4893
    %v4895 = vpop.f32.mrb[0].mxu0
    %4896 = vmatprep.mubr.f32.mxu0 %v4662
    %4897 = vmatmul.mubr.f32.gmra.mrb[0].mxu0 %v4661
    %v4898 = vpop.f32.mrb[0].mxu0
    %v4899 = vadd.f32 %v4755, %v4898
    %v4900 = vpop.f32.mrb[0].mxu0
    %4901 = vmatprep.mubr.f32.mxu0 %v4666
    %4902 = vmatmul.mubr.f32.gmra.mrb[0].mxu0 %v4665
    %v4903 = vpop.f32.mrb[0].mxu0
    %v4904 = vadd.f32 %v4760, %v4903
    %v4905 = vpop.f32.mrb[0].mxu0
    %4906 = vmatprep.mubr.f32.mxu0 %v4670
    %4907 = vmatmul.mubr.f32.gmra.mrb[0].mxu0 %v4669
    %v4908 = vpop.f32.mrb[0].mxu0
    %v4909 = vadd.f32 %v4765, %v4908
    %v4910 = vpop.f32.mrb[0].mxu0
    %4911 = vmatprep.mubr.f32.mxu0 %v4674
    %4912 = vmatmul.mubr.f32.gmra.mrb[0].mxu0 %v4673
    %v4913 = vpop.f32.mrb[0].mxu0
    %v4914 = vadd.f32 %v4770, %v4913
    %v4915 = vpop.f32.mrb[0].mxu0
    %4916 = vmatprep.mubr.f32.mxu0 %v4678
    %4917 = vmatmul.mubr.f32.gmra.mrb[0].mxu0 %v4677
    %v4918 = vpop.f32.mrb[0].mxu0
    %v4919 = vadd.f32 %v4775, %v4918
    %v4920 = vpop.f32.mrb[0].mxu0
    %4921 = vdwg.mxu0
    %4922 = vmatprep.subr.mxu0 0.0
    %4923 = vmatpush1.msra.mxu0 %v4554
    %4924 = vmatprep.subr.mxu0 0.0
    %4925 = vmatpush1.msra.mxu0 %v4556
    %4926 = vmatprep.subr.mxu0 0.0
    %4927 = vmatpush1.msra.mxu0 %v4558
    %4928 = vmatprep.subr.mxu0 0.0
    %4929 = vmatpush1.msra.mxu0 %v4560
    %4930 = vmatprep.subr.mxu0 0.0
    %4931 = vmatpush1.msra.mxu0 %v4562
    %4932 = vmatprep.subr.mxu0 0.0
    %4933 = vmatpush1.msra.mxu0 %v4564
    %4934 = vmatprep.subr.mxu0 0.0
    %4935 = vmatpush1.msra.mxu0 %v4566
    %4936 = vmatprep.subr.mxu0 0.0
    %4937 = vmatpush1.msra.mxu0 %v4568
    %4938 = vmatprep.subr.mxu0 0.0
    %4939 = vmatpush1.msra.mxu0 %v4570
    %4940 = vmatprep.subr.mxu0 0.0
    %4941 = vmatpush1.msra.mxu0 %v4572
    %4942 = vmatprep.subr.mxu0 0.0
    %4943 = vmatpush1.msra.mxu0 %v4574
    %4944 = vmatprep.subr.mxu0 0.0
    %4945 = vmatpush1.msra.mxu0 %v4576
    %4946 = vmatprep.subr.mxu0 0.0
    %4947 = vmatpush1.msra.mxu0 %v4578
    %4948 = vmatprep.subr.mxu0 0.0
    %4949 = vmatpush1.msra.mxu0 %v4580
    %4950 = vmatprep.subr.mxu0 0.0
    %4951 = vmatpush1.msra.mxu0 %v4582
    %4952 = vmatprep.subr.mxu0 0.0
    %4953 = vmatpush1.msra.mxu0 %v4584
    %4954 = vmatprep.subr.mxu0 0.0
    %4955 = vmatpush1.msra.mxu0 %v4586
    %4956 = vmatprep.subr.mxu0 0.0
    %4957 = vmatpush1.msra.mxu0 %v4588
    %4958 = vmatprep.subr.mxu0 0.0
    %4959 = vmatpush1.msra.mxu0 %v4590
    %4960 = vmatprep.subr.mxu0 0.0
    %4961 = vmatpush1.msra.mxu0 %v4592
    %4962 = vmatprep.subr.mxu0 0.0
    %4963 = vmatpush1.msra.mxu0 %v4594
    %4964 = vmatprep.subr.mxu0 0.0
    %4965 = vmatpush1.msra.mxu0 %v4596
    %4966 = vmatprep.subr.mxu0 0.0
    %4967 = vmatpush1.msra.mxu0 %v4598
    %4968 = vmatprep.subr.mxu0 0.0
    %4969 = vmatpush1.msra.mxu0 %v4600
    %4970 = vmatprep.subr.mxu0 0.0
    %4971 = vmatpush1.msra.mxu0 %v4602
    %4972 = vmatprep.subr.mxu0 0.0
    %4973 = vmatpush1.msra.mxu0 %v4604
    %4974 = vmatprep.subr.mxu0 0.0
    %4975 = vmatpush1.msra.mxu0 %v4606
    %4976 = vmatprep.subr.mxu0 0.0
    %4977 = vmatpush1.msra.mxu0 %v4608
    %4978 = vmatprep.subr.mxu0 0.0
    %4979 = vmatpush1.msra.mxu0 %v4610
    %4980 = vmatprep.subr.mxu0 0.0
    %4981 = vmatpush1.msra.mxu0 %v4612
    %4982 = vmatprep.subr.mxu0 0.0
    %4983 = vmatpush1.msra.mxu0 %v4614
    %4984 = vmatprep.subr.mxu0 0.0
    %4985 = vmatpush1.msra.mxu0 %v4616
    %4986 = vmatprep.mubr.f32.mxu0 %v4620
    %4987 = vmatmul.mubr.f32.gmra.mrb[0].mxu0 %v4619
    %v4988 = vpop.f32.mrb[0].mxu0
    %v4989 = vadd.f32 %v4844, %v4988
    %v4990 = vpop.f32.mrb[0].mxu0
    %4991 = vmatprep.mubr.f32.mxu0 %v4624
    %4992 = vmatmul.mubr.f32.gmra.mrb[0].mxu0 %v4623
    %v4993 = vpop.f32.mrb[0].mxu0
    %v4994 = vadd.f32 %v4849, %v4993
    %v4995 = vpop.f32.mrb[0].mxu0
    %4996 = vmatprep.mubr.f32.mxu0 %v4628
    %4997 = vmatmul.mubr.f32.gmra.mrb[0].mxu0 %v4627
    %v4998 = vpop.f32.mrb[0].mxu0
    %v4999 = vadd.f32 %v4854, %v4998
    %v5000 = vpop.f32.mrb[0].mxu0
    %5001 = vmatprep.mubr.f32.mxu0 %v4632
    %5002 = vmatmul.mubr.f32.gmra.mrb[0].mxu0 %v4631
    %v5003 = vpop.f32.mrb[0].mxu0
    %v5004 = vadd.f32 %v4859, %v5003
    %v5005 = vpop.f32.mrb[0].mxu0
    %5006 = vmatprep.mubr.f32.mxu0 %v4636
    %5007 = vmatmul.mubr.f32.gmra.mrb[0].mxu0 %v4635
    %v5008 = vpop.f32.mrb[0].mxu0
    %v5009 = vadd.f32 %v4864, %v5008
    %v5010 = vpop.f32.mrb[0].mxu0
    %5011 = vmatprep.mubr.f32.mxu0 %v4640
    %5012 = vmatmul.mubr.f32.gmra.mrb[0].mxu0 %v4639
    %v5013 = vpop.f32.mrb[0].mxu0
    %v5014 = vadd.f32 %v4869, %v5013
    %v5015 = vpop.f32.mrb[0].mxu0
    %5016 = vmatprep.mubr.f32.mxu0 %v4644
    %5017 = vmatmul.mubr.f32.gmra.mrb[0].mxu0 %v4643
    %v5018 = vpop.f32.mrb[0].mxu0
    %v5019 = vadd.f32 %v4874, %v5018
    %v5020 = vpop.f32.mrb[0].mxu0
    %5021 = vmatprep.mubr.f32.mxu0 %v4648
    %5022 = vmatmul.mubr.f32.gmra.mrb[0].mxu0 %v4647
    %v5023 = vpop.f32.mrb[0].mxu0
    %v5024 = vadd.f32 %v4879, %v5023
    %v5025 = vpop.f32.mrb[0].mxu0
    %5026 = vmatprep.mubr.f32.mxu0 %v4652
    %5027 = vmatmul.mubr.f32.gmra.mrb[0].mxu0 %v4651
    %v5028 = vpop.f32.mrb[0].mxu0
    %v5029 = vadd.f32 %v4884, %v5028
    %v5030 = vpop.f32.mrb[0].mxu0
    %5031 = vmatprep.mubr.f32.mxu0 %v4656
    %5032 = vmatmul.mubr.f32.gmra.mrb[0].mxu0 %v4655
    %v5033 = vpop.f32.mrb[0].mxu0
    %v5034 = vadd.f32 %v4889, %v5033
    %v5035 = vpop.f32.mrb[0].mxu0
    %5036 = vmatprep.mubr.f32.mxu0 %v4660
    %5037 = vmatmul.mubr.f32.gmra.mrb[0].mxu0 %v4659
    %v5038 = vpop.f32.mrb[0].mxu0
    %v5039 = vadd.f32 %v4894, %v5038
    %v5040 = vpop.f32.mrb[0].mxu0
    %5041 = vmatprep.mubr.f32.mxu0 %v4664
    %5042 = vmatmul.mubr.f32.gmra.mrb[0].mxu0 %v4663
    %v5043 = vpop.f32.mrb[0].mxu0
    %v5044 = vadd.f32 %v4899, %v5043
    %v5045 = vpop.f32.mrb[0].mxu0
    %5046 = vmatprep.mubr.f32.mxu0 %v4668
    %5047 = vmatmul.mubr.f32.gmra.mrb[0].mxu0 %v4667
    %v5048 = vpop.f32.mrb[0].mxu0
    %v5049 = vadd.f32 %v4904, %v5048
    %v5050 = vpop.f32.mrb[0].mxu0
    %5051 = vmatprep.mubr.f32.mxu0 %v4672
    %5052 = vmatmul.mubr.f32.gmra.mrb[0].mxu0 %v4671
    %v5053 = vpop.f32.mrb[0].mxu0
    %v5054 = vadd.f32 %v4909, %v5053
    %v5055 = vpop.f32.mrb[0].mxu0
    %5056 = vmatprep.mubr.f32.mxu0 %v4676
    %5057 = vmatmul.mubr.f32.gmra.mrb[0].mxu0 %v4675
    %v5058 = vpop.f32.mrb[0].mxu0
    %v5059 = vadd.f32 %v4914, %v5058
    %v5060 = vpop.f32.mrb[0].mxu0
    %5061 = vmatprep.mubr.f32.mxu0 %v4680
    %5062 = vmatmul.mubr.f32.gmra.mrb[0].mxu0 %v4679
    %v5063 = vpop.f32.mrb[0].mxu0
    %v5064 = vadd.f32 %v4919, %v5063
    %v5065 = vpop.f32.mrb[0].mxu0
    %5066 = vdwg.mxu0
    %v5067 = vmax.f32 %v4989, 0.0
    %v5068 = vmax.f32 %v4994, 0.0
    %v5069 = vmax.f32 %v4999, 0.0
    %v5070 = vmax.f32 %v5004, 0.0
    %v5071 = vmax.f32 %v5009, 0.0
    %v5072 = vmax.f32 %v5014, 0.0
    %v5073 = vmax.f32 %v5019, 0.0
    %v5074 = vmax.f32 %v5024, 0.0
    %v5075 = vmax.f32 %v5029, 0.0
    %v5076 = vmax.f32 %v5034, 0.0
    %v5077 = vmax.f32 %v5039, 0.0
    %v5078 = vmax.f32 %v5044, 0.0
    %v5079 = vmax.f32 %v5049, 0.0
    %v5080 = vmax.f32 %v5054, 0.0
    %v5081 = vmax.f32 %v5059, 0.0
    %v5082 = vmax.f32 %v5064, 0.0
    %v5083 = vsel %vm2290, %v5067, -inf
    %v5084 = vsel %vm2290, %v5068, -inf
    %v5085 = vsel %vm2290, %v5069, -inf
    %v5086 = vsel %vm2290, %v5070, -inf
    %v5087 = vsel %vm2290, %v5071, -inf
    %v5088 = vsel %vm2290, %v5072, -inf
    %v5089 = vsel %vm2290, %v5073, -inf
    %v5090 = vsel %vm2290, %v5074, -inf
    %v5091 = vsel %vm2290, %v5075, -inf
    %v5092 = vsel %vm2290, %v5076, -inf
    %v5093 = vsel %vm2290, %v5077, -inf
    %v5094 = vsel %vm2290, %v5078, -inf
    %v5095 = vsel %vm2290, %v5079, -inf
    %v5096 = vsel %vm2290, %v5080, -inf
    %v5097 = vsel %vm2290, %v5081, -inf
    %v5098 = vsel %vm2290, %v5082, -inf
    %5099 = vmax.xlane.f32.xlu0 %v5083
    %v5100 = vpop.xlane.xlu0 %5099
    %5101 = vmax.xlane.f32.xlu0 %v5084
    %v5102 = vpop.xlane.xlu0 %5101
    %5103 = vmax.xlane.f32.xlu0 %v5085
    %v5104 = vpop.xlane.xlu0 %5103
    %5105 = vmax.xlane.f32.xlu0 %v5086
    %v5106 = vpop.xlane.xlu0 %5105
    %5107 = vmax.xlane.f32.xlu0 %v5087
    %v5108 = vpop.xlane.xlu0 %5107
    %5109 = vmax.xlane.f32.xlu0 %v5088
    %v5110 = vpop.xlane.xlu0 %5109
    %5111 = vmax.xlane.f32.xlu0 %v5089
    %v5112 = vpop.xlane.xlu0 %5111
    %5113 = vmax.xlane.f32.xlu0 %v5090
    %v5114 = vpop.xlane.xlu0 %5113
    %5115 = vmax.xlane.f32.xlu0 %v5091
    %v5116 = vpop.xlane.xlu0 %5115
    %5117 = vmax.xlane.f32.xlu0 %v5092
    %v5118 = vpop.xlane.xlu0 %5117
    %5119 = vmax.xlane.f32.xlu0 %v5093
    %v5120 = vpop.xlane.xlu0 %5119
    %5121 = vmax.xlane.f32.xlu0 %v5094
    %v5122 = vpop.xlane.xlu0 %5121
    %5123 = vmax.xlane.f32.xlu0 %v5095
    %v5124 = vpop.xlane.xlu0 %5123
    %5125 = vmax.xlane.f32.xlu0 %v5096
    %v5126 = vpop.xlane.xlu0 %5125
    %5127 = vmax.xlane.f32.xlu0 %v5097
    %v5128 = vpop.xlane.xlu0 %5127
    %5129 = vmax.xlane.f32.xlu0 %v5098
    %v5130 = vpop.xlane.xlu0 %5129
    %v5131 = vlaneseq
    %v5132 = vshrl.u32 %v5131, 7
    %v5133 = vsub.s32 1, %v5132
    %v5134 = vrot.slane %v597, %v5133
    %v5135 = vmul.f32 %v3412, %v5134
    %v5136 = vmul.f32 %v3417, %v5134
    %v5137 = vmul.f32 %v3422, %v5134
    %v5138 = vmul.f32 %v3427, %v5134
    %v5139 = vmul.f32 %v3432, %v5134
    %v5140 = vmul.f32 %v3437, %v5134
    %v5141 = vmul.f32 %v3442, %v5134
    %v5142 = vmul.f32 %v3447, %v5134
    %v5143 = vmul.f32 %v3452, %v5134
    %v5144 = vmul.f32 %v3457, %v5134
    %v5145 = vmul.f32 %v3462, %v5134
    %v5146 = vmul.f32 %v3467, %v5134
    %v5147 = vmul.f32 %v3472, %v5134
    %v5148 = vmul.f32 %v3477, %v5134
    %v5149 = vmul.f32 %v3482, %v5134
    %v5150 = vmul.f32 %v3487, %v5134
    %v5151 = vadd.f32 %v5135, 0.0
    %v5152 = vadd.f32 %v5136, 0.0
    %v5153 = vadd.f32 %v5137, 0.0
    %v5154 = vadd.f32 %v5138, 0.0
    %v5155 = vadd.f32 %v5139, 0.0
    %v5156 = vadd.f32 %v5140, 0.0
    %v5157 = vadd.f32 %v5141, 0.0
    %v5158 = vadd.f32 %v5142, 0.0
    %v5159 = vadd.f32 %v5143, 0.0
    %v5160 = vadd.f32 %v5144, 0.0
    %v5161 = vadd.f32 %v5145, 0.0
    %v5162 = vadd.f32 %v5146, 0.0
    %v5163 = vadd.f32 %v5147, 0.0
    %v5164 = vadd.f32 %v5148, 0.0
    %v5165 = vadd.f32 %v5149, 0.0
    %v5166 = vadd.f32 %v5150, 0.0
    %v5168 = vrot.slane %v597, 1
    %5170 = vrot.lane.b32.xlu0 %v5168, 127
    %v5171 = vpop.permute.xlu0 %5170
    %v5172 = vlaneseq
    %v5173 = vshrl.u32 %v5172, 7
    %v5174 = vsub.s32 0, %v5173
    %v5175 = vrot.slane %v5171, %v5174
    %v5176 = vmul.f32 %v3529, %v5175
    %v5177 = vmul.f32 %v3533, %v5175
    %v5178 = vmul.f32 %v3537, %v5175
    %v5179 = vmul.f32 %v3541, %v5175
    %v5180 = vmul.f32 %v3545, %v5175
    %v5181 = vmul.f32 %v3549, %v5175
    %v5182 = vmul.f32 %v3553, %v5175
    %v5183 = vmul.f32 %v3557, %v5175
    %v5184 = vmul.f32 %v3561, %v5175
    %v5185 = vmul.f32 %v3565, %v5175
    %v5186 = vmul.f32 %v3569, %v5175
    %v5187 = vmul.f32 %v3573, %v5175
    %v5188 = vmul.f32 %v3577, %v5175
    %v5189 = vmul.f32 %v3581, %v5175
    %v5190 = vmul.f32 %v3585, %v5175
    %v5191 = vmul.f32 %v3589, %v5175
    %v5192 = vadd.f32 %v5151, %v5176
    %v5193 = vadd.f32 %v5152, %v5177
    %v5194 = vadd.f32 %v5153, %v5178
    %v5195 = vadd.f32 %v5154, %v5179
    %v5196 = vadd.f32 %v5155, %v5180
    %v5197 = vadd.f32 %v5156, %v5181
    %v5198 = vadd.f32 %v5157, %v5182
    %v5199 = vadd.f32 %v5158, %v5183
    %v5200 = vadd.f32 %v5159, %v5184
    %v5201 = vadd.f32 %v5160, %v5185
    %v5202 = vadd.f32 %v5161, %v5186
    %v5203 = vadd.f32 %v5162, %v5187
    %v5204 = vadd.f32 %v5163, %v5188
    %v5205 = vadd.f32 %v5164, %v5189
    %v5206 = vadd.f32 %v5165, %v5190
    %v5207 = vadd.f32 %v5166, %v5191
    %5208 = vrot.lane.b32.xlu0 %v5168, 126
    %v5209 = vpop.permute.xlu0 %5208
    %v5210 = vlaneseq
    %v5211 = vshrl.u32 %v5210, 7
    %v5212 = vsub.s32 0, %v5211
    %v5213 = vrot.slane %v5209, %v5212
    %v5214 = vmul.f32 %v3631, %v5213
    %v5215 = vmul.f32 %v3635, %v5213
    %v5216 = vmul.f32 %v3639, %v5213
    %v5217 = vmul.f32 %v3643, %v5213
    %v5218 = vmul.f32 %v3647, %v5213
    %v5219 = vmul.f32 %v3651, %v5213
    %v5220 = vmul.f32 %v3655, %v5213
    %v5221 = vmul.f32 %v3659, %v5213
    %v5222 = vmul.f32 %v3663, %v5213
    %v5223 = vmul.f32 %v3667, %v5213
    %v5224 = vmul.f32 %v3671, %v5213
    %v5225 = vmul.f32 %v3675, %v5213
    %v5226 = vmul.f32 %v3679, %v5213
    %v5227 = vmul.f32 %v3683, %v5213
    %v5228 = vmul.f32 %v3687, %v5213
    %v5229 = vmul.f32 %v3691, %v5213
    %v5230 = vadd.f32 %v5192, %v5214
    %v5231 = vadd.f32 %v5193, %v5215
    %v5232 = vadd.f32 %v5194, %v5216
    %v5233 = vadd.f32 %v5195, %v5217
    %v5234 = vadd.f32 %v5196, %v5218
    %v5235 = vadd.f32 %v5197, %v5219
    %v5236 = vadd.f32 %v5198, %v5220
    %v5237 = vadd.f32 %v5199, %v5221
    %v5238 = vadd.f32 %v5200, %v5222
    %v5239 = vadd.f32 %v5201, %v5223
    %v5240 = vadd.f32 %v5202, %v5224
    %v5241 = vadd.f32 %v5203, %v5225
    %v5242 = vadd.f32 %v5204, %v5226
    %v5243 = vadd.f32 %v5205, %v5227
    %v5244 = vadd.f32 %v5206, %v5228
    %v5245 = vadd.f32 %v5207, %v5229
    %5246 = vrot.lane.b32.xlu0 %v5168, 125
    %v5247 = vpop.permute.xlu0 %5246
    %v5248 = vlaneseq
    %v5249 = vshrl.u32 %v5248, 7
    %v5250 = vsub.s32 0, %v5249
    %v5251 = vrot.slane %v5247, %v5250
    %v5252 = vmul.f32 %v3733, %v5251
    %v5253 = vmul.f32 %v3737, %v5251
    %v5254 = vmul.f32 %v3741, %v5251
    %v5255 = vmul.f32 %v3745, %v5251
    %v5256 = vmul.f32 %v3749, %v5251
    %v5257 = vmul.f32 %v3753, %v5251
    %v5258 = vmul.f32 %v3757, %v5251
    %v5259 = vmul.f32 %v3761, %v5251
    %v5260 = vmul.f32 %v3765, %v5251
    %v5261 = vmul.f32 %v3769, %v5251
    %v5262 = vmul.f32 %v3773, %v5251
    %v5263 = vmul.f32 %v3777, %v5251
    %v5264 = vmul.f32 %v3781, %v5251
    %v5265 = vmul.f32 %v3785, %v5251
    %v5266 = vmul.f32 %v3789, %v5251
    %v5267 = vmul.f32 %v3793, %v5251
    %v5268 = vadd.f32 %v5230, %v5252
    %v5269 = vadd.f32 %v5231, %v5253
    %v5270 = vadd.f32 %v5232, %v5254
    %v5271 = vadd.f32 %v5233, %v5255
    %v5272 = vadd.f32 %v5234, %v5256
    %v5273 = vadd.f32 %v5235, %v5257
    %v5274 = vadd.f32 %v5236, %v5258
    %v5275 = vadd.f32 %v5237, %v5259
    %v5276 = vadd.f32 %v5238, %v5260
    %v5277 = vadd.f32 %v5239, %v5261
    %v5278 = vadd.f32 %v5240, %v5262
    %v5279 = vadd.f32 %v5241, %v5263
    %v5280 = vadd.f32 %v5242, %v5264
    %v5281 = vadd.f32 %v5243, %v5265
    %v5282 = vadd.f32 %v5244, %v5266
    %v5283 = vadd.f32 %v5245, %v5267
    %v5284 = vadd.f32 %v5268, %v3850
    %v5285 = vadd.f32 %v5269, %v3855
    %v5286 = vadd.f32 %v5270, %v3860
    %v5287 = vadd.f32 %v5271, %v3865
    %v5288 = vadd.f32 %v5272, %v3870
    %v5289 = vadd.f32 %v5273, %v3875
    %v5290 = vadd.f32 %v5274, %v3880
    %v5291 = vadd.f32 %v5275, %v3885
    %v5292 = vadd.f32 %v5276, %v3890
    %v5293 = vadd.f32 %v5277, %v3895
    %v5294 = vadd.f32 %v5278, %v3900
    %v5295 = vadd.f32 %v5279, %v3905
    %v5296 = vadd.f32 %v5280, %v3910
    %v5297 = vadd.f32 %v5281, %v3915
    %v5298 = vadd.f32 %v5282, %v3920
    %v5299 = vadd.f32 %v5283, %v3925
    %v5300 = vmax.f32 %v5284, 0.0
    %v5301 = vmax.f32 %v5285, 0.0
    %v5302 = vmax.f32 %v5286, 0.0
    %v5303 = vmax.f32 %v5287, 0.0
    %v5304 = vmax.f32 %v5288, 0.0
    %v5305 = vmax.f32 %v5289, 0.0
    %v5306 = vmax.f32 %v5290, 0.0
    %v5307 = vmax.f32 %v5291, 0.0
    %v5308 = vmax.f32 %v5292, 0.0
    %v5309 = vmax.f32 %v5293, 0.0
    %v5310 = vmax.f32 %v5294, 0.0
    %v5311 = vmax.f32 %v5295, 0.0
    %v5312 = vmax.f32 %v5296, 0.0
    %v5313 = vmax.f32 %v5297, 0.0
    %v5314 = vmax.f32 %v5298, 0.0
    %v5315 = vmax.f32 %v5299, 0.0
    %5316 = vrot.lane.b32.xlu0 %v5300, 127
    %v5317 = vpop.permute.xlu0 %5316
    %5318 = vrot.lane.b32.xlu0 %v5301, 127
    %v5319 = vpop.permute.xlu0 %5318
    %5320 = vrot.lane.b32.xlu0 %v5302, 127
    %v5321 = vpop.permute.xlu0 %5320
    %5322 = vrot.lane.b32.xlu0 %v5303, 127
    %v5323 = vpop.permute.xlu0 %5322
    %5324 = vrot.lane.b32.xlu0 %v5304, 127
    %v5325 = vpop.permute.xlu0 %5324
    %5326 = vrot.lane.b32.xlu0 %v5305, 127
    %v5327 = vpop.permute.xlu0 %5326
    %5328 = vrot.lane.b32.xlu0 %v5306, 127
    %v5329 = vpop.permute.xlu0 %5328
    %5330 = vrot.lane.b32.xlu0 %v5307, 127
    %v5331 = vpop.permute.xlu0 %5330
    %5332 = vrot.lane.b32.xlu0 %v5308, 127
    %v5333 = vpop.permute.xlu0 %5332
    %5334 = vrot.lane.b32.xlu0 %v5309, 127
    %v5335 = vpop.permute.xlu0 %5334
    %5336 = vrot.lane.b32.xlu0 %v5310, 127
    %v5337 = vpop.permute.xlu0 %5336
    %5338 = vrot.lane.b32.xlu0 %v5311, 127
    %v5339 = vpop.permute.xlu0 %5338
    %5340 = vrot.lane.b32.xlu0 %v5312, 127
    %v5341 = vpop.permute.xlu0 %5340
    %5342 = vrot.lane.b32.xlu0 %v5313, 127
    %v5343 = vpop.permute.xlu0 %5342
    %5344 = vrot.lane.b32.xlu0 %v5314, 127
    %v5345 = vpop.permute.xlu0 %5344
    %5346 = vrot.lane.b32.xlu0 %v5315, 127
    %v5347 = vpop.permute.xlu0 %5346
    %5348 = vrot.lane.b32.xlu0 %v5300, 126
    %v5349 = vpop.permute.xlu0 %5348
    %5350 = vrot.lane.b32.xlu0 %v5301, 126
    %v5351 = vpop.permute.xlu0 %5350
    %5352 = vrot.lane.b32.xlu0 %v5302, 126
    %v5353 = vpop.permute.xlu0 %5352
    %5354 = vrot.lane.b32.xlu0 %v5303, 126
    %v5355 = vpop.permute.xlu0 %5354
    %5356 = vrot.lane.b32.xlu0 %v5304, 126
    %v5357 = vpop.permute.xlu0 %5356
    %5358 = vrot.lane.b32.xlu0 %v5305, 126
    %v5359 = vpop.permute.xlu0 %5358
    %5360 = vrot.lane.b32.xlu0 %v5306, 126
    %v5361 = vpop.permute.xlu0 %5360
    %5362 = vrot.lane.b32.xlu0 %v5307, 126
    %v5363 = vpop.permute.xlu0 %5362
    %5364 = vrot.lane.b32.xlu0 %v5308, 126
    %v5365 = vpop.permute.xlu0 %5364
    %5366 = vrot.lane.b32.xlu0 %v5309, 126
    %v5367 = vpop.permute.xlu0 %5366
    %5368 = vrot.lane.b32.xlu0 %v5310, 126
    %v5369 = vpop.permute.xlu0 %5368
    %5370 = vrot.lane.b32.xlu0 %v5311, 126
    %v5371 = vpop.permute.xlu0 %5370
    %5372 = vrot.lane.b32.xlu0 %v5312, 126
    %v5373 = vpop.permute.xlu0 %5372
    %5374 = vrot.lane.b32.xlu0 %v5313, 126
    %v5375 = vpop.permute.xlu0 %5374
    %5376 = vrot.lane.b32.xlu0 %v5314, 126
    %v5377 = vpop.permute.xlu0 %5376
    %5378 = vrot.lane.b32.xlu0 %v5315, 126
    %v5379 = vpop.permute.xlu0 %5378
    %5380 = vrot.lane.b32.xlu0 %v5300, 125
    %v5381 = vpop.permute.xlu0 %5380
    %5382 = vrot.lane.b32.xlu0 %v5301, 125
    %v5383 = vpop.permute.xlu0 %5382
    %5384 = vrot.lane.b32.xlu0 %v5302, 125
    %v5385 = vpop.permute.xlu0 %5384
    %5386 = vrot.lane.b32.xlu0 %v5303, 125
    %v5387 = vpop.permute.xlu0 %5386
    %5388 = vrot.lane.b32.xlu0 %v5304, 125
    %v5389 = vpop.permute.xlu0 %5388
    %5390 = vrot.lane.b32.xlu0 %v5305, 125
    %v5391 = vpop.permute.xlu0 %5390
    %5392 = vrot.lane.b32.xlu0 %v5306, 125
    %v5393 = vpop.permute.xlu0 %5392
    %5394 = vrot.lane.b32.xlu0 %v5307, 125
    %v5395 = vpop.permute.xlu0 %5394
    %5396 = vrot.lane.b32.xlu0 %v5308, 125
    %v5397 = vpop.permute.xlu0 %5396
    %5398 = vrot.lane.b32.xlu0 %v5309, 125
    %v5399 = vpop.permute.xlu0 %5398
    %5400 = vrot.lane.b32.xlu0 %v5310, 125
    %v5401 = vpop.permute.xlu0 %5400
    %5402 = vrot.lane.b32.xlu0 %v5311, 125
    %v5403 = vpop.permute.xlu0 %5402
    %5404 = vrot.lane.b32.xlu0 %v5312, 125
    %v5405 = vpop.permute.xlu0 %5404
    %5406 = vrot.lane.b32.xlu0 %v5313, 125
    %v5407 = vpop.permute.xlu0 %5406
    %5408 = vrot.lane.b32.xlu0 %v5314, 125
    %v5409 = vpop.permute.xlu0 %5408
    %5410 = vrot.lane.b32.xlu0 %v5315, 125
    %v5411 = vpop.permute.xlu0 %5410
    %5412 = vmatprep.subr.mxu0 0.0
    %5413 = vmatpush1.msra.mxu0 %v5300
    %5414 = vmatprep.subr.mxu0 0.0
    %5415 = vmatpush1.msra.mxu0 %v5301
    %5416 = vmatprep.subr.mxu0 0.0
    %5417 = vmatpush1.msra.mxu0 %v5302
    %5418 = vmatprep.subr.mxu0 0.0
    %5419 = vmatpush1.msra.mxu0 %v5303
    %5420 = vmatprep.subr.mxu0 0.0
    %5421 = vmatpush1.msra.mxu0 %v5304
    %5422 = vmatprep.subr.mxu0 0.0
    %5423 = vmatpush1.msra.mxu0 %v5305
    %5424 = vmatprep.subr.mxu0 0.0
    %5425 = vmatpush1.msra.mxu0 %v5306
    %5426 = vmatprep.subr.mxu0 0.0
    %5427 = vmatpush1.msra.mxu0 %v5307
    %5428 = vmatprep.subr.mxu0 0.0
    %5429 = vmatpush1.msra.mxu0 %v5308
    %5430 = vmatprep.subr.mxu0 0.0
    %5431 = vmatpush1.msra.mxu0 %v5309
    %5432 = vmatprep.subr.mxu0 0.0
    %5433 = vmatpush1.msra.mxu0 %v5310
    %5434 = vmatprep.subr.mxu0 0.0
    %5435 = vmatpush1.msra.mxu0 %v5311
    %5436 = vmatprep.subr.mxu0 0.0
    %5437 = vmatpush1.msra.mxu0 %v5312
    %5438 = vmatprep.subr.mxu0 0.0
    %5439 = vmatpush1.msra.mxu0 %v5313
    %5440 = vmatprep.subr.mxu0 0.0
    %5441 = vmatpush1.msra.mxu0 %v5314
    %5442 = vmatprep.subr.mxu0 0.0
    %5443 = vmatpush1.msra.mxu0 %v5315
    %5444 = vmatprep.subr.mxu0 0.0
    %5445 = vmatpush1.msra.mxu0 %v5317
    %5446 = vmatprep.subr.mxu0 0.0
    %5447 = vmatpush1.msra.mxu0 %v5319
    %5448 = vmatprep.subr.mxu0 0.0
    %5449 = vmatpush1.msra.mxu0 %v5321
    %5450 = vmatprep.subr.mxu0 0.0
    %5451 = vmatpush1.msra.mxu0 %v5323
    %5452 = vmatprep.subr.mxu0 0.0
    %5453 = vmatpush1.msra.mxu0 %v5325
    %5454 = vmatprep.subr.mxu0 0.0
    %5455 = vmatpush1.msra.mxu0 %v5327
    %5456 = vmatprep.subr.mxu0 0.0
    %5457 = vmatpush1.msra.mxu0 %v5329
    %5458 = vmatprep.subr.mxu0 0.0
    %5459 = vmatpush1.msra.mxu0 %v5331
    %5460 = vmatprep.subr.mxu0 0.0
    %5461 = vmatpush1.msra.mxu0 %v5333
    %5462 = vmatprep.subr.mxu0 0.0
    %5463 = vmatpush1.msra.mxu0 %v5335
    %5464 = vmatprep.subr.mxu0 0.0
    %5465 = vmatpush1.msra.mxu0 %v5337
    %5466 = vmatprep.subr.mxu0 0.0
    %5467 = vmatpush1.msra.mxu0 %v5339
    %5468 = vmatprep.subr.mxu0 0.0
    %5469 = vmatpush1.msra.mxu0 %v5341
    %5470 = vmatprep.subr.mxu0 0.0
    %5471 = vmatpush1.msra.mxu0 %v5343
    %5472 = vmatprep.subr.mxu0 0.0
    %5473 = vmatpush1.msra.mxu0 %v5345
    %5474 = vmatprep.subr.mxu0 0.0
    %5475 = vmatpush1.msra.mxu0 %v5347
    %5476 = vmatprep.mubr.f32.mxu0 %v4056
    %5477 = vmatmul.mubr.f32.gmra.mrb[0].mxu0 %v4055
    %v5478 = vpop.f32.mrb[0].mxu0
    %v5479 = vadd.f32 %v4138, %v5478
    %v5480 = vpop.f32.mrb[0].mxu0
    %5481 = vmatprep.mubr.f32.mxu0 %v4060
    %5482 = vmatmul.mubr.f32.gmra.mrb[0].mxu0 %v4059
    %v5483 = vpop.f32.mrb[0].mxu0
    %v5484 = vadd.f32 %v4143, %v5483
    %v5485 = vpop.f32.mrb[0].mxu0
    %5486 = vmatprep.mubr.f32.mxu0 %v4064
    %5487 = vmatmul.mubr.f32.gmra.mrb[0].mxu0 %v4063
    %v5488 = vpop.f32.mrb[0].mxu0
    %v5489 = vadd.f32 %v4148, %v5488
    %v5490 = vpop.f32.mrb[0].mxu0
    %5491 = vmatprep.mubr.f32.mxu0 %v4068
    %5492 = vmatmul.mubr.f32.gmra.mrb[0].mxu0 %v4067
    %v5493 = vpop.f32.mrb[0].mxu0
    %v5494 = vadd.f32 %v4153, %v5493
    %v5495 = vpop.f32.mrb[0].mxu0
    %5496 = vmatprep.mubr.f32.mxu0 %v4072
    %5497 = vmatmul.mubr.f32.gmra.mrb[0].mxu0 %v4071
    %v5498 = vpop.f32.mrb[0].mxu0
    %v5499 = vadd.f32 %v4158, %v5498
    %v5500 = vpop.f32.mrb[0].mxu0
    %5501 = vmatprep.mubr.f32.mxu0 %v4076
    %5502 = vmatmul.mubr.f32.gmra.mrb[0].mxu0 %v4075
    %v5503 = vpop.f32.mrb[0].mxu0
    %v5504 = vadd.f32 %v4163, %v5503
    %v5505 = vpop.f32.mrb[0].mxu0
    %5506 = vmatprep.mubr.f32.mxu0 %v4080
    %5507 = vmatmul.mubr.f32.gmra.mrb[0].mxu0 %v4079
    %v5508 = vpop.f32.mrb[0].mxu0
    %v5509 = vadd.f32 %v4168, %v5508
    %v5510 = vpop.f32.mrb[0].mxu0
    %5511 = vmatprep.mubr.f32.mxu0 %v4084
    %5512 = vmatmul.mubr.f32.gmra.mrb[0].mxu0 %v4083
    %v5513 = vpop.f32.mrb[0].mxu0
    %v5514 = vadd.f32 %v4173, %v5513
    %v5515 = vpop.f32.mrb[0].mxu0
    %5516 = vmatprep.mubr.f32.mxu0 %v4088
    %5517 = vmatmul.mubr.f32.gmra.mrb[0].mxu0 %v4087
    %v5518 = vpop.f32.mrb[0].mxu0
    %v5519 = vadd.f32 %v4178, %v5518
    %v5520 = vpop.f32.mrb[0].mxu0
    %5521 = vmatprep.mubr.f32.mxu0 %v4092
    %5522 = vmatmul.mubr.f32.gmra.mrb[0].mxu0 %v4091
    %v5523 = vpop.f32.mrb[0].mxu0
    %v5524 = vadd.f32 %v4183, %v5523
    %v5525 = vpop.f32.mrb[0].mxu0
    %5526 = vmatprep.mubr.f32.mxu0 %v4096
    %5527 = vmatmul.mubr.f32.gmra.mrb[0].mxu0 %v4095
    %v5528 = vpop.f32.mrb[0].mxu0
    %v5529 = vadd.f32 %v4188, %v5528
    %v5530 = vpop.f32.mrb[0].mxu0
    %5531 = vmatprep.mubr.f32.mxu0 %v4100
    %5532 = vmatmul.mubr.f32.gmra.mrb[0].mxu0 %v4099
    %v5533 = vpop.f32.mrb[0].mxu0
    %v5534 = vadd.f32 %v4193, %v5533
    %v5535 = vpop.f32.mrb[0].mxu0
    %5536 = vmatprep.mubr.f32.mxu0 %v4104
    %5537 = vmatmul.mubr.f32.gmra.mrb[0].mxu0 %v4103
    %v5538 = vpop.f32.mrb[0].mxu0
    %v5539 = vadd.f32 %v4198, %v5538
    %v5540 = vpop.f32.mrb[0].mxu0
    %5541 = vmatprep.mubr.f32.mxu0 %v4108
    %5542 = vmatmul.mubr.f32.gmra.mrb[0].mxu0 %v4107
    %v5543 = vpop.f32.mrb[0].mxu0
    %v5544 = vadd.f32 %v4203, %v5543
    %v5545 = vpop.f32.mrb[0].mxu0
    %5546 = vmatprep.mubr.f32.mxu0 %v4112
    %5547 = vmatmul.mubr.f32.gmra.mrb[0].mxu0 %v4111
    %v5548 = vpop.f32.mrb[0].mxu0
    %v5549 = vadd.f32 %v4208, %v5548
    %v5550 = vpop.f32.mrb[0].mxu0
    %5551 = vmatprep.mubr.f32.mxu0 %v4116
    %5552 = vmatmul.mubr.f32.gmra.mrb[0].mxu0 %v4115
    %v5553 = vpop.f32.mrb[0].mxu0
    %v5554 = vadd.f32 %v4213, %v5553
    %v5555 = vpop.f32.mrb[0].mxu0
    %5556 = vdwg.mxu0
    %5557 = vmatprep.subr.mxu0 0.0
    %5558 = vmatpush1.msra.mxu0 %v5349
    %5559 = vmatprep.subr.mxu0 0.0
    %5560 = vmatpush1.msra.mxu0 %v5351
    %5561 = vmatprep.subr.mxu0 0.0
    %5562 = vmatpush1.msra.mxu0 %v5353
    %5563 = vmatprep.subr.mxu0 0.0
    %5564 = vmatpush1.msra.mxu0 %v5355
    %5565 = vmatprep.subr.mxu0 0.0
    %5566 = vmatpush1.msra.mxu0 %v5357
    %5567 = vmatprep.subr.mxu0 0.0
    %5568 = vmatpush1.msra.mxu0 %v5359
    %5569 = vmatprep.subr.mxu0 0.0
    %5570 = vmatpush1.msra.mxu0 %v5361
    %5571 = vmatprep.subr.mxu0 0.0
    %5572 = vmatpush1.msra.mxu0 %v5363
    %5573 = vmatprep.subr.mxu0 0.0
    %5574 = vmatpush1.msra.mxu0 %v5365
    %5575 = vmatprep.subr.mxu0 0.0
    %5576 = vmatpush1.msra.mxu0 %v5367
    %5577 = vmatprep.subr.mxu0 0.0
    %5578 = vmatpush1.msra.mxu0 %v5369
    %5579 = vmatprep.subr.mxu0 0.0
    %5580 = vmatpush1.msra.mxu0 %v5371
    %5581 = vmatprep.subr.mxu0 0.0
    %5582 = vmatpush1.msra.mxu0 %v5373
    %5583 = vmatprep.subr.mxu0 0.0
    %5584 = vmatpush1.msra.mxu0 %v5375
    %5585 = vmatprep.subr.mxu0 0.0
    %5586 = vmatpush1.msra.mxu0 %v5377
    %5587 = vmatprep.subr.mxu0 0.0
    %5588 = vmatpush1.msra.mxu0 %v5379
    %5589 = vmatprep.subr.mxu0 0.0
    %5590 = vmatpush1.msra.mxu0 %v5381
    %5591 = vmatprep.subr.mxu0 0.0
    %5592 = vmatpush1.msra.mxu0 %v5383
    %5593 = vmatprep.subr.mxu0 0.0
    %5594 = vmatpush1.msra.mxu0 %v5385
    %5595 = vmatprep.subr.mxu0 0.0
    %5596 = vmatpush1.msra.mxu0 %v5387
    %5597 = vmatprep.subr.mxu0 0.0
    %5598 = vmatpush1.msra.mxu0 %v5389
    %5599 = vmatprep.subr.mxu0 0.0
    %5600 = vmatpush1.msra.mxu0 %v5391
    %5601 = vmatprep.subr.mxu0 0.0
    %5602 = vmatpush1.msra.mxu0 %v5393
    %5603 = vmatprep.subr.mxu0 0.0
    %5604 = vmatpush1.msra.mxu0 %v5395
    %5605 = vmatprep.subr.mxu0 0.0
    %5606 = vmatpush1.msra.mxu0 %v5397
    %5607 = vmatprep.subr.mxu0 0.0
    %5608 = vmatpush1.msra.mxu0 %v5399
    %5609 = vmatprep.subr.mxu0 0.0
    %5610 = vmatpush1.msra.mxu0 %v5401
    %5611 = vmatprep.subr.mxu0 0.0
    %5612 = vmatpush1.msra.mxu0 %v5403
    %5613 = vmatprep.subr.mxu0 0.0
    %5614 = vmatpush1.msra.mxu0 %v5405
    %5615 = vmatprep.subr.mxu0 0.0
    %5616 = vmatpush1.msra.mxu0 %v5407
    %5617 = vmatprep.subr.mxu0 0.0
    %5618 = vmatpush1.msra.mxu0 %v5409
    %5619 = vmatprep.subr.mxu0 0.0
    %5620 = vmatpush1.msra.mxu0 %v5411
    %5621 = vmatprep.mubr.f32.mxu0 %v4058
    %5622 = vmatmul.mubr.f32.gmra.mrb[0].mxu0 %v4057
    %v5623 = vpop.f32.mrb[0].mxu0
    %v5624 = vadd.f32 %v5479, %v5623
    %v5625 = vpop.f32.mrb[0].mxu0
    %5626 = vmatprep.mubr.f32.mxu0 %v4062
    %5627 = vmatmul.mubr.f32.gmra.mrb[0].mxu0 %v4061
    %v5628 = vpop.f32.mrb[0].mxu0
    %v5629 = vadd.f32 %v5484, %v5628
    %v5630 = vpop.f32.mrb[0].mxu0
    %5631 = vmatprep.mubr.f32.mxu0 %v4066
    %5632 = vmatmul.mubr.f32.gmra.mrb[0].mxu0 %v4065
    %v5633 = vpop.f32.mrb[0].mxu0
    %v5634 = vadd.f32 %v5489, %v5633
    %v5635 = vpop.f32.mrb[0].mxu0
    %5636 = vmatprep.mubr.f32.mxu0 %v4070
    %5637 = vmatmul.mubr.f32.gmra.mrb[0].mxu0 %v4069
    %v5638 = vpop.f32.mrb[0].mxu0
    %v5639 = vadd.f32 %v5494, %v5638
    %v5640 = vpop.f32.mrb[0].mxu0
    %5641 = vmatprep.mubr.f32.mxu0 %v4074
    %5642 = vmatmul.mubr.f32.gmra.mrb[0].mxu0 %v4073
    %v5643 = vpop.f32.mrb[0].mxu0
    %v5644 = vadd.f32 %v5499, %v5643
    %v5645 = vpop.f32.mrb[0].mxu0
    %5646 = vmatprep.mubr.f32.mxu0 %v4078
    %5647 = vmatmul.mubr.f32.gmra.mrb[0].mxu0 %v4077
    %v5648 = vpop.f32.mrb[0].mxu0
    %v5649 = vadd.f32 %v5504, %v5648
    %v5650 = vpop.f32.mrb[0].mxu0
    %5651 = vmatprep.mubr.f32.mxu0 %v4082
    %5652 = vmatmul.mubr.f32.gmra.mrb[0].mxu0 %v4081
    %v5653 = vpop.f32.mrb[0].mxu0
    %v5654 = vadd.f32 %v5509, %v5653
    %v5655 = vpop.f32.mrb[0].mxu0
    %5656 = vmatprep.mubr.f32.mxu0 %v4086
    %5657 = vmatmul.mubr.f32.gmra.mrb[0].mxu0 %v4085
    %v5658 = vpop.f32.mrb[0].mxu0
    %v5659 = vadd.f32 %v5514, %v5658
    %v5660 = vpop.f32.mrb[0].mxu0
    %5661 = vmatprep.mubr.f32.mxu0 %v4090
    %5662 = vmatmul.mubr.f32.gmra.mrb[0].mxu0 %v4089
    %v5663 = vpop.f32.mrb[0].mxu0
    %v5664 = vadd.f32 %v5519, %v5663
    %v5665 = vpop.f32.mrb[0].mxu0
    %5666 = vmatprep.mubr.f32.mxu0 %v4094
    %5667 = vmatmul.mubr.f32.gmra.mrb[0].mxu0 %v4093
    %v5668 = vpop.f32.mrb[0].mxu0
    %v5669 = vadd.f32 %v5524, %v5668
    %v5670 = vpop.f32.mrb[0].mxu0
    %5671 = vmatprep.mubr.f32.mxu0 %v4098
    %5672 = vmatmul.mubr.f32.gmra.mrb[0].mxu0 %v4097
    %v5673 = vpop.f32.mrb[0].mxu0
    %v5674 = vadd.f32 %v5529, %v5673
    %v5675 = vpop.f32.mrb[0].mxu0
    %5676 = vmatprep.mubr.f32.mxu0 %v4102
    %5677 = vmatmul.mubr.f32.gmra.mrb[0].mxu0 %v4101
    %v5678 = vpop.f32.mrb[0].mxu0
    %v5679 = vadd.f32 %v5534, %v5678
    %v5680 = vpop.f32.mrb[0].mxu0
    %5681 = vmatprep.mubr.f32.mxu0 %v4106
    %5682 = vmatmul.mubr.f32.gmra.mrb[0].mxu0 %v4105
    %v5683 = vpop.f32.mrb[0].mxu0
    %v5684 = vadd.f32 %v5539, %v5683
    %v5685 = vpop.f32.mrb[0].mxu0
    %5686 = vmatprep.mubr.f32.mxu0 %v4110
    %5687 = vmatmul.mubr.f32.gmra.mrb[0].mxu0 %v4109
    %v5688 = vpop.f32.mrb[0].mxu0
    %v5689 = vadd.f32 %v5544, %v5688
    %v5690 = vpop.f32.mrb[0].mxu0
    %5691 = vmatprep.mubr.f32.mxu0 %v4114
    %5692 = vmatmul.mubr.f32.gmra.mrb[0].mxu0 %v4113
    %v5693 = vpop.f32.mrb[0].mxu0
    %v5694 = vadd.f32 %v5549, %v5693
    %v5695 = vpop.f32.mrb[0].mxu0
    %5696 = vmatprep.mubr.f32.mxu0 %v4118
    %5697 = vmatmul.mubr.f32.gmra.mrb[0].mxu0 %v4117
    %v5698 = vpop.f32.mrb[0].mxu0
    %v5699 = vadd.f32 %v5554, %v5698
    %v5700 = vpop.f32.mrb[0].mxu0
    %5701 = vdwg.mxu0
    %v5702 = vmax.f32 %v5624, 0.0
    %v5703 = vmax.f32 %v5629, 0.0
    %v5704 = vmax.f32 %v5634, 0.0
    %v5705 = vmax.f32 %v5639, 0.0
    %v5706 = vmax.f32 %v5644, 0.0
    %v5707 = vmax.f32 %v5649, 0.0
    %v5708 = vmax.f32 %v5654, 0.0
    %v5709 = vmax.f32 %v5659, 0.0
    %v5710 = vmax.f32 %v5664, 0.0
    %v5711 = vmax.f32 %v5669, 0.0
    %v5712 = vmax.f32 %v5674, 0.0
    %v5713 = vmax.f32 %v5679, 0.0
    %v5714 = vmax.f32 %v5684, 0.0
    %v5715 = vmax.f32 %v5689, 0.0
    %v5716 = vmax.f32 %v5694, 0.0
    %v5717 = vmax.f32 %v5699, 0.0
    %5718 = vrot.lane.b32.xlu0 %v5702, 127
    %v5719 = vpop.permute.xlu0 %5718
    %5720 = vrot.lane.b32.xlu0 %v5703, 127
    %v5721 = vpop.permute.xlu0 %5720
    %5722 = vrot.lane.b32.xlu0 %v5704, 127
    %v5723 = vpop.permute.xlu0 %5722
    %5724 = vrot.lane.b32.xlu0 %v5705, 127
    %v5725 = vpop.permute.xlu0 %5724
    %5726 = vrot.lane.b32.xlu0 %v5706, 127
    %v5727 = vpop.permute.xlu0 %5726
    %5728 = vrot.lane.b32.xlu0 %v5707, 127
    %v5729 = vpop.permute.xlu0 %5728
    %5730 = vrot.lane.b32.xlu0 %v5708, 127
    %v5731 = vpop.permute.xlu0 %5730
    %5732 = vrot.lane.b32.xlu0 %v5709, 127
    %v5733 = vpop.permute.xlu0 %5732
    %5734 = vrot.lane.b32.xlu0 %v5710, 127
    %v5735 = vpop.permute.xlu0 %5734
    %5736 = vrot.lane.b32.xlu0 %v5711, 127
    %v5737 = vpop.permute.xlu0 %5736
    %5738 = vrot.lane.b32.xlu0 %v5712, 127
    %v5739 = vpop.permute.xlu0 %5738
    %5740 = vrot.lane.b32.xlu0 %v5713, 127
    %v5741 = vpop.permute.xlu0 %5740
    %5742 = vrot.lane.b32.xlu0 %v5714, 127
    %v5743 = vpop.permute.xlu0 %5742
    %5744 = vrot.lane.b32.xlu0 %v5715, 127
    %v5745 = vpop.permute.xlu0 %5744
    %5746 = vrot.lane.b32.xlu0 %v5716, 127
    %v5747 = vpop.permute.xlu0 %5746
    %5748 = vrot.lane.b32.xlu0 %v5717, 127
    %v5749 = vpop.permute.xlu0 %5748
    %5750 = vrot.lane.b32.xlu0 %v5702, 126
    %v5751 = vpop.permute.xlu0 %5750
    %5752 = vrot.lane.b32.xlu0 %v5703, 126
    %v5753 = vpop.permute.xlu0 %5752
    %5754 = vrot.lane.b32.xlu0 %v5704, 126
    %v5755 = vpop.permute.xlu0 %5754
    %5756 = vrot.lane.b32.xlu0 %v5705, 126
    %v5757 = vpop.permute.xlu0 %5756
    %5758 = vrot.lane.b32.xlu0 %v5706, 126
    %v5759 = vpop.permute.xlu0 %5758
    %5760 = vrot.lane.b32.xlu0 %v5707, 126
    %v5761 = vpop.permute.xlu0 %5760
    %5762 = vrot.lane.b32.xlu0 %v5708, 126
    %v5763 = vpop.permute.xlu0 %5762
    %5764 = vrot.lane.b32.xlu0 %v5709, 126
    %v5765 = vpop.permute.xlu0 %5764
    %5766 = vrot.lane.b32.xlu0 %v5710, 126
    %v5767 = vpop.permute.xlu0 %5766
    %5768 = vrot.lane.b32.xlu0 %v5711, 126
    %v5769 = vpop.permute.xlu0 %5768
    %5770 = vrot.lane.b32.xlu0 %v5712, 126
    %v5771 = vpop.permute.xlu0 %5770
    %5772 = vrot.lane.b32.xlu0 %v5713, 126
    %v5773 = vpop.permute.xlu0 %5772
    %5774 = vrot.lane.b32.xlu0 %v5714, 126
    %v5775 = vpop.permute.xlu0 %5774
    %5776 = vrot.lane.b32.xlu0 %v5715, 126
    %v5777 = vpop.permute.xlu0 %5776
    %5778 = vrot.lane.b32.xlu0 %v5716, 126
    %v5779 = vpop.permute.xlu0 %5778
    %5780 = vrot.lane.b32.xlu0 %v5717, 126
    %v5781 = vpop.permute.xlu0 %5780
    %5782 = vrot.lane.b32.xlu0 %v5702, 125
    %v5783 = vpop.permute.xlu0 %5782
    %5784 = vrot.lane.b32.xlu0 %v5703, 125
    %v5785 = vpop.permute.xlu0 %5784
    %5786 = vrot.lane.b32.xlu0 %v5704, 125
    %v5787 = vpop.permute.xlu0 %5786
    %5788 = vrot.lane.b32.xlu0 %v5705, 125
    %v5789 = vpop.permute.xlu0 %5788
    %5790 = vrot.lane.b32.xlu0 %v5706, 125
    %v5791 = vpop.permute.xlu0 %5790
    %5792 = vrot.lane.b32.xlu0 %v5707, 125
    %v5793 = vpop.permute.xlu0 %5792
    %5794 = vrot.lane.b32.xlu0 %v5708, 125
    %v5795 = vpop.permute.xlu0 %5794
    %5796 = vrot.lane.b32.xlu0 %v5709, 125
    %v5797 = vpop.permute.xlu0 %5796
    %5798 = vrot.lane.b32.xlu0 %v5710, 125
    %v5799 = vpop.permute.xlu0 %5798
    %5800 = vrot.lane.b32.xlu0 %v5711, 125
    %v5801 = vpop.permute.xlu0 %5800
    %5802 = vrot.lane.b32.xlu0 %v5712, 125
    %v5803 = vpop.permute.xlu0 %5802
    %5804 = vrot.lane.b32.xlu0 %v5713, 125
    %v5805 = vpop.permute.xlu0 %5804
    %5806 = vrot.lane.b32.xlu0 %v5714, 125
    %v5807 = vpop.permute.xlu0 %5806
    %5808 = vrot.lane.b32.xlu0 %v5715, 125
    %v5809 = vpop.permute.xlu0 %5808
    %5810 = vrot.lane.b32.xlu0 %v5716, 125
    %v5811 = vpop.permute.xlu0 %5810
    %5812 = vrot.lane.b32.xlu0 %v5717, 125
    %v5813 = vpop.permute.xlu0 %5812
    %5814 = vmatprep.subr.mxu0 0.0
    %5815 = vmatpush1.msra.mxu0 %v5702
    %5816 = vmatprep.subr.mxu0 0.0
    %5817 = vmatpush1.msra.mxu0 %v5703
    %5818 = vmatprep.subr.mxu0 0.0
    %5819 = vmatpush1.msra.mxu0 %v5704
    %5820 = vmatprep.subr.mxu0 0.0
    %5821 = vmatpush1.msra.mxu0 %v5705
    %5822 = vmatprep.subr.mxu0 0.0
    %5823 = vmatpush1.msra.mxu0 %v5706
    %5824 = vmatprep.subr.mxu0 0.0
    %5825 = vmatpush1.msra.mxu0 %v5707
    %5826 = vmatprep.subr.mxu0 0.0
    %5827 = vmatpush1.msra.mxu0 %v5708
    %5828 = vmatprep.subr.mxu0 0.0
    %5829 = vmatpush1.msra.mxu0 %v5709
    %5830 = vmatprep.subr.mxu0 0.0
    %5831 = vmatpush1.msra.mxu0 %v5710
    %5832 = vmatprep.subr.mxu0 0.0
    %5833 = vmatpush1.msra.mxu0 %v5711
    %5834 = vmatprep.subr.mxu0 0.0
    %5835 = vmatpush1.msra.mxu0 %v5712
    %5836 = vmatprep.subr.mxu0 0.0
    %5837 = vmatpush1.msra.mxu0 %v5713
    %5838 = vmatprep.subr.mxu0 0.0
    %5839 = vmatpush1.msra.mxu0 %v5714
    %5840 = vmatprep.subr.mxu0 0.0
    %5841 = vmatpush1.msra.mxu0 %v5715
    %5842 = vmatprep.subr.mxu0 0.0
    %5843 = vmatpush1.msra.mxu0 %v5716
    %5844 = vmatprep.subr.mxu0 0.0
    %5845 = vmatpush1.msra.mxu0 %v5717
    %5846 = vmatprep.subr.mxu0 0.0
    %5847 = vmatpush1.msra.mxu0 %v5719
    %5848 = vmatprep.subr.mxu0 0.0
    %5849 = vmatpush1.msra.mxu0 %v5721
    %5850 = vmatprep.subr.mxu0 0.0
    %5851 = vmatpush1.msra.mxu0 %v5723
    %5852 = vmatprep.subr.mxu0 0.0
    %5853 = vmatpush1.msra.mxu0 %v5725
    %5854 = vmatprep.subr.mxu0 0.0
    %5855 = vmatpush1.msra.mxu0 %v5727
    %5856 = vmatprep.subr.mxu0 0.0
    %5857 = vmatpush1.msra.mxu0 %v5729
    %5858 = vmatprep.subr.mxu0 0.0
    %5859 = vmatpush1.msra.mxu0 %v5731
    %5860 = vmatprep.subr.mxu0 0.0
    %5861 = vmatpush1.msra.mxu0 %v5733
    %5862 = vmatprep.subr.mxu0 0.0
    %5863 = vmatpush1.msra.mxu0 %v5735
    %5864 = vmatprep.subr.mxu0 0.0
    %5865 = vmatpush1.msra.mxu0 %v5737
    %5866 = vmatprep.subr.mxu0 0.0
    %5867 = vmatpush1.msra.mxu0 %v5739
    %5868 = vmatprep.subr.mxu0 0.0
    %5869 = vmatpush1.msra.mxu0 %v5741
    %5870 = vmatprep.subr.mxu0 0.0
    %5871 = vmatpush1.msra.mxu0 %v5743
    %5872 = vmatprep.subr.mxu0 0.0
    %5873 = vmatpush1.msra.mxu0 %v5745
    %5874 = vmatprep.subr.mxu0 0.0
    %5875 = vmatpush1.msra.mxu0 %v5747
    %5876 = vmatprep.subr.mxu0 0.0
    %5877 = vmatpush1.msra.mxu0 %v5749
    %5878 = vmatprep.mubr.f32.mxu0 %v4618
    %5879 = vmatmul.mubr.f32.gmra.mrb[0].mxu0 %v4617
    %v5880 = vpop.f32.mrb[0].mxu0
    %v5881 = vadd.f32 %v4700, %v5880
    %v5882 = vpop.f32.mrb[0].mxu0
    %5883 = vmatprep.mubr.f32.mxu0 %v4622
    %5884 = vmatmul.mubr.f32.gmra.mrb[0].mxu0 %v4621
    %v5885 = vpop.f32.mrb[0].mxu0
    %v5886 = vadd.f32 %v4705, %v5885
    %v5887 = vpop.f32.mrb[0].mxu0
    %5888 = vmatprep.mubr.f32.mxu0 %v4626
    %5889 = vmatmul.mubr.f32.gmra.mrb[0].mxu0 %v4625
    %v5890 = vpop.f32.mrb[0].mxu0
    %v5891 = vadd.f32 %v4710, %v5890
    %v5892 = vpop.f32.mrb[0].mxu0
    %5893 = vmatprep.mubr.f32.mxu0 %v4630
    %5894 = vmatmul.mubr.f32.gmra.mrb[0].mxu0 %v4629
    %v5895 = vpop.f32.mrb[0].mxu0
    %v5896 = vadd.f32 %v4715, %v5895
    %v5897 = vpop.f32.mrb[0].mxu0
    %5898 = vmatprep.mubr.f32.mxu0 %v4634
    %5899 = vmatmul.mubr.f32.gmra.mrb[0].mxu0 %v4633
    %v5900 = vpop.f32.mrb[0].mxu0
    %v5901 = vadd.f32 %v4720, %v5900
    %v5902 = vpop.f32.mrb[0].mxu0
    %5903 = vmatprep.mubr.f32.mxu0 %v4638
    %5904 = vmatmul.mubr.f32.gmra.mrb[0].mxu0 %v4637
    %v5905 = vpop.f32.mrb[0].mxu0
    %v5906 = vadd.f32 %v4725, %v5905
    %v5907 = vpop.f32.mrb[0].mxu0
    %5908 = vmatprep.mubr.f32.mxu0 %v4642
    %5909 = vmatmul.mubr.f32.gmra.mrb[0].mxu0 %v4641
    %v5910 = vpop.f32.mrb[0].mxu0
    %v5911 = vadd.f32 %v4730, %v5910
    %v5912 = vpop.f32.mrb[0].mxu0
    %5913 = vmatprep.mubr.f32.mxu0 %v4646
    %5914 = vmatmul.mubr.f32.gmra.mrb[0].mxu0 %v4645
    %v5915 = vpop.f32.mrb[0].mxu0
    %v5916 = vadd.f32 %v4735, %v5915
    %v5917 = vpop.f32.mrb[0].mxu0
    %5918 = vmatprep.mubr.f32.mxu0 %v4650
    %5919 = vmatmul.mubr.f32.gmra.mrb[0].mxu0 %v4649
    %v5920 = vpop.f32.mrb[0].mxu0
    %v5921 = vadd.f32 %v4740, %v5920
    %v5922 = vpop.f32.mrb[0].mxu0
    %5923 = vmatprep.mubr.f32.mxu0 %v4654
    %5924 = vmatmul.mubr.f32.gmra.mrb[0].mxu0 %v4653
    %v5925 = vpop.f32.mrb[0].mxu0
    %v5926 = vadd.f32 %v4745, %v5925
    %v5927 = vpop.f32.mrb[0].mxu0
    %5928 = vmatprep.mubr.f32.mxu0 %v4658
    %5929 = vmatmul.mubr.f32.gmra.mrb[0].mxu0 %v4657
    %v5930 = vpop.f32.mrb[0].mxu0
    %v5931 = vadd.f32 %v4750, %v5930
    %v5932 = vpop.f32.mrb[0].mxu0
    %5933 = vmatprep.mubr.f32.mxu0 %v4662
    %5934 = vmatmul.mubr.f32.gmra.mrb[0].mxu0 %v4661
    %v5935 = vpop.f32.mrb[0].mxu0
    %v5936 = vadd.f32 %v4755, %v5935
    %v5937 = vpop.f32.mrb[0].mxu0
    %5938 = vmatprep.mubr.f32.mxu0 %v4666
    %5939 = vmatmul.mubr.f32.gmra.mrb[0].mxu0 %v4665
    %v5940 = vpop.f32.mrb[0].mxu0
    %v5941 = vadd.f32 %v4760, %v5940
    %v5942 = vpop.f32.mrb[0].mxu0
    %5943 = vmatprep.mubr.f32.mxu0 %v4670
    %5944 = vmatmul.mubr.f32.gmra.mrb[0].mxu0 %v4669
    %v5945 = vpop.f32.mrb[0].mxu0
    %v5946 = vadd.f32 %v4765, %v5945
    %v5947 = vpop.f32.mrb[0].mxu0
    %5948 = vmatprep.mubr.f32.mxu0 %v4674
    %5949 = vmatmul.mubr.f32.gmra.mrb[0].mxu0 %v4673
    %v5950 = vpop.f32.mrb[0].mxu0
    %v5951 = vadd.f32 %v4770, %v5950
    %v5952 = vpop.f32.mrb[0].mxu0
    %5953 = vmatprep.mubr.f32.mxu0 %v4678
    %5954 = vmatmul.mubr.f32.gmra.mrb[0].mxu0 %v4677
    %v5955 = vpop.f32.mrb[0].mxu0
    %v5956 = vadd.f32 %v4775, %v5955
    %v5957 = vpop.f32.mrb[0].mxu0
    %5958 = vdwg.mxu0
    %5959 = vmatprep.subr.mxu0 0.0
    %5960 = vmatpush1.msra.mxu0 %v5751
    %5961 = vmatprep.subr.mxu0 0.0
    %5962 = vmatpush1.msra.mxu0 %v5753
    %5963 = vmatprep.subr.mxu0 0.0
    %5964 = vmatpush1.msra.mxu0 %v5755
    %5965 = vmatprep.subr.mxu0 0.0
    %5966 = vmatpush1.msra.mxu0 %v5757
    %5967 = vmatprep.subr.mxu0 0.0
    %5968 = vmatpush1.msra.mxu0 %v5759
    %5969 = vmatprep.subr.mxu0 0.0
    %5970 = vmatpush1.msra.mxu0 %v5761
    %5971 = vmatprep.subr.mxu0 0.0
    %5972 = vmatpush1.msra.mxu0 %v5763
    %5973 = vmatprep.subr.mxu0 0.0
    %5974 = vmatpush1.msra.mxu0 %v5765
    %5975 = vmatprep.subr.mxu0 0.0
    %5976 = vmatpush1.msra.mxu0 %v5767
    %5977 = vmatprep.subr.mxu0 0.0
    %5978 = vmatpush1.msra.mxu0 %v5769
    %5979 = vmatprep.subr.mxu0 0.0
    %5980 = vmatpush1.msra.mxu0 %v5771
    %5981 = vmatprep.subr.mxu0 0.0
    %5982 = vmatpush1.msra.mxu0 %v5773
    %5983 = vmatprep.subr.mxu0 0.0
    %5984 = vmatpush1.msra.mxu0 %v5775
    %5985 = vmatprep.subr.mxu0 0.0
    %5986 = vmatpush1.msra.mxu0 %v5777
    %5987 = vmatprep.subr.mxu0 0.0
    %5988 = vmatpush1.msra.mxu0 %v5779
    %5989 = vmatprep.subr.mxu0 0.0
    %5990 = vmatpush1.msra.mxu0 %v5781
    %5991 = vmatprep.subr.mxu0 0.0
    %5992 = vmatpush1.msra.mxu0 %v5783
    %5993 = vmatprep.subr.mxu0 0.0
    %5994 = vmatpush1.msra.mxu0 %v5785
    %5995 = vmatprep.subr.mxu0 0.0
    %5996 = vmatpush1.msra.mxu0 %v5787
    %5997 = vmatprep.subr.mxu0 0.0
    %5998 = vmatpush1.msra.mxu0 %v5789
    %5999 = vmatprep.subr.mxu0 0.0
    %6000 = vmatpush1.msra.mxu0 %v5791
    %6001 = vmatprep.subr.mxu0 0.0
    %6002 = vmatpush1.msra.mxu0 %v5793
    %6003 = vmatprep.subr.mxu0 0.0
    %6004 = vmatpush1.msra.mxu0 %v5795
    %6005 = vmatprep.subr.mxu0 0.0
    %6006 = vmatpush1.msra.mxu0 %v5797
    %6007 = vmatprep.subr.mxu0 0.0
    %6008 = vmatpush1.msra.mxu0 %v5799
    %6009 = vmatprep.subr.mxu0 0.0
    %6010 = vmatpush1.msra.mxu0 %v5801
    %6011 = vmatprep.subr.mxu0 0.0
    %6012 = vmatpush1.msra.mxu0 %v5803
    %6013 = vmatprep.subr.mxu0 0.0
    %6014 = vmatpush1.msra.mxu0 %v5805
    %6015 = vmatprep.subr.mxu0 0.0
    %6016 = vmatpush1.msra.mxu0 %v5807
    %6017 = vmatprep.subr.mxu0 0.0
    %6018 = vmatpush1.msra.mxu0 %v5809
    %6019 = vmatprep.subr.mxu0 0.0
    %6020 = vmatpush1.msra.mxu0 %v5811
    %6021 = vmatprep.subr.mxu0 0.0
    %6022 = vmatpush1.msra.mxu0 %v5813
    %6023 = vmatprep.mubr.f32.mxu0 %v4620
    %6024 = vmatmul.mubr.f32.gmra.mrb[0].mxu0 %v4619
    %v6025 = vpop.f32.mrb[0].mxu0
    %v6026 = vadd.f32 %v5881, %v6025
    %v6027 = vpop.f32.mrb[0].mxu0
    %6028 = vmatprep.mubr.f32.mxu0 %v4624
    %6029 = vmatmul.mubr.f32.gmra.mrb[0].mxu0 %v4623
    %v6030 = vpop.f32.mrb[0].mxu0
    %v6031 = vadd.f32 %v5886, %v6030
    %v6032 = vpop.f32.mrb[0].mxu0
    %6033 = vmatprep.mubr.f32.mxu0 %v4628
    %6034 = vmatmul.mubr.f32.gmra.mrb[0].mxu0 %v4627
    %v6035 = vpop.f32.mrb[0].mxu0
    %v6036 = vadd.f32 %v5891, %v6035
    %v6037 = vpop.f32.mrb[0].mxu0
    %6038 = vmatprep.mubr.f32.mxu0 %v4632
    %6039 = vmatmul.mubr.f32.gmra.mrb[0].mxu0 %v4631
    %v6040 = vpop.f32.mrb[0].mxu0
    %v6041 = vadd.f32 %v5896, %v6040
    %v6042 = vpop.f32.mrb[0].mxu0
    %6043 = vmatprep.mubr.f32.mxu0 %v4636
    %6044 = vmatmul.mubr.f32.gmra.mrb[0].mxu0 %v4635
    %v6045 = vpop.f32.mrb[0].mxu0
    %v6046 = vadd.f32 %v5901, %v6045
    %v6047 = vpop.f32.mrb[0].mxu0
    %6048 = vmatprep.mubr.f32.mxu0 %v4640
    %6049 = vmatmul.mubr.f32.gmra.mrb[0].mxu0 %v4639
    %v6050 = vpop.f32.mrb[0].mxu0
    %v6051 = vadd.f32 %v5906, %v6050
    %v6052 = vpop.f32.mrb[0].mxu0
    %6053 = vmatprep.mubr.f32.mxu0 %v4644
    %6054 = vmatmul.mubr.f32.gmra.mrb[0].mxu0 %v4643
    %v6055 = vpop.f32.mrb[0].mxu0
    %v6056 = vadd.f32 %v5911, %v6055
    %v6057 = vpop.f32.mrb[0].mxu0
    %6058 = vmatprep.mubr.f32.mxu0 %v4648
    %6059 = vmatmul.mubr.f32.gmra.mrb[0].mxu0 %v4647
    %v6060 = vpop.f32.mrb[0].mxu0
    %v6061 = vadd.f32 %v5916, %v6060
    %v6062 = vpop.f32.mrb[0].mxu0
    %6063 = vmatprep.mubr.f32.mxu0 %v4652
    %6064 = vmatmul.mubr.f32.gmra.mrb[0].mxu0 %v4651
    %v6065 = vpop.f32.mrb[0].mxu0
    %v6066 = vadd.f32 %v5921, %v6065
    %v6067 = vpop.f32.mrb[0].mxu0
    %6068 = vmatprep.mubr.f32.mxu0 %v4656
    %6069 = vmatmul.mubr.f32.gmra.mrb[0].mxu0 %v4655
    %v6070 = vpop.f32.mrb[0].mxu0
    %v6071 = vadd.f32 %v5926, %v6070
    %v6072 = vpop.f32.mrb[0].mxu0
    %6073 = vmatprep.mubr.f32.mxu0 %v4660
    %6074 = vmatmul.mubr.f32.gmra.mrb[0].mxu0 %v4659
    %v6075 = vpop.f32.mrb[0].mxu0
    %v6076 = vadd.f32 %v5931, %v6075
    %v6077 = vpop.f32.mrb[0].mxu0
    %6078 = vmatprep.mubr.f32.mxu0 %v4664
    %6079 = vmatmul.mubr.f32.gmra.mrb[0].mxu0 %v4663
    %v6080 = vpop.f32.mrb[0].mxu0
    %v6081 = vadd.f32 %v5936, %v6080
    %v6082 = vpop.f32.mrb[0].mxu0
    %6083 = vmatprep.mubr.f32.mxu0 %v4668
    %6084 = vmatmul.mubr.f32.gmra.mrb[0].mxu0 %v4667
    %v6085 = vpop.f32.mrb[0].mxu0
    %v6086 = vadd.f32 %v5941, %v6085
    %v6087 = vpop.f32.mrb[0].mxu0
    %6088 = vmatprep.mubr.f32.mxu0 %v4672
    %6089 = vmatmul.mubr.f32.gmra.mrb[0].mxu0 %v4671
    %v6090 = vpop.f32.mrb[0].mxu0
    %v6091 = vadd.f32 %v5946, %v6090
    %v6092 = vpop.f32.mrb[0].mxu0
    %6093 = vmatprep.mubr.f32.mxu0 %v4676
    %6094 = vmatmul.mubr.f32.gmra.mrb[0].mxu0 %v4675
    %v6095 = vpop.f32.mrb[0].mxu0
    %v6096 = vadd.f32 %v5951, %v6095
    %v6097 = vpop.f32.mrb[0].mxu0
    %6098 = vmatprep.mubr.f32.mxu0 %v4680
    %6099 = vmatmul.mubr.f32.gmra.mrb[0].mxu0 %v4679
    %v6100 = vpop.f32.mrb[0].mxu0
    %v6101 = vadd.f32 %v5956, %v6100
    %v6102 = vpop.f32.mrb[0].mxu0
    %6103 = vdwg.mxu0
    %v6104 = vmax.f32 %v6026, 0.0
    %v6105 = vmax.f32 %v6031, 0.0
    %v6106 = vmax.f32 %v6036, 0.0
    %v6107 = vmax.f32 %v6041, 0.0
    %v6108 = vmax.f32 %v6046, 0.0
    %v6109 = vmax.f32 %v6051, 0.0
    %v6110 = vmax.f32 %v6056, 0.0
    %v6111 = vmax.f32 %v6061, 0.0
    %v6112 = vmax.f32 %v6066, 0.0
    %v6113 = vmax.f32 %v6071, 0.0
    %v6114 = vmax.f32 %v6076, 0.0
    %v6115 = vmax.f32 %v6081, 0.0
    %v6116 = vmax.f32 %v6086, 0.0
    %v6117 = vmax.f32 %v6091, 0.0
    %v6118 = vmax.f32 %v6096, 0.0
    %v6119 = vmax.f32 %v6101, 0.0
    %v6120 = vsel %vm2290, %v6104, -inf
    %v6121 = vsel %vm2290, %v6105, -inf
    %v6122 = vsel %vm2290, %v6106, -inf
    %v6123 = vsel %vm2290, %v6107, -inf
    %v6124 = vsel %vm2290, %v6108, -inf
    %v6125 = vsel %vm2290, %v6109, -inf
    %v6126 = vsel %vm2290, %v6110, -inf
    %v6127 = vsel %vm2290, %v6111, -inf
    %v6128 = vsel %vm2290, %v6112, -inf
    %v6129 = vsel %vm2290, %v6113, -inf
    %v6130 = vsel %vm2290, %v6114, -inf
    %v6131 = vsel %vm2290, %v6115, -inf
    %v6132 = vsel %vm2290, %v6116, -inf
    %v6133 = vsel %vm2290, %v6117, -inf
    %v6134 = vsel %vm2290, %v6118, -inf
    %v6135 = vsel %vm2290, %v6119, -inf
    %6136 = vmax.xlane.f32.xlu0 %v6120
    %v6137 = vpop.xlane.xlu0 %6136
    %6138 = vmax.xlane.f32.xlu0 %v6121
    %v6139 = vpop.xlane.xlu0 %6138
    %6140 = vmax.xlane.f32.xlu0 %v6122
    %v6141 = vpop.xlane.xlu0 %6140
    %6142 = vmax.xlane.f32.xlu0 %v6123
    %v6143 = vpop.xlane.xlu0 %6142
    %6144 = vmax.xlane.f32.xlu0 %v6124
    %v6145 = vpop.xlane.xlu0 %6144
    %6146 = vmax.xlane.f32.xlu0 %v6125
    %v6147 = vpop.xlane.xlu0 %6146
    %6148 = vmax.xlane.f32.xlu0 %v6126
    %v6149 = vpop.xlane.xlu0 %6148
    %6150 = vmax.xlane.f32.xlu0 %v6127
    %v6151 = vpop.xlane.xlu0 %6150
    %6152 = vmax.xlane.f32.xlu0 %v6128
    %v6153 = vpop.xlane.xlu0 %6152
    %6154 = vmax.xlane.f32.xlu0 %v6129
    %v6155 = vpop.xlane.xlu0 %6154
    %6156 = vmax.xlane.f32.xlu0 %v6130
    %v6157 = vpop.xlane.xlu0 %6156
    %6158 = vmax.xlane.f32.xlu0 %v6131
    %v6159 = vpop.xlane.xlu0 %6158
    %6160 = vmax.xlane.f32.xlu0 %v6132
    %v6161 = vpop.xlane.xlu0 %6160
    %6162 = vmax.xlane.f32.xlu0 %v6133
    %v6163 = vpop.xlane.xlu0 %6162
    %6164 = vmax.xlane.f32.xlu0 %v6134
    %v6165 = vpop.xlane.xlu0 %6164
    %6166 = vmax.xlane.f32.xlu0 %v6135
    %v6167 = vpop.xlane.xlu0 %6166
    %v6168 = vsel %vm3376, %v5100, %v6137
    %v6169 = vsel %vm3376, %v5102, %v6139
    %v6170 = vsel %vm3376, %v5104, %v6141
    %v6171 = vsel %vm3376, %v5106, %v6143
    %v6172 = vsel %vm3376, %v5108, %v6145
    %v6173 = vsel %vm3376, %v5110, %v6147
    %v6174 = vsel %vm3376, %v5112, %v6149
    %v6175 = vsel %vm3376, %v5114, %v6151
    %v6176 = vsel %vm3376, %v5116, %v6153
    %v6177 = vsel %vm3376, %v5118, %v6155
    %v6178 = vsel %vm3376, %v5120, %v6157
    %v6179 = vsel %vm3376, %v5122, %v6159
    %v6180 = vsel %vm3376, %v5124, %v6161
    %v6181 = vsel %vm3376, %v5126, %v6163
    %v6182 = vsel %vm3376, %v5128, %v6165
    %v6183 = vsel %vm3376, %v5130, %v6167
    %v6184 = vld [vmem:[%s49] sm:$0xff]
    %v6185 = vld [vmem:[%s49 + $0x8] sm:$0xff]
    %v6186 = vld [vmem:[%s49 + $0x10] sm:$0xff]
    %v6187 = vld [vmem:[%s49 + $0x18] sm:$0xff]
    %v6188 = vld [vmem:[%s49 + $0x20] sm:$0xff]
    %v6189 = vld [vmem:[%s49 + $0x28] sm:$0xff]
    %v6190 = vld [vmem:[%s49 + $0x30] sm:$0xff]
    %v6191 = vld [vmem:[%s49 + $0x38] sm:$0xff]
    %v6192 = vld [vmem:[%s49 + $0x40] sm:$0xff]
    %v6193 = vld [vmem:[%s49 + $0x48] sm:$0xff]
    %v6194 = vld [vmem:[%s49 + $0x50] sm:$0xff]
    %v6195 = vld [vmem:[%s49 + $0x58] sm:$0xff]
    %v6196 = vld [vmem:[%s49 + $0x60] sm:$0xff]
    %v6197 = vld [vmem:[%s49 + $0x68] sm:$0xff]
    %v6198 = vld [vmem:[%s49 + $0x70] sm:$0xff]
    %v6199 = vld [vmem:[%s49 + $0x78] sm:$0xff]
    %v6200 = vld [vmem:[%s49 + $0x80] sm:$0xff]
    %v6201 = vld [vmem:[%s49 + $0x88] sm:$0xff]
    %v6202 = vld [vmem:[%s49 + $0x90] sm:$0xff]
    %v6203 = vld [vmem:[%s49 + $0x98] sm:$0xff]
    %v6204 = vld [vmem:[%s49 + $0xa0] sm:$0xff]
    %v6205 = vld [vmem:[%s49 + $0xa8] sm:$0xff]
    %v6206 = vld [vmem:[%s49 + $0xb0] sm:$0xff]
    %v6207 = vld [vmem:[%s49 + $0xb8] sm:$0xff]
    %v6208 = vld [vmem:[%s49 + $0xc0] sm:$0xff]
    %v6209 = vld [vmem:[%s49 + $0xc8] sm:$0xff]
    %v6210 = vld [vmem:[%s49 + $0xd0] sm:$0xff]
    %v6211 = vld [vmem:[%s49 + $0xd8] sm:$0xff]
    %v6212 = vld [vmem:[%s49 + $0xe0] sm:$0xff]
    %v6213 = vld [vmem:[%s49 + $0xe8] sm:$0xff]
    %v6214 = vld [vmem:[%s49 + $0xf0] sm:$0xff]
    %v6215 = vld [vmem:[%s49 + $0xf8] sm:$0xff]
    %v6216 = vld [vmem:[%s49 + $0x100] sm:$0xff]
    %v6217 = vld [vmem:[%s49 + $0x108] sm:$0xff]
    %v6218 = vld [vmem:[%s49 + $0x110] sm:$0xff]
    %v6219 = vld [vmem:[%s49 + $0x118] sm:$0xff]
    %v6220 = vld [vmem:[%s49 + $0x120] sm:$0xff]
    %v6221 = vld [vmem:[%s49 + $0x128] sm:$0xff]
    %v6222 = vld [vmem:[%s49 + $0x130] sm:$0xff]
    %v6223 = vld [vmem:[%s49 + $0x138] sm:$0xff]
    %v6224 = vld [vmem:[%s49 + $0x140] sm:$0xff]
    %v6225 = vld [vmem:[%s49 + $0x148] sm:$0xff]
    %v6226 = vld [vmem:[%s49 + $0x150] sm:$0xff]
    %v6227 = vld [vmem:[%s49 + $0x158] sm:$0xff]
    %v6228 = vld [vmem:[%s49 + $0x160] sm:$0xff]
    %v6229 = vld [vmem:[%s49 + $0x168] sm:$0xff]
    %v6230 = vld [vmem:[%s49 + $0x170] sm:$0xff]
    %v6231 = vld [vmem:[%s49 + $0x178] sm:$0xff]
    %v6232 = vld [vmem:[%s49 + $0x180] sm:$0xff]
    %v6233 = vld [vmem:[%s49 + $0x188] sm:$0xff]
    %v6234 = vld [vmem:[%s49 + $0x190] sm:$0xff]
    %v6235 = vld [vmem:[%s49 + $0x198] sm:$0xff]
    %v6236 = vld [vmem:[%s49 + $0x1a0] sm:$0xff]
    %v6237 = vld [vmem:[%s49 + $0x1a8] sm:$0xff]
    %v6238 = vld [vmem:[%s49 + $0x1b0] sm:$0xff]
    %v6239 = vld [vmem:[%s49 + $0x1b8] sm:$0xff]
    %v6240 = vld [vmem:[%s49 + $0x1c0] sm:$0xff]
    %v6241 = vld [vmem:[%s49 + $0x1c8] sm:$0xff]
    %v6242 = vld [vmem:[%s49 + $0x1d0] sm:$0xff]
    %v6243 = vld [vmem:[%s49 + $0x1d8] sm:$0xff]
    %v6244 = vld [vmem:[%s49 + $0x1e0] sm:$0xff]
    %v6245 = vld [vmem:[%s49 + $0x1e8] sm:$0xff]
    %v6246 = vld [vmem:[%s49 + $0x1f0] sm:$0xff]
    %v6247 = vld [vmem:[%s49 + $0x1f8] sm:$0xff]
    %v6248 = vld [vmem:[%s51] sm:$0xff]
    %v6249 = vld [vmem:[%s51 + $0x8] sm:$0xff]
    %v6250 = vld [vmem:[%s51 + $0x10] sm:$0xff]
    %v6251 = vld [vmem:[%s51 + $0x18] sm:$0xff]
    %v6252 = vld [vmem:[%s51 + $0x20] sm:$0xff]
    %v6253 = vld [vmem:[%s51 + $0x28] sm:$0xff]
    %v6254 = vld [vmem:[%s51 + $0x30] sm:$0xff]
    %v6255 = vld [vmem:[%s51 + $0x38] sm:$0xff]
    %v6256 = vld [vmem:[%s51 + $0x40] sm:$0xff]
    %v6257 = vld [vmem:[%s51 + $0x48] sm:$0xff]
    %v6258 = vld [vmem:[%s51 + $0x50] sm:$0xff]
    %v6259 = vld [vmem:[%s51 + $0x58] sm:$0xff]
    %v6260 = vld [vmem:[%s51 + $0x60] sm:$0xff]
    %v6261 = vld [vmem:[%s51 + $0x68] sm:$0xff]
    %v6262 = vld [vmem:[%s51 + $0x70] sm:$0xff]
    %v6263 = vld [vmem:[%s51 + $0x78] sm:$0xff]
    %v6264 = vld [vmem:[%s51 + $0x80] sm:$0xff]
    %v6265 = vld [vmem:[%s51 + $0x88] sm:$0xff]
    %v6266 = vld [vmem:[%s51 + $0x90] sm:$0xff]
    %v6267 = vld [vmem:[%s51 + $0x98] sm:$0xff]
    %v6268 = vld [vmem:[%s51 + $0xa0] sm:$0xff]
    %v6269 = vld [vmem:[%s51 + $0xa8] sm:$0xff]
    %v6270 = vld [vmem:[%s51 + $0xb0] sm:$0xff]
    %v6271 = vld [vmem:[%s51 + $0xb8] sm:$0xff]
    %v6272 = vld [vmem:[%s51 + $0xc0] sm:$0xff]
    %v6273 = vld [vmem:[%s51 + $0xc8] sm:$0xff]
    %v6274 = vld [vmem:[%s51 + $0xd0] sm:$0xff]
    %v6275 = vld [vmem:[%s51 + $0xd8] sm:$0xff]
    %v6276 = vld [vmem:[%s51 + $0xe0] sm:$0xff]
    %v6277 = vld [vmem:[%s51 + $0xe8] sm:$0xff]
    %v6278 = vld [vmem:[%s51 + $0xf0] sm:$0xff]
    %v6279 = vld [vmem:[%s51 + $0xf8] sm:$0xff]
    %6281 = vset.pattern.permute.xlu0 0
    %6282 = vperm.xlu0 %6281, %v6248
    %v6283 = vpop.permute.xlu0 %6282
    %6286 = vset.pattern.permute.xlu0 0
    %6287 = vperm.xlu0 %6286, %v6249
    %v6288 = vpop.permute.xlu0 %6287
    %6291 = vset.pattern.permute.xlu0 0
    %6292 = vperm.xlu0 %6291, %v6250
    %v6293 = vpop.permute.xlu0 %6292
    %6296 = vset.pattern.permute.xlu0 0
    %6297 = vperm.xlu0 %6296, %v6251
    %v6298 = vpop.permute.xlu0 %6297
    %6301 = vset.pattern.permute.xlu0 0
    %6302 = vperm.xlu0 %6301, %v6252
    %v6303 = vpop.permute.xlu0 %6302
    %6306 = vset.pattern.permute.xlu0 0
    %6307 = vperm.xlu0 %6306, %v6253
    %v6308 = vpop.permute.xlu0 %6307
    %6311 = vset.pattern.permute.xlu0 0
    %6312 = vperm.xlu0 %6311, %v6254
    %v6313 = vpop.permute.xlu0 %6312
    %6316 = vset.pattern.permute.xlu0 0
    %6317 = vperm.xlu0 %6316, %v6255
    %v6318 = vpop.permute.xlu0 %6317
    %6321 = vset.pattern.permute.xlu0 0
    %6322 = vperm.xlu0 %6321, %v6256
    %v6323 = vpop.permute.xlu0 %6322
    %6326 = vset.pattern.permute.xlu0 0
    %6327 = vperm.xlu0 %6326, %v6257
    %v6328 = vpop.permute.xlu0 %6327
    %6331 = vset.pattern.permute.xlu0 0
    %6332 = vperm.xlu0 %6331, %v6258
    %v6333 = vpop.permute.xlu0 %6332
    %6336 = vset.pattern.permute.xlu0 0
    %6337 = vperm.xlu0 %6336, %v6259
    %v6338 = vpop.permute.xlu0 %6337
    %6341 = vset.pattern.permute.xlu0 0
    %6342 = vperm.xlu0 %6341, %v6260
    %v6343 = vpop.permute.xlu0 %6342
    %6346 = vset.pattern.permute.xlu0 0
    %6347 = vperm.xlu0 %6346, %v6261
    %v6348 = vpop.permute.xlu0 %6347
    %6351 = vset.pattern.permute.xlu0 0
    %6352 = vperm.xlu0 %6351, %v6262
    %v6353 = vpop.permute.xlu0 %6352
    %6356 = vset.pattern.permute.xlu0 0
    %6357 = vperm.xlu0 %6356, %v6263
    %v6358 = vpop.permute.xlu0 %6357
    %6361 = vset.pattern.permute.xlu0 0
    %6362 = vperm.xlu0 %6361, %v6264
    %v6363 = vpop.permute.xlu0 %6362
    %6366 = vset.pattern.permute.xlu0 0
    %6367 = vperm.xlu0 %6366, %v6265
    %v6368 = vpop.permute.xlu0 %6367
    %6371 = vset.pattern.permute.xlu0 0
    %6372 = vperm.xlu0 %6371, %v6266
    %v6373 = vpop.permute.xlu0 %6372
    %6376 = vset.pattern.permute.xlu0 0
    %6377 = vperm.xlu0 %6376, %v6267
    %v6378 = vpop.permute.xlu0 %6377
    %6381 = vset.pattern.permute.xlu0 0
    %6382 = vperm.xlu0 %6381, %v6268
    %v6383 = vpop.permute.xlu0 %6382
    %6386 = vset.pattern.permute.xlu0 0
    %6387 = vperm.xlu0 %6386, %v6269
    %v6388 = vpop.permute.xlu0 %6387
    %6391 = vset.pattern.permute.xlu0 0
    %6392 = vperm.xlu0 %6391, %v6270
    %v6393 = vpop.permute.xlu0 %6392
    %6396 = vset.pattern.permute.xlu0 0
    %6397 = vperm.xlu0 %6396, %v6271
    %v6398 = vpop.permute.xlu0 %6397
    %6401 = vset.pattern.permute.xlu0 0
    %6402 = vperm.xlu0 %6401, %v6272
    %v6403 = vpop.permute.xlu0 %6402
    %6406 = vset.pattern.permute.xlu0 0
    %6407 = vperm.xlu0 %6406, %v6273
    %v6408 = vpop.permute.xlu0 %6407
    %6411 = vset.pattern.permute.xlu0 0
    %6412 = vperm.xlu0 %6411, %v6274
    %v6413 = vpop.permute.xlu0 %6412
    %6416 = vset.pattern.permute.xlu0 0
    %6417 = vperm.xlu0 %6416, %v6275
    %v6418 = vpop.permute.xlu0 %6417
    %6421 = vset.pattern.permute.xlu0 0
    %6422 = vperm.xlu0 %6421, %v6276
    %v6423 = vpop.permute.xlu0 %6422
    %6426 = vset.pattern.permute.xlu0 0
    %6427 = vperm.xlu0 %6426, %v6277
    %v6428 = vpop.permute.xlu0 %6427
    %6431 = vset.pattern.permute.xlu0 0
    %6432 = vperm.xlu0 %6431, %v6278
    %v6433 = vpop.permute.xlu0 %6432
    %6436 = vset.pattern.permute.xlu0 0
    %6437 = vperm.xlu0 %6436, %v6279
    %v6438 = vpop.permute.xlu0 %6437
    %6440 = vmatprep.subr.mxu0 0.0
    %6441 = vmatpush1.msra.mxu0 %v3377
    %6442 = vmatprep.subr.mxu0 0.0
    %6443 = vmatpush1.msra.mxu0 %v3378
    %6444 = vmatprep.subr.mxu0 0.0
    %6445 = vmatpush1.msra.mxu0 %v3379
    %6446 = vmatprep.subr.mxu0 0.0
    %6447 = vmatpush1.msra.mxu0 %v3380
    %6448 = vmatprep.subr.mxu0 0.0
    %6449 = vmatpush1.msra.mxu0 %v3381
    %6450 = vmatprep.subr.mxu0 0.0
    %6451 = vmatpush1.msra.mxu0 %v3382
    %6452 = vmatprep.subr.mxu0 0.0
    %6453 = vmatpush1.msra.mxu0 %v3383
    %6454 = vmatprep.subr.mxu0 0.0
    %6455 = vmatpush1.msra.mxu0 %v3384
    %6456 = vmatprep.subr.mxu0 0.0
    %6457 = vmatpush1.msra.mxu0 %v3385
    %6458 = vmatprep.subr.mxu0 0.0
    %6459 = vmatpush1.msra.mxu0 %v3386
    %6460 = vmatprep.subr.mxu0 0.0
    %6461 = vmatpush1.msra.mxu0 %v3387
    %6462 = vmatprep.subr.mxu0 0.0
    %6463 = vmatpush1.msra.mxu0 %v3388
    %6464 = vmatprep.subr.mxu0 0.0
    %6465 = vmatpush1.msra.mxu0 %v3389
    %6466 = vmatprep.subr.mxu0 0.0
    %6467 = vmatpush1.msra.mxu0 %v3390
    %6468 = vmatprep.subr.mxu0 0.0
    %6469 = vmatpush1.msra.mxu0 %v3391
    %6470 = vmatprep.subr.mxu0 0.0
    %6471 = vmatpush1.msra.mxu0 %v3392
    %6472 = vmatprep.subr.mxu0 0.0
    %6473 = vmatpush1.msra.mxu0 %v6168
    %6474 = vmatprep.subr.mxu0 0.0
    %6475 = vmatpush1.msra.mxu0 %v6169
    %6476 = vmatprep.subr.mxu0 0.0
    %6477 = vmatpush1.msra.mxu0 %v6170
    %6478 = vmatprep.subr.mxu0 0.0
    %6479 = vmatpush1.msra.mxu0 %v6171
    %6480 = vmatprep.subr.mxu0 0.0
    %6481 = vmatpush1.msra.mxu0 %v6172
    %6482 = vmatprep.subr.mxu0 0.0
    %6483 = vmatpush1.msra.mxu0 %v6173
    %6484 = vmatprep.subr.mxu0 0.0
    %6485 = vmatpush1.msra.mxu0 %v6174
    %6486 = vmatprep.subr.mxu0 0.0
    %6487 = vmatpush1.msra.mxu0 %v6175
    %6488 = vmatprep.subr.mxu0 0.0
    %6489 = vmatpush1.msra.mxu0 %v6176
    %6490 = vmatprep.subr.mxu0 0.0
    %6491 = vmatpush1.msra.mxu0 %v6177
    %6492 = vmatprep.subr.mxu0 0.0
    %6493 = vmatpush1.msra.mxu0 %v6178
    %6494 = vmatprep.subr.mxu0 0.0
    %6495 = vmatpush1.msra.mxu0 %v6179
    %6496 = vmatprep.subr.mxu0 0.0
    %6497 = vmatpush1.msra.mxu0 %v6180
    %6498 = vmatprep.subr.mxu0 0.0
    %6499 = vmatpush1.msra.mxu0 %v6181
    %6500 = vmatprep.subr.mxu0 0.0
    %6501 = vmatpush1.msra.mxu0 %v6182
    %6502 = vmatprep.subr.mxu0 0.0
    %6503 = vmatpush1.msra.mxu0 %v6183
    %6504 = vmatprep.mubr.f32.mxu0 %v6185
    %6505 = vmatmul.mubr.f32.gmra.mrb[0].mxu0 %v6184
    %v6506 = vpop.f32.mrb[0].mxu0
    %v6507 = vadd.f32 %v6283, %v6506
    %v6508 = vpop.f32.mrb[0].mxu0
    %6509 = vmatprep.mubr.f32.mxu0 %v6187
    %6510 = vmatmul.mubr.f32.gmra.mrb[0].mxu0 %v6186
    %v6511 = vpop.f32.mrb[0].mxu0
    %v6512 = vadd.f32 %v6288, %v6511
    %v6513 = vpop.f32.mrb[0].mxu0
    %6514 = vmatprep.mubr.f32.mxu0 %v6189
    %6515 = vmatmul.mubr.f32.gmra.mrb[0].mxu0 %v6188
    %v6516 = vpop.f32.mrb[0].mxu0
    %v6517 = vadd.f32 %v6293, %v6516
    %v6518 = vpop.f32.mrb[0].mxu0
    %6519 = vmatprep.mubr.f32.mxu0 %v6191
    %6520 = vmatmul.mubr.f32.gmra.mrb[0].mxu0 %v6190
    %v6521 = vpop.f32.mrb[0].mxu0
    %v6522 = vadd.f32 %v6298, %v6521
    %v6523 = vpop.f32.mrb[0].mxu0
    %6524 = vmatprep.mubr.f32.mxu0 %v6193
    %6525 = vmatmul.mubr.f32.gmra.mrb[0].mxu0 %v6192
    %v6526 = vpop.f32.mrb[0].mxu0
    %v6527 = vadd.f32 %v6303, %v6526
    %v6528 = vpop.f32.mrb[0].mxu0
    %6529 = vmatprep.mubr.f32.mxu0 %v6195
    %6530 = vmatmul.mubr.f32.gmra.mrb[0].mxu0 %v6194
    %v6531 = vpop.f32.mrb[0].mxu0
    %v6532 = vadd.f32 %v6308, %v6531
    %v6533 = vpop.f32.mrb[0].mxu0
    %6534 = vmatprep.mubr.f32.mxu0 %v6197
    %6535 = vmatmul.mubr.f32.gmra.mrb[0].mxu0 %v6196
    %v6536 = vpop.f32.mrb[0].mxu0
    %v6537 = vadd.f32 %v6313, %v6536
    %v6538 = vpop.f32.mrb[0].mxu0
    %6539 = vmatprep.mubr.f32.mxu0 %v6199
    %6540 = vmatmul.mubr.f32.gmra.mrb[0].mxu0 %v6198
    %v6541 = vpop.f32.mrb[0].mxu0
    %v6542 = vadd.f32 %v6318, %v6541
    %v6543 = vpop.f32.mrb[0].mxu0
    %6544 = vmatprep.mubr.f32.mxu0 %v6201
    %6545 = vmatmul.mubr.f32.gmra.mrb[0].mxu0 %v6200
    %v6546 = vpop.f32.mrb[0].mxu0
    %v6547 = vadd.f32 %v6323, %v6546
    %v6548 = vpop.f32.mrb[0].mxu0
    %6549 = vmatprep.mubr.f32.mxu0 %v6203
    %6550 = vmatmul.mubr.f32.gmra.mrb[0].mxu0 %v6202
    %v6551 = vpop.f32.mrb[0].mxu0
    %v6552 = vadd.f32 %v6328, %v6551
    %v6553 = vpop.f32.mrb[0].mxu0
    %6554 = vmatprep.mubr.f32.mxu0 %v6205
    %6555 = vmatmul.mubr.f32.gmra.mrb[0].mxu0 %v6204
    %v6556 = vpop.f32.mrb[0].mxu0
    %v6557 = vadd.f32 %v6333, %v6556
    %v6558 = vpop.f32.mrb[0].mxu0
    %6559 = vmatprep.mubr.f32.mxu0 %v6207
    %6560 = vmatmul.mubr.f32.gmra.mrb[0].mxu0 %v6206
    %v6561 = vpop.f32.mrb[0].mxu0
    %v6562 = vadd.f32 %v6338, %v6561
    %v6563 = vpop.f32.mrb[0].mxu0
    %6564 = vmatprep.mubr.f32.mxu0 %v6209
    %6565 = vmatmul.mubr.f32.gmra.mrb[0].mxu0 %v6208
    %v6566 = vpop.f32.mrb[0].mxu0
    %v6567 = vadd.f32 %v6343, %v6566
    %v6568 = vpop.f32.mrb[0].mxu0
    %6569 = vmatprep.mubr.f32.mxu0 %v6211
    %6570 = vmatmul.mubr.f32.gmra.mrb[0].mxu0 %v6210
    %v6571 = vpop.f32.mrb[0].mxu0
    %v6572 = vadd.f32 %v6348, %v6571
    %v6573 = vpop.f32.mrb[0].mxu0
    %6574 = vmatprep.mubr.f32.mxu0 %v6213
    %6575 = vmatmul.mubr.f32.gmra.mrb[0].mxu0 %v6212
    %v6576 = vpop.f32.mrb[0].mxu0
    %v6577 = vadd.f32 %v6353, %v6576
    %v6578 = vpop.f32.mrb[0].mxu0
    %6579 = vmatprep.mubr.f32.mxu0 %v6215
    %6580 = vmatmul.mubr.f32.gmra.mrb[0].mxu0 %v6214
    %v6581 = vpop.f32.mrb[0].mxu0
    %v6582 = vadd.f32 %v6358, %v6581
    %v6583 = vpop.f32.mrb[0].mxu0
    %6584 = vmatprep.mubr.f32.mxu0 %v6217
    %6585 = vmatmul.mubr.f32.gmra.mrb[0].mxu0 %v6216
    %v6586 = vpop.f32.mrb[0].mxu0
    %v6587 = vadd.f32 %v6363, %v6586
    %v6588 = vpop.f32.mrb[0].mxu0
    %6589 = vmatprep.mubr.f32.mxu0 %v6219
    %6590 = vmatmul.mubr.f32.gmra.mrb[0].mxu0 %v6218
    %v6591 = vpop.f32.mrb[0].mxu0
    %v6592 = vadd.f32 %v6368, %v6591
    %v6593 = vpop.f32.mrb[0].mxu0
    %6594 = vmatprep.mubr.f32.mxu0 %v6221
    %6595 = vmatmul.mubr.f32.gmra.mrb[0].mxu0 %v6220
    %v6596 = vpop.f32.mrb[0].mxu0
    %v6597 = vadd.f32 %v6373, %v6596
    %v6598 = vpop.f32.mrb[0].mxu0
    %6599 = vmatprep.mubr.f32.mxu0 %v6223
    %6600 = vmatmul.mubr.f32.gmra.mrb[0].mxu0 %v6222
    %v6601 = vpop.f32.mrb[0].mxu0
    %v6602 = vadd.f32 %v6378, %v6601
    %v6603 = vpop.f32.mrb[0].mxu0
    %6604 = vmatprep.mubr.f32.mxu0 %v6225
    %6605 = vmatmul.mubr.f32.gmra.mrb[0].mxu0 %v6224
    %v6606 = vpop.f32.mrb[0].mxu0
    %v6607 = vadd.f32 %v6383, %v6606
    %v6608 = vpop.f32.mrb[0].mxu0
    %6609 = vmatprep.mubr.f32.mxu0 %v6227
    %6610 = vmatmul.mubr.f32.gmra.mrb[0].mxu0 %v6226
    %v6611 = vpop.f32.mrb[0].mxu0
    %v6612 = vadd.f32 %v6388, %v6611
    %v6613 = vpop.f32.mrb[0].mxu0
    %6614 = vmatprep.mubr.f32.mxu0 %v6229
    %6615 = vmatmul.mubr.f32.gmra.mrb[0].mxu0 %v6228
    %v6616 = vpop.f32.mrb[0].mxu0
    %v6617 = vadd.f32 %v6393, %v6616
    %v6618 = vpop.f32.mrb[0].mxu0
    %6619 = vmatprep.mubr.f32.mxu0 %v6231
    %6620 = vmatmul.mubr.f32.gmra.mrb[0].mxu0 %v6230
    %v6621 = vpop.f32.mrb[0].mxu0
    %v6622 = vadd.f32 %v6398, %v6621
    %v6623 = vpop.f32.mrb[0].mxu0
    %6624 = vmatprep.mubr.f32.mxu0 %v6233
    %6625 = vmatmul.mubr.f32.gmra.mrb[0].mxu0 %v6232
    %v6626 = vpop.f32.mrb[0].mxu0
    %v6627 = vadd.f32 %v6403, %v6626
    %v6628 = vpop.f32.mrb[0].mxu0
    %6629 = vmatprep.mubr.f32.mxu0 %v6235
    %6630 = vmatmul.mubr.f32.gmra.mrb[0].mxu0 %v6234
    %v6631 = vpop.f32.mrb[0].mxu0
    %v6632 = vadd.f32 %v6408, %v6631
    %v6633 = vpop.f32.mrb[0].mxu0
    %6634 = vmatprep.mubr.f32.mxu0 %v6237
    %6635 = vmatmul.mubr.f32.gmra.mrb[0].mxu0 %v6236
    %v6636 = vpop.f32.mrb[0].mxu0
    %v6637 = vadd.f32 %v6413, %v6636
    %v6638 = vpop.f32.mrb[0].mxu0
    %6639 = vmatprep.mubr.f32.mxu0 %v6239
    %6640 = vmatmul.mubr.f32.gmra.mrb[0].mxu0 %v6238
    %v6641 = vpop.f32.mrb[0].mxu0
    %v6642 = vadd.f32 %v6418, %v6641
    %v6643 = vpop.f32.mrb[0].mxu0
    %6644 = vmatprep.mubr.f32.mxu0 %v6241
    %6645 = vmatmul.mubr.f32.gmra.mrb[0].mxu0 %v6240
    %v6646 = vpop.f32.mrb[0].mxu0
    %v6647 = vadd.f32 %v6423, %v6646
    %v6648 = vpop.f32.mrb[0].mxu0
    %6649 = vmatprep.mubr.f32.mxu0 %v6243
    %6650 = vmatmul.mubr.f32.gmra.mrb[0].mxu0 %v6242
    %v6651 = vpop.f32.mrb[0].mxu0
    %v6652 = vadd.f32 %v6428, %v6651
    %v6653 = vpop.f32.mrb[0].mxu0
    %6654 = vmatprep.mubr.f32.mxu0 %v6245
    %6655 = vmatmul.mubr.f32.gmra.mrb[0].mxu0 %v6244
    %v6656 = vpop.f32.mrb[0].mxu0
    %v6657 = vadd.f32 %v6433, %v6656
    %v6658 = vpop.f32.mrb[0].mxu0
    %6659 = vmatprep.mubr.f32.mxu0 %v6247
    %6660 = vmatmul.mubr.f32.gmra.mrb[0].mxu0 %v6246
    %v6661 = vpop.f32.mrb[0].mxu0
    %v6662 = vadd.f32 %v6438, %v6661
    %v6663 = vpop.f32.mrb[0].mxu0
    %6664 = vdwg.mxu0
    %v6665 = vmax.f32 %v6507, 0.0
    %v6666 = vmax.f32 %v6512, 0.0
    %v6667 = vmax.f32 %v6517, 0.0
    %v6668 = vmax.f32 %v6522, 0.0
    %v6669 = vmax.f32 %v6527, 0.0
    %v6670 = vmax.f32 %v6532, 0.0
    %v6671 = vmax.f32 %v6537, 0.0
    %v6672 = vmax.f32 %v6542, 0.0
    %v6673 = vmax.f32 %v6547, 0.0
    %v6674 = vmax.f32 %v6552, 0.0
    %v6675 = vmax.f32 %v6557, 0.0
    %v6676 = vmax.f32 %v6562, 0.0
    %v6677 = vmax.f32 %v6567, 0.0
    %v6678 = vmax.f32 %v6572, 0.0
    %v6679 = vmax.f32 %v6577, 0.0
    %v6680 = vmax.f32 %v6582, 0.0
    %v6681 = vmax.f32 %v6587, 0.0
    %v6682 = vmax.f32 %v6592, 0.0
    %v6683 = vmax.f32 %v6597, 0.0
    %v6684 = vmax.f32 %v6602, 0.0
    %v6685 = vmax.f32 %v6607, 0.0
    %v6686 = vmax.f32 %v6612, 0.0
    %v6687 = vmax.f32 %v6617, 0.0
    %v6688 = vmax.f32 %v6622, 0.0
    %v6689 = vmax.f32 %v6627, 0.0
    %v6690 = vmax.f32 %v6632, 0.0
    %v6691 = vmax.f32 %v6637, 0.0
    %v6692 = vmax.f32 %v6642, 0.0
    %v6693 = vmax.f32 %v6647, 0.0
    %v6694 = vmax.f32 %v6652, 0.0
    %v6695 = vmax.f32 %v6657, 0.0
    %v6696 = vmax.f32 %v6662, 0.0
    %v6697 = vld [vmem:[%s53] sm:$0xff]
    %v6698 = vld [vmem:[%s53 + $0x8] sm:$0xff]
    %v6699 = vld [vmem:[%s53 + $0x10] sm:$0xff]
    %v6700 = vld [vmem:[%s53 + $0x18] sm:$0xff]
    %v6701 = vld [vmem:[%s53 + $0x20] sm:$0xff]
    %v6702 = vld [vmem:[%s53 + $0x28] sm:$0xff]
    %v6703 = vld [vmem:[%s53 + $0x30] sm:$0xff]
    %v6704 = vld [vmem:[%s53 + $0x38] sm:$0xff]
    %v6705 = vld [vmem:[%s53 + $0x40] sm:$0xff]
    %v6706 = vld [vmem:[%s53 + $0x48] sm:$0xff]
    %v6707 = vld [vmem:[%s53 + $0x50] sm:$0xff]
    %v6708 = vld [vmem:[%s53 + $0x58] sm:$0xff]
    %v6709 = vld [vmem:[%s53 + $0x60] sm:$0xff]
    %v6710 = vld [vmem:[%s53 + $0x68] sm:$0xff]
    %v6711 = vld [vmem:[%s53 + $0x70] sm:$0xff]
    %v6712 = vld [vmem:[%s53 + $0x78] sm:$0xff]
    %v6713 = vld [vmem:[%s53 + $0x80] sm:$0xff]
    %v6714 = vld [vmem:[%s53 + $0x88] sm:$0xff]
    %v6715 = vld [vmem:[%s53 + $0x90] sm:$0xff]
    %v6716 = vld [vmem:[%s53 + $0x98] sm:$0xff]
    %v6717 = vld [vmem:[%s53 + $0xa0] sm:$0xff]
    %v6718 = vld [vmem:[%s53 + $0xa8] sm:$0xff]
    %v6719 = vld [vmem:[%s53 + $0xb0] sm:$0xff]
    %v6720 = vld [vmem:[%s53 + $0xb8] sm:$0xff]
    %v6721 = vld [vmem:[%s53 + $0xc0] sm:$0xff]
    %v6722 = vld [vmem:[%s53 + $0xc8] sm:$0xff]
    %v6723 = vld [vmem:[%s53 + $0xd0] sm:$0xff]
    %v6724 = vld [vmem:[%s53 + $0xd8] sm:$0xff]
    %v6725 = vld [vmem:[%s53 + $0xe0] sm:$0xff]
    %v6726 = vld [vmem:[%s53 + $0xe8] sm:$0xff]
    %v6727 = vld [vmem:[%s53 + $0xf0] sm:$0xff]
    %v6728 = vld [vmem:[%s53 + $0xf8] sm:$0xff]
    %v6729 = vld [vmem:[%s55] sm:$0xff]
    %v6730 = vld [vmem:[%s55 + $0x8] sm:$0xff]
    %v6731 = vld [vmem:[%s55 + $0x10] sm:$0xff]
    %v6732 = vld [vmem:[%s55 + $0x18] sm:$0xff]
    %v6733 = vld [vmem:[%s55 + $0x20] sm:$0xff]
    %v6734 = vld [vmem:[%s55 + $0x28] sm:$0xff]
    %v6735 = vld [vmem:[%s55 + $0x30] sm:$0xff]
    %v6736 = vld [vmem:[%s55 + $0x38] sm:$0xff]
    %v6737 = vld [vmem:[%s55 + $0x40] sm:$0xff]
    %v6738 = vld [vmem:[%s55 + $0x48] sm:$0xff]
    %v6739 = vld [vmem:[%s55 + $0x50] sm:$0xff]
    %v6740 = vld [vmem:[%s55 + $0x58] sm:$0xff]
    %v6741 = vld [vmem:[%s55 + $0x60] sm:$0xff]
    %v6742 = vld [vmem:[%s55 + $0x68] sm:$0xff]
    %v6743 = vld [vmem:[%s55 + $0x70] sm:$0xff]
    %v6744 = vld [vmem:[%s55 + $0x78] sm:$0xff]
    %6746 = vset.pattern.permute.xlu0 0
    %6747 = vperm.xlu0 %6746, %v6729
    %v6748 = vpop.permute.xlu0 %6747
    %6751 = vset.pattern.permute.xlu0 0
    %6752 = vperm.xlu0 %6751, %v6730
    %v6753 = vpop.permute.xlu0 %6752
    %6756 = vset.pattern.permute.xlu0 0
    %6757 = vperm.xlu0 %6756, %v6731
    %v6758 = vpop.permute.xlu0 %6757
    %6761 = vset.pattern.permute.xlu0 0
    %6762 = vperm.xlu0 %6761, %v6732
    %v6763 = vpop.permute.xlu0 %6762
    %6766 = vset.pattern.permute.xlu0 0
    %6767 = vperm.xlu0 %6766, %v6733
    %v6768 = vpop.permute.xlu0 %6767
    %6771 = vset.pattern.permute.xlu0 0
    %6772 = vperm.xlu0 %6771, %v6734
    %v6773 = vpop.permute.xlu0 %6772
    %6776 = vset.pattern.permute.xlu0 0
    %6777 = vperm.xlu0 %6776, %v6735
    %v6778 = vpop.permute.xlu0 %6777
    %6781 = vset.pattern.permute.xlu0 0
    %6782 = vperm.xlu0 %6781, %v6736
    %v6783 = vpop.permute.xlu0 %6782
    %6786 = vset.pattern.permute.xlu0 0
    %6787 = vperm.xlu0 %6786, %v6737
    %v6788 = vpop.permute.xlu0 %6787
    %6791 = vset.pattern.permute.xlu0 0
    %6792 = vperm.xlu0 %6791, %v6738
    %v6793 = vpop.permute.xlu0 %6792
    %6796 = vset.pattern.permute.xlu0 0
    %6797 = vperm.xlu0 %6796, %v6739
    %v6798 = vpop.permute.xlu0 %6797
    %6801 = vset.pattern.permute.xlu0 0
    %6802 = vperm.xlu0 %6801, %v6740
    %v6803 = vpop.permute.xlu0 %6802
    %6806 = vset.pattern.permute.xlu0 0
    %6807 = vperm.xlu0 %6806, %v6741
    %v6808 = vpop.permute.xlu0 %6807
    %6811 = vset.pattern.permute.xlu0 0
    %6812 = vperm.xlu0 %6811, %v6742
    %v6813 = vpop.permute.xlu0 %6812
    %6816 = vset.pattern.permute.xlu0 0
    %6817 = vperm.xlu0 %6816, %v6743
    %v6818 = vpop.permute.xlu0 %6817
    %6821 = vset.pattern.permute.xlu0 0
    %6822 = vperm.xlu0 %6821, %v6744
    %v6823 = vpop.permute.xlu0 %6822
    %6825 = vmatprep.subr.mxu0 0.0
    %6826 = vmatpush1.msra.mxu0 %v6665
    %6827 = vmatprep.subr.mxu0 0.0
    %6828 = vmatpush1.msra.mxu0 %v6666
    %6829 = vmatprep.subr.mxu0 0.0
    %6830 = vmatpush1.msra.mxu0 %v6667
    %6831 = vmatprep.subr.mxu0 0.0
    %6832 = vmatpush1.msra.mxu0 %v6668
    %6833 = vmatprep.subr.mxu0 0.0
    %6834 = vmatpush1.msra.mxu0 %v6669
    %6835 = vmatprep.subr.mxu0 0.0
    %6836 = vmatpush1.msra.mxu0 %v6670
    %6837 = vmatprep.subr.mxu0 0.0
    %6838 = vmatpush1.msra.mxu0 %v6671
    %6839 = vmatprep.subr.mxu0 0.0
    %6840 = vmatpush1.msra.mxu0 %v6672
    %6841 = vmatprep.subr.mxu0 0.0
    %6842 = vmatpush1.msra.mxu0 %v6673
    %6843 = vmatprep.subr.mxu0 0.0
    %6844 = vmatpush1.msra.mxu0 %v6674
    %6845 = vmatprep.subr.mxu0 0.0
    %6846 = vmatpush1.msra.mxu0 %v6675
    %6847 = vmatprep.subr.mxu0 0.0
    %6848 = vmatpush1.msra.mxu0 %v6676
    %6849 = vmatprep.subr.mxu0 0.0
    %6850 = vmatpush1.msra.mxu0 %v6677
    %6851 = vmatprep.subr.mxu0 0.0
    %6852 = vmatpush1.msra.mxu0 %v6678
    %6853 = vmatprep.subr.mxu0 0.0
    %6854 = vmatpush1.msra.mxu0 %v6679
    %6855 = vmatprep.subr.mxu0 0.0
    %6856 = vmatpush1.msra.mxu0 %v6680
    %6857 = vmatprep.subr.mxu0 0.0
    %6858 = vmatpush1.msra.mxu0 %v6681
    %6859 = vmatprep.subr.mxu0 0.0
    %6860 = vmatpush1.msra.mxu0 %v6682
    %6861 = vmatprep.subr.mxu0 0.0
    %6862 = vmatpush1.msra.mxu0 %v6683
    %6863 = vmatprep.subr.mxu0 0.0
    %6864 = vmatpush1.msra.mxu0 %v6684
    %6865 = vmatprep.subr.mxu0 0.0
    %6866 = vmatpush1.msra.mxu0 %v6685
    %6867 = vmatprep.subr.mxu0 0.0
    %6868 = vmatpush1.msra.mxu0 %v6686
    %6869 = vmatprep.subr.mxu0 0.0
    %6870 = vmatpush1.msra.mxu0 %v6687
    %6871 = vmatprep.subr.mxu0 0.0
    %6872 = vmatpush1.msra.mxu0 %v6688
    %6873 = vmatprep.subr.mxu0 0.0
    %6874 = vmatpush1.msra.mxu0 %v6689
    %6875 = vmatprep.subr.mxu0 0.0
    %6876 = vmatpush1.msra.mxu0 %v6690
    %6877 = vmatprep.subr.mxu0 0.0
    %6878 = vmatpush1.msra.mxu0 %v6691
    %6879 = vmatprep.subr.mxu0 0.0
    %6880 = vmatpush1.msra.mxu0 %v6692
    %6881 = vmatprep.subr.mxu0 0.0
    %6882 = vmatpush1.msra.mxu0 %v6693
    %6883 = vmatprep.subr.mxu0 0.0
    %6884 = vmatpush1.msra.mxu0 %v6694
    %6885 = vmatprep.subr.mxu0 0.0
    %6886 = vmatpush1.msra.mxu0 %v6695
    %6887 = vmatprep.subr.mxu0 0.0
    %6888 = vmatpush1.msra.mxu0 %v6696
    %6889 = vmatprep.mubr.f32.mxu0 %v6698
    %6890 = vmatmul.mubr.f32.gmra.mrb[0].mxu0 %v6697
    %v6891 = vpop.f32.mrb[0].mxu0
    %v6892 = vadd.f32 %v6748, %v6891
    %v6893 = vpop.f32.mrb[0].mxu0
    %6894 = vmatprep.mubr.f32.mxu0 %v6700
    %6895 = vmatmul.mubr.f32.gmra.mrb[0].mxu0 %v6699
    %v6896 = vpop.f32.mrb[0].mxu0
    %v6897 = vadd.f32 %v6753, %v6896
    %v6898 = vpop.f32.mrb[0].mxu0
    %6899 = vmatprep.mubr.f32.mxu0 %v6702
    %6900 = vmatmul.mubr.f32.gmra.mrb[0].mxu0 %v6701
    %v6901 = vpop.f32.mrb[0].mxu0
    %v6902 = vadd.f32 %v6758, %v6901
    %v6903 = vpop.f32.mrb[0].mxu0
    %6904 = vmatprep.mubr.f32.mxu0 %v6704
    %6905 = vmatmul.mubr.f32.gmra.mrb[0].mxu0 %v6703
    %v6906 = vpop.f32.mrb[0].mxu0
    %v6907 = vadd.f32 %v6763, %v6906
    %v6908 = vpop.f32.mrb[0].mxu0
    %6909 = vmatprep.mubr.f32.mxu0 %v6706
    %6910 = vmatmul.mubr.f32.gmra.mrb[0].mxu0 %v6705
    %v6911 = vpop.f32.mrb[0].mxu0
    %v6912 = vadd.f32 %v6768, %v6911
    %v6913 = vpop.f32.mrb[0].mxu0
    %6914 = vmatprep.mubr.f32.mxu0 %v6708
    %6915 = vmatmul.mubr.f32.gmra.mrb[0].mxu0 %v6707
    %v6916 = vpop.f32.mrb[0].mxu0
    %v6917 = vadd.f32 %v6773, %v6916
    %v6918 = vpop.f32.mrb[0].mxu0
    %6919 = vmatprep.mubr.f32.mxu0 %v6710
    %6920 = vmatmul.mubr.f32.gmra.mrb[0].mxu0 %v6709
    %v6921 = vpop.f32.mrb[0].mxu0
    %v6922 = vadd.f32 %v6778, %v6921
    %v6923 = vpop.f32.mrb[0].mxu0
    %6924 = vmatprep.mubr.f32.mxu0 %v6712
    %6925 = vmatmul.mubr.f32.gmra.mrb[0].mxu0 %v6711
    %v6926 = vpop.f32.mrb[0].mxu0
    %v6927 = vadd.f32 %v6783, %v6926
    %v6928 = vpop.f32.mrb[0].mxu0
    %6929 = vmatprep.mubr.f32.mxu0 %v6714
    %6930 = vmatmul.mubr.f32.gmra.mrb[0].mxu0 %v6713
    %v6931 = vpop.f32.mrb[0].mxu0
    %v6932 = vadd.f32 %v6788, %v6931
    %v6933 = vpop.f32.mrb[0].mxu0
    %6934 = vmatprep.mubr.f32.mxu0 %v6716
    %6935 = vmatmul.mubr.f32.gmra.mrb[0].mxu0 %v6715
    %v6936 = vpop.f32.mrb[0].mxu0
    %v6937 = vadd.f32 %v6793, %v6936
    %v6938 = vpop.f32.mrb[0].mxu0
    %6939 = vmatprep.mubr.f32.mxu0 %v6718
    %6940 = vmatmul.mubr.f32.gmra.mrb[0].mxu0 %v6717
    %v6941 = vpop.f32.mrb[0].mxu0
    %v6942 = vadd.f32 %v6798, %v6941
    %v6943 = vpop.f32.mrb[0].mxu0
    %6944 = vmatprep.mubr.f32.mxu0 %v6720
    %6945 = vmatmul.mubr.f32.gmra.mrb[0].mxu0 %v6719
    %v6946 = vpop.f32.mrb[0].mxu0
    %v6947 = vadd.f32 %v6803, %v6946
    %v6948 = vpop.f32.mrb[0].mxu0
    %6949 = vmatprep.mubr.f32.mxu0 %v6722
    %6950 = vmatmul.mubr.f32.gmra.mrb[0].mxu0 %v6721
    %v6951 = vpop.f32.mrb[0].mxu0
    %v6952 = vadd.f32 %v6808, %v6951
    %v6953 = vpop.f32.mrb[0].mxu0
    %6954 = vmatprep.mubr.f32.mxu0 %v6724
    %6955 = vmatmul.mubr.f32.gmra.mrb[0].mxu0 %v6723
    %v6956 = vpop.f32.mrb[0].mxu0
    %v6957 = vadd.f32 %v6813, %v6956
    %v6958 = vpop.f32.mrb[0].mxu0
    %6959 = vmatprep.mubr.f32.mxu0 %v6726
    %6960 = vmatmul.mubr.f32.gmra.mrb[0].mxu0 %v6725
    %v6961 = vpop.f32.mrb[0].mxu0
    %v6962 = vadd.f32 %v6818, %v6961
    %v6963 = vpop.f32.mrb[0].mxu0
    %6964 = vmatprep.mubr.f32.mxu0 %v6728
    %6965 = vmatmul.mubr.f32.gmra.mrb[0].mxu0 %v6727
    %v6966 = vpop.f32.mrb[0].mxu0
    %v6967 = vadd.f32 %v6823, %v6966
    %v6968 = vpop.f32.mrb[0].mxu0
    %6969 = vdwg.mxu0
    %v6970 = vmax.f32 %v6892, 0.0
    %v6971 = vmax.f32 %v6897, 0.0
    %v6972 = vmax.f32 %v6902, 0.0
    %v6973 = vmax.f32 %v6907, 0.0
    %v6974 = vmax.f32 %v6912, 0.0
    %v6975 = vmax.f32 %v6917, 0.0
    %v6976 = vmax.f32 %v6922, 0.0
    %v6977 = vmax.f32 %v6927, 0.0
    %v6978 = vmax.f32 %v6932, 0.0
    %v6979 = vmax.f32 %v6937, 0.0
    %v6980 = vmax.f32 %v6942, 0.0
    %v6981 = vmax.f32 %v6947, 0.0
    %v6982 = vmax.f32 %v6952, 0.0
    %v6983 = vmax.f32 %v6957, 0.0
    %v6984 = vmax.f32 %v6962, 0.0
    %v6985 = vmax.f32 %v6967, 0.0
    %v6986 = vld [vmem:[%s57] sm:$0x1]
    %v6987 = vld [vmem:[#allocation2] sm:$0x1]
    %6989 = vset.pattern.permute.xlu0 0
    %6990 = vperm.xlu0 %6989, %v6987
    %v6991 = vpop.permute.xlu0 %6990
    %v6993 = vlaneseq
    %v6994 = vshrl.u32 %v6993, 7
    %v6995 = vsub.s32 0, %v6994
    %v6996 = vrot.slane %v6991, %v6995
    %6997 = vmatprep.subr.mxu0 0.0
    %6998 = vmatpush1.msra.mxu0 %v6970
    %6999 = vmatprep.subr.mxu0 0.0
    %7000 = vmatpush1.msra.mxu0 %v6971
    %7001 = vmatprep.subr.mxu0 0.0
    %7002 = vmatpush1.msra.mxu0 %v6972
    %7003 = vmatprep.subr.mxu0 0.0
    %7004 = vmatpush1.msra.mxu0 %v6973
    %7005 = vmatprep.subr.mxu0 0.0
    %7006 = vmatpush1.msra.mxu0 %v6974
    %7007 = vmatprep.subr.mxu0 0.0
    %7008 = vmatpush1.msra.mxu0 %v6975
    %7009 = vmatprep.subr.mxu0 0.0
    %7010 = vmatpush1.msra.mxu0 %v6976
    %7011 = vmatprep.subr.mxu0 0.0
    %7012 = vmatpush1.msra.mxu0 %v6977
    %7013 = vmatprep.subr.mxu0 0.0
    %7014 = vmatpush1.msra.mxu0 %v6978
    %7015 = vmatprep.subr.mxu0 0.0
    %7016 = vmatpush1.msra.mxu0 %v6979
    %7017 = vmatprep.subr.mxu0 0.0
    %7018 = vmatpush1.msra.mxu0 %v6980
    %7019 = vmatprep.subr.mxu0 0.0
    %7020 = vmatpush1.msra.mxu0 %v6981
    %7021 = vmatprep.subr.mxu0 0.0
    %7022 = vmatpush1.msra.mxu0 %v6982
    %7023 = vmatprep.subr.mxu0 0.0
    %7024 = vmatpush1.msra.mxu0 %v6983
    %7025 = vmatprep.subr.mxu0 0.0
    %7026 = vmatpush1.msra.mxu0 %v6984
    %7027 = vmatprep.subr.mxu0 0.0
    %7028 = vmatpush1.msra.mxu0 %v6985
    %7029 = vmatprep.subr.mxu0 0.0
    %7030 = vmatpush1.msra.mxu0 0.0
    %7031 = vmatprep.subr.mxu0 0.0
    %7032 = vmatpush1.msra.mxu0 0.0
    %7033 = vmatprep.subr.mxu0 0.0
    %7034 = vmatpush1.msra.mxu0 0.0
    %7035 = vmatprep.subr.mxu0 0.0
    %7036 = vmatpush1.msra.mxu0 0.0
    %7037 = vmatprep.subr.mxu0 0.0
    %7038 = vmatpush1.msra.mxu0 0.0
    %7039 = vmatprep.subr.mxu0 0.0
    %7040 = vmatpush1.msra.mxu0 0.0
    %7041 = vmatprep.subr.mxu0 0.0
    %7042 = vmatpush1.msra.mxu0 0.0
    %7043 = vmatprep.subr.mxu0 0.0
    %7044 = vmatpush1.msra.mxu0 0.0
    %7045 = vmatprep.subr.mxu0 0.0
    %7046 = vmatpush1.msra.mxu0 0.0
    %7047 = vmatprep.subr.mxu0 0.0
    %7048 = vmatpush1.msra.mxu0 0.0
    %7049 = vmatprep.subr.mxu0 0.0
    %7050 = vmatpush1.msra.mxu0 0.0
    %7051 = vmatprep.subr.mxu0 0.0
    %7052 = vmatpush1.msra.mxu0 0.0
    %7053 = vmatprep.subr.mxu0 0.0
    %7054 = vmatpush1.msra.mxu0 0.0
    %7055 = vmatprep.subr.mxu0 0.0
    %7056 = vmatpush1.msra.mxu0 0.0
    %7057 = vmatprep.subr.mxu0 0.0
    %7058 = vmatpush1.msra.mxu0 0.0
    %7059 = vmatprep.subr.mxu0 0.0
    %7060 = vmatpush1.msra.mxu0 0.0
    %7061 = vmatprep.mubr.f32.mxu0 0.0
    %7062 = vmatmul.mubr.f32.gmra.mrb[0].mxu0 %v6986
    %v7063 = vpop.f32.mrb[0].mxu0
    %v7064 = vadd.f32 %v6996, %v7063
    %v7065 = vpop.f32.mrb[0].mxu0
    %7066 = vdwg.mxu0
    %vm7067 = vcmask 8192
    %7068 = vst.msk [vmem:[#allocation3] sm:$0x1] %vm7067, %v7064
    // Predicated region
    $region122: #{bert_cnn_forward.1} parent=1 // pred_check
      _
    $region123: #{bert_cnn_forward.1} parent=1 // pred_check_branch
      %7070 = sbr.rel (0) target = $region125
    $region124: #{bert_cnn_forward.1} parent=1 // pred_region
      %s7072 = ssub.s32 16, 16
      %7073 = vsyncadd [#allocation4], %s7072
      %s7075 = sshll.u32 [#allocation3], 4
      %s7076 = int_to_ptr.vmem [resolvable:$true] %s7075
      %7078 = dma.vmem_to_hbm [thread:$0]  %s7076, 16, %s61, [#allocation4]
    $region125: #{bert_cnn_forward.1} parent=1 // pred_fallthru
      _
    // Predicated region
    $region126: #{bert_cnn_forward.1} parent=1 // pred_check
      _
    $region127: #{bert_cnn_forward.1} parent=1 // pred_check_branch
      %7080 = sbr.rel (0) target = $region129
    $region128: #{bert_cnn_forward.1} parent=1 // pred_region
      %7081 = dma.done [#allocation4], 16
    $region129: #{bert_cnn_forward.1} parent=1 // pred_fallthru
      _
    %7082 = vsyncpa [#allocation4], 1

</llo_original>
